<compile_context>
chip_gen: v6e
topology: v6e:2x2x1
jax: 0.10.0
libtpu: 0.0.40
codegen_flags: <defaults>
</compile_context>

<pallas_src>
import functools

import jax
import jax.numpy as jnp
from jax.experimental import pallas as pl
from jax.experimental.pallas import tpu as pltpu


# ----------------------------------------------------------------------------
# Helpers
# ----------------------------------------------------------------------------
def _round_up(x, m):
    return ((x + m - 1) // m) * m


def _upsample_onehot(n, h, w, h5, w5, k_src):
    """0/1 selection matrix U (n*h*w, k_src): row r selects the p5 row that a
    nearest-neighbour (factor h/h5 x w/w5) upsample would place at flat r."""
    fh, fw = h // h5, w // w5
    nn = jnp.arange(n)[:, None, None]
    hh = jnp.arange(h)[None, :, None]
    ww = jnp.arange(w)[None, None, :]
    src = (nn * (h5 * w5) + (hh // fh) * w5 + (ww // fw)).reshape(n * h * w)
    return jax.nn.one_hot(src, k_src, dtype=jnp.float32)


# ----------------------------------------------------------------------------
# Fused per-level Pallas kernel
#   m  = x @ W_lat + b_lat + (U @ p5)          (1x1 lateral + upsampled resid)
#   f  = valid 3x3 conv of m (3 grouped-K matmuls), cropped rows written out
# ----------------------------------------------------------------------------
def _fpn_level_kernel(x_ref, wl_ref, bl_ref, u_ref, p5_ref, wf_ref, bf_ref,
                      o_ref, *, n, h, w):
    cout = o_ref.shape[1]
    ho, wo = h - 2, w - 2
    m_rows = n * h * w
    # Rows >= r_rows can never be valid 3x3 outputs (they map to h >= H-2 or
    # w >= W-2 or the last image rows), so taps never index past m_rows.
    r_rows = m_rows - 2 * w - 2

    # --- lateral 1x1 conv + bias + f32 nearest-upsampled p5 residual ---
    m = jnp.dot(x_ref[...], wl_ref[...], preferred_element_type=jnp.float32)
    m = m + bl_ref[...]
    m = m + jnp.dot(u_ref[...], p5_ref[...], preferred_element_type=jnp.float32)

    # --- valid 3x3 conv: 3 matmuls with K = 3*Cin (kj taps grouped on K) ---
    acc = jnp.zeros((r_rows, cout), jnp.float32)
    for ki in range(3):
        base = ki * w
        op = jnp.concatenate(
            [m[base + kj:base + kj + r_rows, :] for kj in range(3)], axis=1)
        acc = acc + jnp.dot(op.astype(jnp.bfloat16), wf_ref[ki],
                            preferred_element_type=jnp.float32)
    acc = acc + bf_ref[...]

    # --- write only valid (cropped) rows: output is (n, ho, wo, cout) flat ---
    for nn in range(n):
        for hh in range(ho):
            src = nn * h * w + hh * w
            dst = (nn * ho + hh) * wo
            o_ref[pl.ds(dst, wo), :] = acc[src:src + wo, :].astype(o_ref.dtype)


def fpn_level(x_nhwc, wl, bl, p5_flat, p5_hw, wf, bf, *,
              out_dtype=jnp.float32):
    """One FPN head level: final_3x3(lateral_1x1(x) + upsample(p5)).

    x_nhwc: (N,H,W,Cin) bf16; wl: (Cin,256) bf16; bl: (256,) f32;
    p5_flat: (N*h5*w5, 256) f32; wf: (3, 3*256, 256) bf16 (ki, kj*Cin+c, Cout);
    bf: (256,) f32.  Returns (N, H-2, W-2, 256) out_dtype, NHWC.
    """
    n, h, w, cin = x_nhwc.shape
    h5, w5 = p5_hw
    cm = wl.shape[1]
    cout = wf.shape[-1]
    assert h >= 3 and w >= 3 and h % h5 == 0 and w % w5 == 0
    ho, wo = h - 2, w - 2
    m_rows = n * h * w
    mo = n * ho * wo
    r_rows = m_rows - 2 * w - 2

    x2 = x_nhwc.reshape(m_rows, cin)
    bl2 = bl.reshape(1, cm).astype(jnp.float32)
    bf2 = bf.reshape(1, cout).astype(jnp.float32)

    # Selection-matmul upsample operands (pad K to a lane-dense 128 multiple).
    k_src = _round_up(n * h5 * w5, 128)
    u = _upsample_onehot(n, h, w, h5, w5, k_src)
    p5_pad = jnp.pad(p5_flat.astype(jnp.float32),
                     ((0, k_src - p5_flat.shape[0]), (0, 0)))

    # Single-block VMEM budget guard (see TODO(synk) in the header).
    vmem_est = (2 * m_rows * cin * 2 + 2 * 3 * 3 * cm * cout * 2
                + 2 * mo * cout * 4 + m_rows * k_src * 4 + k_src * cm * 4
                + cin * cm * 2 + 6 * m_rows * cm * 4)
    if vmem_est > 24 * (1 << 20):
        raise NotImplementedError(
            "FPN level too large for the single-block fused kernel")

    flops = (2 * m_rows * cin * cm          # lateral 1x1
             + 2 * m_rows * k_src * cm      # upsample selection matmul
             + 3 * 2 * r_rows * (3 * cm) * cout)  # grouped 3x3 taps
    bytes_accessed = (m_rows * cin * 2 + cin * cm * 2 + cm * 4
                      + m_rows * k_src * 4 + k_src * cm * 4
                      + 3 * 3 * cm * cout * 2 + cout * 4
                      + mo * cout * jnp.dtype(out_dtype).itemsize)

    out = pl.pallas_call(
        functools.partial(_fpn_level_kernel, n=n, h=h, w=w),
        out_shape=jax.ShapeDtypeStruct((mo, cout), out_dtype),
        grid=(1,),
        in_specs=[
            pl.BlockSpec((m_rows, cin), lambda i: (0, 0)),
            pl.BlockSpec((cin, cm), lambda i: (0, 0)),
            pl.BlockSpec((1, cm), lambda i: (0, 0)),
            pl.BlockSpec((m_rows, k_src), lambda i: (0, 0)),
            pl.BlockSpec((k_src, cm), lambda i: (0, 0)),
            pl.BlockSpec((3, 3 * cm, cout), lambda i: (0, 0, 0)),
            pl.BlockSpec((1, cout), lambda i: (0, 0)),
        ],
        out_specs=pl.BlockSpec((mo, cout), lambda i: (0, 0)),
        compiler_params=pltpu.CompilerParams(
            dimension_semantics=("arbitrary",)),
        cost_estimate=pl.CostEstimate(flops=int(flops), transcendentals=0,
                                      bytes_accessed=int(bytes_accessed)),
    )(x2, wl, bl2, u, p5_pad, wf, bf2)

    return out.reshape(n, ho, wo, cout)


# ----------------------------------------------------------------------------
# Plain-JAX glue (stand-in pathways; tiny / launch-overhead-bound)
# ----------------------------------------------------------------------------
def _down2(x):
    return x[:, ::2, ::2, :]


def _xla_proj_relu(x, w, b):
    y = jnp.einsum("nhwc,cd->nhwd", x, w,
                   preferred_element_type=jnp.float32) + b
    return jnp.maximum(y, 0.0).astype(jnp.bfloat16)


# ----------------------------------------------------------------------------
# Parameter initialization (deterministic, synthetic)
# ----------------------------------------------------------------------------
def init_params(key):
    def w_init(k, shape, fan_in):
        w = jax.random.normal(k, shape, jnp.float32)
        return (w * (1.0 / jnp.sqrt(jnp.float32(fan_in)))).astype(jnp.bfloat16)

    specs = {
        # bottom-up pathway stand-in (stride-2 1x1 projections)
        "bu1_w": ((3, 64), 3), "bu2_w": ((64, 64), 64),
        "bu3_w": ((64, 128), 64), "bu4_w": ((128, 256), 128),
        "bu5_w": ((256, 512), 256),
        # top-down p5 projection
        "p5_w": ((512, 256), 512),
        # FPN head: 1x1 laterals
        "il4_w": ((256, 256), 256), "il3_w": ((128, 256), 128),
        "il2_w": ((64, 256), 64),
        # FPN head: 3x3 finals, grouped-K layout (ki, kj*Cin + c, Cout)
        "fl4_w": ((3, 3 * 256, 256), 9 * 256),
        "fl3_w": ((3, 3 * 256, 256), 9 * 256),
        "fl2_w": ((3, 3 * 256, 256), 9 * 256),
    }
    params = {}
    keys = jax.random.split(key, len(specs))
    for k, (name, (shape, fan_in)) in zip(keys, specs.items()):
        params[name] = w_init(k, shape, fan_in)
        params[name.replace("_w", "_b")] = jnp.full(
            (shape[-1],), 0.01, jnp.float32)
    return params


# ----------------------------------------------------------------------------
# FPN forward
# ----------------------------------------------------------------------------
def fpn_forward(params, x_nchw, *, nchw_outputs=False):
    p = params
    # NCHW (PyTorch) -> NHWC (kernel layout), bf16 activations between stages.
    x = jnp.transpose(x_nchw, (0, 2, 3, 1)).astype(jnp.bfloat16)

    # --- bottom-up pathway (Resnet stand-in, plain XLA) ---
    s1 = _xla_proj_relu(_down2(x), p["bu1_w"], p["bu1_b"])    # /2,   64
    c2 = _xla_proj_relu(_down2(s1), p["bu2_w"], p["bu2_b"])   # /4,   64
    c3 = _xla_proj_relu(_down2(c2), p["bu3_w"], p["bu3_b"])   # /8,  128
    c4 = _xla_proj_relu(_down2(c3), p["bu4_w"], p["bu4_b"])   # /16, 256
    c5 = _xla_proj_relu(_down2(c4), p["bu5_w"], p["bu5_b"])   # /32, 512

    # --- top-down pathway (Upsampling stand-in): p5 is 8 rows -> plain XLA,
    #     kept in f32 so the lateral residual add happens in f32 in-kernel. ---
    p5 = (jnp.einsum("nhwc,cd->nhwd", c5, p["p5_w"],
                     preferred_element_type=jnp.float32) + p["p5_b"])
    n, h5, w5, cm = p5.shape
    p5_flat = p5.reshape(n * h5 * w5, cm)

    # --- FPN head: fused lateral + upsampled-residual + valid 3x3 per level ---
    f4 = fpn_level(c4, p["il4_w"], p["il4_b"], p5_flat, (h5, w5),
                   p["fl4_w"], p["fl4_b"])
    f3 = fpn_level(c3, p["il3_w"], p["il3_b"], p5_flat, (h5, w5),
                   p["fl3_w"], p["fl3_b"])
    f2 = fpn_level(c2, p["il2_w"], p["il2_b"], p5_flat, (h5, w5),
                   p["fl2_w"], p["fl2_b"])
    f5 = p5

    outs = [f2, f3, f4, f5]          # NHWC (lane-dense) by default
    if nchw_outputs:                 # PyTorch layout, if required downstream
        outs = [jnp.transpose(t, (0, 3, 1, 2)) for t in outs]
    return outs


# ----------------------------------------------------------------------------
if __name__ == "__main__":
    key = jax.random.PRNGKey(0)
    k_param, k_x = jax.random.split(key)

    params = init_params(k_param)
    # small input consistent with the module (in_channels=3); spatial 64 so the
    # /16 level is still >= 3x3 for the valid 3x3 final convs.
    x = jax.random.normal(k_x, (2, 3, 64, 64), jnp.float32)

    outs = jax.jit(functools.partial(fpn_forward, params))(x)
    outs = jax.block_until_ready(outs)

    expected = [(2, 14, 14, 256), (2, 6, 6, 256),
                (2, 2, 2, 256), (2, 2, 2, 256)]
    assert [tuple(o.shape) for o in outs] == expected, \
        [tuple(o.shape) for o in outs]
    assert all(bool(jnp.all(jnp.isfinite(o.astype(jnp.float32)))) for o in outs)

    print("KERNEL_OK")
</pallas_src>

<mosaic_0001>
module attributes {stable_mosaic.version = 11 : i64} {
  func.func @_fpn_level_kernel(%arg0: i32, %arg1: memref<32x256xbf16, #tpu.memory_space<vmem>>, %arg2: memref<256x256xbf16, #tpu.memory_space<vmem>>, %arg3: memref<1x256xf32, #tpu.memory_space<vmem>>, %arg4: memref<32x128xf32, #tpu.memory_space<vmem>>, %arg5: memref<128x256xf32, #tpu.memory_space<vmem>>, %arg6: memref<3x768x256xbf16, #tpu.memory_space<vmem>>, %arg7: memref<1x256xf32, #tpu.memory_space<vmem>>, %arg8: memref<8x256xf32, #tpu.memory_space<vmem>>) attributes {dimension_semantics = [#tpu.dimension_semantics<arbitrary>], iteration_bounds = array<i64: 1>, scalar_prefetch = 0 : i64, scratch_operands = 0 : i64, tpu.core_type = #tpu.core_type<tc>, window_params = [{pipeline_mode = #tpu.pipeline_mode<synchronous>, transform_indices = @transform_0, window_bounds = array<i64: 32, 256>}, {pipeline_mode = #tpu.pipeline_mode<synchronous>, transform_indices = @transform_1, window_bounds = array<i64: 256, 256>}, {pipeline_mode = #tpu.pipeline_mode<synchronous>, transform_indices = @transform_2, window_bounds = array<i64: 1, 256>}, {pipeline_mode = #tpu.pipeline_mode<synchronous>, transform_indices = @transform_3, window_bounds = array<i64: 32, 128>}, {pipeline_mode = #tpu.pipeline_mode<synchronous>, transform_indices = @transform_4, window_bounds = array<i64: 128, 256>}, {pipeline_mode = #tpu.pipeline_mode<synchronous>, transform_indices = @transform_5, window_bounds = array<i64: 3, 768, 256>}, {pipeline_mode = #tpu.pipeline_mode<synchronous>, transform_indices = @transform_6, window_bounds = array<i64: 1, 256>}, {pipeline_mode = #tpu.pipeline_mode<synchronous>, transform_indices = @transform_7, window_bounds = array<i64: 8, 256>}]} {
    %c0 = arith.constant 0 : index
    %c0_0 = arith.constant 0 : index
    %0 = vector.load %arg1[%c0, %c0_0] : memref<32x256xbf16, #tpu.memory_space<vmem>>, vector<32x256xbf16>
    %c0_1 = arith.constant 0 : index
    %c0_2 = arith.constant 0 : index
    %1 = vector.load %arg2[%c0_1, %c0_2] : memref<256x256xbf16, #tpu.memory_space<vmem>>, vector<256x256xbf16>
    %cst = arith.constant dense<0.000000e+00> : vector<32x256xf32>
    %2 = tpu.matmul %0, %1, %cst {dimension_numbers = #tpu.dot_dimension_numbers<[1], [0], [0], [1], [0, 0, 1, 1], [], []>} : vector<32x256xbf16>, vector<256x256xbf16>, vector<32x256xf32> -> vector<32x256xf32>
    %c0_3 = arith.constant 0 : index
    %c0_4 = arith.constant 0 : index
    %3 = vector.load %arg3[%c0_3, %c0_4] : memref<1x256xf32, #tpu.memory_space<vmem>>, vector<1x256xf32>
    %4 = vector.broadcast %3 : vector<1x256xf32> to vector<32x256xf32>
    %5 = arith.addf %2, %4 : vector<32x256xf32>
    %c0_5 = arith.constant 0 : index
    %c0_6 = arith.constant 0 : index
    %6 = vector.load %arg4[%c0_5, %c0_6] : memref<32x128xf32, #tpu.memory_space<vmem>>, vector<32x128xf32>
    %c0_7 = arith.constant 0 : index
    %c0_8 = arith.constant 0 : index
    %7 = vector.load %arg5[%c0_7, %c0_8] : memref<128x256xf32, #tpu.memory_space<vmem>>, vector<128x256xf32>
    %cst_9 = arith.constant dense<0.000000e+00> : vector<32x256xf32>
    %8 = tpu.matmul %6, %7, %cst_9 {dimension_numbers = #tpu.dot_dimension_numbers<[1], [0], [0], [1], [0, 0, 1, 1], [], []>} : vector<32x128xf32>, vector<128x256xf32>, vector<32x256xf32> -> vector<32x256xf32>
    %9 = arith.addf %5, %8 : vector<32x256xf32>
    %cst_10 = arith.constant 0.000000e+00 : f32
    %10 = vector.broadcast %cst_10 : f32 to vector<22x256xf32>
    %11 = vector.extract_strided_slice %9 {offsets = [0, 0], sizes = [22, 256], strides = [1, 1]} : vector<32x256xf32> to vector<22x256xf32>
    %12 = vector.extract_strided_slice %9 {offsets = [1, 0], sizes = [22, 256], strides = [1, 1]} : vector<32x256xf32> to vector<22x256xf32>
    %13 = vector.extract_strided_slice %9 {offsets = [2, 0], sizes = [22, 256], strides = [1, 1]} : vector<32x256xf32> to vector<22x256xf32>
    %14 = tpu.concatenate %11, %12, %13 in 1 : vector<22x256xf32>, vector<22x256xf32>, vector<22x256xf32> -> vector<22x768xf32>
    %15 = arith.truncf %14 : vector<22x768xf32> to vector<22x768xbf16>
    %c0_11 = arith.constant 0 : index
    %c0_12 = arith.constant 0 : index
    %c0_13 = arith.constant 0 : index
    %16 = vector.load %arg6[%c0_11, %c0_12, %c0_13] : memref<3x768x256xbf16, #tpu.memory_space<vmem>>, vector<1x768x256xbf16>
    %17 = vector.shape_cast %16 : vector<1x768x256xbf16> to vector<768x256xbf16>
    %cst_14 = arith.constant dense<0.000000e+00> : vector<22x256xf32>
    %18 = tpu.matmul %15, %17, %cst_14 {dimension_numbers = #tpu.dot_dimension_numbers<[1], [0], [0], [1], [0, 0, 1, 1], [], []>} : vector<22x768xbf16>, vector<768x256xbf16>, vector<22x256xf32> -> vector<22x256xf32>
    %19 = arith.addf %10, %18 : vector<22x256xf32>
    %20 = vector.extract_strided_slice %9 {offsets = [4, 0], sizes = [22, 256], strides = [1, 1]} : vector<32x256xf32> to vector<22x256xf32>
    %21 = vector.extract_strided_slice %9 {offsets = [5, 0], sizes = [22, 256], strides = [1, 1]} : vector<32x256xf32> to vector<22x256xf32>
    %22 = vector.extract_strided_slice %9 {offsets = [6, 0], sizes = [22, 256], strides = [1, 1]} : vector<32x256xf32> to vector<22x256xf32>
    %23 = tpu.concatenate %20, %21, %22 in 1 : vector<22x256xf32>, vector<22x256xf32>, vector<22x256xf32> -> vector<22x768xf32>
    %24 = arith.truncf %23 : vector<22x768xf32> to vector<22x768xbf16>
    %c1 = arith.constant 1 : index
    %c0_15 = arith.constant 0 : index
    %c0_16 = arith.constant 0 : index
    %25 = vector.load %arg6[%c1, %c0_15, %c0_16] : memref<3x768x256xbf16, #tpu.memory_space<vmem>>, vector<1x768x256xbf16>
    %26 = vector.shape_cast %25 : vector<1x768x256xbf16> to vector<768x256xbf16>
    %cst_17 = arith.constant dense<0.000000e+00> : vector<22x256xf32>
    %27 = tpu.matmul %24, %26, %cst_17 {dimension_numbers = #tpu.dot_dimension_numbers<[1], [0], [0], [1], [0, 0, 1, 1], [], []>} : vector<22x768xbf16>, vector<768x256xbf16>, vector<22x256xf32> -> vector<22x256xf32>
    %28 = arith.addf %19, %27 : vector<22x256xf32>
    %29 = vector.extract_strided_slice %9 {offsets = [8, 0], sizes = [22, 256], strides = [1, 1]} : vector<32x256xf32> to vector<22x256xf32>
    %30 = vector.extract_strided_slice %9 {offsets = [9, 0], sizes = [22, 256], strides = [1, 1]} : vector<32x256xf32> to vector<22x256xf32>
    %31 = vector.extract_strided_slice %9 {offsets = [10, 0], sizes = [22, 256], strides = [1, 1]} : vector<32x256xf32> to vector<22x256xf32>
    %32 = tpu.concatenate %29, %30, %31 in 1 : vector<22x256xf32>, vector<22x256xf32>, vector<22x256xf32> -> vector<22x768xf32>
    %33 = arith.truncf %32 : vector<22x768xf32> to vector<22x768xbf16>
    %c2 = arith.constant 2 : index
    %c0_18 = arith.constant 0 : index
    %c0_19 = arith.constant 0 : index
    %34 = vector.load %arg6[%c2, %c0_18, %c0_19] : memref<3x768x256xbf16, #tpu.memory_space<vmem>>, vector<1x768x256xbf16>
    %35 = vector.shape_cast %34 : vector<1x768x256xbf16> to vector<768x256xbf16>
    %cst_20 = arith.constant dense<0.000000e+00> : vector<22x256xf32>
    %36 = tpu.matmul %33, %35, %cst_20 {dimension_numbers = #tpu.dot_dimension_numbers<[1], [0], [0], [1], [0, 0, 1, 1], [], []>} : vector<22x768xbf16>, vector<768x256xbf16>, vector<22x256xf32> -> vector<22x256xf32>
    %37 = arith.addf %28, %36 : vector<22x256xf32>
    %c0_21 = arith.constant 0 : index
    %c0_22 = arith.constant 0 : index
    %38 = vector.load %arg7[%c0_21, %c0_22] : memref<1x256xf32, #tpu.memory_space<vmem>>, vector<1x256xf32>
    %39 = vector.broadcast %38 : vector<1x256xf32> to vector<22x256xf32>
    %40 = arith.addf %37, %39 : vector<22x256xf32>
    %41 = vector.extract_strided_slice %40 {offsets = [0, 0], sizes = [2, 256], strides = [1, 1]} : vector<22x256xf32> to vector<2x256xf32>
    %c0_23 = arith.constant 0 : index
    %c0_24 = arith.constant 0 : index
    %42 = vector.load %arg8[%c0_23, %c0_24] : memref<8x256xf32, #tpu.memory_space<vmem>>, vector<2x256xf32>
    tpu.vector_store %arg8[%c0_23, %c0_24], %41 {strides = array<i32>} : memref<8x256xf32, #tpu.memory_space<vmem>>, vector<2x256xf32>,
    %43 = vector.extract_strided_slice %40 {offsets = [4, 0], sizes = [2, 256], strides = [1, 1]} : vector<22x256xf32> to vector<2x256xf32>
    %c2_25 = arith.constant 2 : index
    %c0_26 = arith.constant 0 : index
    %44 = vector.load %arg8[%c2_25, %c0_26] : memref<8x256xf32, #tpu.memory_space<vmem>>, vector<2x256xf32>
    tpu.vector_store %arg8[%c2_25, %c0_26], %43 {strides = array<i32>} : memref<8x256xf32, #tpu.memory_space<vmem>>, vector<2x256xf32>,
    %45 = vector.extract_strided_slice %40 {offsets = [16, 0], sizes = [2, 256], strides = [1, 1]} : vector<22x256xf32> to vector<2x256xf32>
    %c4 = arith.constant 4 : index
    %c0_27 = arith.constant 0 : index
    %46 = vector.load %arg8[%c4, %c0_27] : memref<8x256xf32, #tpu.memory_space<vmem>>, vector<2x256xf32>
    tpu.vector_store %arg8[%c4, %c0_27], %45 {strides = array<i32>} : memref<8x256xf32, #tpu.memory_space<vmem>>, vector<2x256xf32>,
    %47 = vector.extract_strided_slice %40 {offsets = [20, 0], sizes = [2, 256], strides = [1, 1]} : vector<22x256xf32> to vector<2x256xf32>
    %c6 = arith.constant 6 : index
    %c0_28 = arith.constant 0 : index
    %48 = vector.load %arg8[%c6, %c0_28] : memref<8x256xf32, #tpu.memory_space<vmem>>, vector<2x256xf32>
    tpu.vector_store %arg8[%c6, %c0_28], %47 {strides = array<i32>} : memref<8x256xf32, #tpu.memory_space<vmem>>, vector<2x256xf32>,
    return
  }
  func.func @transform_0(%arg0: i32) -> (i32, i32) {
    %c0_i32 = arith.constant 0 : i32
    %c0_i32_0 = arith.constant 0 : i32
    %c0_i32_1 = arith.constant 0 : i32
    return %c0_i32, %c0_i32_0 : i32, i32
  }
  func.func @transform_1(%arg0: i32) -> (i32, i32) {
    %c0_i32 = arith.constant 0 : i32
    %c0_i32_0 = arith.constant 0 : i32
    %c0_i32_1 = arith.constant 0 : i32
    return %c0_i32, %c0_i32_0 : i32, i32
  }
  func.func @transform_2(%arg0: i32) -> (i32, i32) {
    %c0_i32 = arith.constant 0 : i32
    %c0_i32_0 = arith.constant 0 : i32
    %c0_i32_1 = arith.constant 0 : i32
    return %c0_i32, %c0_i32_0 : i32, i32
  }
  func.func @transform_3(%arg0: i32) -> (i32, i32) {
    %c0_i32 = arith.constant 0 : i32
    %c0_i32_0 = arith.constant 0 : i32
    %c0_i32_1 = arith.constant 0 : i32
    return %c0_i32, %c0_i32_0 : i32, i32
  }
  func.func @transform_4(%arg0: i32) -> (i32, i32) {
    %c0_i32 = arith.constant 0 : i32
    %c0_i32_0 = arith.constant 0 : i32
    %c0_i32_1 = arith.constant 0 : i32
    return %c0_i32, %c0_i32_0 : i32, i32
  }
  func.func @transform_5(%arg0: i32) -> (i32, i32, i32) {
    %c0_i32 = arith.constant 0 : i32
    %c0_i32_0 = arith.constant 0 : i32
    %c0_i32_1 = arith.constant 0 : i32
    %c0_i32_2 = arith.constant 0 : i32
    return %c0_i32, %c0_i32_0, %c0_i32_1 : i32, i32, i32
  }
  func.func @transform_6(%arg0: i32) -> (i32, i32) {
    %c0_i32 = arith.constant 0 : i32
    %c0_i32_0 = arith.constant 0 : i32
    %c0_i32_1 = arith.constant 0 : i32
    return %c0_i32, %c0_i32_0 : i32, i32
  }
  func.func @transform_7(%arg0: i32) -> (i32, i32) {
    %c0_i32 = arith.constant 0 : i32
    %c0_i32_0 = arith.constant 0 : i32
    %c0_i32_1 = arith.constant 0 : i32
    return %c0_i32, %c0_i32_0 : i32, i32
  }
}

module attributes {stable_mosaic.version = 11 : i64} {
  func.func @_fpn_level_kernel(%arg0: i32, %arg1: memref<128x128xbf16, #tpu.memory_space<vmem>>, %arg2: memref<128x256xbf16, #tpu.memory_space<vmem>>, %arg3: memref<1x256xf32, #tpu.memory_space<vmem>>, %arg4: memref<128x128xf32, #tpu.memory_space<vmem>>, %arg5: memref<128x256xf32, #tpu.memory_space<vmem>>, %arg6: memref<3x768x256xbf16, #tpu.memory_space<vmem>>, %arg7: memref<1x256xf32, #tpu.memory_space<vmem>>, %arg8: memref<72x256xf32, #tpu.memory_space<vmem>>) attributes {dimension_semantics = [#tpu.dimension_semantics<arbitrary>], iteration_bounds = array<i64: 1>, scalar_prefetch = 0 : i64, scratch_operands = 0 : i64, tpu.core_type = #tpu.core_type<tc>, window_params = [{pipeline_mode = #tpu.pipeline_mode<synchronous>, transform_indices = @transform_0, window_bounds = array<i64: 128, 128>}, {pipeline_mode = #tpu.pipeline_mode<synchronous>, transform_indices = @transform_1, window_bounds = array<i64: 128, 256>}, {pipeline_mode = #tpu.pipeline_mode<synchronous>, transform_indices = @transform_2, window_bounds = array<i64: 1, 256>}, {pipeline_mode = #tpu.pipeline_mode<synchronous>, transform_indices = @transform_3, window_bounds = array<i64: 128, 128>}, {pipeline_mode = #tpu.pipeline_mode<synchronous>, transform_indices = @transform_4, window_bounds = array<i64: 128, 256>}, {pipeline_mode = #tpu.pipeline_mode<synchronous>, transform_indices = @transform_5, window_bounds = array<i64: 3, 768, 256>}, {pipeline_mode = #tpu.pipeline_mode<synchronous>, transform_indices = @transform_6, window_bounds = array<i64: 1, 256>}, {pipeline_mode = #tpu.pipeline_mode<synchronous>, transform_indices = @transform_7, window_bounds = array<i64: 72, 256>}]} {
    %c0 = arith.constant 0 : index
    %c0_0 = arith.constant 0 : index
    %0 = vector.load %arg1[%c0, %c0_0] : memref<128x128xbf16, #tpu.memory_space<vmem>>, vector<128x128xbf16>
    %c0_1 = arith.constant 0 : index
    %c0_2 = arith.constant 0 : index
    %1 = vector.load %arg2[%c0_1, %c0_2] : memref<128x256xbf16, #tpu.memory_space<vmem>>, vector<128x256xbf16>
    %cst = arith.constant dense<0.000000e+00> : vector<128x256xf32>
    %2 = tpu.matmul %0, %1, %cst {dimension_numbers = #tpu.dot_dimension_numbers<[1], [0], [0], [1], [0, 0, 1, 1], [], []>} : vector<128x128xbf16>, vector<128x256xbf16>, vector<128x256xf32> -> vector<128x256xf32>
    %c0_3 = arith.constant 0 : index
    %c0_4 = arith.constant 0 : index
    %3 = vector.load %arg3[%c0_3, %c0_4] : memref<1x256xf32, #tpu.memory_space<vmem>>, vector<1x256xf32>
    %4 = vector.broadcast %3 : vector<1x256xf32> to vector<128x256xf32>
    %5 = arith.addf %2, %4 : vector<128x256xf32>
    %c0_5 = arith.constant 0 : index
    %c0_6 = arith.constant 0 : index
    %6 = vector.load %arg4[%c0_5, %c0_6] : memref<128x128xf32, #tpu.memory_space<vmem>>, vector<128x128xf32>
    %c0_7 = arith.constant 0 : index
    %c0_8 = arith.constant 0 : index
    %7 = vector.load %arg5[%c0_7, %c0_8] : memref<128x256xf32, #tpu.memory_space<vmem>>, vector<128x256xf32>
    %cst_9 = arith.constant dense<0.000000e+00> : vector<128x256xf32>
    %8 = tpu.matmul %6, %7, %cst_9 {dimension_numbers = #tpu.dot_dimension_numbers<[1], [0], [0], [1], [0, 0, 1, 1], [], []>} : vector<128x128xf32>, vector<128x256xf32>, vector<128x256xf32> -> vector<128x256xf32>
    %9 = arith.addf %5, %8 : vector<128x256xf32>
    %cst_10 = arith.constant 0.000000e+00 : f32
    %10 = vector.broadcast %cst_10 : f32 to vector<110x256xf32>
    %11 = vector.extract_strided_slice %9 {offsets = [0, 0], sizes = [110, 256], strides = [1, 1]} : vector<128x256xf32> to vector<110x256xf32>
    %12 = vector.extract_strided_slice %9 {offsets = [1, 0], sizes = [110, 256], strides = [1, 1]} : vector<128x256xf32> to vector<110x256xf32>
    %13 = vector.extract_strided_slice %9 {offsets = [2, 0], sizes = [110, 256], strides = [1, 1]} : vector<128x256xf32> to vector<110x256xf32>
    %14 = tpu.concatenate %11, %12, %13 in 1 : vector<110x256xf32>, vector<110x256xf32>, vector<110x256xf32> -> vector<110x768xf32>
    %15 = arith.truncf %14 : vector<110x768xf32> to vector<110x768xbf16>
    %c0_11 = arith.constant 0 : index
    %c0_12 = arith.constant 0 : index
    %c0_13 = arith.constant 0 : index
    %16 = vector.load %arg6[%c0_11, %c0_12, %c0_13] : memref<3x768x256xbf16, #tpu.memory_space<vmem>>, vector<1x768x256xbf16>
    %17 = vector.shape_cast %16 : vector<1x768x256xbf16> to vector<768x256xbf16>
    %cst_14 = arith.constant dense<0.000000e+00> : vector<110x256xf32>
    %18 = tpu.matmul %15, %17, %cst_14 {dimension_numbers = #tpu.dot_dimension_numbers<[1], [0], [0], [1], [0, 0, 1, 1], [], []>} : vector<110x768xbf16>, vector<768x256xbf16>, vector<110x256xf32> -> vector<110x256xf32>
    %19 = arith.addf %10, %18 : vector<110x256xf32>
    %20 = vector.extract_strided_slice %9 {offsets = [8, 0], sizes = [110, 256], strides = [1, 1]} : vector<128x256xf32> to vector<110x256xf32>
    %21 = vector.extract_strided_slice %9 {offsets = [9, 0], sizes = [110, 256], strides = [1, 1]} : vector<128x256xf32> to vector<110x256xf32>
    %22 = vector.extract_strided_slice %9 {offsets = [10, 0], sizes = [110, 256], strides = [1, 1]} : vector<128x256xf32> to vector<110x256xf32>
    %23 = tpu.concatenate %20, %21, %22 in 1 : vector<110x256xf32>, vector<110x256xf32>, vector<110x256xf32> -> vector<110x768xf32>
    %24 = arith.truncf %23 : vector<110x768xf32> to vector<110x768xbf16>
    %c1 = arith.constant 1 : index
    %c0_15 = arith.constant 0 : index
    %c0_16 = arith.constant 0 : index
    %25 = vector.load %arg6[%c1, %c0_15, %c0_16] : memref<3x768x256xbf16, #tpu.memory_space<vmem>>, vector<1x768x256xbf16>
    %26 = vector.shape_cast %25 : vector<1x768x256xbf16> to vector<768x256xbf16>
    %cst_17 = arith.constant dense<0.000000e+00> : vector<110x256xf32>
    %27 = tpu.matmul %24, %26, %cst_17 {dimension_numbers = #tpu.dot_dimension_numbers<[1], [0], [0], [1], [0, 0, 1, 1], [], []>} : vector<110x768xbf16>, vector<768x256xbf16>, vector<110x256xf32> -> vector<110x256xf32>
    %28 = arith.addf %19, %27 : vector<110x256xf32>
    %29 = vector.extract_strided_slice %9 {offsets = [16, 0], sizes = [110, 256], strides = [1, 1]} : vector<128x256xf32> to vector<110x256xf32>
    %30 = vector.extract_strided_slice %9 {offsets = [17, 0], sizes = [110, 256], strides = [1, 1]} : vector<128x256xf32> to vector<110x256xf32>
    %31 = vector.extract_strided_slice %9 {offsets = [18, 0], sizes = [110, 256], strides = [1, 1]} : vector<128x256xf32> to vector<110x256xf32>
    %32 = tpu.concatenate %29, %30, %31 in 1 : vector<110x256xf32>, vector<110x256xf32>, vector<110x256xf32> -> vector<110x768xf32>
    %33 = arith.truncf %32 : vector<110x768xf32> to vector<110x768xbf16>
    %c2 = arith.constant 2 : index
    %c0_18 = arith.constant 0 : index
    %c0_19 = arith.constant 0 : index
    %34 = vector.load %arg6[%c2, %c0_18, %c0_19] : memref<3x768x256xbf16, #tpu.memory_space<vmem>>, vector<1x768x256xbf16>
    %35 = vector.shape_cast %34 : vector<1x768x256xbf16> to vector<768x256xbf16>
    %cst_20 = arith.constant dense<0.000000e+00> : vector<110x256xf32>
    %36 = tpu.matmul %33, %35, %cst_20 {dimension_numbers = #tpu.dot_dimension_numbers<[1], [0], [0], [1], [0, 0, 1, 1], [], []>} : vector<110x768xbf16>, vector<768x256xbf16>, vector<110x256xf32> -> vector<110x256xf32>
    %37 = arith.addf %28, %36 : vector<110x256xf32>
    %c0_21 = arith.constant 0 : index
    %c0_22 = arith.constant 0 : index
    %38 = vector.load %arg7[%c0_21, %c0_22] : memref<1x256xf32, #tpu.memory_space<vmem>>, vector<1x256xf32>
    %39 = vector.broadcast %38 : vector<1x256xf32> to vector<110x256xf32>
    %40 = arith.addf %37, %39 : vector<110x256xf32>
    %41 = vector.extract_strided_slice %40 {offsets = [0, 0], sizes = [6, 256], strides = [1, 1]} : vector<110x256xf32> to vector<6x256xf32>
    %c0_23 = arith.constant 0 : index
    %c0_24 = arith.constant 0 : index
    %42 = vector.load %arg8[%c0_23, %c0_24] : memref<72x256xf32, #tpu.memory_space<vmem>>, vector<6x256xf32>
    tpu.vector_store %arg8[%c0_23, %c0_24], %41 {strides = array<i32>} : memref<72x256xf32, #tpu.memory_space<vmem>>, vector<6x256xf32>,
    %43 = vector.extract_strided_slice %40 {offsets = [8, 0], sizes = [6, 256], strides = [1, 1]} : vector<110x256xf32> to vector<6x256xf32>
    %c6 = arith.constant 6 : index
    %c0_25 = arith.constant 0 : index
    %44 = vector.load %arg8[%c6, %c0_25] : memref<72x256xf32, #tpu.memory_space<vmem>>, vector<6x256xf32>
    tpu.vector_store %arg8[%c6, %c0_25], %43 {strides = array<i32>} : memref<72x256xf32, #tpu.memory_space<vmem>>, vector<6x256xf32>,
    %45 = vector.extract_strided_slice %40 {offsets = [16, 0], sizes = [6, 256], strides = [1, 1]} : vector<110x256xf32> to vector<6x256xf32>
    %c12 = arith.constant 12 : index
    %c0_26 = arith.constant 0 : index
    %46 = vector.load %arg8[%c12, %c0_26] : memref<72x256xf32, #tpu.memory_space<vmem>>, vector<6x256xf32>
    tpu.vector_store %arg8[%c12, %c0_26], %45 {strides = array<i32>} : memref<72x256xf32, #tpu.memory_space<vmem>>, vector<6x256xf32>,
    %47 = vector.extract_strided_slice %40 {offsets = [24, 0], sizes = [6, 256], strides = [1, 1]} : vector<110x256xf32> to vector<6x256xf32>
    %c18 = arith.constant 18 : index
    %c0_27 = arith.constant 0 : index
    %48 = vector.load %arg8[%c18, %c0_27] : memref<72x256xf32, #tpu.memory_space<vmem>>, vector<6x256xf32>
    tpu.vector_store %arg8[%c18, %c0_27], %47 {strides = array<i32>} : memref<72x256xf32, #tpu.memory_space<vmem>>, vector<6x256xf32>,
    %49 = vector.extract_strided_slice %40 {offsets = [32, 0], sizes = [6, 256], strides = [1, 1]} : vector<110x256xf32> to vector<6x256xf32>
    %c24 = arith.constant 24 : index
    %c0_28 = arith.constant 0 : index
    %50 = vector.load %arg8[%c24, %c0_28] : memref<72x256xf32, #tpu.memory_space<vmem>>, vector<6x256xf32>
    tpu.vector_store %arg8[%c24, %c0_28], %49 {strides = array<i32>} : memref<72x256xf32, #tpu.memory_space<vmem>>, vector<6x256xf32>,
    %51 = vector.extract_strided_slice %40 {offsets = [40, 0], sizes = [6, 256], strides = [1, 1]} : vector<110x256xf32> to vector<6x256xf32>
    %c30 = arith.constant 30 : index
    %c0_29 = arith.constant 0 : index
    %52 = vector.load %arg8[%c30, %c0_29] : memref<72x256xf32, #tpu.memory_space<vmem>>, vector<6x256xf32>
    tpu.vector_store %arg8[%c30, %c0_29], %51 {strides = array<i32>} : memref<72x256xf32, #tpu.memory_space<vmem>>, vector<6x256xf32>,
    %53 = vector.extract_strided_slice %40 {offsets = [64, 0], sizes = [6, 256], strides = [1, 1]} : vector<110x256xf32> to vector<6x256xf32>
    %c36 = arith.constant 36 : index
    %c0_30 = arith.constant 0 : index
    %54 = vector.load %arg8[%c36, %c0_30] : memref<72x256xf32, #tpu.memory_space<vmem>>, vector<6x256xf32>
    tpu.vector_store %arg8[%c36, %c0_30], %53 {strides = array<i32>} : memref<72x256xf32, #tpu.memory_space<vmem>>, vector<6x256xf32>,
    %55 = vector.extract_strided_slice %40 {offsets = [72, 0], sizes = [6, 256], strides = [1, 1]} : vector<110x256xf32> to vector<6x256xf32>
    %c42 = arith.constant 42 : index
    %c0_31 = arith.constant 0 : index
    %56 = vector.load %arg8[%c42, %c0_31] : memref<72x256xf32, #tpu.memory_space<vmem>>, vector<6x256xf32>
    tpu.vector_store %arg8[%c42, %c0_31], %55 {strides = array<i32>} : memref<72x256xf32, #tpu.memory_space<vmem>>, vector<6x256xf32>,
    %57 = vector.extract_strided_slice %40 {offsets = [80, 0], sizes = [6, 256], strides = [1, 1]} : vector<110x256xf32> to vector<6x256xf32>
    %c48 = arith.constant 48 : index
    %c0_32 = arith.constant 0 : index
    %58 = vector.load %arg8[%c48, %c0_32] : memref<72x256xf32, #tpu.memory_space<vmem>>, vector<6x256xf32>
    tpu.vector_store %arg8[%c48, %c0_32], %57 {strides = array<i32>} : memref<72x256xf32, #tpu.memory_space<vmem>>, vector<6x256xf32>,
    %59 = vector.extract_strided_slice %40 {offsets = [88, 0], sizes = [6, 256], strides = [1, 1]} : vector<110x256xf32> to vector<6x256xf32>
    %c54 = arith.constant 54 : index
    %c0_33 = arith.constant 0 : index
    %60 = vector.load %arg8[%c54, %c0_33] : memref<72x256xf32, #tpu.memory_space<vmem>>, vector<6x256xf32>
    tpu.vector_store %arg8[%c54, %c0_33], %59 {strides = array<i32>} : memref<72x256xf32, #tpu.memory_space<vmem>>, vector<6x256xf32>,
    %61 = vector.extract_strided_slice %40 {offsets = [96, 0], sizes = [6, 256], strides = [1, 1]} : vector<110x256xf32> to vector<6x256xf32>
    %c60 = arith.constant 60 : index
    %c0_34 = arith.constant 0 : index
    %62 = vector.load %arg8[%c60, %c0_34] : memref<72x256xf32, #tpu.memory_space<vmem>>, vector<6x256xf32>
    tpu.vector_store %arg8[%c60, %c0_34], %61 {strides = array<i32>} : memref<72x256xf32, #tpu.memory_space<vmem>>, vector<6x256xf32>,
    %63 = vector.extract_strided_slice %40 {offsets = [104, 0], sizes = [6, 256], strides = [1, 1]} : vector<110x256xf32> to vector<6x256xf32>
    %c66 = arith.constant 66 : index
    %c0_35 = arith.constant 0 : index
    %64 = vector.load %arg8[%c66, %c0_35] : memref<72x256xf32, #tpu.memory_space<vmem>>, vector<6x256xf32>
    tpu.vector_store %arg8[%c66, %c0_35], %63 {strides = array<i32>} : memref<72x256xf32, #tpu.memory_space<vmem>>, vector<6x256xf32>,
    return
  }
  func.func @transform_0(%arg0: i32) -> (i32, i32) {
    %c0_i32 = arith.constant 0 : i32
    %c0_i32_0 = arith.constant 0 : i32
    %c0_i32_1 = arith.constant 0 : i32
    return %c0_i32, %c0_i32_0 : i32, i32
  }
  func.func @transform_1(%arg0: i32) -> (i32, i32) {
    %c0_i32 = arith.constant 0 : i32
    %c0_i32_0 = arith.constant 0 : i32
    %c0_i32_1 = arith.constant 0 : i32
    return %c0_i32, %c0_i32_0 : i32, i32
  }
  func.func @transform_2(%arg0: i32) -> (i32, i32) {
    %c0_i32 = arith.constant 0 : i32
    %c0_i32_0 = arith.constant 0 : i32
    %c0_i32_1 = arith.constant 0 : i32
    return %c0_i32, %c0_i32_0 : i32, i32
  }
  func.func @transform_3(%arg0: i32) -> (i32, i32) {
    %c0_i32 = arith.constant 0 : i32
    %c0_i32_0 = arith.constant 0 : i32
    %c0_i32_1 = arith.constant 0 : i32
    return %c0_i32, %c0_i32_0 : i32, i32
  }
  func.func @transform_4(%arg0: i32) -> (i32, i32) {
    %c0_i32 = arith.constant 0 : i32
    %c0_i32_0 = arith.constant 0 : i32
    %c0_i32_1 = arith.constant 0 : i32
    return %c0_i32, %c0_i32_0 : i32, i32
  }
  func.func @transform_5(%arg0: i32) -> (i32, i32, i32) {
    %c0_i32 = arith.constant 0 : i32
    %c0_i32_0 = arith.constant 0 : i32
    %c0_i32_1 = arith.constant 0 : i32
    %c0_i32_2 = arith.constant 0 : i32
    return %c0_i32, %c0_i32_0, %c0_i32_1 : i32, i32, i32
  }
  func.func @transform_6(%arg0: i32) -> (i32, i32) {
    %c0_i32 = arith.constant 0 : i32
    %c0_i32_0 = arith.constant 0 : i32
    %c0_i32_1 = arith.constant 0 : i32
    return %c0_i32, %c0_i32_0 : i32, i32
  }
  func.func @transform_7(%arg0: i32) -> (i32, i32) {
    %c0_i32 = arith.constant 0 : i32
    %c0_i32_0 = arith.constant 0 : i32
    %c0_i32_1 = arith.constant 0 : i32
    return %c0_i32, %c0_i32_0 : i32, i32
  }
}

module attributes {stable_mosaic.version = 11 : i64} {
  func.func @_fpn_level_kernel(%arg0: i32, %arg1: memref<512x64xbf16, #tpu.memory_space<vmem>>, %arg2: memref<64x256xbf16, #tpu.memory_space<vmem>>, %arg3: memref<1x256xf32, #tpu.memory_space<vmem>>, %arg4: memref<512x128xf32, #tpu.memory_space<vmem>>, %arg5: memref<128x256xf32, #tpu.memory_space<vmem>>, %arg6: memref<3x768x256xbf16, #tpu.memory_space<vmem>>, %arg7: memref<1x256xf32, #tpu.memory_space<vmem>>, %arg8: memref<392x256xf32, #tpu.memory_space<vmem>>) attributes {dimension_semantics = [#tpu.dimension_semantics<arbitrary>], iteration_bounds = array<i64: 1>, scalar_prefetch = 0 : i64, scratch_operands = 0 : i64, tpu.core_type = #tpu.core_type<tc>, window_params = [{pipeline_mode = #tpu.pipeline_mode<synchronous>, transform_indices = @transform_0, window_bounds = array<i64: 512, 64>}, {pipeline_mode = #tpu.pipeline_mode<synchronous>, transform_indices = @transform_1, window_bounds = array<i64: 64, 256>}, {pipeline_mode = #tpu.pipeline_mode<synchronous>, transform_indices = @transform_2, window_bounds = array<i64: 1, 256>}, {pipeline_mode = #tpu.pipeline_mode<synchronous>, transform_indices = @transform_3, window_bounds = array<i64: 512, 128>}, {pipeline_mode = #tpu.pipeline_mode<synchronous>, transform_indices = @transform_4, window_bounds = array<i64: 128, 256>}, {pipeline_mode = #tpu.pipeline_mode<synchronous>, transform_indices = @transform_5, window_bounds = array<i64: 3, 768, 256>}, {pipeline_mode = #tpu.pipeline_mode<synchronous>, transform_indices = @transform_6, window_bounds = array<i64: 1, 256>}, {pipeline_mode = #tpu.pipeline_mode<synchronous>, transform_indices = @transform_7, window_bounds = array<i64: 392, 256>}]} {
    %c0 = arith.constant 0 : index
    %c0_0 = arith.constant 0 : index
    %0 = vector.load %arg1[%c0, %c0_0] : memref<512x64xbf16, #tpu.memory_space<vmem>>, vector<512x64xbf16>
    %c0_1 = arith.constant 0 : index
    %c0_2 = arith.constant 0 : index
    %1 = vector.load %arg2[%c0_1, %c0_2] : memref<64x256xbf16, #tpu.memory_space<vmem>>, vector<64x256xbf16>
    %cst = arith.constant dense<0.000000e+00> : vector<512x256xf32>
    %2 = tpu.matmul %0, %1, %cst {dimension_numbers = #tpu.dot_dimension_numbers<[1], [0], [0], [1], [0, 0, 1, 1], [], []>} : vector<512x64xbf16>, vector<64x256xbf16>, vector<512x256xf32> -> vector<512x256xf32>
    %c0_3 = arith.constant 0 : index
    %c0_4 = arith.constant 0 : index
    %3 = vector.load %arg3[%c0_3, %c0_4] : memref<1x256xf32, #tpu.memory_space<vmem>>, vector<1x256xf32>
    %4 = vector.broadcast %3 : vector<1x256xf32> to vector<512x256xf32>
    %5 = arith.addf %2, %4 : vector<512x256xf32>
    %c0_5 = arith.constant 0 : index
    %c0_6 = arith.constant 0 : index
    %6 = vector.load %arg4[%c0_5, %c0_6] : memref<512x128xf32, #tpu.memory_space<vmem>>, vector<512x128xf32>
    %c0_7 = arith.constant 0 : index
    %c0_8 = arith.constant 0 : index
    %7 = vector.load %arg5[%c0_7, %c0_8] : memref<128x256xf32, #tpu.memory_space<vmem>>, vector<128x256xf32>
    %cst_9 = arith.constant dense<0.000000e+00> : vector<512x256xf32>
    %8 = tpu.matmul %6, %7, %cst_9 {dimension_numbers = #tpu.dot_dimension_numbers<[1], [0], [0], [1], [0, 0, 1, 1], [], []>} : vector<512x128xf32>, vector<128x256xf32>, vector<512x256xf32> -> vector<512x256xf32>
    %9 = arith.addf %5, %8 : vector<512x256xf32>
    %cst_10 = arith.constant 0.000000e+00 : f32
    %10 = vector.broadcast %cst_10 : f32 to vector<478x256xf32>
    %11 = vector.extract_strided_slice %9 {offsets = [0, 0], sizes = [478, 256], strides = [1, 1]} : vector<512x256xf32> to vector<478x256xf32>
    %12 = vector.extract_strided_slice %9 {offsets = [1, 0], sizes = [478, 256], strides = [1, 1]} : vector<512x256xf32> to vector<478x256xf32>
    %13 = vector.extract_strided_slice %9 {offsets = [2, 0], sizes = [478, 256], strides = [1, 1]} : vector<512x256xf32> to vector<478x256xf32>
    %14 = tpu.concatenate %11, %12, %13 in 1 : vector<478x256xf32>, vector<478x256xf32>, vector<478x256xf32> -> vector<478x768xf32>
    %15 = arith.truncf %14 : vector<478x768xf32> to vector<478x768xbf16>
    %c0_11 = arith.constant 0 : index
    %c0_12 = arith.constant 0 : index
    %c0_13 = arith.constant 0 : index
    %16 = vector.load %arg6[%c0_11, %c0_12, %c0_13] : memref<3x768x256xbf16, #tpu.memory_space<vmem>>, vector<1x768x256xbf16>
    %17 = vector.shape_cast %16 : vector<1x768x256xbf16> to vector<768x256xbf16>
    %cst_14 = arith.constant dense<0.000000e+00> : vector<478x256xf32>
    %18 = tpu.matmul %15, %17, %cst_14 {dimension_numbers = #tpu.dot_dimension_numbers<[1], [0], [0], [1], [0, 0, 1, 1], [], []>} : vector<478x768xbf16>, vector<768x256xbf16>, vector<478x256xf32> -> vector<478x256xf32>
    %19 = arith.addf %10, %18 : vector<478x256xf32>
    %20 = vector.extract_strided_slice %9 {offsets = [16, 0], sizes = [478, 256], strides = [1, 1]} : vector<512x256xf32> to vector<478x256xf32>
    %21 = vector.extract_strided_slice %9 {offsets = [17, 0], sizes = [478, 256], strides = [1, 1]} : vector<512x256xf32> to vector<478x256xf32>
    %22 = vector.extract_strided_slice %9 {offsets = [18, 0], sizes = [478, 256], strides = [1, 1]} : vector<512x256xf32> to vector<478x256xf32>
    %23 = tpu.concatenate %20, %21, %22 in 1 : vector<478x256xf32>, vector<478x256xf32>, vector<478x256xf32> -> vector<478x768xf32>
    %24 = arith.truncf %23 : vector<478x768xf32> to vector<478x768xbf16>
    %c1 = arith.constant 1 : index
    %c0_15 = arith.constant 0 : index
    %c0_16 = arith.constant 0 : index
    %25 = vector.load %arg6[%c1, %c0_15, %c0_16] : memref<3x768x256xbf16, #tpu.memory_space<vmem>>, vector<1x768x256xbf16>
    %26 = vector.shape_cast %25 : vector<1x768x256xbf16> to vector<768x256xbf16>
    %cst_17 = arith.constant dense<0.000000e+00> : vector<478x256xf32>
    %27 = tpu.matmul %24, %26, %cst_17 {dimension_numbers = #tpu.dot_dimension_numbers<[1], [0], [0], [1], [0, 0, 1, 1], [], []>} : vector<478x768xbf16>, vector<768x256xbf16>, vector<478x256xf32> -> vector<478x256xf32>
    %28 = arith.addf %19, %27 : vector<478x256xf32>
    %29 = vector.extract_strided_slice %9 {offsets = [32, 0], sizes = [478, 256], strides = [1, 1]} : vector<512x256xf32> to vector<478x256xf32>
    %30 = vector.extract_strided_slice %9 {offsets = [33, 0], sizes = [478, 256], strides = [1, 1]} : vector<512x256xf32> to vector<478x256xf32>
    %31 = vector.extract_strided_slice %9 {offsets = [34, 0], sizes = [478, 256], strides = [1, 1]} : vector<512x256xf32> to vector<478x256xf32>
    %32 = tpu.concatenate %29, %30, %31 in 1 : vector<478x256xf32>, vector<478x256xf32>, vector<478x256xf32> -> vector<478x768xf32>
    %33 = arith.truncf %32 : vector<478x768xf32> to vector<478x768xbf16>
    %c2 = arith.constant 2 : index
    %c0_18 = arith.constant 0 : index
    %c0_19 = arith.constant 0 : index
    %34 = vector.load %arg6[%c2, %c0_18, %c0_19] : memref<3x768x256xbf16, #tpu.memory_space<vmem>>, vector<1x768x256xbf16>
    %35 = vector.shape_cast %34 : vector<1x768x256xbf16> to vector<768x256xbf16>
    %cst_20 = arith.constant dense<0.000000e+00> : vector<478x256xf32>
    %36 = tpu.matmul %33, %35, %cst_20 {dimension_numbers = #tpu.dot_dimension_numbers<[1], [0], [0], [1], [0, 0, 1, 1], [], []>} : vector<478x768xbf16>, vector<768x256xbf16>, vector<478x256xf32> -> vector<478x256xf32>
    %37 = arith.addf %28, %36 : vector<478x256xf32>
    %c0_21 = arith.constant 0 : index
    %c0_22 = arith.constant 0 : index
    %38 = vector.load %arg7[%c0_21, %c0_22] : memref<1x256xf32, #tpu.memory_space<vmem>>, vector<1x256xf32>
    %39 = vector.broadcast %38 : vector<1x256xf32> to vector<478x256xf32>
    %40 = arith.addf %37, %39 : vector<478x256xf32>
    %41 = vector.extract_strided_slice %40 {offsets = [0, 0], sizes = [14, 256], strides = [1, 1]} : vector<478x256xf32> to vector<14x256xf32>
    %c0_23 = arith.constant 0 : index
    %c0_24 = arith.constant 0 : index
    %42 = vector.load %arg8[%c0_23, %c0_24] : memref<392x256xf32, #tpu.memory_space<vmem>>, vector<14x256xf32>
    tpu.vector_store %arg8[%c0_23, %c0_24], %41 {strides = array<i32>} : memref<392x256xf32, #tpu.memory_space<vmem>>, vector<14x256xf32>,
    %43 = vector.extract_strided_slice %40 {offsets = [16, 0], sizes = [14, 256], strides = [1, 1]} : vector<478x256xf32> to vector<14x256xf32>
    %c14 = arith.constant 14 : index
    %c0_25 = arith.constant 0 : index
    %44 = vector.load %arg8[%c14, %c0_25] : memref<392x256xf32, #tpu.memory_space<vmem>>, vector<14x256xf32>
    tpu.vector_store %arg8[%c14, %c0_25], %43 {strides = array<i32>} : memref<392x256xf32, #tpu.memory_space<vmem>>, vector<14x256xf32>,
    %45 = vector.extract_strided_slice %40 {offsets = [32, 0], sizes = [14, 256], strides = [1, 1]} : vector<478x256xf32> to vector<14x256xf32>
    %c28 = arith.constant 28 : index
    %c0_26 = arith.constant 0 : index
    %46 = vector.load %arg8[%c28, %c0_26] : memref<392x256xf32, #tpu.memory_space<vmem>>, vector<14x256xf32>
    tpu.vector_store %arg8[%c28, %c0_26], %45 {strides = array<i32>} : memref<392x256xf32, #tpu.memory_space<vmem>>, vector<14x256xf32>,
    %47 = vector.extract_strided_slice %40 {offsets = [48, 0], sizes = [14, 256], strides = [1, 1]} : vector<478x256xf32> to vector<14x256xf32>
    %c42 = arith.constant 42 : index
    %c0_27 = arith.constant 0 : index
    %48 = vector.load %arg8[%c42, %c0_27] : memref<392x256xf32, #tpu.memory_space<vmem>>, vector<14x256xf32>
    tpu.vector_store %arg8[%c42, %c0_27], %47 {strides = array<i32>} : memref<392x256xf32, #tpu.memory_space<vmem>>, vector<14x256xf32>,
    %49 = vector.extract_strided_slice %40 {offsets = [64, 0], sizes = [14, 256], strides = [1, 1]} : vector<478x256xf32> to vector<14x256xf32>
    %c56 = arith.constant 56 : index
    %c0_28 = arith.constant 0 : index
    %50 = vector.load %arg8[%c56, %c0_28] : memref<392x256xf32, #tpu.memory_space<vmem>>, vector<14x256xf32>
    tpu.vector_store %arg8[%c56, %c0_28], %49 {strides = array<i32>} : memref<392x256xf32, #tpu.memory_space<vmem>>, vector<14x256xf32>,
    %51 = vector.extract_strided_slice %40 {offsets = [80, 0], sizes = [14, 256], strides = [1, 1]} : vector<478x256xf32> to vector<14x256xf32>
    %c70 = arith.constant 70 : index
    %c0_29 = arith.constant 0 : index
    %52 = vector.load %arg8[%c70, %c0_29] : memref<392x256xf32, #tpu.memory_space<vmem>>, vector<14x256xf32>
    tpu.vector_store %arg8[%c70, %c0_29], %51 {strides = array<i32>} : memref<392x256xf32, #tpu.memory_space<vmem>>, vector<14x256xf32>,
    %53 = vector.extract_strided_slice %40 {offsets = [96, 0], sizes = [14, 256], strides = [1, 1]} : vector<478x256xf32> to vector<14x256xf32>
    %c84 = arith.constant 84 : index
    %c0_30 = arith.constant 0 : index
    %54 = vector.load %arg8[%c84, %c0_30] : memref<392x256xf32, #tpu.memory_space<vmem>>, vector<14x256xf32>
    tpu.vector_store %arg8[%c84, %c0_30], %53 {strides = array<i32>} : memref<392x256xf32, #tpu.memory_space<vmem>>, vector<14x256xf32>,
    %55 = vector.extract_strided_slice %40 {offsets = [112, 0], sizes = [14, 256], strides = [1, 1]} : vector<478x256xf32> to vector<14x256xf32>
    %c98 = arith.constant 98 : index
    %c0_31 = arith.constant 0 : index
    %56 = vector.load %arg8[%c98, %c0_31] : memref<392x256xf32, #tpu.memory_space<vmem>>, vector<14x256xf32>
    tpu.vector_store %arg8[%c98, %c0_31], %55 {strides = array<i32>} : memref<392x256xf32, #tpu.memory_space<vmem>>, vector<14x256xf32>,
    %57 = vector.extract_strided_slice %40 {offsets = [128, 0], sizes = [14, 256], strides = [1, 1]} : vector<478x256xf32> to vector<14x256xf32>
    %c112 = arith.constant 112 : index
    %c0_32 = arith.constant 0 : index
    %58 = vector.load %arg8[%c112, %c0_32] : memref<392x256xf32, #tpu.memory_space<vmem>>, vector<14x256xf32>
    tpu.vector_store %arg8[%c112, %c0_32], %57 {strides = array<i32>} : memref<392x256xf32, #tpu.memory_space<vmem>>, vector<14x256xf32>,
    %59 = vector.extract_strided_slice %40 {offsets = [144, 0], sizes = [14, 256], strides = [1, 1]} : vector<478x256xf32> to vector<14x256xf32>
    %c126 = arith.constant 126 : index
    %c0_33 = arith.constant 0 : index
    %60 = vector.load %arg8[%c126, %c0_33] : memref<392x256xf32, #tpu.memory_space<vmem>>, vector<14x256xf32>
    tpu.vector_store %arg8[%c126, %c0_33], %59 {strides = array<i32>} : memref<392x256xf32, #tpu.memory_space<vmem>>, vector<14x256xf32>,
    %61 = vector.extract_strided_slice %40 {offsets = [160, 0], sizes = [14, 256], strides = [1, 1]} : vector<478x256xf32> to vector<14x256xf32>
    %c140 = arith.constant 140 : index
    %c0_34 = arith.constant 0 : index
    %62 = vector.load %arg8[%c140, %c0_34] : memref<392x256xf32, #tpu.memory_space<vmem>>, vector<14x256xf32>
    tpu.vector_store %arg8[%c140, %c0_34], %61 {strides = array<i32>} : memref<392x256xf32, #tpu.memory_space<vmem>>, vector<14x256xf32>,
    %63 = vector.extract_strided_slice %40 {offsets = [176, 0], sizes = [14, 256], strides = [1, 1]} : vector<478x256xf32> to vector<14x256xf32>
    %c154 = arith.constant 154 : index
    %c0_35 = arith.constant 0 : index
    %64 = vector.load %arg8[%c154, %c0_35] : memref<392x256xf32, #tpu.memory_space<vmem>>, vector<14x256xf32>
    tpu.vector_store %arg8[%c154, %c0_35], %63 {strides = array<i32>} : memref<392x256xf32, #tpu.memory_space<vmem>>, vector<14x256xf32>,
    %65 = vector.extract_strided_slice %40 {offsets = [192, 0], sizes = [14, 256], strides = [1, 1]} : vector<478x256xf32> to vector<14x256xf32>
    %c168 = arith.constant 168 : index
    %c0_36 = arith.constant 0 : index
    %66 = vector.load %arg8[%c168, %c0_36] : memref<392x256xf32, #tpu.memory_space<vmem>>, vector<14x256xf32>
    tpu.vector_store %arg8[%c168, %c0_36], %65 {strides = array<i32>} : memref<392x256xf32, #tpu.memory_space<vmem>>, vector<14x256xf32>,
    %67 = vector.extract_strided_slice %40 {offsets = [208, 0], sizes = [14, 256], strides = [1, 1]} : vector<478x256xf32> to vector<14x256xf32>
    %c182 = arith.constant 182 : index
    %c0_37 = arith.constant 0 : index
    %68 = vector.load %arg8[%c182, %c0_37] : memref<392x256xf32, #tpu.memory_space<vmem>>, vector<14x256xf32>
    tpu.vector_store %arg8[%c182, %c0_37], %67 {strides = array<i32>} : memref<392x256xf32, #tpu.memory_space<vmem>>, vector<14x256xf32>,
    %69 = vector.extract_strided_slice %40 {offsets = [256, 0], sizes = [14, 256], strides = [1, 1]} : vector<478x256xf32> to vector<14x256xf32>
    %c196 = arith.constant 196 : index
    %c0_38 = arith.constant 0 : index
    %70 = vector.load %arg8[%c196, %c0_38] : memref<392x256xf32, #tpu.memory_space<vmem>>, vector<14x256xf32>
    tpu.vector_store %arg8[%c196, %c0_38], %69 {strides = array<i32>} : memref<392x256xf32, #tpu.memory_space<vmem>>, vector<14x256xf32>,
    %71 = vector.extract_strided_slice %40 {offsets = [272, 0], sizes = [14, 256], strides = [1, 1]} : vector<478x256xf32> to vector<14x256xf32>
    %c210 = arith.constant 210 : index
    %c0_39 = arith.constant 0 : index
    %72 = vector.load %arg8[%c210, %c0_39] : memref<392x256xf32, #tpu.memory_space<vmem>>, vector<14x256xf32>
    tpu.vector_store %arg8[%c210, %c0_39], %71 {strides = array<i32>} : memref<392x256xf32, #tpu.memory_space<vmem>>, vector<14x256xf32>,
    %73 = vector.extract_strided_slice %40 {offsets = [288, 0], sizes = [14, 256], strides = [1, 1]} : vector<478x256xf32> to vector<14x256xf32>
    %c224 = arith.constant 224 : index
    %c0_40 = arith.constant 0 : index
    %74 = vector.load %arg8[%c224, %c0_40] : memref<392x256xf32, #tpu.memory_space<vmem>>, vector<14x256xf32>
    tpu.vector_store %arg8[%c224, %c0_40], %73 {strides = array<i32>} : memref<392x256xf32, #tpu.memory_space<vmem>>, vector<14x256xf32>,
    %75 = vector.extract_strided_slice %40 {offsets = [304, 0], sizes = [14, 256], strides = [1, 1]} : vector<478x256xf32> to vector<14x256xf32>
    %c238 = arith.constant 238 : index
    %c0_41 = arith.constant 0 : index
    %76 = vector.load %arg8[%c238, %c0_41] : memref<392x256xf32, #tpu.memory_space<vmem>>, vector<14x256xf32>
    tpu.vector_store %arg8[%c238, %c0_41], %75 {strides = array<i32>} : memref<392x256xf32, #tpu.memory_space<vmem>>, vector<14x256xf32>,
    %77 = vector.extract_strided_slice %40 {offsets = [320, 0], sizes = [14, 256], strides = [1, 1]} : vector<478x256xf32> to vector<14x256xf32>
    %c252 = arith.constant 252 : index
    %c0_42 = arith.constant 0 : index
    %78 = vector.load %arg8[%c252, %c0_42] : memref<392x256xf32, #tpu.memory_space<vmem>>, vector<14x256xf32>
    tpu.vector_store %arg8[%c252, %c0_42], %77 {strides = array<i32>} : memref<392x256xf32, #tpu.memory_space<vmem>>, vector<14x256xf32>,
    %79 = vector.extract_strided_slice %40 {offsets = [336, 0], sizes = [14, 256], strides = [1, 1]} : vector<478x256xf32> to vector<14x256xf32>
    %c266 = arith.constant 266 : index
    %c0_43 = arith.constant 0 : index
    %80 = vector.load %arg8[%c266, %c0_43] : memref<392x256xf32, #tpu.memory_space<vmem>>, vector<14x256xf32>
    tpu.vector_store %arg8[%c266, %c0_43], %79 {strides = array<i32>} : memref<392x256xf32, #tpu.memory_space<vmem>>, vector<14x256xf32>,
    %81 = vector.extract_strided_slice %40 {offsets = [352, 0], sizes = [14, 256], strides = [1, 1]} : vector<478x256xf32> to vector<14x256xf32>
    %c280 = arith.constant 280 : index
    %c0_44 = arith.constant 0 : index
    %82 = vector.load %arg8[%c280, %c0_44] : memref<392x256xf32, #tpu.memory_space<vmem>>, vector<14x256xf32>
    tpu.vector_store %arg8[%c280, %c0_44], %81 {strides = array<i32>} : memref<392x256xf32, #tpu.memory_space<vmem>>, vector<14x256xf32>,
    %83 = vector.extract_strided_slice %40 {offsets = [368, 0], sizes = [14, 256], strides = [1, 1]} : vector<478x256xf32> to vector<14x256xf32>
    %c294 = arith.constant 294 : index
    %c0_45 = arith.constant 0 : index
    %84 = vector.load %arg8[%c294, %c0_45] : memref<392x256xf32, #tpu.memory_space<vmem>>, vector<14x256xf32>
    tpu.vector_store %arg8[%c294, %c0_45], %83 {strides = array<i32>} : memref<392x256xf32, #tpu.memory_space<vmem>>, vector<14x256xf32>,
    %85 = vector.extract_strided_slice %40 {offsets = [384, 0], sizes = [14, 256], strides = [1, 1]} : vector<478x256xf32> to vector<14x256xf32>
    %c308 = arith.constant 308 : index
    %c0_46 = arith.constant 0 : index
    %86 = vector.load %arg8[%c308, %c0_46] : memref<392x256xf32, #tpu.memory_space<vmem>>, vector<14x256xf32>
    tpu.vector_store %arg8[%c308, %c0_46], %85 {strides = array<i32>} : memref<392x256xf32, #tpu.memory_space<vmem>>, vector<14x256xf32>,
    %87 = vector.extract_strided_slice %40 {offsets = [400, 0], sizes = [14, 256], strides = [1, 1]} : vector<478x256xf32> to vector<14x256xf32>
    %c322 = arith.constant 322 : index
    %c0_47 = arith.constant 0 : index
    %88 = vector.load %arg8[%c322, %c0_47] : memref<392x256xf32, #tpu.memory_space<vmem>>, vector<14x256xf32>
    tpu.vector_store %arg8[%c322, %c0_47], %87 {strides = array<i32>} : memref<392x256xf32, #tpu.memory_space<vmem>>, vector<14x256xf32>,
    %89 = vector.extract_strided_slice %40 {offsets = [416, 0], sizes = [14, 256], strides = [1, 1]} : vector<478x256xf32> to vector<14x256xf32>
    %c336 = arith.constant 336 : index
    %c0_48 = arith.constant 0 : index
    %90 = vector.load %arg8[%c336, %c0_48] : memref<392x256xf32, #tpu.memory_space<vmem>>, vector<14x256xf32>
    tpu.vector_store %arg8[%c336, %c0_48], %89 {strides = array<i32>} : memref<392x256xf32, #tpu.memory_space<vmem>>, vector<14x256xf32>,
    %91 = vector.extract_strided_slice %40 {offsets = [432, 0], sizes = [14, 256], strides = [1, 1]} : vector<478x256xf32> to vector<14x256xf32>
    %c350 = arith.constant 350 : index
    %c0_49 = arith.constant 0 : index
    %92 = vector.load %arg8[%c350, %c0_49] : memref<392x256xf32, #tpu.memory_space<vmem>>, vector<14x256xf32>
    tpu.vector_store %arg8[%c350, %c0_49], %91 {strides = array<i32>} : memref<392x256xf32, #tpu.memory_space<vmem>>, vector<14x256xf32>,
    %93 = vector.extract_strided_slice %40 {offsets = [448, 0], sizes = [14, 256], strides = [1, 1]} : vector<478x256xf32> to vector<14x256xf32>
    %c364 = arith.constant 364 : index
    %c0_50 = arith.constant 0 : index
    %94 = vector.load %arg8[%c364, %c0_50] : memref<392x256xf32, #tpu.memory_space<vmem>>, vector<14x256xf32>
    tpu.vector_store %arg8[%c364, %c0_50], %93 {strides = array<i32>} : memref<392x256xf32, #tpu.memory_space<vmem>>, vector<14x256xf32>,
    %95 = vector.extract_strided_slice %40 {offsets = [464, 0], sizes = [14, 256], strides = [1, 1]} : vector<478x256xf32> to vector<14x256xf32>
    %c378 = arith.constant 378 : index
    %c0_51 = arith.constant 0 : index
    %96 = vector.load %arg8[%c378, %c0_51] : memref<392x256xf32, #tpu.memory_space<vmem>>, vector<14x256xf32>
    tpu.vector_store %arg8[%c378, %c0_51], %95 {strides = array<i32>} : memref<392x256xf32, #tpu.memory_space<vmem>>, vector<14x256xf32>,
    return
  }
  func.func @transform_0(%arg0: i32) -> (i32, i32) {
    %c0_i32 = arith.constant 0 : i32
    %c0_i32_0 = arith.constant 0 : i32
    %c0_i32_1 = arith.constant 0 : i32
    return %c0_i32, %c0_i32_0 : i32, i32
  }
  func.func @transform_1(%arg0: i32) -> (i32, i32) {
    %c0_i32 = arith.constant 0 : i32
    %c0_i32_0 = arith.constant 0 : i32
    %c0_i32_1 = arith.constant 0 : i32
    return %c0_i32, %c0_i32_0 : i32, i32
  }
  func.func @transform_2(%arg0: i32) -> (i32, i32) {
    %c0_i32 = arith.constant 0 : i32
    %c0_i32_0 = arith.constant 0 : i32
    %c0_i32_1 = arith.constant 0 : i32
    return %c0_i32, %c0_i32_0 : i32, i32
  }
  func.func @transform_3(%arg0: i32) -> (i32, i32) {
    %c0_i32 = arith.constant 0 : i32
    %c0_i32_0 = arith.constant 0 : i32
    %c0_i32_1 = arith.constant 0 : i32
    return %c0_i32, %c0_i32_0 : i32, i32
  }
  func.func @transform_4(%arg0: i32) -> (i32, i32) {
    %c0_i32 = arith.constant 0 : i32
    %c0_i32_0 = arith.constant 0 : i32
    %c0_i32_1 = arith.constant 0 : i32
    return %c0_i32, %c0_i32_0 : i32, i32
  }
  func.func @transform_5(%arg0: i32) -> (i32, i32, i32) {
    %c0_i32 = arith.constant 0 : i32
    %c0_i32_0 = arith.constant 0 : i32
    %c0_i32_1 = arith.constant 0 : i32
    %c0_i32_2 = arith.constant 0 : i32
    return %c0_i32, %c0_i32_0, %c0_i32_1 : i32, i32, i32
  }
  func.func @transform_6(%arg0: i32) -> (i32, i32) {
    %c0_i32 = arith.constant 0 : i32
    %c0_i32_0 = arith.constant 0 : i32
    %c0_i32_1 = arith.constant 0 : i32
    return %c0_i32, %c0_i32_0 : i32, i32
  }
  func.func @transform_7(%arg0: i32) -> (i32, i32) {
    %c0_i32 = arith.constant 0 : i32
    %c0_i32_0 = arith.constant 0 : i32
    %c0_i32_1 = arith.constant 0 : i32
    return %c0_i32, %c0_i32_0 : i32, i32
  }
}

</mosaic_0001>

<llo_original>
// kernel: fpn_forward.3
$region0: #{fpn_forward.3}
  #allocation0 [shape = 'u32[]', space=smem, size = 0x4, offset = 0x4, fixed_abs, tag = 'smem constant byte address 0x4 - core index']
  #allocation1 [shape = 'u32[144,128]{1,0:T(1,128)}', space=vmem, size = 0x12000, scoped, tag = 'internal scratch']
  %s0 = inlined_call_operand.vmem [shape: bf16[32,256], index: 0, kind: input, shape index: {}]
  %s1 = inlined_call_operand.vmem [shape: bf16[256,256], index: 1, kind: input, shape index: {}]
  %s2 = inlined_call_operand.vmem [shape: f32[1,256], index: 2, kind: input, shape index: {}, may-alias: {2,6}]
  %s3 = inlined_call_operand.vmem [shape: f32[32,128], index: 3, kind: input, shape index: {}]
  %s4 = inlined_call_operand.vmem [shape: f32[128,256], index: 4, kind: input, shape index: {}]
  %s5 = inlined_call_operand.vmem [shape: bf16[3,768,256], index: 5, kind: input, shape index: {}]
  %s6 = inlined_call_operand.vmem [shape: f32[1,256], index: 6, kind: input, shape index: {}, may-alias: {2,6}]
  %s7 = inlined_call_operand.vmem [shape: f32[8,256], index: 7, kind: output, shape index: {}]
  %s8 = sld [smem:[#allocation0]]
  $region38: #{fpn_forward.3} parent=0
    _
  %s10 = ssub.s32 1, %s8
  %s11 = scalar_select 0, %s10, %s8
  // Predicated region
  $region2: #{fpn_forward.3} parent=0 // pred_check
    _
  $region3: #{fpn_forward.3} parent=0 // pred_check_branch
    %13 = sbr.rel (0) target = $region5
  $region4: #{fpn_forward.3} parent=0 // pred_region
    _
  $region5: #{fpn_forward.3} parent=0 // pred_fallthru
    _
  // Predicated region
  $region6: #{fpn_forward.3} parent=0 // pred_check
    _
  $region7: #{fpn_forward.3} parent=0 // pred_check_branch
    %15 = sbr.rel (0) target = $region9
  $region8: #{fpn_forward.3} parent=0 // pred_region
    _
  $region9: #{fpn_forward.3} parent=0 // pred_fallthru
    _
  // Predicated region
  $region10: #{fpn_forward.3} parent=0 // pred_check
    _
  $region11: #{fpn_forward.3} parent=0 // pred_check_branch
    %17 = sbr.rel (0) target = $region13
  $region12: #{fpn_forward.3} parent=0 // pred_region
    _
  $region13: #{fpn_forward.3} parent=0 // pred_fallthru
    _
  // Predicated region
  $region14: #{fpn_forward.3} parent=0 // pred_check
    _
  $region15: #{fpn_forward.3} parent=0 // pred_check_branch
    %19 = sbr.rel (0) target = $region17
  $region16: #{fpn_forward.3} parent=0 // pred_region
    _
  $region17: #{fpn_forward.3} parent=0 // pred_fallthru
    _
  // Predicated region
  $region18: #{fpn_forward.3} parent=0 // pred_check
    _
  $region19: #{fpn_forward.3} parent=0 // pred_check_branch
    %21 = sbr.rel (0) target = $region21
  $region20: #{fpn_forward.3} parent=0 // pred_region
    _
  $region21: #{fpn_forward.3} parent=0 // pred_fallthru
    _
  // Predicated region
  $region22: #{fpn_forward.3} parent=0 // pred_check
    _
  $region23: #{fpn_forward.3} parent=0 // pred_check_branch
    %23 = sbr.rel (0) target = $region25
  $region24: #{fpn_forward.3} parent=0 // pred_region
    _
  $region25: #{fpn_forward.3} parent=0 // pred_fallthru
    _
  // Predicated region
  $region26: #{fpn_forward.3} parent=0 // pred_check
    _
  $region27: #{fpn_forward.3} parent=0 // pred_check_branch
    %25 = sbr.rel (0) target = $region29
  $region28: #{fpn_forward.3} parent=0 // pred_region
    _
  $region29: #{fpn_forward.3} parent=0 // pred_fallthru
    _
  %v26 = vld [vmem:[%s0] sm:$0xff]
  %v27 = vld [vmem:[%s0 + $0x8] sm:$0xff]
  %v28 = vld [vmem:[%s0 + $0x10] sm:$0xff]
  %v29 = vld [vmem:[%s0 + $0x18] sm:$0xff]
  %v30 = vld [vmem:[%s1] sm:$0xff]
  %v31 = vld [vmem:[%s1 + $0x8] sm:$0xff]
  %v32 = vld [vmem:[%s1 + $0x10] sm:$0xff]
  %v33 = vld [vmem:[%s1 + $0x18] sm:$0xff]
  %v34 = vld [vmem:[%s1 + $0x20] sm:$0xff]
  %v35 = vld [vmem:[%s1 + $0x28] sm:$0xff]
  %v36 = vld [vmem:[%s1 + $0x30] sm:$0xff]
  %v37 = vld [vmem:[%s1 + $0x38] sm:$0xff]
  %v38 = vld [vmem:[%s1 + $0x40] sm:$0xff]
  %v39 = vld [vmem:[%s1 + $0x48] sm:$0xff]
  %v40 = vld [vmem:[%s1 + $0x50] sm:$0xff]
  %v41 = vld [vmem:[%s1 + $0x58] sm:$0xff]
  %v42 = vld [vmem:[%s1 + $0x60] sm:$0xff]
  %v43 = vld [vmem:[%s1 + $0x68] sm:$0xff]
  %v44 = vld [vmem:[%s1 + $0x70] sm:$0xff]
  %v45 = vld [vmem:[%s1 + $0x78] sm:$0xff]
  %v46 = vld [vmem:[%s1 + $0x80] sm:$0xff]
  %v47 = vld [vmem:[%s1 + $0x88] sm:$0xff]
  %v48 = vld [vmem:[%s1 + $0x90] sm:$0xff]
  %v49 = vld [vmem:[%s1 + $0x98] sm:$0xff]
  %v50 = vld [vmem:[%s1 + $0xa0] sm:$0xff]
  %v51 = vld [vmem:[%s1 + $0xa8] sm:$0xff]
  %v52 = vld [vmem:[%s1 + $0xb0] sm:$0xff]
  %v53 = vld [vmem:[%s1 + $0xb8] sm:$0xff]
  %v54 = vld [vmem:[%s1 + $0xc0] sm:$0xff]
  %v55 = vld [vmem:[%s1 + $0xc8] sm:$0xff]
  %v56 = vld [vmem:[%s1 + $0xd0] sm:$0xff]
  %v57 = vld [vmem:[%s1 + $0xd8] sm:$0xff]
  %v58 = vld [vmem:[%s1 + $0xe0] sm:$0xff]
  %v59 = vld [vmem:[%s1 + $0xe8] sm:$0xff]
  %v60 = vld [vmem:[%s1 + $0xf0] sm:$0xff]
  %v61 = vld [vmem:[%s1 + $0xf8] sm:$0xff]
  %v62 = vld [vmem:[%s2] sm:$0x3]
  %v64 = vlaneseq
  %v65 = vshrl.u32 %v64, 7
  %v66 = vsub.s32 0, %v65
  %v67 = vrot.slane %v62, %v66
  %v68 = vlaneseq
  %v69 = vshrl.u32 %v68, 7
  %v70 = vsub.s32 1, %v69
  %v71 = vrot.slane %v62, %v70
  %v78 = vunpack.c.l.b16 %v26
  %v79 = vunpack.c.h.b16 %v26
  %v80 = vunpack.c.l.b16 %v27
  %v81 = vunpack.c.h.b16 %v27
  %v82 = vunpack.c.l.b16 %v28
  %v83 = vunpack.c.h.b16 %v28
  %v84 = vunpack.c.l.b16 %v29
  %v85 = vunpack.c.h.b16 %v29
  %v86 = vpack.c.b16 %v80, %v78
  %v87 = vpack.c.b16 %v81, %v79
  %v88 = vpack.c.b16 %v84, %v82
  %v89 = vpack.c.b16 %v85, %v83
  %v126 = vunpack.c.l.b16 %v30
  %v127 = vunpack.c.h.b16 %v30
  %v128 = vunpack.c.l.b16 %v31
  %v129 = vunpack.c.h.b16 %v31
  %v130 = vunpack.c.l.b16 %v32
  %v131 = vunpack.c.h.b16 %v32
  %v132 = vunpack.c.l.b16 %v33
  %v133 = vunpack.c.h.b16 %v33
  %v134 = vunpack.c.l.b16 %v34
  %v135 = vunpack.c.h.b16 %v34
  %v136 = vunpack.c.l.b16 %v35
  %v137 = vunpack.c.h.b16 %v35
  %v138 = vunpack.c.l.b16 %v36
  %v139 = vunpack.c.h.b16 %v36
  %v140 = vunpack.c.l.b16 %v37
  %v141 = vunpack.c.h.b16 %v37
  %v142 = vunpack.c.l.b16 %v38
  %v143 = vunpack.c.h.b16 %v38
  %v144 = vunpack.c.l.b16 %v39
  %v145 = vunpack.c.h.b16 %v39
  %v146 = vunpack.c.l.b16 %v40
  %v147 = vunpack.c.h.b16 %v40
  %v148 = vunpack.c.l.b16 %v41
  %v149 = vunpack.c.h.b16 %v41
  %v150 = vunpack.c.l.b16 %v42
  %v151 = vunpack.c.h.b16 %v42
  %v152 = vunpack.c.l.b16 %v43
  %v153 = vunpack.c.h.b16 %v43
  %v154 = vunpack.c.l.b16 %v44
  %v155 = vunpack.c.h.b16 %v44
  %v156 = vunpack.c.l.b16 %v45
  %v157 = vunpack.c.h.b16 %v45
  %v158 = vunpack.c.l.b16 %v46
  %v159 = vunpack.c.h.b16 %v46
  %v160 = vunpack.c.l.b16 %v47
  %v161 = vunpack.c.h.b16 %v47
  %v162 = vunpack.c.l.b16 %v48
  %v163 = vunpack.c.h.b16 %v48
  %v164 = vunpack.c.l.b16 %v49
  %v165 = vunpack.c.h.b16 %v49
  %v166 = vunpack.c.l.b16 %v50
  %v167 = vunpack.c.h.b16 %v50
  %v168 = vunpack.c.l.b16 %v51
  %v169 = vunpack.c.h.b16 %v51
  %v170 = vunpack.c.l.b16 %v52
  %v171 = vunpack.c.h.b16 %v52
  %v172 = vunpack.c.l.b16 %v53
  %v173 = vunpack.c.h.b16 %v53
  %v174 = vunpack.c.l.b16 %v54
  %v175 = vunpack.c.h.b16 %v54
  %v176 = vunpack.c.l.b16 %v55
  %v177 = vunpack.c.h.b16 %v55
  %v178 = vunpack.c.l.b16 %v56
  %v179 = vunpack.c.h.b16 %v56
  %v180 = vunpack.c.l.b16 %v57
  %v181 = vunpack.c.h.b16 %v57
  %v182 = vunpack.c.l.b16 %v58
  %v183 = vunpack.c.h.b16 %v58
  %v184 = vunpack.c.l.b16 %v59
  %v185 = vunpack.c.h.b16 %v59
  %v186 = vunpack.c.l.b16 %v60
  %v187 = vunpack.c.h.b16 %v60
  %v188 = vunpack.c.l.b16 %v61
  %v189 = vunpack.c.h.b16 %v61
  %v190 = vpack.c.b16 %v128, %v126
  %v191 = vpack.c.b16 %v129, %v127
  %v192 = vpack.c.b16 %v132, %v130
  %v193 = vpack.c.b16 %v133, %v131
  %v194 = vpack.c.b16 %v136, %v134
  %v195 = vpack.c.b16 %v137, %v135
  %v196 = vpack.c.b16 %v140, %v138
  %v197 = vpack.c.b16 %v141, %v139
  %v198 = vpack.c.b16 %v144, %v142
  %v199 = vpack.c.b16 %v145, %v143
  %v200 = vpack.c.b16 %v148, %v146
  %v201 = vpack.c.b16 %v149, %v147
  %v202 = vpack.c.b16 %v152, %v150
  %v203 = vpack.c.b16 %v153, %v151
  %v204 = vpack.c.b16 %v156, %v154
  %v205 = vpack.c.b16 %v157, %v155
  %v206 = vpack.c.b16 %v160, %v158
  %v207 = vpack.c.b16 %v161, %v159
  %v208 = vpack.c.b16 %v164, %v162
  %v209 = vpack.c.b16 %v165, %v163
  %v210 = vpack.c.b16 %v168, %v166
  %v211 = vpack.c.b16 %v169, %v167
  %v212 = vpack.c.b16 %v172, %v170
  %v213 = vpack.c.b16 %v173, %v171
  %v214 = vpack.c.b16 %v176, %v174
  %v215 = vpack.c.b16 %v177, %v175
  %v216 = vpack.c.b16 %v180, %v178
  %v217 = vpack.c.b16 %v181, %v179
  %v218 = vpack.c.b16 %v184, %v182
  %v219 = vpack.c.b16 %v185, %v183
  %v220 = vpack.c.b16 %v188, %v186
  %v221 = vpack.c.b16 %v189, %v187
  %254 = vmatprep.subr.bf16.mxu0 %v205
  %255 = vmatpush1.bf16.msra.mxu0 %v204
  %256 = vmatprep.subr.bf16.mxu0 %v203
  %257 = vmatpush1.bf16.msra.mxu0 %v202
  %258 = vmatprep.subr.bf16.mxu0 %v201
  %259 = vmatpush1.bf16.msra.mxu0 %v200
  %260 = vmatprep.subr.bf16.mxu0 %v199
  %261 = vmatpush1.bf16.msra.mxu0 %v198
  %262 = vmatprep.subr.bf16.mxu0 %v197
  %263 = vmatpush1.bf16.msra.mxu0 %v196
  %264 = vmatprep.subr.bf16.mxu0 %v195
  %265 = vmatpush1.bf16.msra.mxu0 %v194
  %266 = vmatprep.subr.bf16.mxu0 %v193
  %267 = vmatpush1.bf16.msra.mxu0 %v192
  %268 = vmatprep.subr.bf16.mxu0 %v191
  %269 = vmatpush1.bf16.msra.mxu0 %v190
  %270 = vmatprep.subr.bf16.mxu0 %v221
  %271 = vmatpush2.bf16.msra.mxu0 %v220
  %272 = vmatprep.subr.bf16.mxu0 %v219
  %273 = vmatpush2.bf16.msra.mxu0 %v218
  %274 = vmatprep.subr.bf16.mxu0 %v217
  %275 = vmatpush2.bf16.msra.mxu0 %v216
  %276 = vmatprep.subr.bf16.mxu0 %v215
  %277 = vmatpush2.bf16.msra.mxu0 %v214
  %278 = vmatprep.subr.bf16.mxu0 %v213
  %279 = vmatpush2.bf16.msra.mxu0 %v212
  %280 = vmatprep.subr.bf16.mxu0 %v211
  %281 = vmatpush2.bf16.msra.mxu0 %v210
  %282 = vmatprep.subr.bf16.mxu0 %v209
  %283 = vmatpush2.bf16.msra.mxu0 %v208
  %284 = vmatprep.subr.bf16.mxu0 %v207
  %285 = vmatpush2.bf16.msra.mxu0 %v206
  %286 = vmatprep.mubr.bf16.mxu0 %v87
  %287 = vmatmul.mubr.bf16.gmra.mxu0 %v86
  %v288 = vpop.f32.mrf.mxu0
  %v289 = vadd.f32 %v67, %v288
  %v290 = vpop.f32.mrf.mxu0
  %v291 = vadd.f32 %v71, %v290
  %v292 = vpop.f32.mrf.mxu0
  %v293 = vadd.f32 %v67, %v292
  %v294 = vpop.f32.mrf.mxu0
  %v295 = vadd.f32 %v71, %v294
  %296 = vmatprep.mubr.bf16.mxu0 %v89
  %297 = vmatmul.mubr.bf16.gmra.mxu0 %v88
  %v298 = vpop.f32.mrf.mxu0
  %v299 = vadd.f32 %v67, %v298
  %v300 = vpop.f32.mrf.mxu0
  %v301 = vadd.f32 %v71, %v300
  %v302 = vpop.f32.mrf.mxu0
  %v303 = vadd.f32 %v67, %v302
  %v304 = vpop.f32.mrf.mxu0
  %v305 = vadd.f32 %v71, %v304
  %306 = vdwg.mxu0
  %v307 = vld [vmem:[%s3] sm:$0xff]
  %v308 = vld [vmem:[%s3 + $0x8] sm:$0xff]
  %v309 = vld [vmem:[%s3 + $0x10] sm:$0xff]
  %v310 = vld [vmem:[%s3 + $0x18] sm:$0xff]
  %v311 = vld [vmem:[%s4] sm:$0xff]
  %v312 = vld [vmem:[%s4 + $0x8] sm:$0xff]
  %v313 = vld [vmem:[%s4 + $0x10] sm:$0xff]
  %v314 = vld [vmem:[%s4 + $0x18] sm:$0xff]
  %v315 = vld [vmem:[%s4 + $0x20] sm:$0xff]
  %v316 = vld [vmem:[%s4 + $0x28] sm:$0xff]
  %v317 = vld [vmem:[%s4 + $0x30] sm:$0xff]
  %v318 = vld [vmem:[%s4 + $0x38] sm:$0xff]
  %v319 = vld [vmem:[%s4 + $0x40] sm:$0xff]
  %v320 = vld [vmem:[%s4 + $0x48] sm:$0xff]
  %v321 = vld [vmem:[%s4 + $0x50] sm:$0xff]
  %v322 = vld [vmem:[%s4 + $0x58] sm:$0xff]
  %v323 = vld [vmem:[%s4 + $0x60] sm:$0xff]
  %v324 = vld [vmem:[%s4 + $0x68] sm:$0xff]
  %v325 = vld [vmem:[%s4 + $0x70] sm:$0xff]
  %v326 = vld [vmem:[%s4 + $0x78] sm:$0xff]
  %v327 = vld [vmem:[%s4 + $0x80] sm:$0xff]
  %v328 = vld [vmem:[%s4 + $0x88] sm:$0xff]
  %v329 = vld [vmem:[%s4 + $0x90] sm:$0xff]
  %v330 = vld [vmem:[%s4 + $0x98] sm:$0xff]
  %v331 = vld [vmem:[%s4 + $0xa0] sm:$0xff]
  %v332 = vld [vmem:[%s4 + $0xa8] sm:$0xff]
  %v333 = vld [vmem:[%s4 + $0xb0] sm:$0xff]
  %v334 = vld [vmem:[%s4 + $0xb8] sm:$0xff]
  %v335 = vld [vmem:[%s4 + $0xc0] sm:$0xff]
  %v336 = vld [vmem:[%s4 + $0xc8] sm:$0xff]
  %v337 = vld [vmem:[%s4 + $0xd0] sm:$0xff]
  %v338 = vld [vmem:[%s4 + $0xd8] sm:$0xff]
  %v339 = vld [vmem:[%s4 + $0xe0] sm:$0xff]
  %v340 = vld [vmem:[%s4 + $0xe8] sm:$0xff]
  %v341 = vld [vmem:[%s4 + $0xf0] sm:$0xff]
  %v342 = vld [vmem:[%s4 + $0xf8] sm:$0xff]
  %343 = vmatprep.subr.mxu0 %v342
  %344 = vmatpush1.msra.mxu0 %v341
  %345 = vmatprep.subr.mxu0 %v340
  %346 = vmatpush1.msra.mxu0 %v339
  %347 = vmatprep.subr.mxu0 %v338
  %348 = vmatpush1.msra.mxu0 %v337
  %349 = vmatprep.subr.mxu0 %v336
  %350 = vmatpush1.msra.mxu0 %v335
  %351 = vmatprep.subr.mxu0 %v334
  %352 = vmatpush1.msra.mxu0 %v333
  %353 = vmatprep.subr.mxu0 %v332
  %354 = vmatpush1.msra.mxu0 %v331
  %355 = vmatprep.subr.mxu0 %v330
  %356 = vmatpush1.msra.mxu0 %v329
  %357 = vmatprep.subr.mxu0 %v328
  %358 = vmatpush1.msra.mxu0 %v327
  %359 = vmatprep.subr.mxu0 %v326
  %360 = vmatpush1.msra.mxu0 %v325
  %361 = vmatprep.subr.mxu0 %v324
  %362 = vmatpush1.msra.mxu0 %v323
  %363 = vmatprep.subr.mxu0 %v322
  %364 = vmatpush1.msra.mxu0 %v321
  %365 = vmatprep.subr.mxu0 %v320
  %366 = vmatpush1.msra.mxu0 %v319
  %367 = vmatprep.subr.mxu0 %v318
  %368 = vmatpush1.msra.mxu0 %v317
  %369 = vmatprep.subr.mxu0 %v316
  %370 = vmatpush1.msra.mxu0 %v315
  %371 = vmatprep.subr.mxu0 %v314
  %372 = vmatpush1.msra.mxu0 %v313
  %373 = vmatprep.subr.mxu0 %v312
  %374 = vmatpush1.msra.mxu0 %v311
  %375 = vmatprep.subr.mxu0 0.0
  %376 = vmatpush2.msra.mxu0 0.0
  %377 = vmatprep.subr.mxu0 0.0
  %378 = vmatpush2.msra.mxu0 0.0
  %379 = vmatprep.subr.mxu0 0.0
  %380 = vmatpush2.msra.mxu0 0.0
  %381 = vmatprep.subr.mxu0 0.0
  %382 = vmatpush2.msra.mxu0 0.0
  %383 = vmatprep.subr.mxu0 0.0
  %384 = vmatpush2.msra.mxu0 0.0
  %385 = vmatprep.subr.mxu0 0.0
  %386 = vmatpush2.msra.mxu0 0.0
  %387 = vmatprep.subr.mxu0 0.0
  %388 = vmatpush2.msra.mxu0 0.0
  %389 = vmatprep.subr.mxu0 0.0
  %390 = vmatpush2.msra.mxu0 0.0
  %391 = vmatprep.subr.mxu0 0.0
  %392 = vmatpush2.msra.mxu0 0.0
  %393 = vmatprep.subr.mxu0 0.0
  %394 = vmatpush2.msra.mxu0 0.0
  %395 = vmatprep.subr.mxu0 0.0
  %396 = vmatpush2.msra.mxu0 0.0
  %397 = vmatprep.subr.mxu0 0.0
  %398 = vmatpush2.msra.mxu0 0.0
  %399 = vmatprep.subr.mxu0 0.0
  %400 = vmatpush2.msra.mxu0 0.0
  %401 = vmatprep.subr.mxu0 0.0
  %402 = vmatpush2.msra.mxu0 0.0
  %403 = vmatprep.subr.mxu0 0.0
  %404 = vmatpush2.msra.mxu0 0.0
  %405 = vmatprep.subr.mxu0 0.0
  %406 = vmatpush2.msra.mxu0 0.0
  %407 = vmatprep.mubr.f32.mxu0 0.0
  %408 = vmatmul.mubr.f32.gmra.mxu0 %v307
  %v409 = vpop.f32.mrf.mxu0
  %v410 = vadd.f32 0.0, %v409
  %v411 = vpop.f32.mrf.mxu0
  %v412 = vadd.f32 0.0, %v411
  %413 = vmatprep.mubr.f32.mxu0 0.0
  %414 = vmatmul.mubr.f32.gmra.mxu0 %v308
  %v415 = vpop.f32.mrf.mxu0
  %v416 = vadd.f32 0.0, %v415
  %v417 = vpop.f32.mrf.mxu0
  %v418 = vadd.f32 0.0, %v417
  %419 = vmatprep.mubr.f32.mxu0 0.0
  %420 = vmatmul.mubr.f32.gmra.mxu0 %v309
  %v421 = vpop.f32.mrf.mxu0
  %v422 = vadd.f32 0.0, %v421
  %v423 = vpop.f32.mrf.mxu0
  %v424 = vadd.f32 0.0, %v423
  %425 = vmatprep.mubr.f32.mxu0 0.0
  %426 = vmatmul.mubr.f32.gmra.mxu0 %v310
  %v427 = vpop.f32.mrf.mxu0
  %v428 = vadd.f32 0.0, %v427
  %v429 = vpop.f32.mrf.mxu0
  %v430 = vadd.f32 0.0, %v429
  %431 = vdwg.mxu0
  %v432 = vadd.f32 %v289, %v410
  %v433 = vadd.f32 %v291, %v412
  %v434 = vadd.f32 %v293, %v416
  %v435 = vadd.f32 %v295, %v418
  %v436 = vadd.f32 %v299, %v422
  %v437 = vadd.f32 %v301, %v424
  %v438 = vadd.f32 %v303, %v428
  %v439 = vadd.f32 %v305, %v430
  %vm446 = vcmask 1046528
  %v447 = vrot.slane %v432, 1
  %v448 = vrot.slane %v434, 1
  %v449 = vsel %vm446, %v447, %v448
  %v450 = vrot.slane %v433, 1
  %v451 = vrot.slane %v435, 1
  %v452 = vsel %vm446, %v450, %v451
  %v453 = vrot.slane %v436, 1
  %v454 = vsel %vm446, %v448, %v453
  %v455 = vrot.slane %v437, 1
  %v456 = vsel %vm446, %v451, %v455
  %vm463 = vcmask 1045504
  %v464 = vrot.slane %v432, 2
  %v465 = vrot.slane %v434, 2
  %v466 = vsel %vm463, %v464, %v465
  %v467 = vrot.slane %v433, 2
  %v468 = vrot.slane %v435, 2
  %v469 = vsel %vm463, %v467, %v468
  %v470 = vrot.slane %v436, 2
  %v471 = vsel %vm463, %v465, %v470
  %v472 = vrot.slane %v437, 2
  %v473 = vsel %vm463, %v468, %v472
  %v480 = vpack.c.bf16 %v434, %v432
  %v481 = vpack.c.bf16 %v435, %v433
  %v482 = vpack.c.bf16 %v454, %v449
  %v483 = vpack.c.bf16 %v456, %v452
  %v484 = vpack.c.bf16 %v471, %v466
  %v485 = vpack.c.bf16 %v473, %v469
  %v486 = vpack.c.bf16 %v436, %v436
  %v487 = vpack.c.bf16 %v437, %v437
  %v488 = vpack.c.bf16 %v453, %v453
  %v489 = vpack.c.bf16 %v455, %v455
  %v490 = vpack.c.bf16 %v470, %v470
  %v491 = vpack.c.bf16 %v472, %v472
  %v492 = vld [vmem:[%s5] sm:$0xff]
  %v493 = vld [vmem:[%s5 + $0x8] sm:$0xff]
  %v494 = vld [vmem:[%s5 + $0x10] sm:$0xff]
  %v495 = vld [vmem:[%s5 + $0x18] sm:$0xff]
  %v496 = vld [vmem:[%s5 + $0x20] sm:$0xff]
  %v497 = vld [vmem:[%s5 + $0x28] sm:$0xff]
  %v498 = vld [vmem:[%s5 + $0x30] sm:$0xff]
  %v499 = vld [vmem:[%s5 + $0x38] sm:$0xff]
  %v500 = vld [vmem:[%s5 + $0x40] sm:$0xff]
  %v501 = vld [vmem:[%s5 + $0x48] sm:$0xff]
  %v502 = vld [vmem:[%s5 + $0x50] sm:$0xff]
  %v503 = vld [vmem:[%s5 + $0x58] sm:$0xff]
  %v504 = vld [vmem:[%s5 + $0x60] sm:$0xff]
  %v505 = vld [vmem:[%s5 + $0x68] sm:$0xff]
  %v506 = vld [vmem:[%s5 + $0x70] sm:$0xff]
  %v507 = vld [vmem:[%s5 + $0x78] sm:$0xff]
  %v508 = vld [vmem:[%s5 + $0x80] sm:$0xff]
  %v509 = vld [vmem:[%s5 + $0x88] sm:$0xff]
  %v510 = vld [vmem:[%s5 + $0x90] sm:$0xff]
  %v511 = vld [vmem:[%s5 + $0x98] sm:$0xff]
  %v512 = vld [vmem:[%s5 + $0xa0] sm:$0xff]
  %v513 = vld [vmem:[%s5 + $0xa8] sm:$0xff]
  %v514 = vld [vmem:[%s5 + $0xb0] sm:$0xff]
  %v515 = vld [vmem:[%s5 + $0xb8] sm:$0xff]
  %v516 = vld [vmem:[%s5 + $0xc0] sm:$0xff]
  %v517 = vld [vmem:[%s5 + $0xc8] sm:$0xff]
  %v518 = vld [vmem:[%s5 + $0xd0] sm:$0xff]
  %v519 = vld [vmem:[%s5 + $0xd8] sm:$0xff]
  %v520 = vld [vmem:[%s5 + $0xe0] sm:$0xff]
  %v521 = vld [vmem:[%s5 + $0xe8] sm:$0xff]
  %v522 = vld [vmem:[%s5 + $0xf0] sm:$0xff]
  %v523 = vld [vmem:[%s5 + $0xf8] sm:$0xff]
  %v524 = vld [vmem:[%s5 + $0x100] sm:$0xff]
  %v525 = vld [vmem:[%s5 + $0x108] sm:$0xff]
  %v526 = vld [vmem:[%s5 + $0x110] sm:$0xff]
  %v527 = vld [vmem:[%s5 + $0x118] sm:$0xff]
  %v528 = vld [vmem:[%s5 + $0x120] sm:$0xff]
  %v529 = vld [vmem:[%s5 + $0x128] sm:$0xff]
  %v530 = vld [vmem:[%s5 + $0x130] sm:$0xff]
  %v531 = vld [vmem:[%s5 + $0x138] sm:$0xff]
  %v532 = vld [vmem:[%s5 + $0x140] sm:$0xff]
  %v533 = vld [vmem:[%s5 + $0x148] sm:$0xff]
  %v534 = vld [vmem:[%s5 + $0x150] sm:$0xff]
  %v535 = vld [vmem:[%s5 + $0x158] sm:$0xff]
  %v536 = vld [vmem:[%s5 + $0x160] sm:$0xff]
  %v537 = vld [vmem:[%s5 + $0x168] sm:$0xff]
  %v538 = vld [vmem:[%s5 + $0x170] sm:$0xff]
  %v539 = vld [vmem:[%s5 + $0x178] sm:$0xff]
  %v540 = vld [vmem:[%s5 + $0x180] sm:$0xff]
  %v541 = vld [vmem:[%s5 + $0x188] sm:$0xff]
  %v542 = vld [vmem:[%s5 + $0x190] sm:$0xff]
  %v543 = vld [vmem:[%s5 + $0x198] sm:$0xff]
  %v544 = vld [vmem:[%s5 + $0x1a0] sm:$0xff]
  %v545 = vld [vmem:[%s5 + $0x1a8] sm:$0xff]
  %v546 = vld [vmem:[%s5 + $0x1b0] sm:$0xff]
  %v547 = vld [vmem:[%s5 + $0x1b8] sm:$0xff]
  %v548 = vld [vmem:[%s5 + $0x1c0] sm:$0xff]
  %v549 = vld [vmem:[%s5 + $0x1c8] sm:$0xff]
  %v550 = vld [vmem:[%s5 + $0x1d0] sm:$0xff]
  %v551 = vld [vmem:[%s5 + $0x1d8] sm:$0xff]
  %v552 = vld [vmem:[%s5 + $0x1e0] sm:$0xff]
  %v553 = vld [vmem:[%s5 + $0x1e8] sm:$0xff]
  %v554 = vld [vmem:[%s5 + $0x1f0] sm:$0xff]
  %v555 = vld [vmem:[%s5 + $0x1f8] sm:$0xff]
  %v556 = vld [vmem:[%s5 + $0x200] sm:$0xff]
  %v557 = vld [vmem:[%s5 + $0x208] sm:$0xff]
  %v558 = vld [vmem:[%s5 + $0x210] sm:$0xff]
  %v559 = vld [vmem:[%s5 + $0x218] sm:$0xff]
  %v560 = vld [vmem:[%s5 + $0x220] sm:$0xff]
  %v561 = vld [vmem:[%s5 + $0x228] sm:$0xff]
  %v562 = vld [vmem:[%s5 + $0x230] sm:$0xff]
  %v563 = vld [vmem:[%s5 + $0x238] sm:$0xff]
  %v564 = vld [vmem:[%s5 + $0x240] sm:$0xff]
  %v565 = vld [vmem:[%s5 + $0x248] sm:$0xff]
  %v566 = vld [vmem:[%s5 + $0x250] sm:$0xff]
  %v567 = vld [vmem:[%s5 + $0x258] sm:$0xff]
  %v568 = vld [vmem:[%s5 + $0x260] sm:$0xff]
  %v569 = vld [vmem:[%s5 + $0x268] sm:$0xff]
  %v570 = vld [vmem:[%s5 + $0x270] sm:$0xff]
  %v571 = vld [vmem:[%s5 + $0x278] sm:$0xff]
  %v572 = vld [vmem:[%s5 + $0x280] sm:$0xff]
  %v573 = vld [vmem:[%s5 + $0x288] sm:$0xff]
  %v574 = vld [vmem:[%s5 + $0x290] sm:$0xff]
  %v575 = vld [vmem:[%s5 + $0x298] sm:$0xff]
  %v576 = vld [vmem:[%s5 + $0x2a0] sm:$0xff]
  %v577 = vld [vmem:[%s5 + $0x2a8] sm:$0xff]
  %v578 = vld [vmem:[%s5 + $0x2b0] sm:$0xff]
  %v579 = vld [vmem:[%s5 + $0x2b8] sm:$0xff]
  %v580 = vld [vmem:[%s5 + $0x2c0] sm:$0xff]
  %v581 = vld [vmem:[%s5 + $0x2c8] sm:$0xff]
  %v582 = vld [vmem:[%s5 + $0x2d0] sm:$0xff]
  %v583 = vld [vmem:[%s5 + $0x2d8] sm:$0xff]
  %v584 = vld [vmem:[%s5 + $0x2e0] sm:$0xff]
  %v585 = vld [vmem:[%s5 + $0x2e8] sm:$0xff]
  %v586 = vld [vmem:[%s5 + $0x2f0] sm:$0xff]
  %v587 = vld [vmem:[%s5 + $0x2f8] sm:$0xff]
  %v590 = vrot.slane %v438, 1
  %v591 = vsel %vm446, %v453, %v590
  %v592 = vrot.slane %v439, 1
  %v593 = vsel %vm446, %v455, %v592
  %v598 = vrot.slane %v438, 2
  %v599 = vsel %vm463, %v470, %v598
  %v600 = vrot.slane %v439, 2
  %v601 = vsel %vm463, %v472, %v600
  %v606 = vpack.c.bf16 %v438, %v436
  %v607 = vpack.c.bf16 %v439, %v437
  %v608 = vpack.c.bf16 %v590, %v591
  %v609 = vpack.c.bf16 %v592, %v593
  %v610 = vpack.c.bf16 %v598, %v599
  %v611 = vpack.c.bf16 %v600, %v601
  %s612 = scalar_lea.vmem %s5, 768
  %v613 = vld [vmem:[%s612] sm:$0xff]
  %v614 = vld [vmem:[%s612 + $0x8] sm:$0xff]
  %v615 = vld [vmem:[%s612 + $0x10] sm:$0xff]
  %v616 = vld [vmem:[%s612 + $0x18] sm:$0xff]
  %v617 = vld [vmem:[%s612 + $0x20] sm:$0xff]
  %v618 = vld [vmem:[%s612 + $0x28] sm:$0xff]
  %v619 = vld [vmem:[%s612 + $0x30] sm:$0xff]
  %v620 = vld [vmem:[%s612 + $0x38] sm:$0xff]
  %v621 = vld [vmem:[%s612 + $0x40] sm:$0xff]
  %v622 = vld [vmem:[%s612 + $0x48] sm:$0xff]
  %v623 = vld [vmem:[%s612 + $0x50] sm:$0xff]
  %v624 = vld [vmem:[%s612 + $0x58] sm:$0xff]
  %v625 = vld [vmem:[%s612 + $0x60] sm:$0xff]
  %v626 = vld [vmem:[%s612 + $0x68] sm:$0xff]
  %v627 = vld [vmem:[%s612 + $0x70] sm:$0xff]
  %v628 = vld [vmem:[%s612 + $0x78] sm:$0xff]
  %v629 = vld [vmem:[%s612 + $0x80] sm:$0xff]
  %v630 = vld [vmem:[%s612 + $0x88] sm:$0xff]
  %v631 = vld [vmem:[%s612 + $0x90] sm:$0xff]
  %v632 = vld [vmem:[%s612 + $0x98] sm:$0xff]
  %v633 = vld [vmem:[%s612 + $0xa0] sm:$0xff]
  %v634 = vld [vmem:[%s612 + $0xa8] sm:$0xff]
  %v635 = vld [vmem:[%s612 + $0xb0] sm:$0xff]
  %v636 = vld [vmem:[%s612 + $0xb8] sm:$0xff]
  %v637 = vld [vmem:[%s612 + $0xc0] sm:$0xff]
  %v638 = vld [vmem:[%s612 + $0xc8] sm:$0xff]
  %v639 = vld [vmem:[%s612 + $0xd0] sm:$0xff]
  %v640 = vld [vmem:[%s612 + $0xd8] sm:$0xff]
  %v641 = vld [vmem:[%s612 + $0xe0] sm:$0xff]
  %v642 = vld [vmem:[%s612 + $0xe8] sm:$0xff]
  %v643 = vld [vmem:[%s612 + $0xf0] sm:$0xff]
  %v644 = vld [vmem:[%s612 + $0xf8] sm:$0xff]
  %v645 = vld [vmem:[%s612 + $0x100] sm:$0xff]
  %v646 = vld [vmem:[%s612 + $0x108] sm:$0xff]
  %v647 = vld [vmem:[%s612 + $0x110] sm:$0xff]
  %v648 = vld [vmem:[%s612 + $0x118] sm:$0xff]
  %v649 = vld [vmem:[%s612 + $0x120] sm:$0xff]
  %v650 = vld [vmem:[%s612 + $0x128] sm:$0xff]
  %v651 = vld [vmem:[%s612 + $0x130] sm:$0xff]
  %v652 = vld [vmem:[%s612 + $0x138] sm:$0xff]
  %v653 = vld [vmem:[%s612 + $0x140] sm:$0xff]
  %v654 = vld [vmem:[%s612 + $0x148] sm:$0xff]
  %v655 = vld [vmem:[%s612 + $0x150] sm:$0xff]
  %v656 = vld [vmem:[%s612 + $0x158] sm:$0xff]
  %v657 = vld [vmem:[%s612 + $0x160] sm:$0xff]
  %v658 = vld [vmem:[%s612 + $0x168] sm:$0xff]
  %v659 = vld [vmem:[%s612 + $0x170] sm:$0xff]
  %v660 = vld [vmem:[%s612 + $0x178] sm:$0xff]
  %v661 = vld [vmem:[%s612 + $0x180] sm:$0xff]
  %v662 = vld [vmem:[%s612 + $0x188] sm:$0xff]
  %v663 = vld [vmem:[%s612 + $0x190] sm:$0xff]
  %v664 = vld [vmem:[%s612 + $0x198] sm:$0xff]
  %v665 = vld [vmem:[%s612 + $0x1a0] sm:$0xff]
  %v666 = vld [vmem:[%s612 + $0x1a8] sm:$0xff]
  %v667 = vld [vmem:[%s612 + $0x1b0] sm:$0xff]
  %v668 = vld [vmem:[%s612 + $0x1b8] sm:$0xff]
  %v669 = vld [vmem:[%s612 + $0x1c0] sm:$0xff]
  %v670 = vld [vmem:[%s612 + $0x1c8] sm:$0xff]
  %v671 = vld [vmem:[%s612 + $0x1d0] sm:$0xff]
  %v672 = vld [vmem:[%s612 + $0x1d8] sm:$0xff]
  %v673 = vld [vmem:[%s612 + $0x1e0] sm:$0xff]
  %v674 = vld [vmem:[%s612 + $0x1e8] sm:$0xff]
  %v675 = vld [vmem:[%s612 + $0x1f0] sm:$0xff]
  %v676 = vld [vmem:[%s612 + $0x1f8] sm:$0xff]
  %v677 = vld [vmem:[%s612 + $0x200] sm:$0xff]
  %v678 = vld [vmem:[%s612 + $0x208] sm:$0xff]
  %v679 = vld [vmem:[%s612 + $0x210] sm:$0xff]
  %v680 = vld [vmem:[%s612 + $0x218] sm:$0xff]
  %v681 = vld [vmem:[%s612 + $0x220] sm:$0xff]
  %v682 = vld [vmem:[%s612 + $0x228] sm:$0xff]
  %v683 = vld [vmem:[%s612 + $0x230] sm:$0xff]
  %v684 = vld [vmem:[%s612 + $0x238] sm:$0xff]
  %v685 = vld [vmem:[%s612 + $0x240] sm:$0xff]
  %v686 = vld [vmem:[%s612 + $0x248] sm:$0xff]
  %v687 = vld [vmem:[%s612 + $0x250] sm:$0xff]
  %v688 = vld [vmem:[%s612 + $0x258] sm:$0xff]
  %v689 = vld [vmem:[%s612 + $0x260] sm:$0xff]
  %v690 = vld [vmem:[%s612 + $0x268] sm:$0xff]
  %v691 = vld [vmem:[%s612 + $0x270] sm:$0xff]
  %v692 = vld [vmem:[%s612 + $0x278] sm:$0xff]
  %v693 = vld [vmem:[%s612 + $0x280] sm:$0xff]
  %v694 = vld [vmem:[%s612 + $0x288] sm:$0xff]
  %v695 = vld [vmem:[%s612 + $0x290] sm:$0xff]
  %v696 = vld [vmem:[%s612 + $0x298] sm:$0xff]
  %v697 = vld [vmem:[%s612 + $0x2a0] sm:$0xff]
  %v698 = vld [vmem:[%s612 + $0x2a8] sm:$0xff]
  %v699 = vld [vmem:[%s612 + $0x2b0] sm:$0xff]
  %v700 = vld [vmem:[%s612 + $0x2b8] sm:$0xff]
  %v701 = vld [vmem:[%s612 + $0x2c0] sm:$0xff]
  %v702 = vld [vmem:[%s612 + $0x2c8] sm:$0xff]
  %v703 = vld [vmem:[%s612 + $0x2d0] sm:$0xff]
  %v704 = vld [vmem:[%s612 + $0x2d8] sm:$0xff]
  %v705 = vld [vmem:[%s612 + $0x2e0] sm:$0xff]
  %v706 = vld [vmem:[%s612 + $0x2e8] sm:$0xff]
  %v707 = vld [vmem:[%s612 + $0x2f0] sm:$0xff]
  %v708 = vld [vmem:[%s612 + $0x2f8] sm:$0xff]
  %vm721 = vcmask 1045504
  %v722 = vrot.slane %v480, 2
  %v723 = vrot.slane %v606, 2
  %v724 = vsel %vm721, %v722, %v723
  %v725 = vrot.slane %v481, 2
  %v726 = vrot.slane %v607, 2
  %v727 = vsel %vm721, %v725, %v726
  %v728 = vrot.slane %v482, 2
  %v729 = vrot.slane %v608, 2
  %v730 = vsel %vm721, %v728, %v729
  %v731 = vrot.slane %v483, 2
  %v732 = vrot.slane %v609, 2
  %v733 = vsel %vm721, %v731, %v732
  %v734 = vrot.slane %v484, 2
  %v735 = vrot.slane %v610, 2
  %v736 = vsel %vm721, %v734, %v735
  %v737 = vrot.slane %v485, 2
  %v738 = vrot.slane %v611, 2
  %v739 = vsel %vm721, %v737, %v738
  %v848 = vunpack.c.l.b16 %v613
  %v849 = vunpack.c.h.b16 %v613
  %v850 = vunpack.c.l.b16 %v614
  %v851 = vunpack.c.h.b16 %v614
  %v852 = vunpack.c.l.b16 %v615
  %v853 = vunpack.c.h.b16 %v615
  %v854 = vunpack.c.l.b16 %v616
  %v855 = vunpack.c.h.b16 %v616
  %v856 = vunpack.c.l.b16 %v617
  %v857 = vunpack.c.h.b16 %v617
  %v858 = vunpack.c.l.b16 %v618
  %v859 = vunpack.c.h.b16 %v618
  %v860 = vunpack.c.l.b16 %v619
  %v861 = vunpack.c.h.b16 %v619
  %v862 = vunpack.c.l.b16 %v620
  %v863 = vunpack.c.h.b16 %v620
  %v864 = vunpack.c.l.b16 %v621
  %v865 = vunpack.c.h.b16 %v621
  %v866 = vunpack.c.l.b16 %v622
  %v867 = vunpack.c.h.b16 %v622
  %v868 = vunpack.c.l.b16 %v623
  %v869 = vunpack.c.h.b16 %v623
  %v870 = vunpack.c.l.b16 %v624
  %v871 = vunpack.c.h.b16 %v624
  %v872 = vunpack.c.l.b16 %v625
  %v873 = vunpack.c.h.b16 %v625
  %v874 = vunpack.c.l.b16 %v626
  %v875 = vunpack.c.h.b16 %v626
  %v876 = vunpack.c.l.b16 %v627
  %v877 = vunpack.c.h.b16 %v627
  %v878 = vunpack.c.l.b16 %v628
  %v879 = vunpack.c.h.b16 %v628
  %v880 = vunpack.c.l.b16 %v629
  %v881 = vunpack.c.h.b16 %v629
  %v882 = vunpack.c.l.b16 %v630
  %v883 = vunpack.c.h.b16 %v630
  %v884 = vunpack.c.l.b16 %v631
  %v885 = vunpack.c.h.b16 %v631
  %v886 = vunpack.c.l.b16 %v632
  %v887 = vunpack.c.h.b16 %v632
  %v888 = vunpack.c.l.b16 %v633
  %v889 = vunpack.c.h.b16 %v633
  %v890 = vunpack.c.l.b16 %v634
  %v891 = vunpack.c.h.b16 %v634
  %v892 = vunpack.c.l.b16 %v635
  %v893 = vunpack.c.h.b16 %v635
  %v894 = vunpack.c.l.b16 %v636
  %v895 = vunpack.c.h.b16 %v636
  %v896 = vunpack.c.l.b16 %v637
  %v897 = vunpack.c.h.b16 %v637
  %v898 = vunpack.c.l.b16 %v638
  %v899 = vunpack.c.h.b16 %v638
  %v900 = vunpack.c.l.b16 %v639
  %v901 = vunpack.c.h.b16 %v639
  %v902 = vunpack.c.l.b16 %v640
  %v903 = vunpack.c.h.b16 %v640
  %v904 = vunpack.c.l.b16 %v641
  %v905 = vunpack.c.h.b16 %v641
  %v906 = vunpack.c.l.b16 %v642
  %v907 = vunpack.c.h.b16 %v642
  %v908 = vunpack.c.l.b16 %v643
  %v909 = vunpack.c.h.b16 %v643
  %v910 = vunpack.c.l.b16 %v644
  %v911 = vunpack.c.h.b16 %v644
  %v912 = vunpack.c.l.b16 %v645
  %v913 = vunpack.c.h.b16 %v645
  %v914 = vunpack.c.l.b16 %v646
  %v915 = vunpack.c.h.b16 %v646
  %v916 = vunpack.c.l.b16 %v647
  %v917 = vunpack.c.h.b16 %v647
  %v918 = vunpack.c.l.b16 %v648
  %v919 = vunpack.c.h.b16 %v648
  %v920 = vunpack.c.l.b16 %v649
  %v921 = vunpack.c.h.b16 %v649
  %v922 = vunpack.c.l.b16 %v650
  %v923 = vunpack.c.h.b16 %v650
  %v924 = vunpack.c.l.b16 %v651
  %v925 = vunpack.c.h.b16 %v651
  %v926 = vunpack.c.l.b16 %v652
  %v927 = vunpack.c.h.b16 %v652
  %v928 = vunpack.c.l.b16 %v653
  %v929 = vunpack.c.h.b16 %v653
  %v930 = vunpack.c.l.b16 %v654
  %v931 = vunpack.c.h.b16 %v654
  %v932 = vunpack.c.l.b16 %v655
  %v933 = vunpack.c.h.b16 %v655
  %v934 = vunpack.c.l.b16 %v656
  %v935 = vunpack.c.h.b16 %v656
  %v936 = vunpack.c.l.b16 %v657
  %v937 = vunpack.c.h.b16 %v657
  %v938 = vunpack.c.l.b16 %v658
  %v939 = vunpack.c.h.b16 %v658
  %v940 = vunpack.c.l.b16 %v659
  %v941 = vunpack.c.h.b16 %v659
  %v942 = vunpack.c.l.b16 %v660
  %v943 = vunpack.c.h.b16 %v660
  %v944 = vunpack.c.l.b16 %v661
  %v945 = vunpack.c.h.b16 %v661
  %v946 = vunpack.c.l.b16 %v662
  %v947 = vunpack.c.h.b16 %v662
  %v948 = vunpack.c.l.b16 %v663
  %v949 = vunpack.c.h.b16 %v663
  %v950 = vunpack.c.l.b16 %v664
  %v951 = vunpack.c.h.b16 %v664
  %v952 = vunpack.c.l.b16 %v665
  %v953 = vunpack.c.h.b16 %v665
  %v954 = vunpack.c.l.b16 %v666
  %v955 = vunpack.c.h.b16 %v666
  %v956 = vunpack.c.l.b16 %v667
  %v957 = vunpack.c.h.b16 %v667
  %v958 = vunpack.c.l.b16 %v668
  %v959 = vunpack.c.h.b16 %v668
  %v960 = vunpack.c.l.b16 %v669
  %v961 = vunpack.c.h.b16 %v669
  %v962 = vunpack.c.l.b16 %v670
  %v963 = vunpack.c.h.b16 %v670
  %v964 = vunpack.c.l.b16 %v671
  %v965 = vunpack.c.h.b16 %v671
  %v966 = vunpack.c.l.b16 %v672
  %v967 = vunpack.c.h.b16 %v672
  %v968 = vunpack.c.l.b16 %v673
  %v969 = vunpack.c.h.b16 %v673
  %v970 = vunpack.c.l.b16 %v674
  %v971 = vunpack.c.h.b16 %v674
  %v972 = vunpack.c.l.b16 %v675
  %v973 = vunpack.c.h.b16 %v675
  %v974 = vunpack.c.l.b16 %v676
  %v975 = vunpack.c.h.b16 %v676
  %v976 = vunpack.c.l.b16 %v677
  %v977 = vunpack.c.h.b16 %v677
  %v978 = vunpack.c.l.b16 %v678
  %v979 = vunpack.c.h.b16 %v678
  %v980 = vunpack.c.l.b16 %v679
  %v981 = vunpack.c.h.b16 %v679
  %v982 = vunpack.c.l.b16 %v680
  %v983 = vunpack.c.h.b16 %v680
  %v984 = vunpack.c.l.b16 %v681
  %v985 = vunpack.c.h.b16 %v681
  %v986 = vunpack.c.l.b16 %v682
  %v987 = vunpack.c.h.b16 %v682
  %v988 = vunpack.c.l.b16 %v683
  %v989 = vunpack.c.h.b16 %v683
  %v990 = vunpack.c.l.b16 %v684
  %v991 = vunpack.c.h.b16 %v684
  %v992 = vunpack.c.l.b16 %v685
  %v993 = vunpack.c.h.b16 %v685
  %v994 = vunpack.c.l.b16 %v686
  %v995 = vunpack.c.h.b16 %v686
  %v996 = vunpack.c.l.b16 %v687
  %v997 = vunpack.c.h.b16 %v687
  %v998 = vunpack.c.l.b16 %v688
  %v999 = vunpack.c.h.b16 %v688
  %v1000 = vunpack.c.l.b16 %v689
  %v1001 = vunpack.c.h.b16 %v689
  %v1002 = vunpack.c.l.b16 %v690
  %v1003 = vunpack.c.h.b16 %v690
  %v1004 = vunpack.c.l.b16 %v691
  %v1005 = vunpack.c.h.b16 %v691
  %v1006 = vunpack.c.l.b16 %v692
  %v1007 = vunpack.c.h.b16 %v692
  %v1008 = vunpack.c.l.b16 %v693
  %v1009 = vunpack.c.h.b16 %v693
  %v1010 = vunpack.c.l.b16 %v694
  %v1011 = vunpack.c.h.b16 %v694
  %v1012 = vunpack.c.l.b16 %v695
  %v1013 = vunpack.c.h.b16 %v695
  %v1014 = vunpack.c.l.b16 %v696
  %v1015 = vunpack.c.h.b16 %v696
  %v1016 = vunpack.c.l.b16 %v697
  %v1017 = vunpack.c.h.b16 %v697
  %v1018 = vunpack.c.l.b16 %v698
  %v1019 = vunpack.c.h.b16 %v698
  %v1020 = vunpack.c.l.b16 %v699
  %v1021 = vunpack.c.h.b16 %v699
  %v1022 = vunpack.c.l.b16 %v700
  %v1023 = vunpack.c.h.b16 %v700
  %v1024 = vunpack.c.l.b16 %v701
  %v1025 = vunpack.c.h.b16 %v701
  %v1026 = vunpack.c.l.b16 %v702
  %v1027 = vunpack.c.h.b16 %v702
  %v1028 = vunpack.c.l.b16 %v703
  %v1029 = vunpack.c.h.b16 %v703
  %v1030 = vunpack.c.l.b16 %v704
  %v1031 = vunpack.c.h.b16 %v704
  %v1032 = vunpack.c.l.b16 %v705
  %v1033 = vunpack.c.h.b16 %v705
  %v1034 = vunpack.c.l.b16 %v706
  %v1035 = vunpack.c.h.b16 %v706
  %v1036 = vunpack.c.l.b16 %v707
  %v1037 = vunpack.c.h.b16 %v707
  %v1038 = vunpack.c.l.b16 %v708
  %v1039 = vunpack.c.h.b16 %v708
  %v1040 = vpack.c.b16 %v850, %v848
  %v1041 = vpack.c.b16 %v851, %v849
  %v1042 = vpack.c.b16 %v854, %v852
  %v1043 = vpack.c.b16 %v855, %v853
  %v1044 = vpack.c.b16 %v858, %v856
  %v1045 = vpack.c.b16 %v859, %v857
  %v1046 = vpack.c.b16 %v862, %v860
  %v1047 = vpack.c.b16 %v863, %v861
  %v1048 = vpack.c.b16 %v866, %v864
  %v1049 = vpack.c.b16 %v867, %v865
  %v1050 = vpack.c.b16 %v870, %v868
  %v1051 = vpack.c.b16 %v871, %v869
  %v1052 = vpack.c.b16 %v874, %v872
  %v1053 = vpack.c.b16 %v875, %v873
  %v1054 = vpack.c.b16 %v878, %v876
  %v1055 = vpack.c.b16 %v879, %v877
  %v1056 = vpack.c.b16 %v882, %v880
  %v1057 = vpack.c.b16 %v883, %v881
  %v1058 = vpack.c.b16 %v886, %v884
  %v1059 = vpack.c.b16 %v887, %v885
  %v1060 = vpack.c.b16 %v890, %v888
  %v1061 = vpack.c.b16 %v891, %v889
  %v1062 = vpack.c.b16 %v894, %v892
  %v1063 = vpack.c.b16 %v895, %v893
  %v1064 = vpack.c.b16 %v898, %v896
  %v1065 = vpack.c.b16 %v899, %v897
  %v1066 = vpack.c.b16 %v902, %v900
  %v1067 = vpack.c.b16 %v903, %v901
  %v1068 = vpack.c.b16 %v906, %v904
  %v1069 = vpack.c.b16 %v907, %v905
  %v1070 = vpack.c.b16 %v910, %v908
  %v1071 = vpack.c.b16 %v911, %v909
  %v1072 = vpack.c.b16 %v914, %v912
  %v1073 = vpack.c.b16 %v915, %v913
  %v1074 = vpack.c.b16 %v918, %v916
  %v1075 = vpack.c.b16 %v919, %v917
  %v1076 = vpack.c.b16 %v922, %v920
  %v1077 = vpack.c.b16 %v923, %v921
  %v1078 = vpack.c.b16 %v926, %v924
  %v1079 = vpack.c.b16 %v927, %v925
  %v1080 = vpack.c.b16 %v930, %v928
  %v1081 = vpack.c.b16 %v931, %v929
  %v1082 = vpack.c.b16 %v934, %v932
  %v1083 = vpack.c.b16 %v935, %v933
  %v1084 = vpack.c.b16 %v938, %v936
  %v1085 = vpack.c.b16 %v939, %v937
  %v1086 = vpack.c.b16 %v942, %v940
  %v1087 = vpack.c.b16 %v943, %v941
  %v1088 = vpack.c.b16 %v946, %v944
  %v1089 = vpack.c.b16 %v947, %v945
  %v1090 = vpack.c.b16 %v950, %v948
  %v1091 = vpack.c.b16 %v951, %v949
  %v1092 = vpack.c.b16 %v954, %v952
  %v1093 = vpack.c.b16 %v955, %v953
  %v1094 = vpack.c.b16 %v958, %v956
  %v1095 = vpack.c.b16 %v959, %v957
  %v1096 = vpack.c.b16 %v962, %v960
  %v1097 = vpack.c.b16 %v963, %v961
  %v1098 = vpack.c.b16 %v966, %v964
  %v1099 = vpack.c.b16 %v967, %v965
  %v1100 = vpack.c.b16 %v970, %v968
  %v1101 = vpack.c.b16 %v971, %v969
  %v1102 = vpack.c.b16 %v974, %v972
  %v1103 = vpack.c.b16 %v975, %v973
  %v1104 = vpack.c.b16 %v978, %v976
  %v1105 = vpack.c.b16 %v979, %v977
  %v1106 = vpack.c.b16 %v982, %v980
  %v1107 = vpack.c.b16 %v983, %v981
  %v1108 = vpack.c.b16 %v986, %v984
  %v1109 = vpack.c.b16 %v987, %v985
  %v1110 = vpack.c.b16 %v990, %v988
  %v1111 = vpack.c.b16 %v991, %v989
  %v1112 = vpack.c.b16 %v994, %v992
  %v1113 = vpack.c.b16 %v995, %v993
  %v1114 = vpack.c.b16 %v998, %v996
  %v1115 = vpack.c.b16 %v999, %v997
  %v1116 = vpack.c.b16 %v1002, %v1000
  %v1117 = vpack.c.b16 %v1003, %v1001
  %v1118 = vpack.c.b16 %v1006, %v1004
  %v1119 = vpack.c.b16 %v1007, %v1005
  %v1120 = vpack.c.b16 %v1010, %v1008
  %v1121 = vpack.c.b16 %v1011, %v1009
  %v1122 = vpack.c.b16 %v1014, %v1012
  %v1123 = vpack.c.b16 %v1015, %v1013
  %v1124 = vpack.c.b16 %v1018, %v1016
  %v1125 = vpack.c.b16 %v1019, %v1017
  %v1126 = vpack.c.b16 %v1022, %v1020
  %v1127 = vpack.c.b16 %v1023, %v1021
  %v1128 = vpack.c.b16 %v1026, %v1024
  %v1129 = vpack.c.b16 %v1027, %v1025
  %v1130 = vpack.c.b16 %v1030, %v1028
  %v1131 = vpack.c.b16 %v1031, %v1029
  %v1132 = vpack.c.b16 %v1034, %v1032
  %v1133 = vpack.c.b16 %v1035, %v1033
  %v1134 = vpack.c.b16 %v1038, %v1036
  %v1135 = vpack.c.b16 %v1039, %v1037
  %1232 = vmatprep.subr.bf16.mxu0 %v1055
  %1233 = vmatpush1.bf16.msra.mxu0 %v1054
  %1234 = vmatprep.subr.bf16.mxu0 %v1053
  %1235 = vmatpush1.bf16.msra.mxu0 %v1052
  %1236 = vmatprep.subr.bf16.mxu0 %v1051
  %1237 = vmatpush1.bf16.msra.mxu0 %v1050
  %1238 = vmatprep.subr.bf16.mxu0 %v1049
  %1239 = vmatpush1.bf16.msra.mxu0 %v1048
  %1240 = vmatprep.subr.bf16.mxu0 %v1047
  %1241 = vmatpush1.bf16.msra.mxu0 %v1046
  %1242 = vmatprep.subr.bf16.mxu0 %v1045
  %1243 = vmatpush1.bf16.msra.mxu0 %v1044
  %1244 = vmatprep.subr.bf16.mxu0 %v1043
  %1245 = vmatpush1.bf16.msra.mxu0 %v1042
  %1246 = vmatprep.subr.bf16.mxu0 %v1041
  %1247 = vmatpush1.bf16.msra.mxu0 %v1040
  %1248 = vmatprep.subr.bf16.mxu0 %v1071
  %1249 = vmatpush2.bf16.msra.mxu0 %v1070
  %1250 = vmatprep.subr.bf16.mxu0 %v1069
  %1251 = vmatpush2.bf16.msra.mxu0 %v1068
  %1252 = vmatprep.subr.bf16.mxu0 %v1067
  %1253 = vmatpush2.bf16.msra.mxu0 %v1066
  %1254 = vmatprep.subr.bf16.mxu0 %v1065
  %1255 = vmatpush2.bf16.msra.mxu0 %v1064
  %1256 = vmatprep.subr.bf16.mxu0 %v1063
  %1257 = vmatpush2.bf16.msra.mxu0 %v1062
  %1258 = vmatprep.subr.bf16.mxu0 %v1061
  %1259 = vmatpush2.bf16.msra.mxu0 %v1060
  %1260 = vmatprep.subr.bf16.mxu0 %v1059
  %1261 = vmatpush2.bf16.msra.mxu0 %v1058
  %1262 = vmatprep.subr.bf16.mxu0 %v1057
  %1263 = vmatpush2.bf16.msra.mxu0 %v1056
  %1264 = vmatprep.mubr.bf16.mxu0 %v727
  %1265 = vmatmul.mubr.bf16.gmra.mxu0 %v724
  %v1266 = vpop.f32.mrf.mxu0
  %v1267 = vadd.f32 0.0, %v1266
  %v1268 = vpop.f32.mrf.mxu0
  %v1269 = vadd.f32 0.0, %v1268
  %v1270 = vpop.f32.mrf.mxu0
  %v1271 = vpop.f32.mrf.mxu0
  %1272 = vmatprep.mubr.bf16.mxu0 %v726
  %1273 = vmatmul.mubr.bf16.gmra.mxu0 %v723
  %v1274 = vpop.f32.mrf.mxu0
  %v1275 = vadd.f32 0.0, %v1274
  %v1276 = vpop.f32.mrf.mxu0
  %v1277 = vadd.f32 0.0, %v1276
  %v1278 = vpop.f32.mrf.mxu0
  %v1279 = vpop.f32.mrf.mxu0
  %1280 = vdwg.mxu0
  %1281 = vmatprep.subr.bf16.mxu0 %v1087
  %1282 = vmatpush1.bf16.msra.mxu0 %v1086
  %1283 = vmatprep.subr.bf16.mxu0 %v1085
  %1284 = vmatpush1.bf16.msra.mxu0 %v1084
  %1285 = vmatprep.subr.bf16.mxu0 %v1083
  %1286 = vmatpush1.bf16.msra.mxu0 %v1082
  %1287 = vmatprep.subr.bf16.mxu0 %v1081
  %1288 = vmatpush1.bf16.msra.mxu0 %v1080
  %1289 = vmatprep.subr.bf16.mxu0 %v1079
  %1290 = vmatpush1.bf16.msra.mxu0 %v1078
  %1291 = vmatprep.subr.bf16.mxu0 %v1077
  %1292 = vmatpush1.bf16.msra.mxu0 %v1076
  %1293 = vmatprep.subr.bf16.mxu0 %v1075
  %1294 = vmatpush1.bf16.msra.mxu0 %v1074
  %1295 = vmatprep.subr.bf16.mxu0 %v1073
  %1296 = vmatpush1.bf16.msra.mxu0 %v1072
  %1297 = vmatprep.subr.bf16.mxu0 %v1103
  %1298 = vmatpush2.bf16.msra.mxu0 %v1102
  %1299 = vmatprep.subr.bf16.mxu0 %v1101
  %1300 = vmatpush2.bf16.msra.mxu0 %v1100
  %1301 = vmatprep.subr.bf16.mxu0 %v1099
  %1302 = vmatpush2.bf16.msra.mxu0 %v1098
  %1303 = vmatprep.subr.bf16.mxu0 %v1097
  %1304 = vmatpush2.bf16.msra.mxu0 %v1096
  %1305 = vmatprep.subr.bf16.mxu0 %v1095
  %1306 = vmatpush2.bf16.msra.mxu0 %v1094
  %1307 = vmatprep.subr.bf16.mxu0 %v1093
  %1308 = vmatpush2.bf16.msra.mxu0 %v1092
  %1309 = vmatprep.subr.bf16.mxu0 %v1091
  %1310 = vmatpush2.bf16.msra.mxu0 %v1090
  %1311 = vmatprep.subr.bf16.mxu0 %v1089
  %1312 = vmatpush2.bf16.msra.mxu0 %v1088
  %1313 = vmatprep.mubr.bf16.mxu0 %v733
  %1314 = vmatmul.mubr.bf16.gmra.mxu0 %v730
  %v1315 = vpop.f32.mrf.mxu0
  %v1316 = vadd.f32 %v1267, %v1315
  %v1317 = vpop.f32.mrf.mxu0
  %v1318 = vadd.f32 %v1269, %v1317
  %v1319 = vpop.f32.mrf.mxu0
  %v1320 = vpop.f32.mrf.mxu0
  %1321 = vmatprep.mubr.bf16.mxu0 %v732
  %1322 = vmatmul.mubr.bf16.gmra.mxu0 %v729
  %v1323 = vpop.f32.mrf.mxu0
  %v1324 = vadd.f32 %v1275, %v1323
  %v1325 = vpop.f32.mrf.mxu0
  %v1326 = vadd.f32 %v1277, %v1325
  %v1327 = vpop.f32.mrf.mxu0
  %v1328 = vpop.f32.mrf.mxu0
  %1329 = vdwg.mxu0
  %1330 = vmatprep.subr.bf16.mxu0 %v1119
  %1331 = vmatpush1.bf16.msra.mxu0 %v1118
  %1332 = vmatprep.subr.bf16.mxu0 %v1117
  %1333 = vmatpush1.bf16.msra.mxu0 %v1116
  %1334 = vmatprep.subr.bf16.mxu0 %v1115
  %1335 = vmatpush1.bf16.msra.mxu0 %v1114
  %1336 = vmatprep.subr.bf16.mxu0 %v1113
  %1337 = vmatpush1.bf16.msra.mxu0 %v1112
  %1338 = vmatprep.subr.bf16.mxu0 %v1111
  %1339 = vmatpush1.bf16.msra.mxu0 %v1110
  %1340 = vmatprep.subr.bf16.mxu0 %v1109
  %1341 = vmatpush1.bf16.msra.mxu0 %v1108
  %1342 = vmatprep.subr.bf16.mxu0 %v1107
  %1343 = vmatpush1.bf16.msra.mxu0 %v1106
  %1344 = vmatprep.subr.bf16.mxu0 %v1105
  %1345 = vmatpush1.bf16.msra.mxu0 %v1104
  %1346 = vmatprep.subr.bf16.mxu0 %v1135
  %1347 = vmatpush2.bf16.msra.mxu0 %v1134
  %1348 = vmatprep.subr.bf16.mxu0 %v1133
  %1349 = vmatpush2.bf16.msra.mxu0 %v1132
  %1350 = vmatprep.subr.bf16.mxu0 %v1131
  %1351 = vmatpush2.bf16.msra.mxu0 %v1130
  %1352 = vmatprep.subr.bf16.mxu0 %v1129
  %1353 = vmatpush2.bf16.msra.mxu0 %v1128
  %1354 = vmatprep.subr.bf16.mxu0 %v1127
  %1355 = vmatpush2.bf16.msra.mxu0 %v1126
  %1356 = vmatprep.subr.bf16.mxu0 %v1125
  %1357 = vmatpush2.bf16.msra.mxu0 %v1124
  %1358 = vmatprep.subr.bf16.mxu0 %v1123
  %1359 = vmatpush2.bf16.msra.mxu0 %v1122
  %1360 = vmatprep.subr.bf16.mxu0 %v1121
  %1361 = vmatpush2.bf16.msra.mxu0 %v1120
  %1362 = vmatprep.mubr.bf16.mxu0 %v739
  %1363 = vmatmul.mubr.bf16.gmra.mxu0 %v736
  %v1364 = vpop.f32.mrf.mxu0
  %v1365 = vadd.f32 %v1316, %v1364
  %v1366 = vpop.f32.mrf.mxu0
  %v1367 = vadd.f32 %v1318, %v1366
  %v1368 = vpop.f32.mrf.mxu0
  %v1369 = vpop.f32.mrf.mxu0
  %1370 = vmatprep.mubr.bf16.mxu0 %v738
  %1371 = vmatmul.mubr.bf16.gmra.mxu0 %v735
  %v1372 = vpop.f32.mrf.mxu0
  %v1373 = vadd.f32 %v1324, %v1372
  %v1374 = vpop.f32.mrf.mxu0
  %v1375 = vadd.f32 %v1326, %v1374
  %v1376 = vpop.f32.mrf.mxu0
  %v1377 = vpop.f32.mrf.mxu0
  %1378 = vdwg.mxu0
  %v1475 = vunpack.c.l.b16 %v492
  %v1476 = vunpack.c.h.b16 %v492
  %v1477 = vunpack.c.l.b16 %v493
  %v1478 = vunpack.c.h.b16 %v493
  %v1479 = vunpack.c.l.b16 %v494
  %v1480 = vunpack.c.h.b16 %v494
  %v1481 = vunpack.c.l.b16 %v495
  %v1482 = vunpack.c.h.b16 %v495
  %v1483 = vunpack.c.l.b16 %v496
  %v1484 = vunpack.c.h.b16 %v496
  %v1485 = vunpack.c.l.b16 %v497
  %v1486 = vunpack.c.h.b16 %v497
  %v1487 = vunpack.c.l.b16 %v498
  %v1488 = vunpack.c.h.b16 %v498
  %v1489 = vunpack.c.l.b16 %v499
  %v1490 = vunpack.c.h.b16 %v499
  %v1491 = vunpack.c.l.b16 %v500
  %v1492 = vunpack.c.h.b16 %v500
  %v1493 = vunpack.c.l.b16 %v501
  %v1494 = vunpack.c.h.b16 %v501
  %v1495 = vunpack.c.l.b16 %v502
  %v1496 = vunpack.c.h.b16 %v502
  %v1497 = vunpack.c.l.b16 %v503
  %v1498 = vunpack.c.h.b16 %v503
  %v1499 = vunpack.c.l.b16 %v504
  %v1500 = vunpack.c.h.b16 %v504
  %v1501 = vunpack.c.l.b16 %v505
  %v1502 = vunpack.c.h.b16 %v505
  %v1503 = vunpack.c.l.b16 %v506
  %v1504 = vunpack.c.h.b16 %v506
  %v1505 = vunpack.c.l.b16 %v507
  %v1506 = vunpack.c.h.b16 %v507
  %v1507 = vunpack.c.l.b16 %v508
  %v1508 = vunpack.c.h.b16 %v508
  %v1509 = vunpack.c.l.b16 %v509
  %v1510 = vunpack.c.h.b16 %v509
  %v1511 = vunpack.c.l.b16 %v510
  %v1512 = vunpack.c.h.b16 %v510
  %v1513 = vunpack.c.l.b16 %v511
  %v1514 = vunpack.c.h.b16 %v511
  %v1515 = vunpack.c.l.b16 %v512
  %v1516 = vunpack.c.h.b16 %v512
  %v1517 = vunpack.c.l.b16 %v513
  %v1518 = vunpack.c.h.b16 %v513
  %v1519 = vunpack.c.l.b16 %v514
  %v1520 = vunpack.c.h.b16 %v514
  %v1521 = vunpack.c.l.b16 %v515
  %v1522 = vunpack.c.h.b16 %v515
  %v1523 = vunpack.c.l.b16 %v516
  %v1524 = vunpack.c.h.b16 %v516
  %v1525 = vunpack.c.l.b16 %v517
  %v1526 = vunpack.c.h.b16 %v517
  %v1527 = vunpack.c.l.b16 %v518
  %v1528 = vunpack.c.h.b16 %v518
  %v1529 = vunpack.c.l.b16 %v519
  %v1530 = vunpack.c.h.b16 %v519
  %v1531 = vunpack.c.l.b16 %v520
  %v1532 = vunpack.c.h.b16 %v520
  %v1533 = vunpack.c.l.b16 %v521
  %v1534 = vunpack.c.h.b16 %v521
  %v1535 = vunpack.c.l.b16 %v522
  %v1536 = vunpack.c.h.b16 %v522
  %v1537 = vunpack.c.l.b16 %v523
  %v1538 = vunpack.c.h.b16 %v523
  %v1539 = vunpack.c.l.b16 %v524
  %v1540 = vunpack.c.h.b16 %v524
  %v1541 = vunpack.c.l.b16 %v525
  %v1542 = vunpack.c.h.b16 %v525
  %v1543 = vunpack.c.l.b16 %v526
  %v1544 = vunpack.c.h.b16 %v526
  %v1545 = vunpack.c.l.b16 %v527
  %v1546 = vunpack.c.h.b16 %v527
  %v1547 = vunpack.c.l.b16 %v528
  %v1548 = vunpack.c.h.b16 %v528
  %v1549 = vunpack.c.l.b16 %v529
  %v1550 = vunpack.c.h.b16 %v529
  %v1551 = vunpack.c.l.b16 %v530
  %v1552 = vunpack.c.h.b16 %v530
  %v1553 = vunpack.c.l.b16 %v531
  %v1554 = vunpack.c.h.b16 %v531
  %v1555 = vunpack.c.l.b16 %v532
  %v1556 = vunpack.c.h.b16 %v532
  %v1557 = vunpack.c.l.b16 %v533
  %v1558 = vunpack.c.h.b16 %v533
  %v1559 = vunpack.c.l.b16 %v534
  %v1560 = vunpack.c.h.b16 %v534
  %v1561 = vunpack.c.l.b16 %v535
  %v1562 = vunpack.c.h.b16 %v535
  %v1563 = vunpack.c.l.b16 %v536
  %v1564 = vunpack.c.h.b16 %v536
  %v1565 = vunpack.c.l.b16 %v537
  %v1566 = vunpack.c.h.b16 %v537
  %v1567 = vunpack.c.l.b16 %v538
  %v1568 = vunpack.c.h.b16 %v538
  %v1569 = vunpack.c.l.b16 %v539
  %v1570 = vunpack.c.h.b16 %v539
  %v1571 = vunpack.c.l.b16 %v540
  %v1572 = vunpack.c.h.b16 %v540
  %v1573 = vunpack.c.l.b16 %v541
  %v1574 = vunpack.c.h.b16 %v541
  %v1575 = vunpack.c.l.b16 %v542
  %v1576 = vunpack.c.h.b16 %v542
  %v1577 = vunpack.c.l.b16 %v543
  %v1578 = vunpack.c.h.b16 %v543
  %v1579 = vunpack.c.l.b16 %v544
  %v1580 = vunpack.c.h.b16 %v544
  %v1581 = vunpack.c.l.b16 %v545
  %v1582 = vunpack.c.h.b16 %v545
  %v1583 = vunpack.c.l.b16 %v546
  %v1584 = vunpack.c.h.b16 %v546
  %v1585 = vunpack.c.l.b16 %v547
  %v1586 = vunpack.c.h.b16 %v547
  %v1587 = vunpack.c.l.b16 %v548
  %v1588 = vunpack.c.h.b16 %v548
  %v1589 = vunpack.c.l.b16 %v549
  %v1590 = vunpack.c.h.b16 %v549
  %v1591 = vunpack.c.l.b16 %v550
  %v1592 = vunpack.c.h.b16 %v550
  %v1593 = vunpack.c.l.b16 %v551
  %v1594 = vunpack.c.h.b16 %v551
  %v1595 = vunpack.c.l.b16 %v552
  %v1596 = vunpack.c.h.b16 %v552
  %v1597 = vunpack.c.l.b16 %v553
  %v1598 = vunpack.c.h.b16 %v553
  %v1599 = vunpack.c.l.b16 %v554
  %v1600 = vunpack.c.h.b16 %v554
  %v1601 = vunpack.c.l.b16 %v555
  %v1602 = vunpack.c.h.b16 %v555
  %v1603 = vunpack.c.l.b16 %v556
  %v1604 = vunpack.c.h.b16 %v556
  %v1605 = vunpack.c.l.b16 %v557
  %v1606 = vunpack.c.h.b16 %v557
  %v1607 = vunpack.c.l.b16 %v558
  %v1608 = vunpack.c.h.b16 %v558
  %v1609 = vunpack.c.l.b16 %v559
  %v1610 = vunpack.c.h.b16 %v559
  %v1611 = vunpack.c.l.b16 %v560
  %v1612 = vunpack.c.h.b16 %v560
  %v1613 = vunpack.c.l.b16 %v561
  %v1614 = vunpack.c.h.b16 %v561
  %v1615 = vunpack.c.l.b16 %v562
  %v1616 = vunpack.c.h.b16 %v562
  %v1617 = vunpack.c.l.b16 %v563
  %v1618 = vunpack.c.h.b16 %v563
  %v1619 = vunpack.c.l.b16 %v564
  %v1620 = vunpack.c.h.b16 %v564
  %v1621 = vunpack.c.l.b16 %v565
  %v1622 = vunpack.c.h.b16 %v565
  %v1623 = vunpack.c.l.b16 %v566
  %v1624 = vunpack.c.h.b16 %v566
  %v1625 = vunpack.c.l.b16 %v567
  %v1626 = vunpack.c.h.b16 %v567
  %v1627 = vunpack.c.l.b16 %v568
  %v1628 = vunpack.c.h.b16 %v568
  %v1629 = vunpack.c.l.b16 %v569
  %v1630 = vunpack.c.h.b16 %v569
  %v1631 = vunpack.c.l.b16 %v570
  %v1632 = vunpack.c.h.b16 %v570
  %v1633 = vunpack.c.l.b16 %v571
  %v1634 = vunpack.c.h.b16 %v571
  %v1635 = vunpack.c.l.b16 %v572
  %v1636 = vunpack.c.h.b16 %v572
  %v1637 = vunpack.c.l.b16 %v573
  %v1638 = vunpack.c.h.b16 %v573
  %v1639 = vunpack.c.l.b16 %v574
  %v1640 = vunpack.c.h.b16 %v574
  %v1641 = vunpack.c.l.b16 %v575
  %v1642 = vunpack.c.h.b16 %v575
  %v1643 = vunpack.c.l.b16 %v576
  %v1644 = vunpack.c.h.b16 %v576
  %v1645 = vunpack.c.l.b16 %v577
  %v1646 = vunpack.c.h.b16 %v577
  %v1647 = vunpack.c.l.b16 %v578
  %v1648 = vunpack.c.h.b16 %v578
  %v1649 = vunpack.c.l.b16 %v579
  %v1650 = vunpack.c.h.b16 %v579
  %v1651 = vunpack.c.l.b16 %v580
  %v1652 = vunpack.c.h.b16 %v580
  %v1653 = vunpack.c.l.b16 %v581
  %v1654 = vunpack.c.h.b16 %v581
  %v1655 = vunpack.c.l.b16 %v582
  %v1656 = vunpack.c.h.b16 %v582
  %v1657 = vunpack.c.l.b16 %v583
  %v1658 = vunpack.c.h.b16 %v583
  %v1659 = vunpack.c.l.b16 %v584
  %v1660 = vunpack.c.h.b16 %v584
  %v1661 = vunpack.c.l.b16 %v585
  %v1662 = vunpack.c.h.b16 %v585
  %v1663 = vunpack.c.l.b16 %v586
  %v1664 = vunpack.c.h.b16 %v586
  %v1665 = vunpack.c.l.b16 %v587
  %v1666 = vunpack.c.h.b16 %v587
  %v1667 = vpack.c.b16 %v1477, %v1475
  %v1668 = vpack.c.b16 %v1478, %v1476
  %v1669 = vpack.c.b16 %v1481, %v1479
  %v1670 = vpack.c.b16 %v1482, %v1480
  %v1671 = vpack.c.b16 %v1485, %v1483
  %v1672 = vpack.c.b16 %v1486, %v1484
  %v1673 = vpack.c.b16 %v1489, %v1487
  %v1674 = vpack.c.b16 %v1490, %v1488
  %v1675 = vpack.c.b16 %v1493, %v1491
  %v1676 = vpack.c.b16 %v1494, %v1492
  %v1677 = vpack.c.b16 %v1497, %v1495
  %v1678 = vpack.c.b16 %v1498, %v1496
  %v1679 = vpack.c.b16 %v1501, %v1499
  %v1680 = vpack.c.b16 %v1502, %v1500
  %v1681 = vpack.c.b16 %v1505, %v1503
  %v1682 = vpack.c.b16 %v1506, %v1504
  %v1683 = vpack.c.b16 %v1509, %v1507
  %v1684 = vpack.c.b16 %v1510, %v1508
  %v1685 = vpack.c.b16 %v1513, %v1511
  %v1686 = vpack.c.b16 %v1514, %v1512
  %v1687 = vpack.c.b16 %v1517, %v1515
  %v1688 = vpack.c.b16 %v1518, %v1516
  %v1689 = vpack.c.b16 %v1521, %v1519
  %v1690 = vpack.c.b16 %v1522, %v1520
  %v1691 = vpack.c.b16 %v1525, %v1523
  %v1692 = vpack.c.b16 %v1526, %v1524
  %v1693 = vpack.c.b16 %v1529, %v1527
  %v1694 = vpack.c.b16 %v1530, %v1528
  %v1695 = vpack.c.b16 %v1533, %v1531
  %v1696 = vpack.c.b16 %v1534, %v1532
  %v1697 = vpack.c.b16 %v1537, %v1535
  %v1698 = vpack.c.b16 %v1538, %v1536
  %v1699 = vpack.c.b16 %v1541, %v1539
  %v1700 = vpack.c.b16 %v1542, %v1540
  %v1701 = vpack.c.b16 %v1545, %v1543
  %v1702 = vpack.c.b16 %v1546, %v1544
  %v1703 = vpack.c.b16 %v1549, %v1547
  %v1704 = vpack.c.b16 %v1550, %v1548
  %v1705 = vpack.c.b16 %v1553, %v1551
  %v1706 = vpack.c.b16 %v1554, %v1552
  %v1707 = vpack.c.b16 %v1557, %v1555
  %v1708 = vpack.c.b16 %v1558, %v1556
  %v1709 = vpack.c.b16 %v1561, %v1559
  %v1710 = vpack.c.b16 %v1562, %v1560
  %v1711 = vpack.c.b16 %v1565, %v1563
  %v1712 = vpack.c.b16 %v1566, %v1564
  %v1713 = vpack.c.b16 %v1569, %v1567
  %v1714 = vpack.c.b16 %v1570, %v1568
  %v1715 = vpack.c.b16 %v1573, %v1571
  %v1716 = vpack.c.b16 %v1574, %v1572
  %v1717 = vpack.c.b16 %v1577, %v1575
  %v1718 = vpack.c.b16 %v1578, %v1576
  %v1719 = vpack.c.b16 %v1581, %v1579
  %v1720 = vpack.c.b16 %v1582, %v1580
  %v1721 = vpack.c.b16 %v1585, %v1583
  %v1722 = vpack.c.b16 %v1586, %v1584
  %v1723 = vpack.c.b16 %v1589, %v1587
  %v1724 = vpack.c.b16 %v1590, %v1588
  %v1725 = vpack.c.b16 %v1593, %v1591
  %v1726 = vpack.c.b16 %v1594, %v1592
  %v1727 = vpack.c.b16 %v1597, %v1595
  %v1728 = vpack.c.b16 %v1598, %v1596
  %v1729 = vpack.c.b16 %v1601, %v1599
  %v1730 = vpack.c.b16 %v1602, %v1600
  %v1731 = vpack.c.b16 %v1605, %v1603
  %v1732 = vpack.c.b16 %v1606, %v1604
  %v1733 = vpack.c.b16 %v1609, %v1607
  %v1734 = vpack.c.b16 %v1610, %v1608
  %v1735 = vpack.c.b16 %v1613, %v1611
  %v1736 = vpack.c.b16 %v1614, %v1612
  %v1737 = vpack.c.b16 %v1617, %v1615
  %v1738 = vpack.c.b16 %v1618, %v1616
  %v1739 = vpack.c.b16 %v1621, %v1619
  %v1740 = vpack.c.b16 %v1622, %v1620
  %v1741 = vpack.c.b16 %v1625, %v1623
  %v1742 = vpack.c.b16 %v1626, %v1624
  %v1743 = vpack.c.b16 %v1629, %v1627
  %v1744 = vpack.c.b16 %v1630, %v1628
  %v1745 = vpack.c.b16 %v1633, %v1631
  %v1746 = vpack.c.b16 %v1634, %v1632
  %v1747 = vpack.c.b16 %v1637, %v1635
  %v1748 = vpack.c.b16 %v1638, %v1636
  %v1749 = vpack.c.b16 %v1641, %v1639
  %v1750 = vpack.c.b16 %v1642, %v1640
  %v1751 = vpack.c.b16 %v1645, %v1643
  %v1752 = vpack.c.b16 %v1646, %v1644
  %v1753 = vpack.c.b16 %v1649, %v1647
  %v1754 = vpack.c.b16 %v1650, %v1648
  %v1755 = vpack.c.b16 %v1653, %v1651
  %v1756 = vpack.c.b16 %v1654, %v1652
  %v1757 = vpack.c.b16 %v1657, %v1655
  %v1758 = vpack.c.b16 %v1658, %v1656
  %v1759 = vpack.c.b16 %v1661, %v1659
  %v1760 = vpack.c.b16 %v1662, %v1660
  %v1761 = vpack.c.b16 %v1665, %v1663
  %v1762 = vpack.c.b16 %v1666, %v1664
  %1859 = vmatprep.subr.bf16.mxu0 %v1682
  %1860 = vmatpush1.bf16.msra.mxu0 %v1681
  %1861 = vmatprep.subr.bf16.mxu0 %v1680
  %1862 = vmatpush1.bf16.msra.mxu0 %v1679
  %1863 = vmatprep.subr.bf16.mxu0 %v1678
  %1864 = vmatpush1.bf16.msra.mxu0 %v1677
  %1865 = vmatprep.subr.bf16.mxu0 %v1676
  %1866 = vmatpush1.bf16.msra.mxu0 %v1675
  %1867 = vmatprep.subr.bf16.mxu0 %v1674
  %1868 = vmatpush1.bf16.msra.mxu0 %v1673
  %1869 = vmatprep.subr.bf16.mxu0 %v1672
  %1870 = vmatpush1.bf16.msra.mxu0 %v1671
  %1871 = vmatprep.subr.bf16.mxu0 %v1670
  %1872 = vmatpush1.bf16.msra.mxu0 %v1669
  %1873 = vmatprep.subr.bf16.mxu0 %v1668
  %1874 = vmatpush1.bf16.msra.mxu0 %v1667
  %1875 = vmatprep.subr.bf16.mxu0 %v1698
  %1876 = vmatpush2.bf16.msra.mxu0 %v1697
  %1877 = vmatprep.subr.bf16.mxu0 %v1696
  %1878 = vmatpush2.bf16.msra.mxu0 %v1695
  %1879 = vmatprep.subr.bf16.mxu0 %v1694
  %1880 = vmatpush2.bf16.msra.mxu0 %v1693
  %1881 = vmatprep.subr.bf16.mxu0 %v1692
  %1882 = vmatpush2.bf16.msra.mxu0 %v1691
  %1883 = vmatprep.subr.bf16.mxu0 %v1690
  %1884 = vmatpush2.bf16.msra.mxu0 %v1689
  %1885 = vmatprep.subr.bf16.mxu0 %v1688
  %1886 = vmatpush2.bf16.msra.mxu0 %v1687
  %1887 = vmatprep.subr.bf16.mxu0 %v1686
  %1888 = vmatpush2.bf16.msra.mxu0 %v1685
  %1889 = vmatprep.subr.bf16.mxu0 %v1684
  %1890 = vmatpush2.bf16.msra.mxu0 %v1683
  %1891 = vmatprep.mubr.bf16.mxu0 %v481
  %1892 = vmatmul.mubr.bf16.gmra.mxu0 %v480
  %v1893 = vpop.f32.mrf.mxu0
  %v1894 = vadd.f32 %v1365, %v1893
  %v1895 = vpop.f32.mrf.mxu0
  %v1896 = vadd.f32 %v1367, %v1895
  %v1897 = vpop.f32.mrf.mxu0
  %v1898 = vpop.f32.mrf.mxu0
  %1899 = vmatprep.mubr.bf16.mxu0 %v487
  %1900 = vmatmul.mubr.bf16.gmra.mxu0 %v486
  %v1901 = vpop.f32.mrf.mxu0
  %v1902 = vadd.f32 %v1373, %v1901
  %v1903 = vpop.f32.mrf.mxu0
  %v1904 = vadd.f32 %v1375, %v1903
  %v1905 = vpop.f32.mrf.mxu0
  %v1906 = vpop.f32.mrf.mxu0
  %1907 = vdwg.mxu0
  %1908 = vmatprep.subr.bf16.mxu0 %v1714
  %1909 = vmatpush1.bf16.msra.mxu0 %v1713
  %1910 = vmatprep.subr.bf16.mxu0 %v1712
  %1911 = vmatpush1.bf16.msra.mxu0 %v1711
  %1912 = vmatprep.subr.bf16.mxu0 %v1710
  %1913 = vmatpush1.bf16.msra.mxu0 %v1709
  %1914 = vmatprep.subr.bf16.mxu0 %v1708
  %1915 = vmatpush1.bf16.msra.mxu0 %v1707
  %1916 = vmatprep.subr.bf16.mxu0 %v1706
  %1917 = vmatpush1.bf16.msra.mxu0 %v1705
  %1918 = vmatprep.subr.bf16.mxu0 %v1704
  %1919 = vmatpush1.bf16.msra.mxu0 %v1703
  %1920 = vmatprep.subr.bf16.mxu0 %v1702
  %1921 = vmatpush1.bf16.msra.mxu0 %v1701
  %1922 = vmatprep.subr.bf16.mxu0 %v1700
  %1923 = vmatpush1.bf16.msra.mxu0 %v1699
  %1924 = vmatprep.subr.bf16.mxu0 %v1730
  %1925 = vmatpush2.bf16.msra.mxu0 %v1729
  %1926 = vmatprep.subr.bf16.mxu0 %v1728
  %1927 = vmatpush2.bf16.msra.mxu0 %v1727
  %1928 = vmatprep.subr.bf16.mxu0 %v1726
  %1929 = vmatpush2.bf16.msra.mxu0 %v1725
  %1930 = vmatprep.subr.bf16.mxu0 %v1724
  %1931 = vmatpush2.bf16.msra.mxu0 %v1723
  %1932 = vmatprep.subr.bf16.mxu0 %v1722
  %1933 = vmatpush2.bf16.msra.mxu0 %v1721
  %1934 = vmatprep.subr.bf16.mxu0 %v1720
  %1935 = vmatpush2.bf16.msra.mxu0 %v1719
  %1936 = vmatprep.subr.bf16.mxu0 %v1718
  %1937 = vmatpush2.bf16.msra.mxu0 %v1717
  %1938 = vmatprep.subr.bf16.mxu0 %v1716
  %1939 = vmatpush2.bf16.msra.mxu0 %v1715
  %1940 = vmatprep.mubr.bf16.mxu0 %v483
  %1941 = vmatmul.mubr.bf16.gmra.mxu0 %v482
  %v1942 = vpop.f32.mrf.mxu0
  %v1943 = vadd.f32 %v1894, %v1942
  %v1944 = vpop.f32.mrf.mxu0
  %v1945 = vadd.f32 %v1896, %v1944
  %v1946 = vpop.f32.mrf.mxu0
  %v1947 = vpop.f32.mrf.mxu0
  %1948 = vmatprep.mubr.bf16.mxu0 %v489
  %1949 = vmatmul.mubr.bf16.gmra.mxu0 %v488
  %v1950 = vpop.f32.mrf.mxu0
  %v1951 = vadd.f32 %v1902, %v1950
  %v1952 = vpop.f32.mrf.mxu0
  %v1953 = vadd.f32 %v1904, %v1952
  %v1954 = vpop.f32.mrf.mxu0
  %v1955 = vpop.f32.mrf.mxu0
  %1956 = vdwg.mxu0
  %1957 = vmatprep.subr.bf16.mxu0 %v1746
  %1958 = vmatpush1.bf16.msra.mxu0 %v1745
  %1959 = vmatprep.subr.bf16.mxu0 %v1744
  %1960 = vmatpush1.bf16.msra.mxu0 %v1743
  %1961 = vmatprep.subr.bf16.mxu0 %v1742
  %1962 = vmatpush1.bf16.msra.mxu0 %v1741
  %1963 = vmatprep.subr.bf16.mxu0 %v1740
  %1964 = vmatpush1.bf16.msra.mxu0 %v1739
  %1965 = vmatprep.subr.bf16.mxu0 %v1738
  %1966 = vmatpush1.bf16.msra.mxu0 %v1737
  %1967 = vmatprep.subr.bf16.mxu0 %v1736
  %1968 = vmatpush1.bf16.msra.mxu0 %v1735
  %1969 = vmatprep.subr.bf16.mxu0 %v1734
  %1970 = vmatpush1.bf16.msra.mxu0 %v1733
  %1971 = vmatprep.subr.bf16.mxu0 %v1732
  %1972 = vmatpush1.bf16.msra.mxu0 %v1731
  %1973 = vmatprep.subr.bf16.mxu0 %v1762
  %1974 = vmatpush2.bf16.msra.mxu0 %v1761
  %1975 = vmatprep.subr.bf16.mxu0 %v1760
  %1976 = vmatpush2.bf16.msra.mxu0 %v1759
  %1977 = vmatprep.subr.bf16.mxu0 %v1758
  %1978 = vmatpush2.bf16.msra.mxu0 %v1757
  %1979 = vmatprep.subr.bf16.mxu0 %v1756
  %1980 = vmatpush2.bf16.msra.mxu0 %v1755
  %1981 = vmatprep.subr.bf16.mxu0 %v1754
  %1982 = vmatpush2.bf16.msra.mxu0 %v1753
  %1983 = vmatprep.subr.bf16.mxu0 %v1752
  %1984 = vmatpush2.bf16.msra.mxu0 %v1751
  %1985 = vmatprep.subr.bf16.mxu0 %v1750
  %1986 = vmatpush2.bf16.msra.mxu0 %v1749
  %1987 = vmatprep.subr.bf16.mxu0 %v1748
  %1988 = vmatpush2.bf16.msra.mxu0 %v1747
  %1989 = vmatprep.mubr.bf16.mxu0 %v485
  %1990 = vmatmul.mubr.bf16.gmra.mxu0 %v484
  %v1991 = vpop.f32.mrf.mxu0
  %v1992 = vadd.f32 %v1943, %v1991
  %v1993 = vpop.f32.mrf.mxu0
  %v1994 = vadd.f32 %v1945, %v1993
  %v1995 = vpop.f32.mrf.mxu0
  %v1996 = vpop.f32.mrf.mxu0
  %1997 = vmatprep.mubr.bf16.mxu0 %v491
  %1998 = vmatmul.mubr.bf16.gmra.mxu0 %v490
  %v1999 = vpop.f32.mrf.mxu0
  %v2000 = vadd.f32 %v1951, %v1999
  %v2001 = vpop.f32.mrf.mxu0
  %v2002 = vadd.f32 %v1953, %v2001
  %v2003 = vpop.f32.mrf.mxu0
  %v2004 = vpop.f32.mrf.mxu0
  %2005 = vdwg.mxu0
  %v2006 = vpack.c.bf16 %v436, %v434
  %v2007 = vpack.c.bf16 %v437, %v435
  %v2008 = vpack.c.bf16 %v591, %v454
  %v2009 = vpack.c.bf16 %v593, %v456
  %v2010 = vpack.c.bf16 %v599, %v471
  %v2011 = vpack.c.bf16 %v601, %v473
  %v2012 = vpack.c.bf16 %v438, %v438
  %v2013 = vpack.c.bf16 %v439, %v439
  %v2014 = vpack.c.bf16 %v590, %v590
  %v2015 = vpack.c.bf16 %v592, %v592
  %v2016 = vpack.c.bf16 %v598, %v598
  %v2017 = vpack.c.bf16 %v600, %v600
  %s2018 = scalar_lea.vmem %s5, 1536
  %v2019 = vld [vmem:[%s2018] sm:$0xff]
  %v2020 = vld [vmem:[%s2018 + $0x8] sm:$0xff]
  %v2021 = vld [vmem:[%s2018 + $0x10] sm:$0xff]
  %v2022 = vld [vmem:[%s2018 + $0x18] sm:$0xff]
  %v2023 = vld [vmem:[%s2018 + $0x20] sm:$0xff]
  %v2024 = vld [vmem:[%s2018 + $0x28] sm:$0xff]
  %v2025 = vld [vmem:[%s2018 + $0x30] sm:$0xff]
  %v2026 = vld [vmem:[%s2018 + $0x38] sm:$0xff]
  %v2027 = vld [vmem:[%s2018 + $0x40] sm:$0xff]
  %v2028 = vld [vmem:[%s2018 + $0x48] sm:$0xff]
  %v2029 = vld [vmem:[%s2018 + $0x50] sm:$0xff]
  %v2030 = vld [vmem:[%s2018 + $0x58] sm:$0xff]
  %v2031 = vld [vmem:[%s2018 + $0x60] sm:$0xff]
  %v2032 = vld [vmem:[%s2018 + $0x68] sm:$0xff]
  %v2033 = vld [vmem:[%s2018 + $0x70] sm:$0xff]
  %v2034 = vld [vmem:[%s2018 + $0x78] sm:$0xff]
  %v2035 = vld [vmem:[%s2018 + $0x80] sm:$0xff]
  %v2036 = vld [vmem:[%s2018 + $0x88] sm:$0xff]
  %v2037 = vld [vmem:[%s2018 + $0x90] sm:$0xff]
  %v2038 = vld [vmem:[%s2018 + $0x98] sm:$0xff]
  %v2039 = vld [vmem:[%s2018 + $0xa0] sm:$0xff]
  %v2040 = vld [vmem:[%s2018 + $0xa8] sm:$0xff]
  %v2041 = vld [vmem:[%s2018 + $0xb0] sm:$0xff]
  %v2042 = vld [vmem:[%s2018 + $0xb8] sm:$0xff]
  %v2043 = vld [vmem:[%s2018 + $0xc0] sm:$0xff]
  %v2044 = vld [vmem:[%s2018 + $0xc8] sm:$0xff]
  %v2045 = vld [vmem:[%s2018 + $0xd0] sm:$0xff]
  %v2046 = vld [vmem:[%s2018 + $0xd8] sm:$0xff]
  %v2047 = vld [vmem:[%s2018 + $0xe0] sm:$0xff]
  %v2048 = vld [vmem:[%s2018 + $0xe8] sm:$0xff]
  %v2049 = vld [vmem:[%s2018 + $0xf0] sm:$0xff]
  %v2050 = vld [vmem:[%s2018 + $0xf8] sm:$0xff]
  %v2051 = vld [vmem:[%s2018 + $0x100] sm:$0xff]
  %v2052 = vld [vmem:[%s2018 + $0x108] sm:$0xff]
  %v2053 = vld [vmem:[%s2018 + $0x110] sm:$0xff]
  %v2054 = vld [vmem:[%s2018 + $0x118] sm:$0xff]
  %v2055 = vld [vmem:[%s2018 + $0x120] sm:$0xff]
  %v2056 = vld [vmem:[%s2018 + $0x128] sm:$0xff]
  %v2057 = vld [vmem:[%s2018 + $0x130] sm:$0xff]
  %v2058 = vld [vmem:[%s2018 + $0x138] sm:$0xff]
  %v2059 = vld [vmem:[%s2018 + $0x140] sm:$0xff]
  %v2060 = vld [vmem:[%s2018 + $0x148] sm:$0xff]
  %v2061 = vld [vmem:[%s2018 + $0x150] sm:$0xff]
  %v2062 = vld [vmem:[%s2018 + $0x158] sm:$0xff]
  %v2063 = vld [vmem:[%s2018 + $0x160] sm:$0xff]
  %v2064 = vld [vmem:[%s2018 + $0x168] sm:$0xff]
  %v2065 = vld [vmem:[%s2018 + $0x170] sm:$0xff]
  %v2066 = vld [vmem:[%s2018 + $0x178] sm:$0xff]
  %v2067 = vld [vmem:[%s2018 + $0x180] sm:$0xff]
  %v2068 = vld [vmem:[%s2018 + $0x188] sm:$0xff]
  %v2069 = vld [vmem:[%s2018 + $0x190] sm:$0xff]
  %v2070 = vld [vmem:[%s2018 + $0x198] sm:$0xff]
  %v2071 = vld [vmem:[%s2018 + $0x1a0] sm:$0xff]
  %v2072 = vld [vmem:[%s2018 + $0x1a8] sm:$0xff]
  %v2073 = vld [vmem:[%s2018 + $0x1b0] sm:$0xff]
  %v2074 = vld [vmem:[%s2018 + $0x1b8] sm:$0xff]
  %v2075 = vld [vmem:[%s2018 + $0x1c0] sm:$0xff]
  %v2076 = vld [vmem:[%s2018 + $0x1c8] sm:$0xff]
  %v2077 = vld [vmem:[%s2018 + $0x1d0] sm:$0xff]
  %v2078 = vld [vmem:[%s2018 + $0x1d8] sm:$0xff]
  %v2079 = vld [vmem:[%s2018 + $0x1e0] sm:$0xff]
  %v2080 = vld [vmem:[%s2018 + $0x1e8] sm:$0xff]
  %v2081 = vld [vmem:[%s2018 + $0x1f0] sm:$0xff]
  %v2082 = vld [vmem:[%s2018 + $0x1f8] sm:$0xff]
  %v2083 = vld [vmem:[%s2018 + $0x200] sm:$0xff]
  %v2084 = vld [vmem:[%s2018 + $0x208] sm:$0xff]
  %v2085 = vld [vmem:[%s2018 + $0x210] sm:$0xff]
  %v2086 = vld [vmem:[%s2018 + $0x218] sm:$0xff]
  %v2087 = vld [vmem:[%s2018 + $0x220] sm:$0xff]
  %v2088 = vld [vmem:[%s2018 + $0x228] sm:$0xff]
  %v2089 = vld [vmem:[%s2018 + $0x230] sm:$0xff]
  %v2090 = vld [vmem:[%s2018 + $0x238] sm:$0xff]
  %v2091 = vld [vmem:[%s2018 + $0x240] sm:$0xff]
  %v2092 = vld [vmem:[%s2018 + $0x248] sm:$0xff]
  %v2093 = vld [vmem:[%s2018 + $0x250] sm:$0xff]
  %v2094 = vld [vmem:[%s2018 + $0x258] sm:$0xff]
  %v2095 = vld [vmem:[%s2018 + $0x260] sm:$0xff]
  %v2096 = vld [vmem:[%s2018 + $0x268] sm:$0xff]
  %v2097 = vld [vmem:[%s2018 + $0x270] sm:$0xff]
  %v2098 = vld [vmem:[%s2018 + $0x278] sm:$0xff]
  %v2099 = vld [vmem:[%s2018 + $0x280] sm:$0xff]
  %v2100 = vld [vmem:[%s2018 + $0x288] sm:$0xff]
  %v2101 = vld [vmem:[%s2018 + $0x290] sm:$0xff]
  %v2102 = vld [vmem:[%s2018 + $0x298] sm:$0xff]
  %v2103 = vld [vmem:[%s2018 + $0x2a0] sm:$0xff]
  %v2104 = vld [vmem:[%s2018 + $0x2a8] sm:$0xff]
  %v2105 = vld [vmem:[%s2018 + $0x2b0] sm:$0xff]
  %v2106 = vld [vmem:[%s2018 + $0x2b8] sm:$0xff]
  %v2107 = vld [vmem:[%s2018 + $0x2c0] sm:$0xff]
  %v2108 = vld [vmem:[%s2018 + $0x2c8] sm:$0xff]
  %v2109 = vld [vmem:[%s2018 + $0x2d0] sm:$0xff]
  %v2110 = vld [vmem:[%s2018 + $0x2d8] sm:$0xff]
  %v2111 = vld [vmem:[%s2018 + $0x2e0] sm:$0xff]
  %v2112 = vld [vmem:[%s2018 + $0x2e8] sm:$0xff]
  %v2113 = vld [vmem:[%s2018 + $0x2f0] sm:$0xff]
  %v2114 = vld [vmem:[%s2018 + $0x2f8] sm:$0xff]
  %v2211 = vunpack.c.l.b16 %v2019
  %v2212 = vunpack.c.h.b16 %v2019
  %v2213 = vunpack.c.l.b16 %v2020
  %v2214 = vunpack.c.h.b16 %v2020
  %v2215 = vunpack.c.l.b16 %v2021
  %v2216 = vunpack.c.h.b16 %v2021
  %v2217 = vunpack.c.l.b16 %v2022
  %v2218 = vunpack.c.h.b16 %v2022
  %v2219 = vunpack.c.l.b16 %v2023
  %v2220 = vunpack.c.h.b16 %v2023
  %v2221 = vunpack.c.l.b16 %v2024
  %v2222 = vunpack.c.h.b16 %v2024
  %v2223 = vunpack.c.l.b16 %v2025
  %v2224 = vunpack.c.h.b16 %v2025
  %v2225 = vunpack.c.l.b16 %v2026
  %v2226 = vunpack.c.h.b16 %v2026
  %v2227 = vunpack.c.l.b16 %v2027
  %v2228 = vunpack.c.h.b16 %v2027
  %v2229 = vunpack.c.l.b16 %v2028
  %v2230 = vunpack.c.h.b16 %v2028
  %v2231 = vunpack.c.l.b16 %v2029
  %v2232 = vunpack.c.h.b16 %v2029
  %v2233 = vunpack.c.l.b16 %v2030
  %v2234 = vunpack.c.h.b16 %v2030
  %v2235 = vunpack.c.l.b16 %v2031
  %v2236 = vunpack.c.h.b16 %v2031
  %v2237 = vunpack.c.l.b16 %v2032
  %v2238 = vunpack.c.h.b16 %v2032
  %v2239 = vunpack.c.l.b16 %v2033
  %v2240 = vunpack.c.h.b16 %v2033
  %v2241 = vunpack.c.l.b16 %v2034
  %v2242 = vunpack.c.h.b16 %v2034
  %v2243 = vunpack.c.l.b16 %v2035
  %v2244 = vunpack.c.h.b16 %v2035
  %v2245 = vunpack.c.l.b16 %v2036
  %v2246 = vunpack.c.h.b16 %v2036
  %v2247 = vunpack.c.l.b16 %v2037
  %v2248 = vunpack.c.h.b16 %v2037
  %v2249 = vunpack.c.l.b16 %v2038
  %v2250 = vunpack.c.h.b16 %v2038
  %v2251 = vunpack.c.l.b16 %v2039
  %v2252 = vunpack.c.h.b16 %v2039
  %v2253 = vunpack.c.l.b16 %v2040
  %v2254 = vunpack.c.h.b16 %v2040
  %v2255 = vunpack.c.l.b16 %v2041
  %v2256 = vunpack.c.h.b16 %v2041
  %v2257 = vunpack.c.l.b16 %v2042
  %v2258 = vunpack.c.h.b16 %v2042
  %v2259 = vunpack.c.l.b16 %v2043
  %v2260 = vunpack.c.h.b16 %v2043
  %v2261 = vunpack.c.l.b16 %v2044
  %v2262 = vunpack.c.h.b16 %v2044
  %v2263 = vunpack.c.l.b16 %v2045
  %v2264 = vunpack.c.h.b16 %v2045
  %v2265 = vunpack.c.l.b16 %v2046
  %v2266 = vunpack.c.h.b16 %v2046
  %v2267 = vunpack.c.l.b16 %v2047
  %v2268 = vunpack.c.h.b16 %v2047
  %v2269 = vunpack.c.l.b16 %v2048
  %v2270 = vunpack.c.h.b16 %v2048
  %v2271 = vunpack.c.l.b16 %v2049
  %v2272 = vunpack.c.h.b16 %v2049
  %v2273 = vunpack.c.l.b16 %v2050
  %v2274 = vunpack.c.h.b16 %v2050
  %v2275 = vunpack.c.l.b16 %v2051
  %v2276 = vunpack.c.h.b16 %v2051
  %v2277 = vunpack.c.l.b16 %v2052
  %v2278 = vunpack.c.h.b16 %v2052
  %v2279 = vunpack.c.l.b16 %v2053
  %v2280 = vunpack.c.h.b16 %v2053
  %v2281 = vunpack.c.l.b16 %v2054
  %v2282 = vunpack.c.h.b16 %v2054
  %v2283 = vunpack.c.l.b16 %v2055
  %v2284 = vunpack.c.h.b16 %v2055
  %v2285 = vunpack.c.l.b16 %v2056
  %v2286 = vunpack.c.h.b16 %v2056
  %v2287 = vunpack.c.l.b16 %v2057
  %v2288 = vunpack.c.h.b16 %v2057
  %v2289 = vunpack.c.l.b16 %v2058
  %v2290 = vunpack.c.h.b16 %v2058
  %v2291 = vunpack.c.l.b16 %v2059
  %v2292 = vunpack.c.h.b16 %v2059
  %v2293 = vunpack.c.l.b16 %v2060
  %v2294 = vunpack.c.h.b16 %v2060
  %v2295 = vunpack.c.l.b16 %v2061
  %v2296 = vunpack.c.h.b16 %v2061
  %v2297 = vunpack.c.l.b16 %v2062
  %v2298 = vunpack.c.h.b16 %v2062
  %v2299 = vunpack.c.l.b16 %v2063
  %v2300 = vunpack.c.h.b16 %v2063
  %v2301 = vunpack.c.l.b16 %v2064
  %v2302 = vunpack.c.h.b16 %v2064
  %v2303 = vunpack.c.l.b16 %v2065
  %v2304 = vunpack.c.h.b16 %v2065
  %v2305 = vunpack.c.l.b16 %v2066
  %v2306 = vunpack.c.h.b16 %v2066
  %v2307 = vunpack.c.l.b16 %v2067
  %v2308 = vunpack.c.h.b16 %v2067
  %v2309 = vunpack.c.l.b16 %v2068
  %v2310 = vunpack.c.h.b16 %v2068
  %v2311 = vunpack.c.l.b16 %v2069
  %v2312 = vunpack.c.h.b16 %v2069
  %v2313 = vunpack.c.l.b16 %v2070
  %v2314 = vunpack.c.h.b16 %v2070
  %v2315 = vunpack.c.l.b16 %v2071
  %v2316 = vunpack.c.h.b16 %v2071
  %v2317 = vunpack.c.l.b16 %v2072
  %v2318 = vunpack.c.h.b16 %v2072
  %v2319 = vunpack.c.l.b16 %v2073
  %v2320 = vunpack.c.h.b16 %v2073
  %v2321 = vunpack.c.l.b16 %v2074
  %v2322 = vunpack.c.h.b16 %v2074
  %v2323 = vunpack.c.l.b16 %v2075
  %v2324 = vunpack.c.h.b16 %v2075
  %v2325 = vunpack.c.l.b16 %v2076
  %v2326 = vunpack.c.h.b16 %v2076
  %v2327 = vunpack.c.l.b16 %v2077
  %v2328 = vunpack.c.h.b16 %v2077
  %v2329 = vunpack.c.l.b16 %v2078
  %v2330 = vunpack.c.h.b16 %v2078
  %v2331 = vunpack.c.l.b16 %v2079
  %v2332 = vunpack.c.h.b16 %v2079
  %v2333 = vunpack.c.l.b16 %v2080
  %v2334 = vunpack.c.h.b16 %v2080
  %v2335 = vunpack.c.l.b16 %v2081
  %v2336 = vunpack.c.h.b16 %v2081
  %v2337 = vunpack.c.l.b16 %v2082
  %v2338 = vunpack.c.h.b16 %v2082
  %v2339 = vunpack.c.l.b16 %v2083
  %v2340 = vunpack.c.h.b16 %v2083
  %v2341 = vunpack.c.l.b16 %v2084
  %v2342 = vunpack.c.h.b16 %v2084
  %v2343 = vunpack.c.l.b16 %v2085
  %v2344 = vunpack.c.h.b16 %v2085
  %v2345 = vunpack.c.l.b16 %v2086
  %v2346 = vunpack.c.h.b16 %v2086
  %v2347 = vunpack.c.l.b16 %v2087
  %v2348 = vunpack.c.h.b16 %v2087
  %v2349 = vunpack.c.l.b16 %v2088
  %v2350 = vunpack.c.h.b16 %v2088
  %v2351 = vunpack.c.l.b16 %v2089
  %v2352 = vunpack.c.h.b16 %v2089
  %v2353 = vunpack.c.l.b16 %v2090
  %v2354 = vunpack.c.h.b16 %v2090
  %v2355 = vunpack.c.l.b16 %v2091
  %v2356 = vunpack.c.h.b16 %v2091
  %v2357 = vunpack.c.l.b16 %v2092
  %v2358 = vunpack.c.h.b16 %v2092
  %v2359 = vunpack.c.l.b16 %v2093
  %v2360 = vunpack.c.h.b16 %v2093
  %v2361 = vunpack.c.l.b16 %v2094
  %v2362 = vunpack.c.h.b16 %v2094
  %v2363 = vunpack.c.l.b16 %v2095
  %v2364 = vunpack.c.h.b16 %v2095
  %v2365 = vunpack.c.l.b16 %v2096
  %v2366 = vunpack.c.h.b16 %v2096
  %v2367 = vunpack.c.l.b16 %v2097
  %v2368 = vunpack.c.h.b16 %v2097
  %v2369 = vunpack.c.l.b16 %v2098
  %v2370 = vunpack.c.h.b16 %v2098
  %v2371 = vunpack.c.l.b16 %v2099
  %v2372 = vunpack.c.h.b16 %v2099
  %v2373 = vunpack.c.l.b16 %v2100
  %v2374 = vunpack.c.h.b16 %v2100
  %v2375 = vunpack.c.l.b16 %v2101
  %v2376 = vunpack.c.h.b16 %v2101
  %v2377 = vunpack.c.l.b16 %v2102
  %v2378 = vunpack.c.h.b16 %v2102
  %v2379 = vunpack.c.l.b16 %v2103
  %v2380 = vunpack.c.h.b16 %v2103
  %v2381 = vunpack.c.l.b16 %v2104
  %v2382 = vunpack.c.h.b16 %v2104
  %v2383 = vunpack.c.l.b16 %v2105
  %v2384 = vunpack.c.h.b16 %v2105
  %v2385 = vunpack.c.l.b16 %v2106
  %v2386 = vunpack.c.h.b16 %v2106
  %v2387 = vunpack.c.l.b16 %v2107
  %v2388 = vunpack.c.h.b16 %v2107
  %v2389 = vunpack.c.l.b16 %v2108
  %v2390 = vunpack.c.h.b16 %v2108
  %v2391 = vunpack.c.l.b16 %v2109
  %v2392 = vunpack.c.h.b16 %v2109
  %v2393 = vunpack.c.l.b16 %v2110
  %v2394 = vunpack.c.h.b16 %v2110
  %v2395 = vunpack.c.l.b16 %v2111
  %v2396 = vunpack.c.h.b16 %v2111
  %v2397 = vunpack.c.l.b16 %v2112
  %v2398 = vunpack.c.h.b16 %v2112
  %v2399 = vunpack.c.l.b16 %v2113
  %v2400 = vunpack.c.h.b16 %v2113
  %v2401 = vunpack.c.l.b16 %v2114
  %v2402 = vunpack.c.h.b16 %v2114
  %v2403 = vpack.c.b16 %v2213, %v2211
  %v2404 = vpack.c.b16 %v2214, %v2212
  %v2405 = vpack.c.b16 %v2217, %v2215
  %v2406 = vpack.c.b16 %v2218, %v2216
  %v2407 = vpack.c.b16 %v2221, %v2219
  %v2408 = vpack.c.b16 %v2222, %v2220
  %v2409 = vpack.c.b16 %v2225, %v2223
  %v2410 = vpack.c.b16 %v2226, %v2224
  %v2411 = vpack.c.b16 %v2229, %v2227
  %v2412 = vpack.c.b16 %v2230, %v2228
  %v2413 = vpack.c.b16 %v2233, %v2231
  %v2414 = vpack.c.b16 %v2234, %v2232
  %v2415 = vpack.c.b16 %v2237, %v2235
  %v2416 = vpack.c.b16 %v2238, %v2236
  %v2417 = vpack.c.b16 %v2241, %v2239
  %v2418 = vpack.c.b16 %v2242, %v2240
  %v2419 = vpack.c.b16 %v2245, %v2243
  %v2420 = vpack.c.b16 %v2246, %v2244
  %v2421 = vpack.c.b16 %v2249, %v2247
  %v2422 = vpack.c.b16 %v2250, %v2248
  %v2423 = vpack.c.b16 %v2253, %v2251
  %v2424 = vpack.c.b16 %v2254, %v2252
  %v2425 = vpack.c.b16 %v2257, %v2255
  %v2426 = vpack.c.b16 %v2258, %v2256
  %v2427 = vpack.c.b16 %v2261, %v2259
  %v2428 = vpack.c.b16 %v2262, %v2260
  %v2429 = vpack.c.b16 %v2265, %v2263
  %v2430 = vpack.c.b16 %v2266, %v2264
  %v2431 = vpack.c.b16 %v2269, %v2267
  %v2432 = vpack.c.b16 %v2270, %v2268
  %v2433 = vpack.c.b16 %v2273, %v2271
  %v2434 = vpack.c.b16 %v2274, %v2272
  %v2435 = vpack.c.b16 %v2277, %v2275
  %v2436 = vpack.c.b16 %v2278, %v2276
  %v2437 = vpack.c.b16 %v2281, %v2279
  %v2438 = vpack.c.b16 %v2282, %v2280
  %v2439 = vpack.c.b16 %v2285, %v2283
  %v2440 = vpack.c.b16 %v2286, %v2284
  %v2441 = vpack.c.b16 %v2289, %v2287
  %v2442 = vpack.c.b16 %v2290, %v2288
  %v2443 = vpack.c.b16 %v2293, %v2291
  %v2444 = vpack.c.b16 %v2294, %v2292
  %v2445 = vpack.c.b16 %v2297, %v2295
  %v2446 = vpack.c.b16 %v2298, %v2296
  %v2447 = vpack.c.b16 %v2301, %v2299
  %v2448 = vpack.c.b16 %v2302, %v2300
  %v2449 = vpack.c.b16 %v2305, %v2303
  %v2450 = vpack.c.b16 %v2306, %v2304
  %v2451 = vpack.c.b16 %v2309, %v2307
  %v2452 = vpack.c.b16 %v2310, %v2308
  %v2453 = vpack.c.b16 %v2313, %v2311
  %v2454 = vpack.c.b16 %v2314, %v2312
  %v2455 = vpack.c.b16 %v2317, %v2315
  %v2456 = vpack.c.b16 %v2318, %v2316
  %v2457 = vpack.c.b16 %v2321, %v2319
  %v2458 = vpack.c.b16 %v2322, %v2320
  %v2459 = vpack.c.b16 %v2325, %v2323
  %v2460 = vpack.c.b16 %v2326, %v2324
  %v2461 = vpack.c.b16 %v2329, %v2327
  %v2462 = vpack.c.b16 %v2330, %v2328
  %v2463 = vpack.c.b16 %v2333, %v2331
  %v2464 = vpack.c.b16 %v2334, %v2332
  %v2465 = vpack.c.b16 %v2337, %v2335
  %v2466 = vpack.c.b16 %v2338, %v2336
  %v2467 = vpack.c.b16 %v2341, %v2339
  %v2468 = vpack.c.b16 %v2342, %v2340
  %v2469 = vpack.c.b16 %v2345, %v2343
  %v2470 = vpack.c.b16 %v2346, %v2344
  %v2471 = vpack.c.b16 %v2349, %v2347
  %v2472 = vpack.c.b16 %v2350, %v2348
  %v2473 = vpack.c.b16 %v2353, %v2351
  %v2474 = vpack.c.b16 %v2354, %v2352
  %v2475 = vpack.c.b16 %v2357, %v2355
  %v2476 = vpack.c.b16 %v2358, %v2356
  %v2477 = vpack.c.b16 %v2361, %v2359
  %v2478 = vpack.c.b16 %v2362, %v2360
  %v2479 = vpack.c.b16 %v2365, %v2363
  %v2480 = vpack.c.b16 %v2366, %v2364
  %v2481 = vpack.c.b16 %v2369, %v2367
  %v2482 = vpack.c.b16 %v2370, %v2368
  %v2483 = vpack.c.b16 %v2373, %v2371
  %v2484 = vpack.c.b16 %v2374, %v2372
  %v2485 = vpack.c.b16 %v2377, %v2375
  %v2486 = vpack.c.b16 %v2378, %v2376
  %v2487 = vpack.c.b16 %v2381, %v2379
  %v2488 = vpack.c.b16 %v2382, %v2380
  %v2489 = vpack.c.b16 %v2385, %v2383
  %v2490 = vpack.c.b16 %v2386, %v2384
  %v2491 = vpack.c.b16 %v2389, %v2387
  %v2492 = vpack.c.b16 %v2390, %v2388
  %v2493 = vpack.c.b16 %v2393, %v2391
  %v2494 = vpack.c.b16 %v2394, %v2392
  %v2495 = vpack.c.b16 %v2397, %v2395
  %v2496 = vpack.c.b16 %v2398, %v2396
  %v2497 = vpack.c.b16 %v2401, %v2399
  %v2498 = vpack.c.b16 %v2402, %v2400
  %2595 = vmatprep.subr.bf16.mxu0 %v2418
  %2596 = vmatpush1.bf16.msra.mxu0 %v2417
  %2597 = vmatprep.subr.bf16.mxu0 %v2416
  %2598 = vmatpush1.bf16.msra.mxu0 %v2415
  %2599 = vmatprep.subr.bf16.mxu0 %v2414
  %2600 = vmatpush1.bf16.msra.mxu0 %v2413
  %2601 = vmatprep.subr.bf16.mxu0 %v2412
  %2602 = vmatpush1.bf16.msra.mxu0 %v2411
  %2603 = vmatprep.subr.bf16.mxu0 %v2410
  %2604 = vmatpush1.bf16.msra.mxu0 %v2409
  %2605 = vmatprep.subr.bf16.mxu0 %v2408
  %2606 = vmatpush1.bf16.msra.mxu0 %v2407
  %2607 = vmatprep.subr.bf16.mxu0 %v2406
  %2608 = vmatpush1.bf16.msra.mxu0 %v2405
  %2609 = vmatprep.subr.bf16.mxu0 %v2404
  %2610 = vmatpush1.bf16.msra.mxu0 %v2403
  %2611 = vmatprep.subr.bf16.mxu0 %v2434
  %2612 = vmatpush2.bf16.msra.mxu0 %v2433
  %2613 = vmatprep.subr.bf16.mxu0 %v2432
  %2614 = vmatpush2.bf16.msra.mxu0 %v2431
  %2615 = vmatprep.subr.bf16.mxu0 %v2430
  %2616 = vmatpush2.bf16.msra.mxu0 %v2429
  %2617 = vmatprep.subr.bf16.mxu0 %v2428
  %2618 = vmatpush2.bf16.msra.mxu0 %v2427
  %2619 = vmatprep.subr.bf16.mxu0 %v2426
  %2620 = vmatpush2.bf16.msra.mxu0 %v2425
  %2621 = vmatprep.subr.bf16.mxu0 %v2424
  %2622 = vmatpush2.bf16.msra.mxu0 %v2423
  %2623 = vmatprep.subr.bf16.mxu0 %v2422
  %2624 = vmatpush2.bf16.msra.mxu0 %v2421
  %2625 = vmatprep.subr.bf16.mxu0 %v2420
  %2626 = vmatpush2.bf16.msra.mxu0 %v2419
  %2627 = vmatprep.mubr.bf16.mxu0 %v2007
  %2628 = vmatmul.mubr.bf16.gmra.mxu0 %v2006
  %v2629 = vpop.f32.mrf.mxu0
  %v2630 = vadd.f32 0.0, %v2629
  %v2631 = vpop.f32.mrf.mxu0
  %v2632 = vadd.f32 0.0, %v2631
  %v2633 = vpop.f32.mrf.mxu0
  %v2634 = vpop.f32.mrf.mxu0
  %2635 = vmatprep.mubr.bf16.mxu0 %v2013
  %2636 = vmatmul.mubr.bf16.gmra.mxu0 %v2012
  %v2637 = vpop.f32.mrf.mxu0
  %v2638 = vadd.f32 0.0, %v2637
  %v2639 = vpop.f32.mrf.mxu0
  %v2640 = vadd.f32 0.0, %v2639
  %v2641 = vpop.f32.mrf.mxu0
  %v2642 = vpop.f32.mrf.mxu0
  %2643 = vdwg.mxu0
  %2644 = vmatprep.subr.bf16.mxu0 %v2450
  %2645 = vmatpush1.bf16.msra.mxu0 %v2449
  %2646 = vmatprep.subr.bf16.mxu0 %v2448
  %2647 = vmatpush1.bf16.msra.mxu0 %v2447
  %2648 = vmatprep.subr.bf16.mxu0 %v2446
  %2649 = vmatpush1.bf16.msra.mxu0 %v2445
  %2650 = vmatprep.subr.bf16.mxu0 %v2444
  %2651 = vmatpush1.bf16.msra.mxu0 %v2443
  %2652 = vmatprep.subr.bf16.mxu0 %v2442
  %2653 = vmatpush1.bf16.msra.mxu0 %v2441
  %2654 = vmatprep.subr.bf16.mxu0 %v2440
  %2655 = vmatpush1.bf16.msra.mxu0 %v2439
  %2656 = vmatprep.subr.bf16.mxu0 %v2438
  %2657 = vmatpush1.bf16.msra.mxu0 %v2437
  %2658 = vmatprep.subr.bf16.mxu0 %v2436
  %2659 = vmatpush1.bf16.msra.mxu0 %v2435
  %2660 = vmatprep.subr.bf16.mxu0 %v2466
  %2661 = vmatpush2.bf16.msra.mxu0 %v2465
  %2662 = vmatprep.subr.bf16.mxu0 %v2464
  %2663 = vmatpush2.bf16.msra.mxu0 %v2463
  %2664 = vmatprep.subr.bf16.mxu0 %v2462
  %2665 = vmatpush2.bf16.msra.mxu0 %v2461
  %2666 = vmatprep.subr.bf16.mxu0 %v2460
  %2667 = vmatpush2.bf16.msra.mxu0 %v2459
  %2668 = vmatprep.subr.bf16.mxu0 %v2458
  %2669 = vmatpush2.bf16.msra.mxu0 %v2457
  %2670 = vmatprep.subr.bf16.mxu0 %v2456
  %2671 = vmatpush2.bf16.msra.mxu0 %v2455
  %2672 = vmatprep.subr.bf16.mxu0 %v2454
  %2673 = vmatpush2.bf16.msra.mxu0 %v2453
  %2674 = vmatprep.subr.bf16.mxu0 %v2452
  %2675 = vmatpush2.bf16.msra.mxu0 %v2451
  %2676 = vmatprep.mubr.bf16.mxu0 %v2009
  %2677 = vmatmul.mubr.bf16.gmra.mxu0 %v2008
  %v2678 = vpop.f32.mrf.mxu0
  %v2679 = vadd.f32 %v2630, %v2678
  %v2680 = vpop.f32.mrf.mxu0
  %v2681 = vadd.f32 %v2632, %v2680
  %v2682 = vpop.f32.mrf.mxu0
  %v2683 = vpop.f32.mrf.mxu0
  %2684 = vmatprep.mubr.bf16.mxu0 %v2015
  %2685 = vmatmul.mubr.bf16.gmra.mxu0 %v2014
  %v2686 = vpop.f32.mrf.mxu0
  %v2687 = vadd.f32 %v2638, %v2686
  %v2688 = vpop.f32.mrf.mxu0
  %v2689 = vadd.f32 %v2640, %v2688
  %v2690 = vpop.f32.mrf.mxu0
  %v2691 = vpop.f32.mrf.mxu0
  %2692 = vdwg.mxu0
  %2693 = vmatprep.subr.bf16.mxu0 %v2482
  %2694 = vmatpush1.bf16.msra.mxu0 %v2481
  %2695 = vmatprep.subr.bf16.mxu0 %v2480
  %2696 = vmatpush1.bf16.msra.mxu0 %v2479
  %2697 = vmatprep.subr.bf16.mxu0 %v2478
  %2698 = vmatpush1.bf16.msra.mxu0 %v2477
  %2699 = vmatprep.subr.bf16.mxu0 %v2476
  %2700 = vmatpush1.bf16.msra.mxu0 %v2475
  %2701 = vmatprep.subr.bf16.mxu0 %v2474
  %2702 = vmatpush1.bf16.msra.mxu0 %v2473
  %2703 = vmatprep.subr.bf16.mxu0 %v2472
  %2704 = vmatpush1.bf16.msra.mxu0 %v2471
  %2705 = vmatprep.subr.bf16.mxu0 %v2470
  %2706 = vmatpush1.bf16.msra.mxu0 %v2469
  %2707 = vmatprep.subr.bf16.mxu0 %v2468
  %2708 = vmatpush1.bf16.msra.mxu0 %v2467
  %2709 = vmatprep.subr.bf16.mxu0 %v2498
  %2710 = vmatpush2.bf16.msra.mxu0 %v2497
  %2711 = vmatprep.subr.bf16.mxu0 %v2496
  %2712 = vmatpush2.bf16.msra.mxu0 %v2495
  %2713 = vmatprep.subr.bf16.mxu0 %v2494
  %2714 = vmatpush2.bf16.msra.mxu0 %v2493
  %2715 = vmatprep.subr.bf16.mxu0 %v2492
  %2716 = vmatpush2.bf16.msra.mxu0 %v2491
  %2717 = vmatprep.subr.bf16.mxu0 %v2490
  %2718 = vmatpush2.bf16.msra.mxu0 %v2489
  %2719 = vmatprep.subr.bf16.mxu0 %v2488
  %2720 = vmatpush2.bf16.msra.mxu0 %v2487
  %2721 = vmatprep.subr.bf16.mxu0 %v2486
  %2722 = vmatpush2.bf16.msra.mxu0 %v2485
  %2723 = vmatprep.subr.bf16.mxu0 %v2484
  %2724 = vmatpush2.bf16.msra.mxu0 %v2483
  %2725 = vmatprep.mubr.bf16.mxu0 %v2011
  %2726 = vmatmul.mubr.bf16.gmra.mxu0 %v2010
  %v2727 = vpop.f32.mrf.mxu0
  %v2728 = vadd.f32 %v2679, %v2727
  %v2729 = vpop.f32.mrf.mxu0
  %v2730 = vadd.f32 %v2681, %v2729
  %v2731 = vpop.f32.mrf.mxu0
  %v2732 = vpop.f32.mrf.mxu0
  %2733 = vmatprep.mubr.bf16.mxu0 %v2017
  %2734 = vmatmul.mubr.bf16.gmra.mxu0 %v2016
  %v2735 = vpop.f32.mrf.mxu0
  %v2736 = vadd.f32 %v2687, %v2735
  %v2737 = vpop.f32.mrf.mxu0
  %v2738 = vadd.f32 %v2689, %v2737
  %v2739 = vpop.f32.mrf.mxu0
  %v2740 = vpop.f32.mrf.mxu0
  %2741 = vdwg.mxu0
  %v2742 = vadd.f32 %v1992, %v2728
  %v2743 = vadd.f32 %v1994, %v2730
  %v2744 = vadd.f32 %v2000, %v2736
  %v2745 = vadd.f32 %v2002, %v2738
  %v2746 = vld [vmem:[%s6] sm:$0x3]
  %v2748 = vlaneseq
  %v2749 = vshrl.u32 %v2748, 7
  %v2750 = vsub.s32 0, %v2749
  %v2751 = vrot.slane %v2746, %v2750
  %v2752 = vlaneseq
  %v2753 = vshrl.u32 %v2752, 7
  %v2754 = vsub.s32 1, %v2753
  %v2755 = vrot.slane %v2746, %v2754
  %v2758 = vadd.f32 %v2742, %v2751
  %v2759 = vadd.f32 %v2743, %v2755
  %v2760 = vadd.f32 %v2744, %v2751
  %v2761 = vadd.f32 %v2745, %v2755
  %2762 = vst [vmem:[%s7] sm:$0x3] %v2758
  %2763 = vst [vmem:[%s7 + $0x8] sm:$0x3] %v2759
  %v2766 = vrot.slane %v2758, 2
  %v2767 = vrot.slane %v2759, 2
  %2770 = vst [vmem:[%s7] sm:$0xc] %v2766
  %2771 = vst [vmem:[%s7 + $0x8] sm:$0xc] %v2767
  %v2774 = vrot.slane %v2760, 4
  %v2775 = vrot.slane %v2761, 4
  %2778 = vst [vmem:[%s7] sm:$0x30] %v2774
  %2779 = vst [vmem:[%s7 + $0x8] sm:$0x30] %v2775
  %v2780 = vrot.slane %v2760, 6
  %v2781 = vrot.slane %v2761, 6
  %2784 = vst [vmem:[%s7] sm:$0xc0] %v2780
  %2785 = vst [vmem:[%s7 + $0x8] sm:$0xc0] %v2781
  // Predicated region
  $region30: #{fpn_forward.3} parent=0 // pred_check
    _
  $region31: #{fpn_forward.3} parent=0 // pred_check_branch
    %2787 = sbr.rel (0) target = $region33
  $region32: #{fpn_forward.3} parent=0 // pred_region
    _
  $region33: #{fpn_forward.3} parent=0 // pred_fallthru
    _
  // Predicated region
  $region34: #{fpn_forward.3} parent=0 // pred_check
    _
  $region35: #{fpn_forward.3} parent=0 // pred_check_branch
    %2789 = sbr.rel (0) target = $region37
  $region36: #{fpn_forward.3} parent=0 // pred_region
    _
  $region37: #{fpn_forward.3} parent=0 // pred_fallthru
    _

// kernel: fpn_forward.4
$region0: #{fpn_forward.4}
  #allocation0 [shape = 'u32[]', space=smem, size = 0x4, offset = 0x4, fixed_abs, tag = 'smem constant byte address 0x4 - core index']
  #allocation1 [shape = 'u32[144,128]{1,0:T(1,128)}', space=vmem, size = 0x12000, scoped, tag = 'internal scratch']
  %s0 = inlined_call_operand.vmem [shape: bf16[128,128], index: 0, kind: input, shape index: {}]
  %s1 = inlined_call_operand.vmem [shape: bf16[128,256], index: 1, kind: input, shape index: {}]
  %s2 = inlined_call_operand.vmem [shape: f32[1,256], index: 2, kind: input, shape index: {}, may-alias: {2,6}]
  %s3 = inlined_call_operand.vmem [shape: f32[128,128], index: 3, kind: input, shape index: {}]
  %s4 = inlined_call_operand.vmem [shape: f32[128,256], index: 4, kind: input, shape index: {}]
  %s5 = inlined_call_operand.vmem [shape: bf16[3,768,256], index: 5, kind: input, shape index: {}]
  %s6 = inlined_call_operand.vmem [shape: f32[1,256], index: 6, kind: input, shape index: {}, may-alias: {2,6}]
  %s7 = inlined_call_operand.vmem [shape: f32[72,256], index: 7, kind: output, shape index: {}]
  %s8 = sld [smem:[#allocation0]]
  $region38: #{fpn_forward.4} parent=0
    _
  %s10 = ssub.s32 1, %s8
  %s11 = scalar_select 0, %s10, %s8
  // Predicated region
  $region2: #{fpn_forward.4} parent=0 // pred_check
    _
  $region3: #{fpn_forward.4} parent=0 // pred_check_branch
    %13 = sbr.rel (0) target = $region5
  $region4: #{fpn_forward.4} parent=0 // pred_region
    _
  $region5: #{fpn_forward.4} parent=0 // pred_fallthru
    _
  // Predicated region
  $region6: #{fpn_forward.4} parent=0 // pred_check
    _
  $region7: #{fpn_forward.4} parent=0 // pred_check_branch
    %15 = sbr.rel (0) target = $region9
  $region8: #{fpn_forward.4} parent=0 // pred_region
    _
  $region9: #{fpn_forward.4} parent=0 // pred_fallthru
    _
  // Predicated region
  $region10: #{fpn_forward.4} parent=0 // pred_check
    _
  $region11: #{fpn_forward.4} parent=0 // pred_check_branch
    %17 = sbr.rel (0) target = $region13
  $region12: #{fpn_forward.4} parent=0 // pred_region
    _
  $region13: #{fpn_forward.4} parent=0 // pred_fallthru
    _
  // Predicated region
  $region14: #{fpn_forward.4} parent=0 // pred_check
    _
  $region15: #{fpn_forward.4} parent=0 // pred_check_branch
    %19 = sbr.rel (0) target = $region17
  $region16: #{fpn_forward.4} parent=0 // pred_region
    _
  $region17: #{fpn_forward.4} parent=0 // pred_fallthru
    _
  // Predicated region
  $region18: #{fpn_forward.4} parent=0 // pred_check
    _
  $region19: #{fpn_forward.4} parent=0 // pred_check_branch
    %21 = sbr.rel (0) target = $region21
  $region20: #{fpn_forward.4} parent=0 // pred_region
    _
  $region21: #{fpn_forward.4} parent=0 // pred_fallthru
    _
  // Predicated region
  $region22: #{fpn_forward.4} parent=0 // pred_check
    _
  $region23: #{fpn_forward.4} parent=0 // pred_check_branch
    %23 = sbr.rel (0) target = $region25
  $region24: #{fpn_forward.4} parent=0 // pred_region
    _
  $region25: #{fpn_forward.4} parent=0 // pred_fallthru
    _
  // Predicated region
  $region26: #{fpn_forward.4} parent=0 // pred_check
    _
  $region27: #{fpn_forward.4} parent=0 // pred_check_branch
    %25 = sbr.rel (0) target = $region29
  $region28: #{fpn_forward.4} parent=0 // pred_region
    _
  $region29: #{fpn_forward.4} parent=0 // pred_fallthru
    _
  %v27 = vld [vmem:[%s0] sm:$0xf]
  %v28 = vld [vmem:[%s0 + $0x4] sm:$0xf]
  %v29 = vld [vmem:[%s0 + $0x8] sm:$0xf]
  %v30 = vld [vmem:[%s0 + $0xc] sm:$0xf]
  %v31 = vld [vmem:[%s0 + $0x10] sm:$0xf]
  %v32 = vld [vmem:[%s0 + $0x14] sm:$0xf]
  %v33 = vld [vmem:[%s0 + $0x18] sm:$0xf]
  %v34 = vld [vmem:[%s0 + $0x1c] sm:$0xf]
  %v35 = vld [vmem:[%s0 + $0x20] sm:$0xf]
  %v36 = vld [vmem:[%s0 + $0x24] sm:$0xf]
  %v37 = vld [vmem:[%s0 + $0x28] sm:$0xf]
  %v38 = vld [vmem:[%s0 + $0x2c] sm:$0xf]
  %v39 = vld [vmem:[%s0 + $0x30] sm:$0xf]
  %v40 = vld [vmem:[%s0 + $0x34] sm:$0xf]
  %v41 = vld [vmem:[%s0 + $0x38] sm:$0xf]
  %v42 = vld [vmem:[%s0 + $0x3c] sm:$0xf]
  %v43 = vld [vmem:[%s1] sm:$0xff]
  %v44 = vld [vmem:[%s1 + $0x8] sm:$0xff]
  %v45 = vld [vmem:[%s1 + $0x10] sm:$0xff]
  %v46 = vld [vmem:[%s1 + $0x18] sm:$0xff]
  %v47 = vld [vmem:[%s1 + $0x20] sm:$0xff]
  %v48 = vld [vmem:[%s1 + $0x28] sm:$0xff]
  %v49 = vld [vmem:[%s1 + $0x30] sm:$0xff]
  %v50 = vld [vmem:[%s1 + $0x38] sm:$0xff]
  %v51 = vld [vmem:[%s1 + $0x40] sm:$0xff]
  %v52 = vld [vmem:[%s1 + $0x48] sm:$0xff]
  %v53 = vld [vmem:[%s1 + $0x50] sm:$0xff]
  %v54 = vld [vmem:[%s1 + $0x58] sm:$0xff]
  %v55 = vld [vmem:[%s1 + $0x60] sm:$0xff]
  %v56 = vld [vmem:[%s1 + $0x68] sm:$0xff]
  %v57 = vld [vmem:[%s1 + $0x70] sm:$0xff]
  %v58 = vld [vmem:[%s1 + $0x78] sm:$0xff]
  %v59 = vld [vmem:[%s2] sm:$0x3]
  %v61 = vlaneseq
  %v62 = vshrl.u32 %v61, 7
  %v63 = vsub.s32 0, %v62
  %v64 = vrot.slane %v59, %v63
  %v65 = vlaneseq
  %v66 = vshrl.u32 %v65, 7
  %v67 = vsub.s32 1, %v66
  %v68 = vrot.slane %v59, %v67
  %v87 = vunpack.c.l.b16 %v27
  %v88 = vunpack.c.l.b16 %v28
  %v89 = vunpack.c.l.b16 %v29
  %v90 = vunpack.c.l.b16 %v30
  %v91 = vunpack.c.l.b16 %v31
  %v92 = vunpack.c.l.b16 %v32
  %v93 = vunpack.c.l.b16 %v33
  %v94 = vunpack.c.l.b16 %v34
  %v95 = vunpack.c.l.b16 %v35
  %v96 = vunpack.c.l.b16 %v36
  %v97 = vunpack.c.l.b16 %v37
  %v98 = vunpack.c.l.b16 %v38
  %v99 = vunpack.c.l.b16 %v39
  %v100 = vunpack.c.l.b16 %v40
  %v101 = vunpack.c.l.b16 %v41
  %v102 = vunpack.c.l.b16 %v42
  %v103 = vpack.c.b16 %v88, %v87
  %v104 = vpack.c.b16 %v90, %v89
  %v105 = vpack.c.b16 %v92, %v91
  %v106 = vpack.c.b16 %v94, %v93
  %v107 = vpack.c.b16 %v96, %v95
  %v108 = vpack.c.b16 %v98, %v97
  %v109 = vpack.c.b16 %v100, %v99
  %v110 = vpack.c.b16 %v102, %v101
  %v135 = vunpack.c.l.b16 %v43
  %v136 = vunpack.c.h.b16 %v43
  %v137 = vunpack.c.l.b16 %v44
  %v138 = vunpack.c.h.b16 %v44
  %v139 = vunpack.c.l.b16 %v45
  %v140 = vunpack.c.h.b16 %v45
  %v141 = vunpack.c.l.b16 %v46
  %v142 = vunpack.c.h.b16 %v46
  %v143 = vunpack.c.l.b16 %v47
  %v144 = vunpack.c.h.b16 %v47
  %v145 = vunpack.c.l.b16 %v48
  %v146 = vunpack.c.h.b16 %v48
  %v147 = vunpack.c.l.b16 %v49
  %v148 = vunpack.c.h.b16 %v49
  %v149 = vunpack.c.l.b16 %v50
  %v150 = vunpack.c.h.b16 %v50
  %v151 = vunpack.c.l.b16 %v51
  %v152 = vunpack.c.h.b16 %v51
  %v153 = vunpack.c.l.b16 %v52
  %v154 = vunpack.c.h.b16 %v52
  %v155 = vunpack.c.l.b16 %v53
  %v156 = vunpack.c.h.b16 %v53
  %v157 = vunpack.c.l.b16 %v54
  %v158 = vunpack.c.h.b16 %v54
  %v159 = vunpack.c.l.b16 %v55
  %v160 = vunpack.c.h.b16 %v55
  %v161 = vunpack.c.l.b16 %v56
  %v162 = vunpack.c.h.b16 %v56
  %v163 = vunpack.c.l.b16 %v57
  %v164 = vunpack.c.h.b16 %v57
  %v165 = vunpack.c.l.b16 %v58
  %v166 = vunpack.c.h.b16 %v58
  %v167 = vpack.c.b16 %v137, %v135
  %v168 = vpack.c.b16 %v138, %v136
  %v169 = vpack.c.b16 %v141, %v139
  %v170 = vpack.c.b16 %v142, %v140
  %v171 = vpack.c.b16 %v145, %v143
  %v172 = vpack.c.b16 %v146, %v144
  %v173 = vpack.c.b16 %v149, %v147
  %v174 = vpack.c.b16 %v150, %v148
  %v175 = vpack.c.b16 %v153, %v151
  %v176 = vpack.c.b16 %v154, %v152
  %v177 = vpack.c.b16 %v157, %v155
  %v178 = vpack.c.b16 %v158, %v156
  %v179 = vpack.c.b16 %v161, %v159
  %v180 = vpack.c.b16 %v162, %v160
  %v181 = vpack.c.b16 %v165, %v163
  %v182 = vpack.c.b16 %v166, %v164
  %199 = vmatprep.subr.bf16.mxu0 %v182
  %200 = vmatpush1.bf16.msra.mxu0 %v181
  %201 = vmatprep.subr.bf16.mxu0 %v180
  %202 = vmatpush1.bf16.msra.mxu0 %v179
  %203 = vmatprep.subr.bf16.mxu0 %v178
  %204 = vmatpush1.bf16.msra.mxu0 %v177
  %205 = vmatprep.subr.bf16.mxu0 %v176
  %206 = vmatpush1.bf16.msra.mxu0 %v175
  %207 = vmatprep.subr.bf16.mxu0 %v174
  %208 = vmatpush1.bf16.msra.mxu0 %v173
  %209 = vmatprep.subr.bf16.mxu0 %v172
  %210 = vmatpush1.bf16.msra.mxu0 %v171
  %211 = vmatprep.subr.bf16.mxu0 %v170
  %212 = vmatpush1.bf16.msra.mxu0 %v169
  %213 = vmatprep.subr.bf16.mxu0 %v168
  %214 = vmatpush1.bf16.msra.mxu0 %v167
  %215 = vmatprep.subr.bf16.mxu0 0
  %216 = vmatpush2.bf16.msra.mxu0 0
  %217 = vmatprep.subr.bf16.mxu0 0
  %218 = vmatpush2.bf16.msra.mxu0 0
  %219 = vmatprep.subr.bf16.mxu0 0
  %220 = vmatpush2.bf16.msra.mxu0 0
  %221 = vmatprep.subr.bf16.mxu0 0
  %222 = vmatpush2.bf16.msra.mxu0 0
  %223 = vmatprep.subr.bf16.mxu0 0
  %224 = vmatpush2.bf16.msra.mxu0 0
  %225 = vmatprep.subr.bf16.mxu0 0
  %226 = vmatpush2.bf16.msra.mxu0 0
  %227 = vmatprep.subr.bf16.mxu0 0
  %228 = vmatpush2.bf16.msra.mxu0 0
  %229 = vmatprep.subr.bf16.mxu0 0
  %230 = vmatpush2.bf16.msra.mxu0 0
  %231 = vmatprep.mubr.bf16.mxu0 0
  %232 = vmatmul.mubr.bf16.gmra.mxu0 %v103
  %v233 = vpop.f32.mrf.mxu0
  %v234 = vadd.f32 %v64, %v233
  %v235 = vpop.f32.mrf.mxu0
  %v236 = vadd.f32 %v68, %v235
  %v237 = vpop.f32.mrf.mxu0
  %v238 = vadd.f32 %v64, %v237
  %v239 = vpop.f32.mrf.mxu0
  %v240 = vadd.f32 %v68, %v239
  %241 = vmatprep.mubr.bf16.mxu0 0
  %242 = vmatmul.mubr.bf16.gmra.mxu0 %v104
  %v243 = vpop.f32.mrf.mxu0
  %v244 = vadd.f32 %v64, %v243
  %v245 = vpop.f32.mrf.mxu0
  %v246 = vadd.f32 %v68, %v245
  %v247 = vpop.f32.mrf.mxu0
  %v248 = vadd.f32 %v64, %v247
  %v249 = vpop.f32.mrf.mxu0
  %v250 = vadd.f32 %v68, %v249
  %251 = vmatprep.mubr.bf16.mxu0 0
  %252 = vmatmul.mubr.bf16.gmra.mxu0 %v105
  %v253 = vpop.f32.mrf.mxu0
  %v254 = vadd.f32 %v64, %v253
  %v255 = vpop.f32.mrf.mxu0
  %v256 = vadd.f32 %v68, %v255
  %v257 = vpop.f32.mrf.mxu0
  %v258 = vadd.f32 %v64, %v257
  %v259 = vpop.f32.mrf.mxu0
  %v260 = vadd.f32 %v68, %v259
  %261 = vmatprep.mubr.bf16.mxu0 0
  %262 = vmatmul.mubr.bf16.gmra.mxu0 %v106
  %v263 = vpop.f32.mrf.mxu0
  %v264 = vadd.f32 %v64, %v263
  %v265 = vpop.f32.mrf.mxu0
  %v266 = vadd.f32 %v68, %v265
  %v267 = vpop.f32.mrf.mxu0
  %v268 = vadd.f32 %v64, %v267
  %v269 = vpop.f32.mrf.mxu0
  %v270 = vadd.f32 %v68, %v269
  %271 = vmatprep.mubr.bf16.mxu0 0
  %272 = vmatmul.mubr.bf16.gmra.mxu0 %v107
  %v273 = vpop.f32.mrf.mxu0
  %v274 = vadd.f32 %v64, %v273
  %v275 = vpop.f32.mrf.mxu0
  %v276 = vadd.f32 %v68, %v275
  %v277 = vpop.f32.mrf.mxu0
  %v278 = vadd.f32 %v64, %v277
  %v279 = vpop.f32.mrf.mxu0
  %v280 = vadd.f32 %v68, %v279
  %281 = vmatprep.mubr.bf16.mxu0 0
  %282 = vmatmul.mubr.bf16.gmra.mxu0 %v108
  %v283 = vpop.f32.mrf.mxu0
  %v284 = vadd.f32 %v64, %v283
  %v285 = vpop.f32.mrf.mxu0
  %v286 = vadd.f32 %v68, %v285
  %v287 = vpop.f32.mrf.mxu0
  %v288 = vadd.f32 %v64, %v287
  %v289 = vpop.f32.mrf.mxu0
  %v290 = vadd.f32 %v68, %v289
  %291 = vmatprep.mubr.bf16.mxu0 0
  %292 = vmatmul.mubr.bf16.gmra.mxu0 %v109
  %v293 = vpop.f32.mrf.mxu0
  %v294 = vadd.f32 %v64, %v293
  %v295 = vpop.f32.mrf.mxu0
  %v296 = vadd.f32 %v68, %v295
  %v297 = vpop.f32.mrf.mxu0
  %v298 = vadd.f32 %v64, %v297
  %v299 = vpop.f32.mrf.mxu0
  %v300 = vadd.f32 %v68, %v299
  %301 = vmatprep.mubr.bf16.mxu0 0
  %302 = vmatmul.mubr.bf16.gmra.mxu0 %v110
  %v303 = vpop.f32.mrf.mxu0
  %v304 = vadd.f32 %v64, %v303
  %v305 = vpop.f32.mrf.mxu0
  %v306 = vadd.f32 %v68, %v305
  %v307 = vpop.f32.mrf.mxu0
  %v308 = vadd.f32 %v64, %v307
  %v309 = vpop.f32.mrf.mxu0
  %v310 = vadd.f32 %v68, %v309
  %311 = vdwg.mxu0
  %v312 = vld [vmem:[%s3] sm:$0xff]
  %v313 = vld [vmem:[%s3 + $0x8] sm:$0xff]
  %v314 = vld [vmem:[%s3 + $0x10] sm:$0xff]
  %v315 = vld [vmem:[%s3 + $0x18] sm:$0xff]
  %v316 = vld [vmem:[%s3 + $0x20] sm:$0xff]
  %v317 = vld [vmem:[%s3 + $0x28] sm:$0xff]
  %v318 = vld [vmem:[%s3 + $0x30] sm:$0xff]
  %v319 = vld [vmem:[%s3 + $0x38] sm:$0xff]
  %v320 = vld [vmem:[%s3 + $0x40] sm:$0xff]
  %v321 = vld [vmem:[%s3 + $0x48] sm:$0xff]
  %v322 = vld [vmem:[%s3 + $0x50] sm:$0xff]
  %v323 = vld [vmem:[%s3 + $0x58] sm:$0xff]
  %v324 = vld [vmem:[%s3 + $0x60] sm:$0xff]
  %v325 = vld [vmem:[%s3 + $0x68] sm:$0xff]
  %v326 = vld [vmem:[%s3 + $0x70] sm:$0xff]
  %v327 = vld [vmem:[%s3 + $0x78] sm:$0xff]
  %v328 = vld [vmem:[%s4] sm:$0xff]
  %v329 = vld [vmem:[%s4 + $0x8] sm:$0xff]
  %v330 = vld [vmem:[%s4 + $0x10] sm:$0xff]
  %v331 = vld [vmem:[%s4 + $0x18] sm:$0xff]
  %v332 = vld [vmem:[%s4 + $0x20] sm:$0xff]
  %v333 = vld [vmem:[%s4 + $0x28] sm:$0xff]
  %v334 = vld [vmem:[%s4 + $0x30] sm:$0xff]
  %v335 = vld [vmem:[%s4 + $0x38] sm:$0xff]
  %v336 = vld [vmem:[%s4 + $0x40] sm:$0xff]
  %v337 = vld [vmem:[%s4 + $0x48] sm:$0xff]
  %v338 = vld [vmem:[%s4 + $0x50] sm:$0xff]
  %v339 = vld [vmem:[%s4 + $0x58] sm:$0xff]
  %v340 = vld [vmem:[%s4 + $0x60] sm:$0xff]
  %v341 = vld [vmem:[%s4 + $0x68] sm:$0xff]
  %v342 = vld [vmem:[%s4 + $0x70] sm:$0xff]
  %v343 = vld [vmem:[%s4 + $0x78] sm:$0xff]
  %v344 = vld [vmem:[%s4 + $0x80] sm:$0xff]
  %v345 = vld [vmem:[%s4 + $0x88] sm:$0xff]
  %v346 = vld [vmem:[%s4 + $0x90] sm:$0xff]
  %v347 = vld [vmem:[%s4 + $0x98] sm:$0xff]
  %v348 = vld [vmem:[%s4 + $0xa0] sm:$0xff]
  %v349 = vld [vmem:[%s4 + $0xa8] sm:$0xff]
  %v350 = vld [vmem:[%s4 + $0xb0] sm:$0xff]
  %v351 = vld [vmem:[%s4 + $0xb8] sm:$0xff]
  %v352 = vld [vmem:[%s4 + $0xc0] sm:$0xff]
  %v353 = vld [vmem:[%s4 + $0xc8] sm:$0xff]
  %v354 = vld [vmem:[%s4 + $0xd0] sm:$0xff]
  %v355 = vld [vmem:[%s4 + $0xd8] sm:$0xff]
  %v356 = vld [vmem:[%s4 + $0xe0] sm:$0xff]
  %v357 = vld [vmem:[%s4 + $0xe8] sm:$0xff]
  %v358 = vld [vmem:[%s4 + $0xf0] sm:$0xff]
  %v359 = vld [vmem:[%s4 + $0xf8] sm:$0xff]
  %360 = vmatprep.subr.mxu0 %v359
  %361 = vmatpush1.msra.mxu0 %v358
  %362 = vmatprep.subr.mxu0 %v357
  %363 = vmatpush1.msra.mxu0 %v356
  %364 = vmatprep.subr.mxu0 %v355
  %365 = vmatpush1.msra.mxu0 %v354
  %366 = vmatprep.subr.mxu0 %v353
  %367 = vmatpush1.msra.mxu0 %v352
  %368 = vmatprep.subr.mxu0 %v351
  %369 = vmatpush1.msra.mxu0 %v350
  %370 = vmatprep.subr.mxu0 %v349
  %371 = vmatpush1.msra.mxu0 %v348
  %372 = vmatprep.subr.mxu0 %v347
  %373 = vmatpush1.msra.mxu0 %v346
  %374 = vmatprep.subr.mxu0 %v345
  %375 = vmatpush1.msra.mxu0 %v344
  %376 = vmatprep.subr.mxu0 %v343
  %377 = vmatpush1.msra.mxu0 %v342
  %378 = vmatprep.subr.mxu0 %v341
  %379 = vmatpush1.msra.mxu0 %v340
  %380 = vmatprep.subr.mxu0 %v339
  %381 = vmatpush1.msra.mxu0 %v338
  %382 = vmatprep.subr.mxu0 %v337
  %383 = vmatpush1.msra.mxu0 %v336
  %384 = vmatprep.subr.mxu0 %v335
  %385 = vmatpush1.msra.mxu0 %v334
  %386 = vmatprep.subr.mxu0 %v333
  %387 = vmatpush1.msra.mxu0 %v332
  %388 = vmatprep.subr.mxu0 %v331
  %389 = vmatpush1.msra.mxu0 %v330
  %390 = vmatprep.subr.mxu0 %v329
  %391 = vmatpush1.msra.mxu0 %v328
  %392 = vmatprep.subr.mxu0 0.0
  %393 = vmatpush2.msra.mxu0 0.0
  %394 = vmatprep.subr.mxu0 0.0
  %395 = vmatpush2.msra.mxu0 0.0
  %396 = vmatprep.subr.mxu0 0.0
  %397 = vmatpush2.msra.mxu0 0.0
  %398 = vmatprep.subr.mxu0 0.0
  %399 = vmatpush2.msra.mxu0 0.0
  %400 = vmatprep.subr.mxu0 0.0
  %401 = vmatpush2.msra.mxu0 0.0
  %402 = vmatprep.subr.mxu0 0.0
  %403 = vmatpush2.msra.mxu0 0.0
  %404 = vmatprep.subr.mxu0 0.0
  %405 = vmatpush2.msra.mxu0 0.0
  %406 = vmatprep.subr.mxu0 0.0
  %407 = vmatpush2.msra.mxu0 0.0
  %408 = vmatprep.subr.mxu0 0.0
  %409 = vmatpush2.msra.mxu0 0.0
  %410 = vmatprep.subr.mxu0 0.0
  %411 = vmatpush2.msra.mxu0 0.0
  %412 = vmatprep.subr.mxu0 0.0
  %413 = vmatpush2.msra.mxu0 0.0
  %414 = vmatprep.subr.mxu0 0.0
  %415 = vmatpush2.msra.mxu0 0.0
  %416 = vmatprep.subr.mxu0 0.0
  %417 = vmatpush2.msra.mxu0 0.0
  %418 = vmatprep.subr.mxu0 0.0
  %419 = vmatpush2.msra.mxu0 0.0
  %420 = vmatprep.subr.mxu0 0.0
  %421 = vmatpush2.msra.mxu0 0.0
  %422 = vmatprep.subr.mxu0 0.0
  %423 = vmatpush2.msra.mxu0 0.0
  %424 = vmatprep.mubr.f32.mxu0 0.0
  %425 = vmatmul.mubr.f32.gmra.mxu0 %v312
  %v426 = vpop.f32.mrf.mxu0
  %v427 = vadd.f32 0.0, %v426
  %v428 = vpop.f32.mrf.mxu0
  %v429 = vadd.f32 0.0, %v428
  %430 = vmatprep.mubr.f32.mxu0 0.0
  %431 = vmatmul.mubr.f32.gmra.mxu0 %v313
  %v432 = vpop.f32.mrf.mxu0
  %v433 = vadd.f32 0.0, %v432
  %v434 = vpop.f32.mrf.mxu0
  %v435 = vadd.f32 0.0, %v434
  %436 = vmatprep.mubr.f32.mxu0 0.0
  %437 = vmatmul.mubr.f32.gmra.mxu0 %v314
  %v438 = vpop.f32.mrf.mxu0
  %v439 = vadd.f32 0.0, %v438
  %v440 = vpop.f32.mrf.mxu0
  %v441 = vadd.f32 0.0, %v440
  %442 = vmatprep.mubr.f32.mxu0 0.0
  %443 = vmatmul.mubr.f32.gmra.mxu0 %v315
  %v444 = vpop.f32.mrf.mxu0
  %v445 = vadd.f32 0.0, %v444
  %v446 = vpop.f32.mrf.mxu0
  %v447 = vadd.f32 0.0, %v446
  %448 = vmatprep.mubr.f32.mxu0 0.0
  %449 = vmatmul.mubr.f32.gmra.mxu0 %v316
  %v450 = vpop.f32.mrf.mxu0
  %v451 = vadd.f32 0.0, %v450
  %v452 = vpop.f32.mrf.mxu0
  %v453 = vadd.f32 0.0, %v452
  %454 = vmatprep.mubr.f32.mxu0 0.0
  %455 = vmatmul.mubr.f32.gmra.mxu0 %v317
  %v456 = vpop.f32.mrf.mxu0
  %v457 = vadd.f32 0.0, %v456
  %v458 = vpop.f32.mrf.mxu0
  %v459 = vadd.f32 0.0, %v458
  %460 = vmatprep.mubr.f32.mxu0 0.0
  %461 = vmatmul.mubr.f32.gmra.mxu0 %v318
  %v462 = vpop.f32.mrf.mxu0
  %v463 = vadd.f32 0.0, %v462
  %v464 = vpop.f32.mrf.mxu0
  %v465 = vadd.f32 0.0, %v464
  %466 = vmatprep.mubr.f32.mxu0 0.0
  %467 = vmatmul.mubr.f32.gmra.mxu0 %v319
  %v468 = vpop.f32.mrf.mxu0
  %v469 = vadd.f32 0.0, %v468
  %v470 = vpop.f32.mrf.mxu0
  %v471 = vadd.f32 0.0, %v470
  %472 = vmatprep.mubr.f32.mxu0 0.0
  %473 = vmatmul.mubr.f32.gmra.mxu0 %v320
  %v474 = vpop.f32.mrf.mxu0
  %v475 = vadd.f32 0.0, %v474
  %v476 = vpop.f32.mrf.mxu0
  %v477 = vadd.f32 0.0, %v476
  %478 = vmatprep.mubr.f32.mxu0 0.0
  %479 = vmatmul.mubr.f32.gmra.mxu0 %v321
  %v480 = vpop.f32.mrf.mxu0
  %v481 = vadd.f32 0.0, %v480
  %v482 = vpop.f32.mrf.mxu0
  %v483 = vadd.f32 0.0, %v482
  %484 = vmatprep.mubr.f32.mxu0 0.0
  %485 = vmatmul.mubr.f32.gmra.mxu0 %v322
  %v486 = vpop.f32.mrf.mxu0
  %v487 = vadd.f32 0.0, %v486
  %v488 = vpop.f32.mrf.mxu0
  %v489 = vadd.f32 0.0, %v488
  %490 = vmatprep.mubr.f32.mxu0 0.0
  %491 = vmatmul.mubr.f32.gmra.mxu0 %v323
  %v492 = vpop.f32.mrf.mxu0
  %v493 = vadd.f32 0.0, %v492
  %v494 = vpop.f32.mrf.mxu0
  %v495 = vadd.f32 0.0, %v494
  %496 = vmatprep.mubr.f32.mxu0 0.0
  %497 = vmatmul.mubr.f32.gmra.mxu0 %v324
  %v498 = vpop.f32.mrf.mxu0
  %v499 = vadd.f32 0.0, %v498
  %v500 = vpop.f32.mrf.mxu0
  %v501 = vadd.f32 0.0, %v500
  %502 = vmatprep.mubr.f32.mxu0 0.0
  %503 = vmatmul.mubr.f32.gmra.mxu0 %v325
  %v504 = vpop.f32.mrf.mxu0
  %v505 = vadd.f32 0.0, %v504
  %v506 = vpop.f32.mrf.mxu0
  %v507 = vadd.f32 0.0, %v506
  %508 = vmatprep.mubr.f32.mxu0 0.0
  %509 = vmatmul.mubr.f32.gmra.mxu0 %v326
  %v510 = vpop.f32.mrf.mxu0
  %v511 = vadd.f32 0.0, %v510
  %v512 = vpop.f32.mrf.mxu0
  %v513 = vadd.f32 0.0, %v512
  %514 = vmatprep.mubr.f32.mxu0 0.0
  %515 = vmatmul.mubr.f32.gmra.mxu0 %v327
  %v516 = vpop.f32.mrf.mxu0
  %v517 = vadd.f32 0.0, %v516
  %v518 = vpop.f32.mrf.mxu0
  %v519 = vadd.f32 0.0, %v518
  %520 = vdwg.mxu0
  %v521 = vadd.f32 %v234, %v427
  %v522 = vadd.f32 %v236, %v429
  %v523 = vadd.f32 %v238, %v433
  %v524 = vadd.f32 %v240, %v435
  %v525 = vadd.f32 %v244, %v439
  %v526 = vadd.f32 %v246, %v441
  %v527 = vadd.f32 %v248, %v445
  %v528 = vadd.f32 %v250, %v447
  %v529 = vadd.f32 %v254, %v451
  %v530 = vadd.f32 %v256, %v453
  %v531 = vadd.f32 %v258, %v457
  %v532 = vadd.f32 %v260, %v459
  %v533 = vadd.f32 %v264, %v463
  %v534 = vadd.f32 %v266, %v465
  %v535 = vadd.f32 %v268, %v469
  %v536 = vadd.f32 %v270, %v471
  %v537 = vadd.f32 %v274, %v475
  %v538 = vadd.f32 %v276, %v477
  %v539 = vadd.f32 %v278, %v481
  %v540 = vadd.f32 %v280, %v483
  %v541 = vadd.f32 %v284, %v487
  %v542 = vadd.f32 %v286, %v489
  %v543 = vadd.f32 %v288, %v493
  %v544 = vadd.f32 %v290, %v495
  %v545 = vadd.f32 %v294, %v499
  %v546 = vadd.f32 %v296, %v501
  %v547 = vadd.f32 %v298, %v505
  %v548 = vadd.f32 %v300, %v507
  %v549 = vadd.f32 %v304, %v511
  %v550 = vadd.f32 %v306, %v513
  %v551 = vadd.f32 %v308, %v517
  %v552 = vadd.f32 %v310, %v519
  %vm581 = vcmask 1046528
  %v582 = vrot.slane %v521, 1
  %v583 = vrot.slane %v523, 1
  %v584 = vsel %vm581, %v582, %v583
  %v585 = vrot.slane %v522, 1
  %v586 = vrot.slane %v524, 1
  %v587 = vsel %vm581, %v585, %v586
  %v588 = vrot.slane %v525, 1
  %v589 = vsel %vm581, %v583, %v588
  %v590 = vrot.slane %v526, 1
  %v591 = vsel %vm581, %v586, %v590
  %v592 = vrot.slane %v527, 1
  %v593 = vsel %vm581, %v588, %v592
  %v594 = vrot.slane %v528, 1
  %v595 = vsel %vm581, %v590, %v594
  %v596 = vrot.slane %v529, 1
  %v597 = vsel %vm581, %v592, %v596
  %v598 = vrot.slane %v530, 1
  %v599 = vsel %vm581, %v594, %v598
  %v600 = vrot.slane %v531, 1
  %v601 = vsel %vm581, %v596, %v600
  %v602 = vrot.slane %v532, 1
  %v603 = vsel %vm581, %v598, %v602
  %v604 = vrot.slane %v533, 1
  %v605 = vsel %vm581, %v600, %v604
  %v606 = vrot.slane %v534, 1
  %v607 = vsel %vm581, %v602, %v606
  %v608 = vrot.slane %v535, 1
  %v609 = vsel %vm581, %v604, %v608
  %v610 = vrot.slane %v536, 1
  %v611 = vsel %vm581, %v606, %v610
  %v612 = vrot.slane %v537, 1
  %v613 = vsel %vm581, %v608, %v612
  %v614 = vrot.slane %v538, 1
  %v615 = vsel %vm581, %v610, %v614
  %v616 = vrot.slane %v539, 1
  %v617 = vsel %vm581, %v612, %v616
  %v618 = vrot.slane %v540, 1
  %v619 = vsel %vm581, %v614, %v618
  %v620 = vrot.slane %v541, 1
  %v621 = vsel %vm581, %v616, %v620
  %v622 = vrot.slane %v542, 1
  %v623 = vsel %vm581, %v618, %v622
  %v624 = vrot.slane %v543, 1
  %v625 = vsel %vm581, %v620, %v624
  %v626 = vrot.slane %v544, 1
  %v627 = vsel %vm581, %v622, %v626
  %v628 = vrot.slane %v545, 1
  %v629 = vsel %vm581, %v624, %v628
  %v630 = vrot.slane %v546, 1
  %v631 = vsel %vm581, %v626, %v630
  %v632 = vrot.slane %v547, 1
  %v633 = vsel %vm581, %v628, %v632
  %v634 = vrot.slane %v548, 1
  %v635 = vsel %vm581, %v630, %v634
  %vm664 = vcmask 1045504
  %v665 = vrot.slane %v521, 2
  %v666 = vrot.slane %v523, 2
  %v667 = vsel %vm664, %v665, %v666
  %v668 = vrot.slane %v522, 2
  %v669 = vrot.slane %v524, 2
  %v670 = vsel %vm664, %v668, %v669
  %v671 = vrot.slane %v525, 2
  %v672 = vsel %vm664, %v666, %v671
  %v673 = vrot.slane %v526, 2
  %v674 = vsel %vm664, %v669, %v673
  %v675 = vrot.slane %v527, 2
  %v676 = vsel %vm664, %v671, %v675
  %v677 = vrot.slane %v528, 2
  %v678 = vsel %vm664, %v673, %v677
  %v679 = vrot.slane %v529, 2
  %v680 = vsel %vm664, %v675, %v679
  %v681 = vrot.slane %v530, 2
  %v682 = vsel %vm664, %v677, %v681
  %v683 = vrot.slane %v531, 2
  %v684 = vsel %vm664, %v679, %v683
  %v685 = vrot.slane %v532, 2
  %v686 = vsel %vm664, %v681, %v685
  %v687 = vrot.slane %v533, 2
  %v688 = vsel %vm664, %v683, %v687
  %v689 = vrot.slane %v534, 2
  %v690 = vsel %vm664, %v685, %v689
  %v691 = vrot.slane %v535, 2
  %v692 = vsel %vm664, %v687, %v691
  %v693 = vrot.slane %v536, 2
  %v694 = vsel %vm664, %v689, %v693
  %v695 = vrot.slane %v537, 2
  %v696 = vsel %vm664, %v691, %v695
  %v697 = vrot.slane %v538, 2
  %v698 = vsel %vm664, %v693, %v697
  %v699 = vrot.slane %v539, 2
  %v700 = vsel %vm664, %v695, %v699
  %v701 = vrot.slane %v540, 2
  %v702 = vsel %vm664, %v697, %v701
  %v703 = vrot.slane %v541, 2
  %v704 = vsel %vm664, %v699, %v703
  %v705 = vrot.slane %v542, 2
  %v706 = vsel %vm664, %v701, %v705
  %v707 = vrot.slane %v543, 2
  %v708 = vsel %vm664, %v703, %v707
  %v709 = vrot.slane %v544, 2
  %v710 = vsel %vm664, %v705, %v709
  %v711 = vrot.slane %v545, 2
  %v712 = vsel %vm664, %v707, %v711
  %v713 = vrot.slane %v546, 2
  %v714 = vsel %vm664, %v709, %v713
  %v715 = vrot.slane %v547, 2
  %v716 = vsel %vm664, %v711, %v715
  %v717 = vrot.slane %v548, 2
  %v718 = vsel %vm664, %v713, %v717
  %v747 = vpack.c.bf16 %v523, %v521
  %v748 = vpack.c.bf16 %v524, %v522
  %v749 = vpack.c.bf16 %v589, %v584
  %v750 = vpack.c.bf16 %v591, %v587
  %v751 = vpack.c.bf16 %v672, %v667
  %v752 = vpack.c.bf16 %v674, %v670
  %v753 = vpack.c.bf16 %v527, %v525
  %v754 = vpack.c.bf16 %v528, %v526
  %v755 = vpack.c.bf16 %v597, %v593
  %v756 = vpack.c.bf16 %v599, %v595
  %v757 = vpack.c.bf16 %v680, %v676
  %v758 = vpack.c.bf16 %v682, %v678
  %v759 = vpack.c.bf16 %v531, %v529
  %v760 = vpack.c.bf16 %v532, %v530
  %v761 = vpack.c.bf16 %v605, %v601
  %v762 = vpack.c.bf16 %v607, %v603
  %v763 = vpack.c.bf16 %v688, %v684
  %v764 = vpack.c.bf16 %v690, %v686
  %v765 = vpack.c.bf16 %v535, %v533
  %v766 = vpack.c.bf16 %v536, %v534
  %v767 = vpack.c.bf16 %v613, %v609
  %v768 = vpack.c.bf16 %v615, %v611
  %v769 = vpack.c.bf16 %v696, %v692
  %v770 = vpack.c.bf16 %v698, %v694
  %v771 = vpack.c.bf16 %v539, %v537
  %v772 = vpack.c.bf16 %v540, %v538
  %v773 = vpack.c.bf16 %v621, %v617
  %v774 = vpack.c.bf16 %v623, %v619
  %v775 = vpack.c.bf16 %v704, %v700
  %v776 = vpack.c.bf16 %v706, %v702
  %v777 = vpack.c.bf16 %v543, %v541
  %v778 = vpack.c.bf16 %v544, %v542
  %v779 = vpack.c.bf16 %v629, %v625
  %v780 = vpack.c.bf16 %v631, %v627
  %v781 = vpack.c.bf16 %v712, %v708
  %v782 = vpack.c.bf16 %v714, %v710
  %v783 = vpack.c.bf16 %v547, %v545
  %v784 = vpack.c.bf16 %v548, %v546
  %v785 = vpack.c.bf16 %v632, %v633
  %v786 = vpack.c.bf16 %v634, %v635
  %v787 = vpack.c.bf16 %v715, %v716
  %v788 = vpack.c.bf16 %v717, %v718
  %v789 = vld [vmem:[%s5] sm:$0xff]
  %v790 = vld [vmem:[%s5 + $0x8] sm:$0xff]
  %v791 = vld [vmem:[%s5 + $0x10] sm:$0xff]
  %v792 = vld [vmem:[%s5 + $0x18] sm:$0xff]
  %v793 = vld [vmem:[%s5 + $0x20] sm:$0xff]
  %v794 = vld [vmem:[%s5 + $0x28] sm:$0xff]
  %v795 = vld [vmem:[%s5 + $0x30] sm:$0xff]
  %v796 = vld [vmem:[%s5 + $0x38] sm:$0xff]
  %v797 = vld [vmem:[%s5 + $0x40] sm:$0xff]
  %v798 = vld [vmem:[%s5 + $0x48] sm:$0xff]
  %v799 = vld [vmem:[%s5 + $0x50] sm:$0xff]
  %v800 = vld [vmem:[%s5 + $0x58] sm:$0xff]
  %v801 = vld [vmem:[%s5 + $0x60] sm:$0xff]
  %v802 = vld [vmem:[%s5 + $0x68] sm:$0xff]
  %v803 = vld [vmem:[%s5 + $0x70] sm:$0xff]
  %v804 = vld [vmem:[%s5 + $0x78] sm:$0xff]
  %v805 = vld [vmem:[%s5 + $0x80] sm:$0xff]
  %v806 = vld [vmem:[%s5 + $0x88] sm:$0xff]
  %v807 = vld [vmem:[%s5 + $0x90] sm:$0xff]
  %v808 = vld [vmem:[%s5 + $0x98] sm:$0xff]
  %v809 = vld [vmem:[%s5 + $0xa0] sm:$0xff]
  %v810 = vld [vmem:[%s5 + $0xa8] sm:$0xff]
  %v811 = vld [vmem:[%s5 + $0xb0] sm:$0xff]
  %v812 = vld [vmem:[%s5 + $0xb8] sm:$0xff]
  %v813 = vld [vmem:[%s5 + $0xc0] sm:$0xff]
  %v814 = vld [vmem:[%s5 + $0xc8] sm:$0xff]
  %v815 = vld [vmem:[%s5 + $0xd0] sm:$0xff]
  %v816 = vld [vmem:[%s5 + $0xd8] sm:$0xff]
  %v817 = vld [vmem:[%s5 + $0xe0] sm:$0xff]
  %v818 = vld [vmem:[%s5 + $0xe8] sm:$0xff]
  %v819 = vld [vmem:[%s5 + $0xf0] sm:$0xff]
  %v820 = vld [vmem:[%s5 + $0xf8] sm:$0xff]
  %v821 = vld [vmem:[%s5 + $0x100] sm:$0xff]
  %v822 = vld [vmem:[%s5 + $0x108] sm:$0xff]
  %v823 = vld [vmem:[%s5 + $0x110] sm:$0xff]
  %v824 = vld [vmem:[%s5 + $0x118] sm:$0xff]
  %v825 = vld [vmem:[%s5 + $0x120] sm:$0xff]
  %v826 = vld [vmem:[%s5 + $0x128] sm:$0xff]
  %v827 = vld [vmem:[%s5 + $0x130] sm:$0xff]
  %v828 = vld [vmem:[%s5 + $0x138] sm:$0xff]
  %v829 = vld [vmem:[%s5 + $0x140] sm:$0xff]
  %v830 = vld [vmem:[%s5 + $0x148] sm:$0xff]
  %v831 = vld [vmem:[%s5 + $0x150] sm:$0xff]
  %v832 = vld [vmem:[%s5 + $0x158] sm:$0xff]
  %v833 = vld [vmem:[%s5 + $0x160] sm:$0xff]
  %v834 = vld [vmem:[%s5 + $0x168] sm:$0xff]
  %v835 = vld [vmem:[%s5 + $0x170] sm:$0xff]
  %v836 = vld [vmem:[%s5 + $0x178] sm:$0xff]
  %v837 = vld [vmem:[%s5 + $0x180] sm:$0xff]
  %v838 = vld [vmem:[%s5 + $0x188] sm:$0xff]
  %v839 = vld [vmem:[%s5 + $0x190] sm:$0xff]
  %v840 = vld [vmem:[%s5 + $0x198] sm:$0xff]
  %v841 = vld [vmem:[%s5 + $0x1a0] sm:$0xff]
  %v842 = vld [vmem:[%s5 + $0x1a8] sm:$0xff]
  %v843 = vld [vmem:[%s5 + $0x1b0] sm:$0xff]
  %v844 = vld [vmem:[%s5 + $0x1b8] sm:$0xff]
  %v845 = vld [vmem:[%s5 + $0x1c0] sm:$0xff]
  %v846 = vld [vmem:[%s5 + $0x1c8] sm:$0xff]
  %v847 = vld [vmem:[%s5 + $0x1d0] sm:$0xff]
  %v848 = vld [vmem:[%s5 + $0x1d8] sm:$0xff]
  %v849 = vld [vmem:[%s5 + $0x1e0] sm:$0xff]
  %v850 = vld [vmem:[%s5 + $0x1e8] sm:$0xff]
  %v851 = vld [vmem:[%s5 + $0x1f0] sm:$0xff]
  %v852 = vld [vmem:[%s5 + $0x1f8] sm:$0xff]
  %v853 = vld [vmem:[%s5 + $0x200] sm:$0xff]
  %v854 = vld [vmem:[%s5 + $0x208] sm:$0xff]
  %v855 = vld [vmem:[%s5 + $0x210] sm:$0xff]
  %v856 = vld [vmem:[%s5 + $0x218] sm:$0xff]
  %v857 = vld [vmem:[%s5 + $0x220] sm:$0xff]
  %v858 = vld [vmem:[%s5 + $0x228] sm:$0xff]
  %v859 = vld [vmem:[%s5 + $0x230] sm:$0xff]
  %v860 = vld [vmem:[%s5 + $0x238] sm:$0xff]
  %v861 = vld [vmem:[%s5 + $0x240] sm:$0xff]
  %v862 = vld [vmem:[%s5 + $0x248] sm:$0xff]
  %v863 = vld [vmem:[%s5 + $0x250] sm:$0xff]
  %v864 = vld [vmem:[%s5 + $0x258] sm:$0xff]
  %v865 = vld [vmem:[%s5 + $0x260] sm:$0xff]
  %v866 = vld [vmem:[%s5 + $0x268] sm:$0xff]
  %v867 = vld [vmem:[%s5 + $0x270] sm:$0xff]
  %v868 = vld [vmem:[%s5 + $0x278] sm:$0xff]
  %v869 = vld [vmem:[%s5 + $0x280] sm:$0xff]
  %v870 = vld [vmem:[%s5 + $0x288] sm:$0xff]
  %v871 = vld [vmem:[%s5 + $0x290] sm:$0xff]
  %v872 = vld [vmem:[%s5 + $0x298] sm:$0xff]
  %v873 = vld [vmem:[%s5 + $0x2a0] sm:$0xff]
  %v874 = vld [vmem:[%s5 + $0x2a8] sm:$0xff]
  %v875 = vld [vmem:[%s5 + $0x2b0] sm:$0xff]
  %v876 = vld [vmem:[%s5 + $0x2b8] sm:$0xff]
  %v877 = vld [vmem:[%s5 + $0x2c0] sm:$0xff]
  %v878 = vld [vmem:[%s5 + $0x2c8] sm:$0xff]
  %v879 = vld [vmem:[%s5 + $0x2d0] sm:$0xff]
  %v880 = vld [vmem:[%s5 + $0x2d8] sm:$0xff]
  %v881 = vld [vmem:[%s5 + $0x2e0] sm:$0xff]
  %v882 = vld [vmem:[%s5 + $0x2e8] sm:$0xff]
  %v883 = vld [vmem:[%s5 + $0x2f0] sm:$0xff]
  %v884 = vld [vmem:[%s5 + $0x2f8] sm:$0xff]
  %v887 = vrot.slane %v549, 1
  %v888 = vsel %vm581, %v632, %v887
  %v889 = vrot.slane %v550, 1
  %v890 = vsel %vm581, %v634, %v889
  %v895 = vrot.slane %v549, 2
  %v896 = vsel %vm664, %v715, %v895
  %v897 = vrot.slane %v550, 2
  %v898 = vsel %vm664, %v717, %v897
  %v903 = vpack.c.bf16 %v525, %v523
  %v904 = vpack.c.bf16 %v526, %v524
  %v905 = vpack.c.bf16 %v593, %v589
  %v906 = vpack.c.bf16 %v595, %v591
  %v907 = vpack.c.bf16 %v676, %v672
  %v908 = vpack.c.bf16 %v678, %v674
  %v909 = vpack.c.bf16 %v529, %v527
  %v910 = vpack.c.bf16 %v530, %v528
  %v911 = vpack.c.bf16 %v601, %v597
  %v912 = vpack.c.bf16 %v603, %v599
  %v913 = vpack.c.bf16 %v684, %v680
  %v914 = vpack.c.bf16 %v686, %v682
  %v915 = vpack.c.bf16 %v533, %v531
  %v916 = vpack.c.bf16 %v534, %v532
  %v917 = vpack.c.bf16 %v609, %v605
  %v918 = vpack.c.bf16 %v611, %v607
  %v919 = vpack.c.bf16 %v692, %v688
  %v920 = vpack.c.bf16 %v694, %v690
  %v921 = vpack.c.bf16 %v537, %v535
  %v922 = vpack.c.bf16 %v538, %v536
  %v923 = vpack.c.bf16 %v617, %v613
  %v924 = vpack.c.bf16 %v619, %v615
  %v925 = vpack.c.bf16 %v700, %v696
  %v926 = vpack.c.bf16 %v702, %v698
  %v927 = vpack.c.bf16 %v541, %v539
  %v928 = vpack.c.bf16 %v542, %v540
  %v929 = vpack.c.bf16 %v625, %v621
  %v930 = vpack.c.bf16 %v627, %v623
  %v931 = vpack.c.bf16 %v708, %v704
  %v932 = vpack.c.bf16 %v710, %v706
  %v933 = vpack.c.bf16 %v545, %v543
  %v934 = vpack.c.bf16 %v546, %v544
  %v935 = vpack.c.bf16 %v633, %v629
  %v936 = vpack.c.bf16 %v635, %v631
  %v937 = vpack.c.bf16 %v716, %v712
  %v938 = vpack.c.bf16 %v718, %v714
  %v939 = vpack.c.bf16 %v549, %v547
  %v940 = vpack.c.bf16 %v550, %v548
  %v941 = vpack.c.bf16 %v887, %v888
  %v942 = vpack.c.bf16 %v889, %v890
  %v943 = vpack.c.bf16 %v895, %v896
  %v944 = vpack.c.bf16 %v897, %v898
  %s945 = scalar_lea.vmem %s5, 768
  %v946 = vld [vmem:[%s945] sm:$0xff]
  %v947 = vld [vmem:[%s945 + $0x8] sm:$0xff]
  %v948 = vld [vmem:[%s945 + $0x10] sm:$0xff]
  %v949 = vld [vmem:[%s945 + $0x18] sm:$0xff]
  %v950 = vld [vmem:[%s945 + $0x20] sm:$0xff]
  %v951 = vld [vmem:[%s945 + $0x28] sm:$0xff]
  %v952 = vld [vmem:[%s945 + $0x30] sm:$0xff]
  %v953 = vld [vmem:[%s945 + $0x38] sm:$0xff]
  %v954 = vld [vmem:[%s945 + $0x40] sm:$0xff]
  %v955 = vld [vmem:[%s945 + $0x48] sm:$0xff]
  %v956 = vld [vmem:[%s945 + $0x50] sm:$0xff]
  %v957 = vld [vmem:[%s945 + $0x58] sm:$0xff]
  %v958 = vld [vmem:[%s945 + $0x60] sm:$0xff]
  %v959 = vld [vmem:[%s945 + $0x68] sm:$0xff]
  %v960 = vld [vmem:[%s945 + $0x70] sm:$0xff]
  %v961 = vld [vmem:[%s945 + $0x78] sm:$0xff]
  %v962 = vld [vmem:[%s945 + $0x80] sm:$0xff]
  %v963 = vld [vmem:[%s945 + $0x88] sm:$0xff]
  %v964 = vld [vmem:[%s945 + $0x90] sm:$0xff]
  %v965 = vld [vmem:[%s945 + $0x98] sm:$0xff]
  %v966 = vld [vmem:[%s945 + $0xa0] sm:$0xff]
  %v967 = vld [vmem:[%s945 + $0xa8] sm:$0xff]
  %v968 = vld [vmem:[%s945 + $0xb0] sm:$0xff]
  %v969 = vld [vmem:[%s945 + $0xb8] sm:$0xff]
  %v970 = vld [vmem:[%s945 + $0xc0] sm:$0xff]
  %v971 = vld [vmem:[%s945 + $0xc8] sm:$0xff]
  %v972 = vld [vmem:[%s945 + $0xd0] sm:$0xff]
  %v973 = vld [vmem:[%s945 + $0xd8] sm:$0xff]
  %v974 = vld [vmem:[%s945 + $0xe0] sm:$0xff]
  %v975 = vld [vmem:[%s945 + $0xe8] sm:$0xff]
  %v976 = vld [vmem:[%s945 + $0xf0] sm:$0xff]
  %v977 = vld [vmem:[%s945 + $0xf8] sm:$0xff]
  %v978 = vld [vmem:[%s945 + $0x100] sm:$0xff]
  %v979 = vld [vmem:[%s945 + $0x108] sm:$0xff]
  %v980 = vld [vmem:[%s945 + $0x110] sm:$0xff]
  %v981 = vld [vmem:[%s945 + $0x118] sm:$0xff]
  %v982 = vld [vmem:[%s945 + $0x120] sm:$0xff]
  %v983 = vld [vmem:[%s945 + $0x128] sm:$0xff]
  %v984 = vld [vmem:[%s945 + $0x130] sm:$0xff]
  %v985 = vld [vmem:[%s945 + $0x138] sm:$0xff]
  %v986 = vld [vmem:[%s945 + $0x140] sm:$0xff]
  %v987 = vld [vmem:[%s945 + $0x148] sm:$0xff]
  %v988 = vld [vmem:[%s945 + $0x150] sm:$0xff]
  %v989 = vld [vmem:[%s945 + $0x158] sm:$0xff]
  %v990 = vld [vmem:[%s945 + $0x160] sm:$0xff]
  %v991 = vld [vmem:[%s945 + $0x168] sm:$0xff]
  %v992 = vld [vmem:[%s945 + $0x170] sm:$0xff]
  %v993 = vld [vmem:[%s945 + $0x178] sm:$0xff]
  %v994 = vld [vmem:[%s945 + $0x180] sm:$0xff]
  %v995 = vld [vmem:[%s945 + $0x188] sm:$0xff]
  %v996 = vld [vmem:[%s945 + $0x190] sm:$0xff]
  %v997 = vld [vmem:[%s945 + $0x198] sm:$0xff]
  %v998 = vld [vmem:[%s945 + $0x1a0] sm:$0xff]
  %v999 = vld [vmem:[%s945 + $0x1a8] sm:$0xff]
  %v1000 = vld [vmem:[%s945 + $0x1b0] sm:$0xff]
  %v1001 = vld [vmem:[%s945 + $0x1b8] sm:$0xff]
  %v1002 = vld [vmem:[%s945 + $0x1c0] sm:$0xff]
  %v1003 = vld [vmem:[%s945 + $0x1c8] sm:$0xff]
  %v1004 = vld [vmem:[%s945 + $0x1d0] sm:$0xff]
  %v1005 = vld [vmem:[%s945 + $0x1d8] sm:$0xff]
  %v1006 = vld [vmem:[%s945 + $0x1e0] sm:$0xff]
  %v1007 = vld [vmem:[%s945 + $0x1e8] sm:$0xff]
  %v1008 = vld [vmem:[%s945 + $0x1f0] sm:$0xff]
  %v1009 = vld [vmem:[%s945 + $0x1f8] sm:$0xff]
  %v1010 = vld [vmem:[%s945 + $0x200] sm:$0xff]
  %v1011 = vld [vmem:[%s945 + $0x208] sm:$0xff]
  %v1012 = vld [vmem:[%s945 + $0x210] sm:$0xff]
  %v1013 = vld [vmem:[%s945 + $0x218] sm:$0xff]
  %v1014 = vld [vmem:[%s945 + $0x220] sm:$0xff]
  %v1015 = vld [vmem:[%s945 + $0x228] sm:$0xff]
  %v1016 = vld [vmem:[%s945 + $0x230] sm:$0xff]
  %v1017 = vld [vmem:[%s945 + $0x238] sm:$0xff]
  %v1018 = vld [vmem:[%s945 + $0x240] sm:$0xff]
  %v1019 = vld [vmem:[%s945 + $0x248] sm:$0xff]
  %v1020 = vld [vmem:[%s945 + $0x250] sm:$0xff]
  %v1021 = vld [vmem:[%s945 + $0x258] sm:$0xff]
  %v1022 = vld [vmem:[%s945 + $0x260] sm:$0xff]
  %v1023 = vld [vmem:[%s945 + $0x268] sm:$0xff]
  %v1024 = vld [vmem:[%s945 + $0x270] sm:$0xff]
  %v1025 = vld [vmem:[%s945 + $0x278] sm:$0xff]
  %v1026 = vld [vmem:[%s945 + $0x280] sm:$0xff]
  %v1027 = vld [vmem:[%s945 + $0x288] sm:$0xff]
  %v1028 = vld [vmem:[%s945 + $0x290] sm:$0xff]
  %v1029 = vld [vmem:[%s945 + $0x298] sm:$0xff]
  %v1030 = vld [vmem:[%s945 + $0x2a0] sm:$0xff]
  %v1031 = vld [vmem:[%s945 + $0x2a8] sm:$0xff]
  %v1032 = vld [vmem:[%s945 + $0x2b0] sm:$0xff]
  %v1033 = vld [vmem:[%s945 + $0x2b8] sm:$0xff]
  %v1034 = vld [vmem:[%s945 + $0x2c0] sm:$0xff]
  %v1035 = vld [vmem:[%s945 + $0x2c8] sm:$0xff]
  %v1036 = vld [vmem:[%s945 + $0x2d0] sm:$0xff]
  %v1037 = vld [vmem:[%s945 + $0x2d8] sm:$0xff]
  %v1038 = vld [vmem:[%s945 + $0x2e0] sm:$0xff]
  %v1039 = vld [vmem:[%s945 + $0x2e8] sm:$0xff]
  %v1040 = vld [vmem:[%s945 + $0x2f0] sm:$0xff]
  %v1041 = vld [vmem:[%s945 + $0x2f8] sm:$0xff]
  %v1138 = vunpack.c.l.b16 %v946
  %v1139 = vunpack.c.h.b16 %v946
  %v1140 = vunpack.c.l.b16 %v947
  %v1141 = vunpack.c.h.b16 %v947
  %v1142 = vunpack.c.l.b16 %v948
  %v1143 = vunpack.c.h.b16 %v948
  %v1144 = vunpack.c.l.b16 %v949
  %v1145 = vunpack.c.h.b16 %v949
  %v1146 = vunpack.c.l.b16 %v950
  %v1147 = vunpack.c.h.b16 %v950
  %v1148 = vunpack.c.l.b16 %v951
  %v1149 = vunpack.c.h.b16 %v951
  %v1150 = vunpack.c.l.b16 %v952
  %v1151 = vunpack.c.h.b16 %v952
  %v1152 = vunpack.c.l.b16 %v953
  %v1153 = vunpack.c.h.b16 %v953
  %v1154 = vunpack.c.l.b16 %v954
  %v1155 = vunpack.c.h.b16 %v954
  %v1156 = vunpack.c.l.b16 %v955
  %v1157 = vunpack.c.h.b16 %v955
  %v1158 = vunpack.c.l.b16 %v956
  %v1159 = vunpack.c.h.b16 %v956
  %v1160 = vunpack.c.l.b16 %v957
  %v1161 = vunpack.c.h.b16 %v957
  %v1162 = vunpack.c.l.b16 %v958
  %v1163 = vunpack.c.h.b16 %v958
  %v1164 = vunpack.c.l.b16 %v959
  %v1165 = vunpack.c.h.b16 %v959
  %v1166 = vunpack.c.l.b16 %v960
  %v1167 = vunpack.c.h.b16 %v960
  %v1168 = vunpack.c.l.b16 %v961
  %v1169 = vunpack.c.h.b16 %v961
  %v1170 = vunpack.c.l.b16 %v962
  %v1171 = vunpack.c.h.b16 %v962
  %v1172 = vunpack.c.l.b16 %v963
  %v1173 = vunpack.c.h.b16 %v963
  %v1174 = vunpack.c.l.b16 %v964
  %v1175 = vunpack.c.h.b16 %v964
  %v1176 = vunpack.c.l.b16 %v965
  %v1177 = vunpack.c.h.b16 %v965
  %v1178 = vunpack.c.l.b16 %v966
  %v1179 = vunpack.c.h.b16 %v966
  %v1180 = vunpack.c.l.b16 %v967
  %v1181 = vunpack.c.h.b16 %v967
  %v1182 = vunpack.c.l.b16 %v968
  %v1183 = vunpack.c.h.b16 %v968
  %v1184 = vunpack.c.l.b16 %v969
  %v1185 = vunpack.c.h.b16 %v969
  %v1186 = vunpack.c.l.b16 %v970
  %v1187 = vunpack.c.h.b16 %v970
  %v1188 = vunpack.c.l.b16 %v971
  %v1189 = vunpack.c.h.b16 %v971
  %v1190 = vunpack.c.l.b16 %v972
  %v1191 = vunpack.c.h.b16 %v972
  %v1192 = vunpack.c.l.b16 %v973
  %v1193 = vunpack.c.h.b16 %v973
  %v1194 = vunpack.c.l.b16 %v974
  %v1195 = vunpack.c.h.b16 %v974
  %v1196 = vunpack.c.l.b16 %v975
  %v1197 = vunpack.c.h.b16 %v975
  %v1198 = vunpack.c.l.b16 %v976
  %v1199 = vunpack.c.h.b16 %v976
  %v1200 = vunpack.c.l.b16 %v977
  %v1201 = vunpack.c.h.b16 %v977
  %v1202 = vunpack.c.l.b16 %v978
  %v1203 = vunpack.c.h.b16 %v978
  %v1204 = vunpack.c.l.b16 %v979
  %v1205 = vunpack.c.h.b16 %v979
  %v1206 = vunpack.c.l.b16 %v980
  %v1207 = vunpack.c.h.b16 %v980
  %v1208 = vunpack.c.l.b16 %v981
  %v1209 = vunpack.c.h.b16 %v981
  %v1210 = vunpack.c.l.b16 %v982
  %v1211 = vunpack.c.h.b16 %v982
  %v1212 = vunpack.c.l.b16 %v983
  %v1213 = vunpack.c.h.b16 %v983
  %v1214 = vunpack.c.l.b16 %v984
  %v1215 = vunpack.c.h.b16 %v984
  %v1216 = vunpack.c.l.b16 %v985
  %v1217 = vunpack.c.h.b16 %v985
  %v1218 = vunpack.c.l.b16 %v986
  %v1219 = vunpack.c.h.b16 %v986
  %v1220 = vunpack.c.l.b16 %v987
  %v1221 = vunpack.c.h.b16 %v987
  %v1222 = vunpack.c.l.b16 %v988
  %v1223 = vunpack.c.h.b16 %v988
  %v1224 = vunpack.c.l.b16 %v989
  %v1225 = vunpack.c.h.b16 %v989
  %v1226 = vunpack.c.l.b16 %v990
  %v1227 = vunpack.c.h.b16 %v990
  %v1228 = vunpack.c.l.b16 %v991
  %v1229 = vunpack.c.h.b16 %v991
  %v1230 = vunpack.c.l.b16 %v992
  %v1231 = vunpack.c.h.b16 %v992
  %v1232 = vunpack.c.l.b16 %v993
  %v1233 = vunpack.c.h.b16 %v993
  %v1234 = vunpack.c.l.b16 %v994
  %v1235 = vunpack.c.h.b16 %v994
  %v1236 = vunpack.c.l.b16 %v995
  %v1237 = vunpack.c.h.b16 %v995
  %v1238 = vunpack.c.l.b16 %v996
  %v1239 = vunpack.c.h.b16 %v996
  %v1240 = vunpack.c.l.b16 %v997
  %v1241 = vunpack.c.h.b16 %v997
  %v1242 = vunpack.c.l.b16 %v998
  %v1243 = vunpack.c.h.b16 %v998
  %v1244 = vunpack.c.l.b16 %v999
  %v1245 = vunpack.c.h.b16 %v999
  %v1246 = vunpack.c.l.b16 %v1000
  %v1247 = vunpack.c.h.b16 %v1000
  %v1248 = vunpack.c.l.b16 %v1001
  %v1249 = vunpack.c.h.b16 %v1001
  %v1250 = vunpack.c.l.b16 %v1002
  %v1251 = vunpack.c.h.b16 %v1002
  %v1252 = vunpack.c.l.b16 %v1003
  %v1253 = vunpack.c.h.b16 %v1003
  %v1254 = vunpack.c.l.b16 %v1004
  %v1255 = vunpack.c.h.b16 %v1004
  %v1256 = vunpack.c.l.b16 %v1005
  %v1257 = vunpack.c.h.b16 %v1005
  %v1258 = vunpack.c.l.b16 %v1006
  %v1259 = vunpack.c.h.b16 %v1006
  %v1260 = vunpack.c.l.b16 %v1007
  %v1261 = vunpack.c.h.b16 %v1007
  %v1262 = vunpack.c.l.b16 %v1008
  %v1263 = vunpack.c.h.b16 %v1008
  %v1264 = vunpack.c.l.b16 %v1009
  %v1265 = vunpack.c.h.b16 %v1009
  %v1266 = vunpack.c.l.b16 %v1010
  %v1267 = vunpack.c.h.b16 %v1010
  %v1268 = vunpack.c.l.b16 %v1011
  %v1269 = vunpack.c.h.b16 %v1011
  %v1270 = vunpack.c.l.b16 %v1012
  %v1271 = vunpack.c.h.b16 %v1012
  %v1272 = vunpack.c.l.b16 %v1013
  %v1273 = vunpack.c.h.b16 %v1013
  %v1274 = vunpack.c.l.b16 %v1014
  %v1275 = vunpack.c.h.b16 %v1014
  %v1276 = vunpack.c.l.b16 %v1015
  %v1277 = vunpack.c.h.b16 %v1015
  %v1278 = vunpack.c.l.b16 %v1016
  %v1279 = vunpack.c.h.b16 %v1016
  %v1280 = vunpack.c.l.b16 %v1017
  %v1281 = vunpack.c.h.b16 %v1017
  %v1282 = vunpack.c.l.b16 %v1018
  %v1283 = vunpack.c.h.b16 %v1018
  %v1284 = vunpack.c.l.b16 %v1019
  %v1285 = vunpack.c.h.b16 %v1019
  %v1286 = vunpack.c.l.b16 %v1020
  %v1287 = vunpack.c.h.b16 %v1020
  %v1288 = vunpack.c.l.b16 %v1021
  %v1289 = vunpack.c.h.b16 %v1021
  %v1290 = vunpack.c.l.b16 %v1022
  %v1291 = vunpack.c.h.b16 %v1022
  %v1292 = vunpack.c.l.b16 %v1023
  %v1293 = vunpack.c.h.b16 %v1023
  %v1294 = vunpack.c.l.b16 %v1024
  %v1295 = vunpack.c.h.b16 %v1024
  %v1296 = vunpack.c.l.b16 %v1025
  %v1297 = vunpack.c.h.b16 %v1025
  %v1298 = vunpack.c.l.b16 %v1026
  %v1299 = vunpack.c.h.b16 %v1026
  %v1300 = vunpack.c.l.b16 %v1027
  %v1301 = vunpack.c.h.b16 %v1027
  %v1302 = vunpack.c.l.b16 %v1028
  %v1303 = vunpack.c.h.b16 %v1028
  %v1304 = vunpack.c.l.b16 %v1029
  %v1305 = vunpack.c.h.b16 %v1029
  %v1306 = vunpack.c.l.b16 %v1030
  %v1307 = vunpack.c.h.b16 %v1030
  %v1308 = vunpack.c.l.b16 %v1031
  %v1309 = vunpack.c.h.b16 %v1031
  %v1310 = vunpack.c.l.b16 %v1032
  %v1311 = vunpack.c.h.b16 %v1032
  %v1312 = vunpack.c.l.b16 %v1033
  %v1313 = vunpack.c.h.b16 %v1033
  %v1314 = vunpack.c.l.b16 %v1034
  %v1315 = vunpack.c.h.b16 %v1034
  %v1316 = vunpack.c.l.b16 %v1035
  %v1317 = vunpack.c.h.b16 %v1035
  %v1318 = vunpack.c.l.b16 %v1036
  %v1319 = vunpack.c.h.b16 %v1036
  %v1320 = vunpack.c.l.b16 %v1037
  %v1321 = vunpack.c.h.b16 %v1037
  %v1322 = vunpack.c.l.b16 %v1038
  %v1323 = vunpack.c.h.b16 %v1038
  %v1324 = vunpack.c.l.b16 %v1039
  %v1325 = vunpack.c.h.b16 %v1039
  %v1326 = vunpack.c.l.b16 %v1040
  %v1327 = vunpack.c.h.b16 %v1040
  %v1328 = vunpack.c.l.b16 %v1041
  %v1329 = vunpack.c.h.b16 %v1041
  %v1330 = vpack.c.b16 %v1140, %v1138
  %v1331 = vpack.c.b16 %v1141, %v1139
  %v1332 = vpack.c.b16 %v1144, %v1142
  %v1333 = vpack.c.b16 %v1145, %v1143
  %v1334 = vpack.c.b16 %v1148, %v1146
  %v1335 = vpack.c.b16 %v1149, %v1147
  %v1336 = vpack.c.b16 %v1152, %v1150
  %v1337 = vpack.c.b16 %v1153, %v1151
  %v1338 = vpack.c.b16 %v1156, %v1154
  %v1339 = vpack.c.b16 %v1157, %v1155
  %v1340 = vpack.c.b16 %v1160, %v1158
  %v1341 = vpack.c.b16 %v1161, %v1159
  %v1342 = vpack.c.b16 %v1164, %v1162
  %v1343 = vpack.c.b16 %v1165, %v1163
  %v1344 = vpack.c.b16 %v1168, %v1166
  %v1345 = vpack.c.b16 %v1169, %v1167
  %v1346 = vpack.c.b16 %v1172, %v1170
  %v1347 = vpack.c.b16 %v1173, %v1171
  %v1348 = vpack.c.b16 %v1176, %v1174
  %v1349 = vpack.c.b16 %v1177, %v1175
  %v1350 = vpack.c.b16 %v1180, %v1178
  %v1351 = vpack.c.b16 %v1181, %v1179
  %v1352 = vpack.c.b16 %v1184, %v1182
  %v1353 = vpack.c.b16 %v1185, %v1183
  %v1354 = vpack.c.b16 %v1188, %v1186
  %v1355 = vpack.c.b16 %v1189, %v1187
  %v1356 = vpack.c.b16 %v1192, %v1190
  %v1357 = vpack.c.b16 %v1193, %v1191
  %v1358 = vpack.c.b16 %v1196, %v1194
  %v1359 = vpack.c.b16 %v1197, %v1195
  %v1360 = vpack.c.b16 %v1200, %v1198
  %v1361 = vpack.c.b16 %v1201, %v1199
  %v1362 = vpack.c.b16 %v1204, %v1202
  %v1363 = vpack.c.b16 %v1205, %v1203
  %v1364 = vpack.c.b16 %v1208, %v1206
  %v1365 = vpack.c.b16 %v1209, %v1207
  %v1366 = vpack.c.b16 %v1212, %v1210
  %v1367 = vpack.c.b16 %v1213, %v1211
  %v1368 = vpack.c.b16 %v1216, %v1214
  %v1369 = vpack.c.b16 %v1217, %v1215
  %v1370 = vpack.c.b16 %v1220, %v1218
  %v1371 = vpack.c.b16 %v1221, %v1219
  %v1372 = vpack.c.b16 %v1224, %v1222
  %v1373 = vpack.c.b16 %v1225, %v1223
  %v1374 = vpack.c.b16 %v1228, %v1226
  %v1375 = vpack.c.b16 %v1229, %v1227
  %v1376 = vpack.c.b16 %v1232, %v1230
  %v1377 = vpack.c.b16 %v1233, %v1231
  %v1378 = vpack.c.b16 %v1236, %v1234
  %v1379 = vpack.c.b16 %v1237, %v1235
  %v1380 = vpack.c.b16 %v1240, %v1238
  %v1381 = vpack.c.b16 %v1241, %v1239
  %v1382 = vpack.c.b16 %v1244, %v1242
  %v1383 = vpack.c.b16 %v1245, %v1243
  %v1384 = vpack.c.b16 %v1248, %v1246
  %v1385 = vpack.c.b16 %v1249, %v1247
  %v1386 = vpack.c.b16 %v1252, %v1250
  %v1387 = vpack.c.b16 %v1253, %v1251
  %v1388 = vpack.c.b16 %v1256, %v1254
  %v1389 = vpack.c.b16 %v1257, %v1255
  %v1390 = vpack.c.b16 %v1260, %v1258
  %v1391 = vpack.c.b16 %v1261, %v1259
  %v1392 = vpack.c.b16 %v1264, %v1262
  %v1393 = vpack.c.b16 %v1265, %v1263
  %v1394 = vpack.c.b16 %v1268, %v1266
  %v1395 = vpack.c.b16 %v1269, %v1267
  %v1396 = vpack.c.b16 %v1272, %v1270
  %v1397 = vpack.c.b16 %v1273, %v1271
  %v1398 = vpack.c.b16 %v1276, %v1274
  %v1399 = vpack.c.b16 %v1277, %v1275
  %v1400 = vpack.c.b16 %v1280, %v1278
  %v1401 = vpack.c.b16 %v1281, %v1279
  %v1402 = vpack.c.b16 %v1284, %v1282
  %v1403 = vpack.c.b16 %v1285, %v1283
  %v1404 = vpack.c.b16 %v1288, %v1286
  %v1405 = vpack.c.b16 %v1289, %v1287
  %v1406 = vpack.c.b16 %v1292, %v1290
  %v1407 = vpack.c.b16 %v1293, %v1291
  %v1408 = vpack.c.b16 %v1296, %v1294
  %v1409 = vpack.c.b16 %v1297, %v1295
  %v1410 = vpack.c.b16 %v1300, %v1298
  %v1411 = vpack.c.b16 %v1301, %v1299
  %v1412 = vpack.c.b16 %v1304, %v1302
  %v1413 = vpack.c.b16 %v1305, %v1303
  %v1414 = vpack.c.b16 %v1308, %v1306
  %v1415 = vpack.c.b16 %v1309, %v1307
  %v1416 = vpack.c.b16 %v1312, %v1310
  %v1417 = vpack.c.b16 %v1313, %v1311
  %v1418 = vpack.c.b16 %v1316, %v1314
  %v1419 = vpack.c.b16 %v1317, %v1315
  %v1420 = vpack.c.b16 %v1320, %v1318
  %v1421 = vpack.c.b16 %v1321, %v1319
  %v1422 = vpack.c.b16 %v1324, %v1322
  %v1423 = vpack.c.b16 %v1325, %v1323
  %v1424 = vpack.c.b16 %v1328, %v1326
  %v1425 = vpack.c.b16 %v1329, %v1327
  %1522 = vmatprep.subr.bf16.mxu0 %v1345
  %1523 = vmatpush1.bf16.msra.mxu0 %v1344
  %1524 = vmatprep.subr.bf16.mxu0 %v1343
  %1525 = vmatpush1.bf16.msra.mxu0 %v1342
  %1526 = vmatprep.subr.bf16.mxu0 %v1341
  %1527 = vmatpush1.bf16.msra.mxu0 %v1340
  %1528 = vmatprep.subr.bf16.mxu0 %v1339
  %1529 = vmatpush1.bf16.msra.mxu0 %v1338
  %1530 = vmatprep.subr.bf16.mxu0 %v1337
  %1531 = vmatpush1.bf16.msra.mxu0 %v1336
  %1532 = vmatprep.subr.bf16.mxu0 %v1335
  %1533 = vmatpush1.bf16.msra.mxu0 %v1334
  %1534 = vmatprep.subr.bf16.mxu0 %v1333
  %1535 = vmatpush1.bf16.msra.mxu0 %v1332
  %1536 = vmatprep.subr.bf16.mxu0 %v1331
  %1537 = vmatpush1.bf16.msra.mxu0 %v1330
  %1538 = vmatprep.subr.bf16.mxu0 %v1361
  %1539 = vmatpush2.bf16.msra.mxu0 %v1360
  %1540 = vmatprep.subr.bf16.mxu0 %v1359
  %1541 = vmatpush2.bf16.msra.mxu0 %v1358
  %1542 = vmatprep.subr.bf16.mxu0 %v1357
  %1543 = vmatpush2.bf16.msra.mxu0 %v1356
  %1544 = vmatprep.subr.bf16.mxu0 %v1355
  %1545 = vmatpush2.bf16.msra.mxu0 %v1354
  %1546 = vmatprep.subr.bf16.mxu0 %v1353
  %1547 = vmatpush2.bf16.msra.mxu0 %v1352
  %1548 = vmatprep.subr.bf16.mxu0 %v1351
  %1549 = vmatpush2.bf16.msra.mxu0 %v1350
  %1550 = vmatprep.subr.bf16.mxu0 %v1349
  %1551 = vmatpush2.bf16.msra.mxu0 %v1348
  %1552 = vmatprep.subr.bf16.mxu0 %v1347
  %1553 = vmatpush2.bf16.msra.mxu0 %v1346
  %1554 = vmatprep.mubr.bf16.mxu0 %v904
  %1555 = vmatmul.mubr.bf16.gmra.mxu0 %v903
  %v1556 = vpop.f32.mrf.mxu0
  %v1557 = vadd.f32 0.0, %v1556
  %v1558 = vpop.f32.mrf.mxu0
  %v1559 = vadd.f32 0.0, %v1558
  %v1560 = vpop.f32.mrf.mxu0
  %v1561 = vadd.f32 0.0, %v1560
  %v1562 = vpop.f32.mrf.mxu0
  %v1563 = vadd.f32 0.0, %v1562
  %1564 = vmatprep.mubr.bf16.mxu0 %v910
  %1565 = vmatmul.mubr.bf16.gmra.mxu0 %v909
  %v1566 = vpop.f32.mrf.mxu0
  %v1567 = vadd.f32 0.0, %v1566
  %v1568 = vpop.f32.mrf.mxu0
  %v1569 = vadd.f32 0.0, %v1568
  %v1570 = vpop.f32.mrf.mxu0
  %v1571 = vadd.f32 0.0, %v1570
  %v1572 = vpop.f32.mrf.mxu0
  %v1573 = vadd.f32 0.0, %v1572
  %1574 = vmatprep.mubr.bf16.mxu0 %v916
  %1575 = vmatmul.mubr.bf16.gmra.mxu0 %v915
  %v1576 = vpop.f32.mrf.mxu0
  %v1577 = vadd.f32 0.0, %v1576
  %v1578 = vpop.f32.mrf.mxu0
  %v1579 = vadd.f32 0.0, %v1578
  %v1580 = vpop.f32.mrf.mxu0
  %v1581 = vadd.f32 0.0, %v1580
  %v1582 = vpop.f32.mrf.mxu0
  %v1583 = vadd.f32 0.0, %v1582
  %1584 = vmatprep.mubr.bf16.mxu0 %v922
  %1585 = vmatmul.mubr.bf16.gmra.mxu0 %v921
  %v1586 = vpop.f32.mrf.mxu0
  %v1587 = vpop.f32.mrf.mxu0
  %v1588 = vpop.f32.mrf.mxu0
  %v1589 = vpop.f32.mrf.mxu0
  %1590 = vmatprep.mubr.bf16.mxu0 %v928
  %1591 = vmatmul.mubr.bf16.gmra.mxu0 %v927
  %v1592 = vpop.f32.mrf.mxu0
  %v1593 = vadd.f32 0.0, %v1592
  %v1594 = vpop.f32.mrf.mxu0
  %v1595 = vadd.f32 0.0, %v1594
  %v1596 = vpop.f32.mrf.mxu0
  %v1597 = vadd.f32 0.0, %v1596
  %v1598 = vpop.f32.mrf.mxu0
  %v1599 = vadd.f32 0.0, %v1598
  %1600 = vmatprep.mubr.bf16.mxu0 %v934
  %1601 = vmatmul.mubr.bf16.gmra.mxu0 %v933
  %v1602 = vpop.f32.mrf.mxu0
  %v1603 = vadd.f32 0.0, %v1602
  %v1604 = vpop.f32.mrf.mxu0
  %v1605 = vadd.f32 0.0, %v1604
  %v1606 = vpop.f32.mrf.mxu0
  %v1607 = vadd.f32 0.0, %v1606
  %v1608 = vpop.f32.mrf.mxu0
  %v1609 = vadd.f32 0.0, %v1608
  %1610 = vmatprep.mubr.bf16.mxu0 %v940
  %1611 = vmatmul.mubr.bf16.gmra.mxu0 %v939
  %v1612 = vpop.f32.mrf.mxu0
  %v1613 = vadd.f32 0.0, %v1612
  %v1614 = vpop.f32.mrf.mxu0
  %v1615 = vadd.f32 0.0, %v1614
  %v1616 = vpop.f32.mrf.mxu0
  %v1617 = vadd.f32 0.0, %v1616
  %v1618 = vpop.f32.mrf.mxu0
  %v1619 = vadd.f32 0.0, %v1618
  %1620 = vdwg.mxu0
  %1621 = vmatprep.subr.bf16.mxu0 %v1377
  %1622 = vmatpush1.bf16.msra.mxu0 %v1376
  %1623 = vmatprep.subr.bf16.mxu0 %v1375
  %1624 = vmatpush1.bf16.msra.mxu0 %v1374
  %1625 = vmatprep.subr.bf16.mxu0 %v1373
  %1626 = vmatpush1.bf16.msra.mxu0 %v1372
  %1627 = vmatprep.subr.bf16.mxu0 %v1371
  %1628 = vmatpush1.bf16.msra.mxu0 %v1370
  %1629 = vmatprep.subr.bf16.mxu0 %v1369
  %1630 = vmatpush1.bf16.msra.mxu0 %v1368
  %1631 = vmatprep.subr.bf16.mxu0 %v1367
  %1632 = vmatpush1.bf16.msra.mxu0 %v1366
  %1633 = vmatprep.subr.bf16.mxu0 %v1365
  %1634 = vmatpush1.bf16.msra.mxu0 %v1364
  %1635 = vmatprep.subr.bf16.mxu0 %v1363
  %1636 = vmatpush1.bf16.msra.mxu0 %v1362
  %1637 = vmatprep.subr.bf16.mxu0 %v1393
  %1638 = vmatpush2.bf16.msra.mxu0 %v1392
  %1639 = vmatprep.subr.bf16.mxu0 %v1391
  %1640 = vmatpush2.bf16.msra.mxu0 %v1390
  %1641 = vmatprep.subr.bf16.mxu0 %v1389
  %1642 = vmatpush2.bf16.msra.mxu0 %v1388
  %1643 = vmatprep.subr.bf16.mxu0 %v1387
  %1644 = vmatpush2.bf16.msra.mxu0 %v1386
  %1645 = vmatprep.subr.bf16.mxu0 %v1385
  %1646 = vmatpush2.bf16.msra.mxu0 %v1384
  %1647 = vmatprep.subr.bf16.mxu0 %v1383
  %1648 = vmatpush2.bf16.msra.mxu0 %v1382
  %1649 = vmatprep.subr.bf16.mxu0 %v1381
  %1650 = vmatpush2.bf16.msra.mxu0 %v1380
  %1651 = vmatprep.subr.bf16.mxu0 %v1379
  %1652 = vmatpush2.bf16.msra.mxu0 %v1378
  %1653 = vmatprep.mubr.bf16.mxu0 %v906
  %1654 = vmatmul.mubr.bf16.gmra.mxu0 %v905
  %v1655 = vpop.f32.mrf.mxu0
  %v1656 = vadd.f32 %v1557, %v1655
  %v1657 = vpop.f32.mrf.mxu0
  %v1658 = vadd.f32 %v1559, %v1657
  %v1659 = vpop.f32.mrf.mxu0
  %v1660 = vadd.f32 %v1561, %v1659
  %v1661 = vpop.f32.mrf.mxu0
  %v1662 = vadd.f32 %v1563, %v1661
  %1663 = vmatprep.mubr.bf16.mxu0 %v912
  %1664 = vmatmul.mubr.bf16.gmra.mxu0 %v911
  %v1665 = vpop.f32.mrf.mxu0
  %v1666 = vadd.f32 %v1567, %v1665
  %v1667 = vpop.f32.mrf.mxu0
  %v1668 = vadd.f32 %v1569, %v1667
  %v1669 = vpop.f32.mrf.mxu0
  %v1670 = vadd.f32 %v1571, %v1669
  %v1671 = vpop.f32.mrf.mxu0
  %v1672 = vadd.f32 %v1573, %v1671
  %1673 = vmatprep.mubr.bf16.mxu0 %v918
  %1674 = vmatmul.mubr.bf16.gmra.mxu0 %v917
  %v1675 = vpop.f32.mrf.mxu0
  %v1676 = vadd.f32 %v1577, %v1675
  %v1677 = vpop.f32.mrf.mxu0
  %v1678 = vadd.f32 %v1579, %v1677
  %v1679 = vpop.f32.mrf.mxu0
  %v1680 = vadd.f32 %v1581, %v1679
  %v1681 = vpop.f32.mrf.mxu0
  %v1682 = vadd.f32 %v1583, %v1681
  %1683 = vmatprep.mubr.bf16.mxu0 %v924
  %1684 = vmatmul.mubr.bf16.gmra.mxu0 %v923
  %v1685 = vpop.f32.mrf.mxu0
  %v1686 = vpop.f32.mrf.mxu0
  %v1687 = vpop.f32.mrf.mxu0
  %v1688 = vpop.f32.mrf.mxu0
  %1689 = vmatprep.mubr.bf16.mxu0 %v930
  %1690 = vmatmul.mubr.bf16.gmra.mxu0 %v929
  %v1691 = vpop.f32.mrf.mxu0
  %v1692 = vadd.f32 %v1593, %v1691
  %v1693 = vpop.f32.mrf.mxu0
  %v1694 = vadd.f32 %v1595, %v1693
  %v1695 = vpop.f32.mrf.mxu0
  %v1696 = vadd.f32 %v1597, %v1695
  %v1697 = vpop.f32.mrf.mxu0
  %v1698 = vadd.f32 %v1599, %v1697
  %1699 = vmatprep.mubr.bf16.mxu0 %v936
  %1700 = vmatmul.mubr.bf16.gmra.mxu0 %v935
  %v1701 = vpop.f32.mrf.mxu0
  %v1702 = vadd.f32 %v1603, %v1701
  %v1703 = vpop.f32.mrf.mxu0
  %v1704 = vadd.f32 %v1605, %v1703
  %v1705 = vpop.f32.mrf.mxu0
  %v1706 = vadd.f32 %v1607, %v1705
  %v1707 = vpop.f32.mrf.mxu0
  %v1708 = vadd.f32 %v1609, %v1707
  %1709 = vmatprep.mubr.bf16.mxu0 %v942
  %1710 = vmatmul.mubr.bf16.gmra.mxu0 %v941
  %v1711 = vpop.f32.mrf.mxu0
  %v1712 = vadd.f32 %v1613, %v1711
  %v1713 = vpop.f32.mrf.mxu0
  %v1714 = vadd.f32 %v1615, %v1713
  %v1715 = vpop.f32.mrf.mxu0
  %v1716 = vadd.f32 %v1617, %v1715
  %v1717 = vpop.f32.mrf.mxu0
  %v1718 = vadd.f32 %v1619, %v1717
  %1719 = vdwg.mxu0
  %1720 = vmatprep.subr.bf16.mxu0 %v1409
  %1721 = vmatpush1.bf16.msra.mxu0 %v1408
  %1722 = vmatprep.subr.bf16.mxu0 %v1407
  %1723 = vmatpush1.bf16.msra.mxu0 %v1406
  %1724 = vmatprep.subr.bf16.mxu0 %v1405
  %1725 = vmatpush1.bf16.msra.mxu0 %v1404
  %1726 = vmatprep.subr.bf16.mxu0 %v1403
  %1727 = vmatpush1.bf16.msra.mxu0 %v1402
  %1728 = vmatprep.subr.bf16.mxu0 %v1401
  %1729 = vmatpush1.bf16.msra.mxu0 %v1400
  %1730 = vmatprep.subr.bf16.mxu0 %v1399
  %1731 = vmatpush1.bf16.msra.mxu0 %v1398
  %1732 = vmatprep.subr.bf16.mxu0 %v1397
  %1733 = vmatpush1.bf16.msra.mxu0 %v1396
  %1734 = vmatprep.subr.bf16.mxu0 %v1395
  %1735 = vmatpush1.bf16.msra.mxu0 %v1394
  %1736 = vmatprep.subr.bf16.mxu0 %v1425
  %1737 = vmatpush2.bf16.msra.mxu0 %v1424
  %1738 = vmatprep.subr.bf16.mxu0 %v1423
  %1739 = vmatpush2.bf16.msra.mxu0 %v1422
  %1740 = vmatprep.subr.bf16.mxu0 %v1421
  %1741 = vmatpush2.bf16.msra.mxu0 %v1420
  %1742 = vmatprep.subr.bf16.mxu0 %v1419
  %1743 = vmatpush2.bf16.msra.mxu0 %v1418
  %1744 = vmatprep.subr.bf16.mxu0 %v1417
  %1745 = vmatpush2.bf16.msra.mxu0 %v1416
  %1746 = vmatprep.subr.bf16.mxu0 %v1415
  %1747 = vmatpush2.bf16.msra.mxu0 %v1414
  %1748 = vmatprep.subr.bf16.mxu0 %v1413
  %1749 = vmatpush2.bf16.msra.mxu0 %v1412
  %1750 = vmatprep.subr.bf16.mxu0 %v1411
  %1751 = vmatpush2.bf16.msra.mxu0 %v1410
  %1752 = vmatprep.mubr.bf16.mxu0 %v908
  %1753 = vmatmul.mubr.bf16.gmra.mxu0 %v907
  %v1754 = vpop.f32.mrf.mxu0
  %v1755 = vadd.f32 %v1656, %v1754
  %v1756 = vpop.f32.mrf.mxu0
  %v1757 = vadd.f32 %v1658, %v1756
  %v1758 = vpop.f32.mrf.mxu0
  %v1759 = vadd.f32 %v1660, %v1758
  %v1760 = vpop.f32.mrf.mxu0
  %v1761 = vadd.f32 %v1662, %v1760
  %1762 = vmatprep.mubr.bf16.mxu0 %v914
  %1763 = vmatmul.mubr.bf16.gmra.mxu0 %v913
  %v1764 = vpop.f32.mrf.mxu0
  %v1765 = vadd.f32 %v1666, %v1764
  %v1766 = vpop.f32.mrf.mxu0
  %v1767 = vadd.f32 %v1668, %v1766
  %v1768 = vpop.f32.mrf.mxu0
  %v1769 = vadd.f32 %v1670, %v1768
  %v1770 = vpop.f32.mrf.mxu0
  %v1771 = vadd.f32 %v1672, %v1770
  %1772 = vmatprep.mubr.bf16.mxu0 %v920
  %1773 = vmatmul.mubr.bf16.gmra.mxu0 %v919
  %v1774 = vpop.f32.mrf.mxu0
  %v1775 = vadd.f32 %v1676, %v1774
  %v1776 = vpop.f32.mrf.mxu0
  %v1777 = vadd.f32 %v1678, %v1776
  %v1778 = vpop.f32.mrf.mxu0
  %v1779 = vadd.f32 %v1680, %v1778
  %v1780 = vpop.f32.mrf.mxu0
  %v1781 = vadd.f32 %v1682, %v1780
  %1782 = vmatprep.mubr.bf16.mxu0 %v926
  %1783 = vmatmul.mubr.bf16.gmra.mxu0 %v925
  %v1784 = vpop.f32.mrf.mxu0
  %v1785 = vpop.f32.mrf.mxu0
  %v1786 = vpop.f32.mrf.mxu0
  %v1787 = vpop.f32.mrf.mxu0
  %1788 = vmatprep.mubr.bf16.mxu0 %v932
  %1789 = vmatmul.mubr.bf16.gmra.mxu0 %v931
  %v1790 = vpop.f32.mrf.mxu0
  %v1791 = vadd.f32 %v1692, %v1790
  %v1792 = vpop.f32.mrf.mxu0
  %v1793 = vadd.f32 %v1694, %v1792
  %v1794 = vpop.f32.mrf.mxu0
  %v1795 = vadd.f32 %v1696, %v1794
  %v1796 = vpop.f32.mrf.mxu0
  %v1797 = vadd.f32 %v1698, %v1796
  %1798 = vmatprep.mubr.bf16.mxu0 %v938
  %1799 = vmatmul.mubr.bf16.gmra.mxu0 %v937
  %v1800 = vpop.f32.mrf.mxu0
  %v1801 = vadd.f32 %v1702, %v1800
  %v1802 = vpop.f32.mrf.mxu0
  %v1803 = vadd.f32 %v1704, %v1802
  %v1804 = vpop.f32.mrf.mxu0
  %v1805 = vadd.f32 %v1706, %v1804
  %v1806 = vpop.f32.mrf.mxu0
  %v1807 = vadd.f32 %v1708, %v1806
  %1808 = vmatprep.mubr.bf16.mxu0 %v944
  %1809 = vmatmul.mubr.bf16.gmra.mxu0 %v943
  %v1810 = vpop.f32.mrf.mxu0
  %v1811 = vadd.f32 %v1712, %v1810
  %v1812 = vpop.f32.mrf.mxu0
  %v1813 = vadd.f32 %v1714, %v1812
  %v1814 = vpop.f32.mrf.mxu0
  %v1815 = vadd.f32 %v1716, %v1814
  %v1816 = vpop.f32.mrf.mxu0
  %v1817 = vadd.f32 %v1718, %v1816
  %1818 = vdwg.mxu0
  %v1915 = vunpack.c.l.b16 %v789
  %v1916 = vunpack.c.h.b16 %v789
  %v1917 = vunpack.c.l.b16 %v790
  %v1918 = vunpack.c.h.b16 %v790
  %v1919 = vunpack.c.l.b16 %v791
  %v1920 = vunpack.c.h.b16 %v791
  %v1921 = vunpack.c.l.b16 %v792
  %v1922 = vunpack.c.h.b16 %v792
  %v1923 = vunpack.c.l.b16 %v793
  %v1924 = vunpack.c.h.b16 %v793
  %v1925 = vunpack.c.l.b16 %v794
  %v1926 = vunpack.c.h.b16 %v794
  %v1927 = vunpack.c.l.b16 %v795
  %v1928 = vunpack.c.h.b16 %v795
  %v1929 = vunpack.c.l.b16 %v796
  %v1930 = vunpack.c.h.b16 %v796
  %v1931 = vunpack.c.l.b16 %v797
  %v1932 = vunpack.c.h.b16 %v797
  %v1933 = vunpack.c.l.b16 %v798
  %v1934 = vunpack.c.h.b16 %v798
  %v1935 = vunpack.c.l.b16 %v799
  %v1936 = vunpack.c.h.b16 %v799
  %v1937 = vunpack.c.l.b16 %v800
  %v1938 = vunpack.c.h.b16 %v800
  %v1939 = vunpack.c.l.b16 %v801
  %v1940 = vunpack.c.h.b16 %v801
  %v1941 = vunpack.c.l.b16 %v802
  %v1942 = vunpack.c.h.b16 %v802
  %v1943 = vunpack.c.l.b16 %v803
  %v1944 = vunpack.c.h.b16 %v803
  %v1945 = vunpack.c.l.b16 %v804
  %v1946 = vunpack.c.h.b16 %v804
  %v1947 = vunpack.c.l.b16 %v805
  %v1948 = vunpack.c.h.b16 %v805
  %v1949 = vunpack.c.l.b16 %v806
  %v1950 = vunpack.c.h.b16 %v806
  %v1951 = vunpack.c.l.b16 %v807
  %v1952 = vunpack.c.h.b16 %v807
  %v1953 = vunpack.c.l.b16 %v808
  %v1954 = vunpack.c.h.b16 %v808
  %v1955 = vunpack.c.l.b16 %v809
  %v1956 = vunpack.c.h.b16 %v809
  %v1957 = vunpack.c.l.b16 %v810
  %v1958 = vunpack.c.h.b16 %v810
  %v1959 = vunpack.c.l.b16 %v811
  %v1960 = vunpack.c.h.b16 %v811
  %v1961 = vunpack.c.l.b16 %v812
  %v1962 = vunpack.c.h.b16 %v812
  %v1963 = vunpack.c.l.b16 %v813
  %v1964 = vunpack.c.h.b16 %v813
  %v1965 = vunpack.c.l.b16 %v814
  %v1966 = vunpack.c.h.b16 %v814
  %v1967 = vunpack.c.l.b16 %v815
  %v1968 = vunpack.c.h.b16 %v815
  %v1969 = vunpack.c.l.b16 %v816
  %v1970 = vunpack.c.h.b16 %v816
  %v1971 = vunpack.c.l.b16 %v817
  %v1972 = vunpack.c.h.b16 %v817
  %v1973 = vunpack.c.l.b16 %v818
  %v1974 = vunpack.c.h.b16 %v818
  %v1975 = vunpack.c.l.b16 %v819
  %v1976 = vunpack.c.h.b16 %v819
  %v1977 = vunpack.c.l.b16 %v820
  %v1978 = vunpack.c.h.b16 %v820
  %v1979 = vunpack.c.l.b16 %v821
  %v1980 = vunpack.c.h.b16 %v821
  %v1981 = vunpack.c.l.b16 %v822
  %v1982 = vunpack.c.h.b16 %v822
  %v1983 = vunpack.c.l.b16 %v823
  %v1984 = vunpack.c.h.b16 %v823
  %v1985 = vunpack.c.l.b16 %v824
  %v1986 = vunpack.c.h.b16 %v824
  %v1987 = vunpack.c.l.b16 %v825
  %v1988 = vunpack.c.h.b16 %v825
  %v1989 = vunpack.c.l.b16 %v826
  %v1990 = vunpack.c.h.b16 %v826
  %v1991 = vunpack.c.l.b16 %v827
  %v1992 = vunpack.c.h.b16 %v827
  %v1993 = vunpack.c.l.b16 %v828
  %v1994 = vunpack.c.h.b16 %v828
  %v1995 = vunpack.c.l.b16 %v829
  %v1996 = vunpack.c.h.b16 %v829
  %v1997 = vunpack.c.l.b16 %v830
  %v1998 = vunpack.c.h.b16 %v830
  %v1999 = vunpack.c.l.b16 %v831
  %v2000 = vunpack.c.h.b16 %v831
  %v2001 = vunpack.c.l.b16 %v832
  %v2002 = vunpack.c.h.b16 %v832
  %v2003 = vunpack.c.l.b16 %v833
  %v2004 = vunpack.c.h.b16 %v833
  %v2005 = vunpack.c.l.b16 %v834
  %v2006 = vunpack.c.h.b16 %v834
  %v2007 = vunpack.c.l.b16 %v835
  %v2008 = vunpack.c.h.b16 %v835
  %v2009 = vunpack.c.l.b16 %v836
  %v2010 = vunpack.c.h.b16 %v836
  %v2011 = vunpack.c.l.b16 %v837
  %v2012 = vunpack.c.h.b16 %v837
  %v2013 = vunpack.c.l.b16 %v838
  %v2014 = vunpack.c.h.b16 %v838
  %v2015 = vunpack.c.l.b16 %v839
  %v2016 = vunpack.c.h.b16 %v839
  %v2017 = vunpack.c.l.b16 %v840
  %v2018 = vunpack.c.h.b16 %v840
  %v2019 = vunpack.c.l.b16 %v841
  %v2020 = vunpack.c.h.b16 %v841
  %v2021 = vunpack.c.l.b16 %v842
  %v2022 = vunpack.c.h.b16 %v842
  %v2023 = vunpack.c.l.b16 %v843
  %v2024 = vunpack.c.h.b16 %v843
  %v2025 = vunpack.c.l.b16 %v844
  %v2026 = vunpack.c.h.b16 %v844
  %v2027 = vunpack.c.l.b16 %v845
  %v2028 = vunpack.c.h.b16 %v845
  %v2029 = vunpack.c.l.b16 %v846
  %v2030 = vunpack.c.h.b16 %v846
  %v2031 = vunpack.c.l.b16 %v847
  %v2032 = vunpack.c.h.b16 %v847
  %v2033 = vunpack.c.l.b16 %v848
  %v2034 = vunpack.c.h.b16 %v848
  %v2035 = vunpack.c.l.b16 %v849
  %v2036 = vunpack.c.h.b16 %v849
  %v2037 = vunpack.c.l.b16 %v850
  %v2038 = vunpack.c.h.b16 %v850
  %v2039 = vunpack.c.l.b16 %v851
  %v2040 = vunpack.c.h.b16 %v851
  %v2041 = vunpack.c.l.b16 %v852
  %v2042 = vunpack.c.h.b16 %v852
  %v2043 = vunpack.c.l.b16 %v853
  %v2044 = vunpack.c.h.b16 %v853
  %v2045 = vunpack.c.l.b16 %v854
  %v2046 = vunpack.c.h.b16 %v854
  %v2047 = vunpack.c.l.b16 %v855
  %v2048 = vunpack.c.h.b16 %v855
  %v2049 = vunpack.c.l.b16 %v856
  %v2050 = vunpack.c.h.b16 %v856
  %v2051 = vunpack.c.l.b16 %v857
  %v2052 = vunpack.c.h.b16 %v857
  %v2053 = vunpack.c.l.b16 %v858
  %v2054 = vunpack.c.h.b16 %v858
  %v2055 = vunpack.c.l.b16 %v859
  %v2056 = vunpack.c.h.b16 %v859
  %v2057 = vunpack.c.l.b16 %v860
  %v2058 = vunpack.c.h.b16 %v860
  %v2059 = vunpack.c.l.b16 %v861
  %v2060 = vunpack.c.h.b16 %v861
  %v2061 = vunpack.c.l.b16 %v862
  %v2062 = vunpack.c.h.b16 %v862
  %v2063 = vunpack.c.l.b16 %v863
  %v2064 = vunpack.c.h.b16 %v863
  %v2065 = vunpack.c.l.b16 %v864
  %v2066 = vunpack.c.h.b16 %v864
  %v2067 = vunpack.c.l.b16 %v865
  %v2068 = vunpack.c.h.b16 %v865
  %v2069 = vunpack.c.l.b16 %v866
  %v2070 = vunpack.c.h.b16 %v866
  %v2071 = vunpack.c.l.b16 %v867
  %v2072 = vunpack.c.h.b16 %v867
  %v2073 = vunpack.c.l.b16 %v868
  %v2074 = vunpack.c.h.b16 %v868
  %v2075 = vunpack.c.l.b16 %v869
  %v2076 = vunpack.c.h.b16 %v869
  %v2077 = vunpack.c.l.b16 %v870
  %v2078 = vunpack.c.h.b16 %v870
  %v2079 = vunpack.c.l.b16 %v871
  %v2080 = vunpack.c.h.b16 %v871
  %v2081 = vunpack.c.l.b16 %v872
  %v2082 = vunpack.c.h.b16 %v872
  %v2083 = vunpack.c.l.b16 %v873
  %v2084 = vunpack.c.h.b16 %v873
  %v2085 = vunpack.c.l.b16 %v874
  %v2086 = vunpack.c.h.b16 %v874
  %v2087 = vunpack.c.l.b16 %v875
  %v2088 = vunpack.c.h.b16 %v875
  %v2089 = vunpack.c.l.b16 %v876
  %v2090 = vunpack.c.h.b16 %v876
  %v2091 = vunpack.c.l.b16 %v877
  %v2092 = vunpack.c.h.b16 %v877
  %v2093 = vunpack.c.l.b16 %v878
  %v2094 = vunpack.c.h.b16 %v878
  %v2095 = vunpack.c.l.b16 %v879
  %v2096 = vunpack.c.h.b16 %v879
  %v2097 = vunpack.c.l.b16 %v880
  %v2098 = vunpack.c.h.b16 %v880
  %v2099 = vunpack.c.l.b16 %v881
  %v2100 = vunpack.c.h.b16 %v881
  %v2101 = vunpack.c.l.b16 %v882
  %v2102 = vunpack.c.h.b16 %v882
  %v2103 = vunpack.c.l.b16 %v883
  %v2104 = vunpack.c.h.b16 %v883
  %v2105 = vunpack.c.l.b16 %v884
  %v2106 = vunpack.c.h.b16 %v884
  %v2107 = vpack.c.b16 %v1917, %v1915
  %v2108 = vpack.c.b16 %v1918, %v1916
  %v2109 = vpack.c.b16 %v1921, %v1919
  %v2110 = vpack.c.b16 %v1922, %v1920
  %v2111 = vpack.c.b16 %v1925, %v1923
  %v2112 = vpack.c.b16 %v1926, %v1924
  %v2113 = vpack.c.b16 %v1929, %v1927
  %v2114 = vpack.c.b16 %v1930, %v1928
  %v2115 = vpack.c.b16 %v1933, %v1931
  %v2116 = vpack.c.b16 %v1934, %v1932
  %v2117 = vpack.c.b16 %v1937, %v1935
  %v2118 = vpack.c.b16 %v1938, %v1936
  %v2119 = vpack.c.b16 %v1941, %v1939
  %v2120 = vpack.c.b16 %v1942, %v1940
  %v2121 = vpack.c.b16 %v1945, %v1943
  %v2122 = vpack.c.b16 %v1946, %v1944
  %v2123 = vpack.c.b16 %v1949, %v1947
  %v2124 = vpack.c.b16 %v1950, %v1948
  %v2125 = vpack.c.b16 %v1953, %v1951
  %v2126 = vpack.c.b16 %v1954, %v1952
  %v2127 = vpack.c.b16 %v1957, %v1955
  %v2128 = vpack.c.b16 %v1958, %v1956
  %v2129 = vpack.c.b16 %v1961, %v1959
  %v2130 = vpack.c.b16 %v1962, %v1960
  %v2131 = vpack.c.b16 %v1965, %v1963
  %v2132 = vpack.c.b16 %v1966, %v1964
  %v2133 = vpack.c.b16 %v1969, %v1967
  %v2134 = vpack.c.b16 %v1970, %v1968
  %v2135 = vpack.c.b16 %v1973, %v1971
  %v2136 = vpack.c.b16 %v1974, %v1972
  %v2137 = vpack.c.b16 %v1977, %v1975
  %v2138 = vpack.c.b16 %v1978, %v1976
  %v2139 = vpack.c.b16 %v1981, %v1979
  %v2140 = vpack.c.b16 %v1982, %v1980
  %v2141 = vpack.c.b16 %v1985, %v1983
  %v2142 = vpack.c.b16 %v1986, %v1984
  %v2143 = vpack.c.b16 %v1989, %v1987
  %v2144 = vpack.c.b16 %v1990, %v1988
  %v2145 = vpack.c.b16 %v1993, %v1991
  %v2146 = vpack.c.b16 %v1994, %v1992
  %v2147 = vpack.c.b16 %v1997, %v1995
  %v2148 = vpack.c.b16 %v1998, %v1996
  %v2149 = vpack.c.b16 %v2001, %v1999
  %v2150 = vpack.c.b16 %v2002, %v2000
  %v2151 = vpack.c.b16 %v2005, %v2003
  %v2152 = vpack.c.b16 %v2006, %v2004
  %v2153 = vpack.c.b16 %v2009, %v2007
  %v2154 = vpack.c.b16 %v2010, %v2008
  %v2155 = vpack.c.b16 %v2013, %v2011
  %v2156 = vpack.c.b16 %v2014, %v2012
  %v2157 = vpack.c.b16 %v2017, %v2015
  %v2158 = vpack.c.b16 %v2018, %v2016
  %v2159 = vpack.c.b16 %v2021, %v2019
  %v2160 = vpack.c.b16 %v2022, %v2020
  %v2161 = vpack.c.b16 %v2025, %v2023
  %v2162 = vpack.c.b16 %v2026, %v2024
  %v2163 = vpack.c.b16 %v2029, %v2027
  %v2164 = vpack.c.b16 %v2030, %v2028
  %v2165 = vpack.c.b16 %v2033, %v2031
  %v2166 = vpack.c.b16 %v2034, %v2032
  %v2167 = vpack.c.b16 %v2037, %v2035
  %v2168 = vpack.c.b16 %v2038, %v2036
  %v2169 = vpack.c.b16 %v2041, %v2039
  %v2170 = vpack.c.b16 %v2042, %v2040
  %v2171 = vpack.c.b16 %v2045, %v2043
  %v2172 = vpack.c.b16 %v2046, %v2044
  %v2173 = vpack.c.b16 %v2049, %v2047
  %v2174 = vpack.c.b16 %v2050, %v2048
  %v2175 = vpack.c.b16 %v2053, %v2051
  %v2176 = vpack.c.b16 %v2054, %v2052
  %v2177 = vpack.c.b16 %v2057, %v2055
  %v2178 = vpack.c.b16 %v2058, %v2056
  %v2179 = vpack.c.b16 %v2061, %v2059
  %v2180 = vpack.c.b16 %v2062, %v2060
  %v2181 = vpack.c.b16 %v2065, %v2063
  %v2182 = vpack.c.b16 %v2066, %v2064
  %v2183 = vpack.c.b16 %v2069, %v2067
  %v2184 = vpack.c.b16 %v2070, %v2068
  %v2185 = vpack.c.b16 %v2073, %v2071
  %v2186 = vpack.c.b16 %v2074, %v2072
  %v2187 = vpack.c.b16 %v2077, %v2075
  %v2188 = vpack.c.b16 %v2078, %v2076
  %v2189 = vpack.c.b16 %v2081, %v2079
  %v2190 = vpack.c.b16 %v2082, %v2080
  %v2191 = vpack.c.b16 %v2085, %v2083
  %v2192 = vpack.c.b16 %v2086, %v2084
  %v2193 = vpack.c.b16 %v2089, %v2087
  %v2194 = vpack.c.b16 %v2090, %v2088
  %v2195 = vpack.c.b16 %v2093, %v2091
  %v2196 = vpack.c.b16 %v2094, %v2092
  %v2197 = vpack.c.b16 %v2097, %v2095
  %v2198 = vpack.c.b16 %v2098, %v2096
  %v2199 = vpack.c.b16 %v2101, %v2099
  %v2200 = vpack.c.b16 %v2102, %v2100
  %v2201 = vpack.c.b16 %v2105, %v2103
  %v2202 = vpack.c.b16 %v2106, %v2104
  %2299 = vmatprep.subr.bf16.mxu0 %v2122
  %2300 = vmatpush1.bf16.msra.mxu0 %v2121
  %2301 = vmatprep.subr.bf16.mxu0 %v2120
  %2302 = vmatpush1.bf16.msra.mxu0 %v2119
  %2303 = vmatprep.subr.bf16.mxu0 %v2118
  %2304 = vmatpush1.bf16.msra.mxu0 %v2117
  %2305 = vmatprep.subr.bf16.mxu0 %v2116
  %2306 = vmatpush1.bf16.msra.mxu0 %v2115
  %2307 = vmatprep.subr.bf16.mxu0 %v2114
  %2308 = vmatpush1.bf16.msra.mxu0 %v2113
  %2309 = vmatprep.subr.bf16.mxu0 %v2112
  %2310 = vmatpush1.bf16.msra.mxu0 %v2111
  %2311 = vmatprep.subr.bf16.mxu0 %v2110
  %2312 = vmatpush1.bf16.msra.mxu0 %v2109
  %2313 = vmatprep.subr.bf16.mxu0 %v2108
  %2314 = vmatpush1.bf16.msra.mxu0 %v2107
  %2315 = vmatprep.subr.bf16.mxu0 %v2138
  %2316 = vmatpush2.bf16.msra.mxu0 %v2137
  %2317 = vmatprep.subr.bf16.mxu0 %v2136
  %2318 = vmatpush2.bf16.msra.mxu0 %v2135
  %2319 = vmatprep.subr.bf16.mxu0 %v2134
  %2320 = vmatpush2.bf16.msra.mxu0 %v2133
  %2321 = vmatprep.subr.bf16.mxu0 %v2132
  %2322 = vmatpush2.bf16.msra.mxu0 %v2131
  %2323 = vmatprep.subr.bf16.mxu0 %v2130
  %2324 = vmatpush2.bf16.msra.mxu0 %v2129
  %2325 = vmatprep.subr.bf16.mxu0 %v2128
  %2326 = vmatpush2.bf16.msra.mxu0 %v2127
  %2327 = vmatprep.subr.bf16.mxu0 %v2126
  %2328 = vmatpush2.bf16.msra.mxu0 %v2125
  %2329 = vmatprep.subr.bf16.mxu0 %v2124
  %2330 = vmatpush2.bf16.msra.mxu0 %v2123
  %2331 = vmatprep.mubr.bf16.mxu0 %v748
  %2332 = vmatmul.mubr.bf16.gmra.mxu0 %v747
  %v2333 = vpop.f32.mrf.mxu0
  %v2334 = vadd.f32 %v1755, %v2333
  %v2335 = vpop.f32.mrf.mxu0
  %v2336 = vadd.f32 %v1757, %v2335
  %v2337 = vpop.f32.mrf.mxu0
  %v2338 = vadd.f32 %v1759, %v2337
  %v2339 = vpop.f32.mrf.mxu0
  %v2340 = vadd.f32 %v1761, %v2339
  %2341 = vmatprep.mubr.bf16.mxu0 %v754
  %2342 = vmatmul.mubr.bf16.gmra.mxu0 %v753
  %v2343 = vpop.f32.mrf.mxu0
  %v2344 = vadd.f32 %v1765, %v2343
  %v2345 = vpop.f32.mrf.mxu0
  %v2346 = vadd.f32 %v1767, %v2345
  %v2347 = vpop.f32.mrf.mxu0
  %v2348 = vadd.f32 %v1769, %v2347
  %v2349 = vpop.f32.mrf.mxu0
  %v2350 = vadd.f32 %v1771, %v2349
  %2351 = vmatprep.mubr.bf16.mxu0 %v760
  %2352 = vmatmul.mubr.bf16.gmra.mxu0 %v759
  %v2353 = vpop.f32.mrf.mxu0
  %v2354 = vadd.f32 %v1775, %v2353
  %v2355 = vpop.f32.mrf.mxu0
  %v2356 = vadd.f32 %v1777, %v2355
  %v2357 = vpop.f32.mrf.mxu0
  %v2358 = vadd.f32 %v1779, %v2357
  %v2359 = vpop.f32.mrf.mxu0
  %v2360 = vadd.f32 %v1781, %v2359
  %2361 = vmatprep.mubr.bf16.mxu0 %v766
  %2362 = vmatmul.mubr.bf16.gmra.mxu0 %v765
  %v2363 = vpop.f32.mrf.mxu0
  %v2364 = vpop.f32.mrf.mxu0
  %v2365 = vpop.f32.mrf.mxu0
  %v2366 = vpop.f32.mrf.mxu0
  %2367 = vmatprep.mubr.bf16.mxu0 %v772
  %2368 = vmatmul.mubr.bf16.gmra.mxu0 %v771
  %v2369 = vpop.f32.mrf.mxu0
  %v2370 = vadd.f32 %v1791, %v2369
  %v2371 = vpop.f32.mrf.mxu0
  %v2372 = vadd.f32 %v1793, %v2371
  %v2373 = vpop.f32.mrf.mxu0
  %v2374 = vadd.f32 %v1795, %v2373
  %v2375 = vpop.f32.mrf.mxu0
  %v2376 = vadd.f32 %v1797, %v2375
  %2377 = vmatprep.mubr.bf16.mxu0 %v778
  %2378 = vmatmul.mubr.bf16.gmra.mxu0 %v777
  %v2379 = vpop.f32.mrf.mxu0
  %v2380 = vadd.f32 %v1801, %v2379
  %v2381 = vpop.f32.mrf.mxu0
  %v2382 = vadd.f32 %v1803, %v2381
  %v2383 = vpop.f32.mrf.mxu0
  %v2384 = vadd.f32 %v1805, %v2383
  %v2385 = vpop.f32.mrf.mxu0
  %v2386 = vadd.f32 %v1807, %v2385
  %2387 = vmatprep.mubr.bf16.mxu0 %v784
  %2388 = vmatmul.mubr.bf16.gmra.mxu0 %v783
  %v2389 = vpop.f32.mrf.mxu0
  %v2390 = vadd.f32 %v1811, %v2389
  %v2391 = vpop.f32.mrf.mxu0
  %v2392 = vadd.f32 %v1813, %v2391
  %v2393 = vpop.f32.mrf.mxu0
  %v2394 = vadd.f32 %v1815, %v2393
  %v2395 = vpop.f32.mrf.mxu0
  %v2396 = vadd.f32 %v1817, %v2395
  %2397 = vdwg.mxu0
  %2398 = vmatprep.subr.bf16.mxu0 %v2154
  %2399 = vmatpush1.bf16.msra.mxu0 %v2153
  %2400 = vmatprep.subr.bf16.mxu0 %v2152
  %2401 = vmatpush1.bf16.msra.mxu0 %v2151
  %2402 = vmatprep.subr.bf16.mxu0 %v2150
  %2403 = vmatpush1.bf16.msra.mxu0 %v2149
  %2404 = vmatprep.subr.bf16.mxu0 %v2148
  %2405 = vmatpush1.bf16.msra.mxu0 %v2147
  %2406 = vmatprep.subr.bf16.mxu0 %v2146
  %2407 = vmatpush1.bf16.msra.mxu0 %v2145
  %2408 = vmatprep.subr.bf16.mxu0 %v2144
  %2409 = vmatpush1.bf16.msra.mxu0 %v2143
  %2410 = vmatprep.subr.bf16.mxu0 %v2142
  %2411 = vmatpush1.bf16.msra.mxu0 %v2141
  %2412 = vmatprep.subr.bf16.mxu0 %v2140
  %2413 = vmatpush1.bf16.msra.mxu0 %v2139
  %2414 = vmatprep.subr.bf16.mxu0 %v2170
  %2415 = vmatpush2.bf16.msra.mxu0 %v2169
  %2416 = vmatprep.subr.bf16.mxu0 %v2168
  %2417 = vmatpush2.bf16.msra.mxu0 %v2167
  %2418 = vmatprep.subr.bf16.mxu0 %v2166
  %2419 = vmatpush2.bf16.msra.mxu0 %v2165
  %2420 = vmatprep.subr.bf16.mxu0 %v2164
  %2421 = vmatpush2.bf16.msra.mxu0 %v2163
  %2422 = vmatprep.subr.bf16.mxu0 %v2162
  %2423 = vmatpush2.bf16.msra.mxu0 %v2161
  %2424 = vmatprep.subr.bf16.mxu0 %v2160
  %2425 = vmatpush2.bf16.msra.mxu0 %v2159
  %2426 = vmatprep.subr.bf16.mxu0 %v2158
  %2427 = vmatpush2.bf16.msra.mxu0 %v2157
  %2428 = vmatprep.subr.bf16.mxu0 %v2156
  %2429 = vmatpush2.bf16.msra.mxu0 %v2155
  %2430 = vmatprep.mubr.bf16.mxu0 %v750
  %2431 = vmatmul.mubr.bf16.gmra.mxu0 %v749
  %v2432 = vpop.f32.mrf.mxu0
  %v2433 = vadd.f32 %v2334, %v2432
  %v2434 = vpop.f32.mrf.mxu0
  %v2435 = vadd.f32 %v2336, %v2434
  %v2436 = vpop.f32.mrf.mxu0
  %v2437 = vadd.f32 %v2338, %v2436
  %v2438 = vpop.f32.mrf.mxu0
  %v2439 = vadd.f32 %v2340, %v2438
  %2440 = vmatprep.mubr.bf16.mxu0 %v756
  %2441 = vmatmul.mubr.bf16.gmra.mxu0 %v755
  %v2442 = vpop.f32.mrf.mxu0
  %v2443 = vadd.f32 %v2344, %v2442
  %v2444 = vpop.f32.mrf.mxu0
  %v2445 = vadd.f32 %v2346, %v2444
  %v2446 = vpop.f32.mrf.mxu0
  %v2447 = vadd.f32 %v2348, %v2446
  %v2448 = vpop.f32.mrf.mxu0
  %v2449 = vadd.f32 %v2350, %v2448
  %2450 = vmatprep.mubr.bf16.mxu0 %v762
  %2451 = vmatmul.mubr.bf16.gmra.mxu0 %v761
  %v2452 = vpop.f32.mrf.mxu0
  %v2453 = vadd.f32 %v2354, %v2452
  %v2454 = vpop.f32.mrf.mxu0
  %v2455 = vadd.f32 %v2356, %v2454
  %v2456 = vpop.f32.mrf.mxu0
  %v2457 = vadd.f32 %v2358, %v2456
  %v2458 = vpop.f32.mrf.mxu0
  %v2459 = vadd.f32 %v2360, %v2458
  %2460 = vmatprep.mubr.bf16.mxu0 %v768
  %2461 = vmatmul.mubr.bf16.gmra.mxu0 %v767
  %v2462 = vpop.f32.mrf.mxu0
  %v2463 = vpop.f32.mrf.mxu0
  %v2464 = vpop.f32.mrf.mxu0
  %v2465 = vpop.f32.mrf.mxu0
  %2466 = vmatprep.mubr.bf16.mxu0 %v774
  %2467 = vmatmul.mubr.bf16.gmra.mxu0 %v773
  %v2468 = vpop.f32.mrf.mxu0
  %v2469 = vadd.f32 %v2370, %v2468
  %v2470 = vpop.f32.mrf.mxu0
  %v2471 = vadd.f32 %v2372, %v2470
  %v2472 = vpop.f32.mrf.mxu0
  %v2473 = vadd.f32 %v2374, %v2472
  %v2474 = vpop.f32.mrf.mxu0
  %v2475 = vadd.f32 %v2376, %v2474
  %2476 = vmatprep.mubr.bf16.mxu0 %v780
  %2477 = vmatmul.mubr.bf16.gmra.mxu0 %v779
  %v2478 = vpop.f32.mrf.mxu0
  %v2479 = vadd.f32 %v2380, %v2478
  %v2480 = vpop.f32.mrf.mxu0
  %v2481 = vadd.f32 %v2382, %v2480
  %v2482 = vpop.f32.mrf.mxu0
  %v2483 = vadd.f32 %v2384, %v2482
  %v2484 = vpop.f32.mrf.mxu0
  %v2485 = vadd.f32 %v2386, %v2484
  %2486 = vmatprep.mubr.bf16.mxu0 %v786
  %2487 = vmatmul.mubr.bf16.gmra.mxu0 %v785
  %v2488 = vpop.f32.mrf.mxu0
  %v2489 = vadd.f32 %v2390, %v2488
  %v2490 = vpop.f32.mrf.mxu0
  %v2491 = vadd.f32 %v2392, %v2490
  %v2492 = vpop.f32.mrf.mxu0
  %v2493 = vadd.f32 %v2394, %v2492
  %v2494 = vpop.f32.mrf.mxu0
  %v2495 = vadd.f32 %v2396, %v2494
  %2496 = vdwg.mxu0
  %2497 = vmatprep.subr.bf16.mxu0 %v2186
  %2498 = vmatpush1.bf16.msra.mxu0 %v2185
  %2499 = vmatprep.subr.bf16.mxu0 %v2184
  %2500 = vmatpush1.bf16.msra.mxu0 %v2183
  %2501 = vmatprep.subr.bf16.mxu0 %v2182
  %2502 = vmatpush1.bf16.msra.mxu0 %v2181
  %2503 = vmatprep.subr.bf16.mxu0 %v2180
  %2504 = vmatpush1.bf16.msra.mxu0 %v2179
  %2505 = vmatprep.subr.bf16.mxu0 %v2178
  %2506 = vmatpush1.bf16.msra.mxu0 %v2177
  %2507 = vmatprep.subr.bf16.mxu0 %v2176
  %2508 = vmatpush1.bf16.msra.mxu0 %v2175
  %2509 = vmatprep.subr.bf16.mxu0 %v2174
  %2510 = vmatpush1.bf16.msra.mxu0 %v2173
  %2511 = vmatprep.subr.bf16.mxu0 %v2172
  %2512 = vmatpush1.bf16.msra.mxu0 %v2171
  %2513 = vmatprep.subr.bf16.mxu0 %v2202
  %2514 = vmatpush2.bf16.msra.mxu0 %v2201
  %2515 = vmatprep.subr.bf16.mxu0 %v2200
  %2516 = vmatpush2.bf16.msra.mxu0 %v2199
  %2517 = vmatprep.subr.bf16.mxu0 %v2198
  %2518 = vmatpush2.bf16.msra.mxu0 %v2197
  %2519 = vmatprep.subr.bf16.mxu0 %v2196
  %2520 = vmatpush2.bf16.msra.mxu0 %v2195
  %2521 = vmatprep.subr.bf16.mxu0 %v2194
  %2522 = vmatpush2.bf16.msra.mxu0 %v2193
  %2523 = vmatprep.subr.bf16.mxu0 %v2192
  %2524 = vmatpush2.bf16.msra.mxu0 %v2191
  %2525 = vmatprep.subr.bf16.mxu0 %v2190
  %2526 = vmatpush2.bf16.msra.mxu0 %v2189
  %2527 = vmatprep.subr.bf16.mxu0 %v2188
  %2528 = vmatpush2.bf16.msra.mxu0 %v2187
  %2529 = vmatprep.mubr.bf16.mxu0 %v752
  %2530 = vmatmul.mubr.bf16.gmra.mxu0 %v751
  %v2531 = vpop.f32.mrf.mxu0
  %v2532 = vadd.f32 %v2433, %v2531
  %v2533 = vpop.f32.mrf.mxu0
  %v2534 = vadd.f32 %v2435, %v2533
  %v2535 = vpop.f32.mrf.mxu0
  %v2536 = vadd.f32 %v2437, %v2535
  %v2537 = vpop.f32.mrf.mxu0
  %v2538 = vadd.f32 %v2439, %v2537
  %2539 = vmatprep.mubr.bf16.mxu0 %v758
  %2540 = vmatmul.mubr.bf16.gmra.mxu0 %v757
  %v2541 = vpop.f32.mrf.mxu0
  %v2542 = vadd.f32 %v2443, %v2541
  %v2543 = vpop.f32.mrf.mxu0
  %v2544 = vadd.f32 %v2445, %v2543
  %v2545 = vpop.f32.mrf.mxu0
  %v2546 = vadd.f32 %v2447, %v2545
  %v2547 = vpop.f32.mrf.mxu0
  %v2548 = vadd.f32 %v2449, %v2547
  %2549 = vmatprep.mubr.bf16.mxu0 %v764
  %2550 = vmatmul.mubr.bf16.gmra.mxu0 %v763
  %v2551 = vpop.f32.mrf.mxu0
  %v2552 = vadd.f32 %v2453, %v2551
  %v2553 = vpop.f32.mrf.mxu0
  %v2554 = vadd.f32 %v2455, %v2553
  %v2555 = vpop.f32.mrf.mxu0
  %v2556 = vadd.f32 %v2457, %v2555
  %v2557 = vpop.f32.mrf.mxu0
  %v2558 = vadd.f32 %v2459, %v2557
  %2559 = vmatprep.mubr.bf16.mxu0 %v770
  %2560 = vmatmul.mubr.bf16.gmra.mxu0 %v769
  %v2561 = vpop.f32.mrf.mxu0
  %v2562 = vpop.f32.mrf.mxu0
  %v2563 = vpop.f32.mrf.mxu0
  %v2564 = vpop.f32.mrf.mxu0
  %2565 = vmatprep.mubr.bf16.mxu0 %v776
  %2566 = vmatmul.mubr.bf16.gmra.mxu0 %v775
  %v2567 = vpop.f32.mrf.mxu0
  %v2568 = vadd.f32 %v2469, %v2567
  %v2569 = vpop.f32.mrf.mxu0
  %v2570 = vadd.f32 %v2471, %v2569
  %v2571 = vpop.f32.mrf.mxu0
  %v2572 = vadd.f32 %v2473, %v2571
  %v2573 = vpop.f32.mrf.mxu0
  %v2574 = vadd.f32 %v2475, %v2573
  %2575 = vmatprep.mubr.bf16.mxu0 %v782
  %2576 = vmatmul.mubr.bf16.gmra.mxu0 %v781
  %v2577 = vpop.f32.mrf.mxu0
  %v2578 = vadd.f32 %v2479, %v2577
  %v2579 = vpop.f32.mrf.mxu0
  %v2580 = vadd.f32 %v2481, %v2579
  %v2581 = vpop.f32.mrf.mxu0
  %v2582 = vadd.f32 %v2483, %v2581
  %v2583 = vpop.f32.mrf.mxu0
  %v2584 = vadd.f32 %v2485, %v2583
  %2585 = vmatprep.mubr.bf16.mxu0 %v788
  %2586 = vmatmul.mubr.bf16.gmra.mxu0 %v787
  %v2587 = vpop.f32.mrf.mxu0
  %v2588 = vadd.f32 %v2489, %v2587
  %v2589 = vpop.f32.mrf.mxu0
  %v2590 = vadd.f32 %v2491, %v2589
  %v2591 = vpop.f32.mrf.mxu0
  %v2592 = vadd.f32 %v2493, %v2591
  %v2593 = vpop.f32.mrf.mxu0
  %v2594 = vadd.f32 %v2495, %v2593
  %2595 = vdwg.mxu0
  %v2598 = vrot.slane %v551, 1
  %v2599 = vsel %vm581, %v887, %v2598
  %v2600 = vrot.slane %v552, 1
  %v2601 = vsel %vm581, %v889, %v2600
  %v2606 = vrot.slane %v551, 2
  %v2607 = vsel %vm664, %v895, %v2606
  %v2608 = vrot.slane %v552, 2
  %v2609 = vsel %vm664, %v897, %v2608
  %v2614 = vpack.c.bf16 %v888, %v633
  %v2615 = vpack.c.bf16 %v890, %v635
  %v2616 = vpack.c.bf16 %v896, %v716
  %v2617 = vpack.c.bf16 %v898, %v718
  %v2618 = vpack.c.bf16 %v551, %v549
  %v2619 = vpack.c.bf16 %v552, %v550
  %v2620 = vpack.c.bf16 %v2598, %v2599
  %v2621 = vpack.c.bf16 %v2600, %v2601
  %v2622 = vpack.c.bf16 %v2606, %v2607
  %v2623 = vpack.c.bf16 %v2608, %v2609
  %s2624 = scalar_lea.vmem %s5, 1536
  %v2625 = vld [vmem:[%s2624] sm:$0xff]
  %v2626 = vld [vmem:[%s2624 + $0x8] sm:$0xff]
  %v2627 = vld [vmem:[%s2624 + $0x10] sm:$0xff]
  %v2628 = vld [vmem:[%s2624 + $0x18] sm:$0xff]
  %v2629 = vld [vmem:[%s2624 + $0x20] sm:$0xff]
  %v2630 = vld [vmem:[%s2624 + $0x28] sm:$0xff]
  %v2631 = vld [vmem:[%s2624 + $0x30] sm:$0xff]
  %v2632 = vld [vmem:[%s2624 + $0x38] sm:$0xff]
  %v2633 = vld [vmem:[%s2624 + $0x40] sm:$0xff]
  %v2634 = vld [vmem:[%s2624 + $0x48] sm:$0xff]
  %v2635 = vld [vmem:[%s2624 + $0x50] sm:$0xff]
  %v2636 = vld [vmem:[%s2624 + $0x58] sm:$0xff]
  %v2637 = vld [vmem:[%s2624 + $0x60] sm:$0xff]
  %v2638 = vld [vmem:[%s2624 + $0x68] sm:$0xff]
  %v2639 = vld [vmem:[%s2624 + $0x70] sm:$0xff]
  %v2640 = vld [vmem:[%s2624 + $0x78] sm:$0xff]
  %v2641 = vld [vmem:[%s2624 + $0x80] sm:$0xff]
  %v2642 = vld [vmem:[%s2624 + $0x88] sm:$0xff]
  %v2643 = vld [vmem:[%s2624 + $0x90] sm:$0xff]
  %v2644 = vld [vmem:[%s2624 + $0x98] sm:$0xff]
  %v2645 = vld [vmem:[%s2624 + $0xa0] sm:$0xff]
  %v2646 = vld [vmem:[%s2624 + $0xa8] sm:$0xff]
  %v2647 = vld [vmem:[%s2624 + $0xb0] sm:$0xff]
  %v2648 = vld [vmem:[%s2624 + $0xb8] sm:$0xff]
  %v2649 = vld [vmem:[%s2624 + $0xc0] sm:$0xff]
  %v2650 = vld [vmem:[%s2624 + $0xc8] sm:$0xff]
  %v2651 = vld [vmem:[%s2624 + $0xd0] sm:$0xff]
  %v2652 = vld [vmem:[%s2624 + $0xd8] sm:$0xff]
  %v2653 = vld [vmem:[%s2624 + $0xe0] sm:$0xff]
  %v2654 = vld [vmem:[%s2624 + $0xe8] sm:$0xff]
  %v2655 = vld [vmem:[%s2624 + $0xf0] sm:$0xff]
  %v2656 = vld [vmem:[%s2624 + $0xf8] sm:$0xff]
  %v2657 = vld [vmem:[%s2624 + $0x100] sm:$0xff]
  %v2658 = vld [vmem:[%s2624 + $0x108] sm:$0xff]
  %v2659 = vld [vmem:[%s2624 + $0x110] sm:$0xff]
  %v2660 = vld [vmem:[%s2624 + $0x118] sm:$0xff]
  %v2661 = vld [vmem:[%s2624 + $0x120] sm:$0xff]
  %v2662 = vld [vmem:[%s2624 + $0x128] sm:$0xff]
  %v2663 = vld [vmem:[%s2624 + $0x130] sm:$0xff]
  %v2664 = vld [vmem:[%s2624 + $0x138] sm:$0xff]
  %v2665 = vld [vmem:[%s2624 + $0x140] sm:$0xff]
  %v2666 = vld [vmem:[%s2624 + $0x148] sm:$0xff]
  %v2667 = vld [vmem:[%s2624 + $0x150] sm:$0xff]
  %v2668 = vld [vmem:[%s2624 + $0x158] sm:$0xff]
  %v2669 = vld [vmem:[%s2624 + $0x160] sm:$0xff]
  %v2670 = vld [vmem:[%s2624 + $0x168] sm:$0xff]
  %v2671 = vld [vmem:[%s2624 + $0x170] sm:$0xff]
  %v2672 = vld [vmem:[%s2624 + $0x178] sm:$0xff]
  %v2673 = vld [vmem:[%s2624 + $0x180] sm:$0xff]
  %v2674 = vld [vmem:[%s2624 + $0x188] sm:$0xff]
  %v2675 = vld [vmem:[%s2624 + $0x190] sm:$0xff]
  %v2676 = vld [vmem:[%s2624 + $0x198] sm:$0xff]
  %v2677 = vld [vmem:[%s2624 + $0x1a0] sm:$0xff]
  %v2678 = vld [vmem:[%s2624 + $0x1a8] sm:$0xff]
  %v2679 = vld [vmem:[%s2624 + $0x1b0] sm:$0xff]
  %v2680 = vld [vmem:[%s2624 + $0x1b8] sm:$0xff]
  %v2681 = vld [vmem:[%s2624 + $0x1c0] sm:$0xff]
  %v2682 = vld [vmem:[%s2624 + $0x1c8] sm:$0xff]
  %v2683 = vld [vmem:[%s2624 + $0x1d0] sm:$0xff]
  %v2684 = vld [vmem:[%s2624 + $0x1d8] sm:$0xff]
  %v2685 = vld [vmem:[%s2624 + $0x1e0] sm:$0xff]
  %v2686 = vld [vmem:[%s2624 + $0x1e8] sm:$0xff]
  %v2687 = vld [vmem:[%s2624 + $0x1f0] sm:$0xff]
  %v2688 = vld [vmem:[%s2624 + $0x1f8] sm:$0xff]
  %v2689 = vld [vmem:[%s2624 + $0x200] sm:$0xff]
  %v2690 = vld [vmem:[%s2624 + $0x208] sm:$0xff]
  %v2691 = vld [vmem:[%s2624 + $0x210] sm:$0xff]
  %v2692 = vld [vmem:[%s2624 + $0x218] sm:$0xff]
  %v2693 = vld [vmem:[%s2624 + $0x220] sm:$0xff]
  %v2694 = vld [vmem:[%s2624 + $0x228] sm:$0xff]
  %v2695 = vld [vmem:[%s2624 + $0x230] sm:$0xff]
  %v2696 = vld [vmem:[%s2624 + $0x238] sm:$0xff]
  %v2697 = vld [vmem:[%s2624 + $0x240] sm:$0xff]
  %v2698 = vld [vmem:[%s2624 + $0x248] sm:$0xff]
  %v2699 = vld [vmem:[%s2624 + $0x250] sm:$0xff]
  %v2700 = vld [vmem:[%s2624 + $0x258] sm:$0xff]
  %v2701 = vld [vmem:[%s2624 + $0x260] sm:$0xff]
  %v2702 = vld [vmem:[%s2624 + $0x268] sm:$0xff]
  %v2703 = vld [vmem:[%s2624 + $0x270] sm:$0xff]
  %v2704 = vld [vmem:[%s2624 + $0x278] sm:$0xff]
  %v2705 = vld [vmem:[%s2624 + $0x280] sm:$0xff]
  %v2706 = vld [vmem:[%s2624 + $0x288] sm:$0xff]
  %v2707 = vld [vmem:[%s2624 + $0x290] sm:$0xff]
  %v2708 = vld [vmem:[%s2624 + $0x298] sm:$0xff]
  %v2709 = vld [vmem:[%s2624 + $0x2a0] sm:$0xff]
  %v2710 = vld [vmem:[%s2624 + $0x2a8] sm:$0xff]
  %v2711 = vld [vmem:[%s2624 + $0x2b0] sm:$0xff]
  %v2712 = vld [vmem:[%s2624 + $0x2b8] sm:$0xff]
  %v2713 = vld [vmem:[%s2624 + $0x2c0] sm:$0xff]
  %v2714 = vld [vmem:[%s2624 + $0x2c8] sm:$0xff]
  %v2715 = vld [vmem:[%s2624 + $0x2d0] sm:$0xff]
  %v2716 = vld [vmem:[%s2624 + $0x2d8] sm:$0xff]
  %v2717 = vld [vmem:[%s2624 + $0x2e0] sm:$0xff]
  %v2718 = vld [vmem:[%s2624 + $0x2e8] sm:$0xff]
  %v2719 = vld [vmem:[%s2624 + $0x2f0] sm:$0xff]
  %v2720 = vld [vmem:[%s2624 + $0x2f8] sm:$0xff]
  %v2817 = vunpack.c.l.b16 %v2625
  %v2818 = vunpack.c.h.b16 %v2625
  %v2819 = vunpack.c.l.b16 %v2626
  %v2820 = vunpack.c.h.b16 %v2626
  %v2821 = vunpack.c.l.b16 %v2627
  %v2822 = vunpack.c.h.b16 %v2627
  %v2823 = vunpack.c.l.b16 %v2628
  %v2824 = vunpack.c.h.b16 %v2628
  %v2825 = vunpack.c.l.b16 %v2629
  %v2826 = vunpack.c.h.b16 %v2629
  %v2827 = vunpack.c.l.b16 %v2630
  %v2828 = vunpack.c.h.b16 %v2630
  %v2829 = vunpack.c.l.b16 %v2631
  %v2830 = vunpack.c.h.b16 %v2631
  %v2831 = vunpack.c.l.b16 %v2632
  %v2832 = vunpack.c.h.b16 %v2632
  %v2833 = vunpack.c.l.b16 %v2633
  %v2834 = vunpack.c.h.b16 %v2633
  %v2835 = vunpack.c.l.b16 %v2634
  %v2836 = vunpack.c.h.b16 %v2634
  %v2837 = vunpack.c.l.b16 %v2635
  %v2838 = vunpack.c.h.b16 %v2635
  %v2839 = vunpack.c.l.b16 %v2636
  %v2840 = vunpack.c.h.b16 %v2636
  %v2841 = vunpack.c.l.b16 %v2637
  %v2842 = vunpack.c.h.b16 %v2637
  %v2843 = vunpack.c.l.b16 %v2638
  %v2844 = vunpack.c.h.b16 %v2638
  %v2845 = vunpack.c.l.b16 %v2639
  %v2846 = vunpack.c.h.b16 %v2639
  %v2847 = vunpack.c.l.b16 %v2640
  %v2848 = vunpack.c.h.b16 %v2640
  %v2849 = vunpack.c.l.b16 %v2641
  %v2850 = vunpack.c.h.b16 %v2641
  %v2851 = vunpack.c.l.b16 %v2642
  %v2852 = vunpack.c.h.b16 %v2642
  %v2853 = vunpack.c.l.b16 %v2643
  %v2854 = vunpack.c.h.b16 %v2643
  %v2855 = vunpack.c.l.b16 %v2644
  %v2856 = vunpack.c.h.b16 %v2644
  %v2857 = vunpack.c.l.b16 %v2645
  %v2858 = vunpack.c.h.b16 %v2645
  %v2859 = vunpack.c.l.b16 %v2646
  %v2860 = vunpack.c.h.b16 %v2646
  %v2861 = vunpack.c.l.b16 %v2647
  %v2862 = vunpack.c.h.b16 %v2647
  %v2863 = vunpack.c.l.b16 %v2648
  %v2864 = vunpack.c.h.b16 %v2648
  %v2865 = vunpack.c.l.b16 %v2649
  %v2866 = vunpack.c.h.b16 %v2649
  %v2867 = vunpack.c.l.b16 %v2650
  %v2868 = vunpack.c.h.b16 %v2650
  %v2869 = vunpack.c.l.b16 %v2651
  %v2870 = vunpack.c.h.b16 %v2651
  %v2871 = vunpack.c.l.b16 %v2652
  %v2872 = vunpack.c.h.b16 %v2652
  %v2873 = vunpack.c.l.b16 %v2653
  %v2874 = vunpack.c.h.b16 %v2653
  %v2875 = vunpack.c.l.b16 %v2654
  %v2876 = vunpack.c.h.b16 %v2654
  %v2877 = vunpack.c.l.b16 %v2655
  %v2878 = vunpack.c.h.b16 %v2655
  %v2879 = vunpack.c.l.b16 %v2656
  %v2880 = vunpack.c.h.b16 %v2656
  %v2881 = vunpack.c.l.b16 %v2657
  %v2882 = vunpack.c.h.b16 %v2657
  %v2883 = vunpack.c.l.b16 %v2658
  %v2884 = vunpack.c.h.b16 %v2658
  %v2885 = vunpack.c.l.b16 %v2659
  %v2886 = vunpack.c.h.b16 %v2659
  %v2887 = vunpack.c.l.b16 %v2660
  %v2888 = vunpack.c.h.b16 %v2660
  %v2889 = vunpack.c.l.b16 %v2661
  %v2890 = vunpack.c.h.b16 %v2661
  %v2891 = vunpack.c.l.b16 %v2662
  %v2892 = vunpack.c.h.b16 %v2662
  %v2893 = vunpack.c.l.b16 %v2663
  %v2894 = vunpack.c.h.b16 %v2663
  %v2895 = vunpack.c.l.b16 %v2664
  %v2896 = vunpack.c.h.b16 %v2664
  %v2897 = vunpack.c.l.b16 %v2665
  %v2898 = vunpack.c.h.b16 %v2665
  %v2899 = vunpack.c.l.b16 %v2666
  %v2900 = vunpack.c.h.b16 %v2666
  %v2901 = vunpack.c.l.b16 %v2667
  %v2902 = vunpack.c.h.b16 %v2667
  %v2903 = vunpack.c.l.b16 %v2668
  %v2904 = vunpack.c.h.b16 %v2668
  %v2905 = vunpack.c.l.b16 %v2669
  %v2906 = vunpack.c.h.b16 %v2669
  %v2907 = vunpack.c.l.b16 %v2670
  %v2908 = vunpack.c.h.b16 %v2670
  %v2909 = vunpack.c.l.b16 %v2671
  %v2910 = vunpack.c.h.b16 %v2671
  %v2911 = vunpack.c.l.b16 %v2672
  %v2912 = vunpack.c.h.b16 %v2672
  %v2913 = vunpack.c.l.b16 %v2673
  %v2914 = vunpack.c.h.b16 %v2673
  %v2915 = vunpack.c.l.b16 %v2674
  %v2916 = vunpack.c.h.b16 %v2674
  %v2917 = vunpack.c.l.b16 %v2675
  %v2918 = vunpack.c.h.b16 %v2675
  %v2919 = vunpack.c.l.b16 %v2676
  %v2920 = vunpack.c.h.b16 %v2676
  %v2921 = vunpack.c.l.b16 %v2677
  %v2922 = vunpack.c.h.b16 %v2677
  %v2923 = vunpack.c.l.b16 %v2678
  %v2924 = vunpack.c.h.b16 %v2678
  %v2925 = vunpack.c.l.b16 %v2679
  %v2926 = vunpack.c.h.b16 %v2679
  %v2927 = vunpack.c.l.b16 %v2680
  %v2928 = vunpack.c.h.b16 %v2680
  %v2929 = vunpack.c.l.b16 %v2681
  %v2930 = vunpack.c.h.b16 %v2681
  %v2931 = vunpack.c.l.b16 %v2682
  %v2932 = vunpack.c.h.b16 %v2682
  %v2933 = vunpack.c.l.b16 %v2683
  %v2934 = vunpack.c.h.b16 %v2683
  %v2935 = vunpack.c.l.b16 %v2684
  %v2936 = vunpack.c.h.b16 %v2684
  %v2937 = vunpack.c.l.b16 %v2685
  %v2938 = vunpack.c.h.b16 %v2685
  %v2939 = vunpack.c.l.b16 %v2686
  %v2940 = vunpack.c.h.b16 %v2686
  %v2941 = vunpack.c.l.b16 %v2687
  %v2942 = vunpack.c.h.b16 %v2687
  %v2943 = vunpack.c.l.b16 %v2688
  %v2944 = vunpack.c.h.b16 %v2688
  %v2945 = vunpack.c.l.b16 %v2689
  %v2946 = vunpack.c.h.b16 %v2689
  %v2947 = vunpack.c.l.b16 %v2690
  %v2948 = vunpack.c.h.b16 %v2690
  %v2949 = vunpack.c.l.b16 %v2691
  %v2950 = vunpack.c.h.b16 %v2691
  %v2951 = vunpack.c.l.b16 %v2692
  %v2952 = vunpack.c.h.b16 %v2692
  %v2953 = vunpack.c.l.b16 %v2693
  %v2954 = vunpack.c.h.b16 %v2693
  %v2955 = vunpack.c.l.b16 %v2694
  %v2956 = vunpack.c.h.b16 %v2694
  %v2957 = vunpack.c.l.b16 %v2695
  %v2958 = vunpack.c.h.b16 %v2695
  %v2959 = vunpack.c.l.b16 %v2696
  %v2960 = vunpack.c.h.b16 %v2696
  %v2961 = vunpack.c.l.b16 %v2697
  %v2962 = vunpack.c.h.b16 %v2697
  %v2963 = vunpack.c.l.b16 %v2698
  %v2964 = vunpack.c.h.b16 %v2698
  %v2965 = vunpack.c.l.b16 %v2699
  %v2966 = vunpack.c.h.b16 %v2699
  %v2967 = vunpack.c.l.b16 %v2700
  %v2968 = vunpack.c.h.b16 %v2700
  %v2969 = vunpack.c.l.b16 %v2701
  %v2970 = vunpack.c.h.b16 %v2701
  %v2971 = vunpack.c.l.b16 %v2702
  %v2972 = vunpack.c.h.b16 %v2702
  %v2973 = vunpack.c.l.b16 %v2703
  %v2974 = vunpack.c.h.b16 %v2703
  %v2975 = vunpack.c.l.b16 %v2704
  %v2976 = vunpack.c.h.b16 %v2704
  %v2977 = vunpack.c.l.b16 %v2705
  %v2978 = vunpack.c.h.b16 %v2705
  %v2979 = vunpack.c.l.b16 %v2706
  %v2980 = vunpack.c.h.b16 %v2706
  %v2981 = vunpack.c.l.b16 %v2707
  %v2982 = vunpack.c.h.b16 %v2707
  %v2983 = vunpack.c.l.b16 %v2708
  %v2984 = vunpack.c.h.b16 %v2708
  %v2985 = vunpack.c.l.b16 %v2709
  %v2986 = vunpack.c.h.b16 %v2709
  %v2987 = vunpack.c.l.b16 %v2710
  %v2988 = vunpack.c.h.b16 %v2710
  %v2989 = vunpack.c.l.b16 %v2711
  %v2990 = vunpack.c.h.b16 %v2711
  %v2991 = vunpack.c.l.b16 %v2712
  %v2992 = vunpack.c.h.b16 %v2712
  %v2993 = vunpack.c.l.b16 %v2713
  %v2994 = vunpack.c.h.b16 %v2713
  %v2995 = vunpack.c.l.b16 %v2714
  %v2996 = vunpack.c.h.b16 %v2714
  %v2997 = vunpack.c.l.b16 %v2715
  %v2998 = vunpack.c.h.b16 %v2715
  %v2999 = vunpack.c.l.b16 %v2716
  %v3000 = vunpack.c.h.b16 %v2716
  %v3001 = vunpack.c.l.b16 %v2717
  %v3002 = vunpack.c.h.b16 %v2717
  %v3003 = vunpack.c.l.b16 %v2718
  %v3004 = vunpack.c.h.b16 %v2718
  %v3005 = vunpack.c.l.b16 %v2719
  %v3006 = vunpack.c.h.b16 %v2719
  %v3007 = vunpack.c.l.b16 %v2720
  %v3008 = vunpack.c.h.b16 %v2720
  %v3009 = vpack.c.b16 %v2819, %v2817
  %v3010 = vpack.c.b16 %v2820, %v2818
  %v3011 = vpack.c.b16 %v2823, %v2821
  %v3012 = vpack.c.b16 %v2824, %v2822
  %v3013 = vpack.c.b16 %v2827, %v2825
  %v3014 = vpack.c.b16 %v2828, %v2826
  %v3015 = vpack.c.b16 %v2831, %v2829
  %v3016 = vpack.c.b16 %v2832, %v2830
  %v3017 = vpack.c.b16 %v2835, %v2833
  %v3018 = vpack.c.b16 %v2836, %v2834
  %v3019 = vpack.c.b16 %v2839, %v2837
  %v3020 = vpack.c.b16 %v2840, %v2838
  %v3021 = vpack.c.b16 %v2843, %v2841
  %v3022 = vpack.c.b16 %v2844, %v2842
  %v3023 = vpack.c.b16 %v2847, %v2845
  %v3024 = vpack.c.b16 %v2848, %v2846
  %v3025 = vpack.c.b16 %v2851, %v2849
  %v3026 = vpack.c.b16 %v2852, %v2850
  %v3027 = vpack.c.b16 %v2855, %v2853
  %v3028 = vpack.c.b16 %v2856, %v2854
  %v3029 = vpack.c.b16 %v2859, %v2857
  %v3030 = vpack.c.b16 %v2860, %v2858
  %v3031 = vpack.c.b16 %v2863, %v2861
  %v3032 = vpack.c.b16 %v2864, %v2862
  %v3033 = vpack.c.b16 %v2867, %v2865
  %v3034 = vpack.c.b16 %v2868, %v2866
  %v3035 = vpack.c.b16 %v2871, %v2869
  %v3036 = vpack.c.b16 %v2872, %v2870
  %v3037 = vpack.c.b16 %v2875, %v2873
  %v3038 = vpack.c.b16 %v2876, %v2874
  %v3039 = vpack.c.b16 %v2879, %v2877
  %v3040 = vpack.c.b16 %v2880, %v2878
  %v3041 = vpack.c.b16 %v2883, %v2881
  %v3042 = vpack.c.b16 %v2884, %v2882
  %v3043 = vpack.c.b16 %v2887, %v2885
  %v3044 = vpack.c.b16 %v2888, %v2886
  %v3045 = vpack.c.b16 %v2891, %v2889
  %v3046 = vpack.c.b16 %v2892, %v2890
  %v3047 = vpack.c.b16 %v2895, %v2893
  %v3048 = vpack.c.b16 %v2896, %v2894
  %v3049 = vpack.c.b16 %v2899, %v2897
  %v3050 = vpack.c.b16 %v2900, %v2898
  %v3051 = vpack.c.b16 %v2903, %v2901
  %v3052 = vpack.c.b16 %v2904, %v2902
  %v3053 = vpack.c.b16 %v2907, %v2905
  %v3054 = vpack.c.b16 %v2908, %v2906
  %v3055 = vpack.c.b16 %v2911, %v2909
  %v3056 = vpack.c.b16 %v2912, %v2910
  %v3057 = vpack.c.b16 %v2915, %v2913
  %v3058 = vpack.c.b16 %v2916, %v2914
  %v3059 = vpack.c.b16 %v2919, %v2917
  %v3060 = vpack.c.b16 %v2920, %v2918
  %v3061 = vpack.c.b16 %v2923, %v2921
  %v3062 = vpack.c.b16 %v2924, %v2922
  %v3063 = vpack.c.b16 %v2927, %v2925
  %v3064 = vpack.c.b16 %v2928, %v2926
  %v3065 = vpack.c.b16 %v2931, %v2929
  %v3066 = vpack.c.b16 %v2932, %v2930
  %v3067 = vpack.c.b16 %v2935, %v2933
  %v3068 = vpack.c.b16 %v2936, %v2934
  %v3069 = vpack.c.b16 %v2939, %v2937
  %v3070 = vpack.c.b16 %v2940, %v2938
  %v3071 = vpack.c.b16 %v2943, %v2941
  %v3072 = vpack.c.b16 %v2944, %v2942
  %v3073 = vpack.c.b16 %v2947, %v2945
  %v3074 = vpack.c.b16 %v2948, %v2946
  %v3075 = vpack.c.b16 %v2951, %v2949
  %v3076 = vpack.c.b16 %v2952, %v2950
  %v3077 = vpack.c.b16 %v2955, %v2953
  %v3078 = vpack.c.b16 %v2956, %v2954
  %v3079 = vpack.c.b16 %v2959, %v2957
  %v3080 = vpack.c.b16 %v2960, %v2958
  %v3081 = vpack.c.b16 %v2963, %v2961
  %v3082 = vpack.c.b16 %v2964, %v2962
  %v3083 = vpack.c.b16 %v2967, %v2965
  %v3084 = vpack.c.b16 %v2968, %v2966
  %v3085 = vpack.c.b16 %v2971, %v2969
  %v3086 = vpack.c.b16 %v2972, %v2970
  %v3087 = vpack.c.b16 %v2975, %v2973
  %v3088 = vpack.c.b16 %v2976, %v2974
  %v3089 = vpack.c.b16 %v2979, %v2977
  %v3090 = vpack.c.b16 %v2980, %v2978
  %v3091 = vpack.c.b16 %v2983, %v2981
  %v3092 = vpack.c.b16 %v2984, %v2982
  %v3093 = vpack.c.b16 %v2987, %v2985
  %v3094 = vpack.c.b16 %v2988, %v2986
  %v3095 = vpack.c.b16 %v2991, %v2989
  %v3096 = vpack.c.b16 %v2992, %v2990
  %v3097 = vpack.c.b16 %v2995, %v2993
  %v3098 = vpack.c.b16 %v2996, %v2994
  %v3099 = vpack.c.b16 %v2999, %v2997
  %v3100 = vpack.c.b16 %v3000, %v2998
  %v3101 = vpack.c.b16 %v3003, %v3001
  %v3102 = vpack.c.b16 %v3004, %v3002
  %v3103 = vpack.c.b16 %v3007, %v3005
  %v3104 = vpack.c.b16 %v3008, %v3006
  %3201 = vmatprep.subr.bf16.mxu0 %v3024
  %3202 = vmatpush1.bf16.msra.mxu0 %v3023
  %3203 = vmatprep.subr.bf16.mxu0 %v3022
  %3204 = vmatpush1.bf16.msra.mxu0 %v3021
  %3205 = vmatprep.subr.bf16.mxu0 %v3020
  %3206 = vmatpush1.bf16.msra.mxu0 %v3019
  %3207 = vmatprep.subr.bf16.mxu0 %v3018
  %3208 = vmatpush1.bf16.msra.mxu0 %v3017
  %3209 = vmatprep.subr.bf16.mxu0 %v3016
  %3210 = vmatpush1.bf16.msra.mxu0 %v3015
  %3211 = vmatprep.subr.bf16.mxu0 %v3014
  %3212 = vmatpush1.bf16.msra.mxu0 %v3013
  %3213 = vmatprep.subr.bf16.mxu0 %v3012
  %3214 = vmatpush1.bf16.msra.mxu0 %v3011
  %3215 = vmatprep.subr.bf16.mxu0 %v3010
  %3216 = vmatpush1.bf16.msra.mxu0 %v3009
  %3217 = vmatprep.subr.bf16.mxu0 %v3040
  %3218 = vmatpush2.bf16.msra.mxu0 %v3039
  %3219 = vmatprep.subr.bf16.mxu0 %v3038
  %3220 = vmatpush2.bf16.msra.mxu0 %v3037
  %3221 = vmatprep.subr.bf16.mxu0 %v3036
  %3222 = vmatpush2.bf16.msra.mxu0 %v3035
  %3223 = vmatprep.subr.bf16.mxu0 %v3034
  %3224 = vmatpush2.bf16.msra.mxu0 %v3033
  %3225 = vmatprep.subr.bf16.mxu0 %v3032
  %3226 = vmatpush2.bf16.msra.mxu0 %v3031
  %3227 = vmatprep.subr.bf16.mxu0 %v3030
  %3228 = vmatpush2.bf16.msra.mxu0 %v3029
  %3229 = vmatprep.subr.bf16.mxu0 %v3028
  %3230 = vmatpush2.bf16.msra.mxu0 %v3027
  %3231 = vmatprep.subr.bf16.mxu0 %v3026
  %3232 = vmatpush2.bf16.msra.mxu0 %v3025
  %3233 = vmatprep.mubr.bf16.mxu0 %v754
  %3234 = vmatmul.mubr.bf16.gmra.mxu0 %v753
  %v3235 = vpop.f32.mrf.mxu0
  %v3236 = vadd.f32 0.0, %v3235
  %v3237 = vpop.f32.mrf.mxu0
  %v3238 = vadd.f32 0.0, %v3237
  %v3239 = vpop.f32.mrf.mxu0
  %v3240 = vadd.f32 0.0, %v3239
  %v3241 = vpop.f32.mrf.mxu0
  %v3242 = vadd.f32 0.0, %v3241
  %3243 = vmatprep.mubr.bf16.mxu0 %v760
  %3244 = vmatmul.mubr.bf16.gmra.mxu0 %v759
  %v3245 = vpop.f32.mrf.mxu0
  %v3246 = vadd.f32 0.0, %v3245
  %v3247 = vpop.f32.mrf.mxu0
  %v3248 = vadd.f32 0.0, %v3247
  %v3249 = vpop.f32.mrf.mxu0
  %v3250 = vadd.f32 0.0, %v3249
  %v3251 = vpop.f32.mrf.mxu0
  %v3252 = vadd.f32 0.0, %v3251
  %3253 = vmatprep.mubr.bf16.mxu0 %v766
  %3254 = vmatmul.mubr.bf16.gmra.mxu0 %v765
  %v3255 = vpop.f32.mrf.mxu0
  %v3256 = vadd.f32 0.0, %v3255
  %v3257 = vpop.f32.mrf.mxu0
  %v3258 = vadd.f32 0.0, %v3257
  %v3259 = vpop.f32.mrf.mxu0
  %v3260 = vadd.f32 0.0, %v3259
  %v3261 = vpop.f32.mrf.mxu0
  %v3262 = vadd.f32 0.0, %v3261
  %3263 = vmatprep.mubr.bf16.mxu0 %v772
  %3264 = vmatmul.mubr.bf16.gmra.mxu0 %v771
  %v3265 = vpop.f32.mrf.mxu0
  %v3266 = vpop.f32.mrf.mxu0
  %v3267 = vpop.f32.mrf.mxu0
  %v3268 = vpop.f32.mrf.mxu0
  %3269 = vmatprep.mubr.bf16.mxu0 %v778
  %3270 = vmatmul.mubr.bf16.gmra.mxu0 %v777
  %v3271 = vpop.f32.mrf.mxu0
  %v3272 = vadd.f32 0.0, %v3271
  %v3273 = vpop.f32.mrf.mxu0
  %v3274 = vadd.f32 0.0, %v3273
  %v3275 = vpop.f32.mrf.mxu0
  %v3276 = vadd.f32 0.0, %v3275
  %v3277 = vpop.f32.mrf.mxu0
  %v3278 = vadd.f32 0.0, %v3277
  %3279 = vmatprep.mubr.bf16.mxu0 %v784
  %3280 = vmatmul.mubr.bf16.gmra.mxu0 %v783
  %v3281 = vpop.f32.mrf.mxu0
  %v3282 = vadd.f32 0.0, %v3281
  %v3283 = vpop.f32.mrf.mxu0
  %v3284 = vadd.f32 0.0, %v3283
  %v3285 = vpop.f32.mrf.mxu0
  %v3286 = vadd.f32 0.0, %v3285
  %v3287 = vpop.f32.mrf.mxu0
  %v3288 = vadd.f32 0.0, %v3287
  %3289 = vmatprep.mubr.bf16.mxu0 %v2619
  %3290 = vmatmul.mubr.bf16.gmra.mxu0 %v2618
  %v3291 = vpop.f32.mrf.mxu0
  %v3292 = vadd.f32 0.0, %v3291
  %v3293 = vpop.f32.mrf.mxu0
  %v3294 = vadd.f32 0.0, %v3293
  %v3295 = vpop.f32.mrf.mxu0
  %v3296 = vadd.f32 0.0, %v3295
  %v3297 = vpop.f32.mrf.mxu0
  %v3298 = vadd.f32 0.0, %v3297
  %3299 = vdwg.mxu0
  %3300 = vmatprep.subr.bf16.mxu0 %v3056
  %3301 = vmatpush1.bf16.msra.mxu0 %v3055
  %3302 = vmatprep.subr.bf16.mxu0 %v3054
  %3303 = vmatpush1.bf16.msra.mxu0 %v3053
  %3304 = vmatprep.subr.bf16.mxu0 %v3052
  %3305 = vmatpush1.bf16.msra.mxu0 %v3051
  %3306 = vmatprep.subr.bf16.mxu0 %v3050
  %3307 = vmatpush1.bf16.msra.mxu0 %v3049
  %3308 = vmatprep.subr.bf16.mxu0 %v3048
  %3309 = vmatpush1.bf16.msra.mxu0 %v3047
  %3310 = vmatprep.subr.bf16.mxu0 %v3046
  %3311 = vmatpush1.bf16.msra.mxu0 %v3045
  %3312 = vmatprep.subr.bf16.mxu0 %v3044
  %3313 = vmatpush1.bf16.msra.mxu0 %v3043
  %3314 = vmatprep.subr.bf16.mxu0 %v3042
  %3315 = vmatpush1.bf16.msra.mxu0 %v3041
  %3316 = vmatprep.subr.bf16.mxu0 %v3072
  %3317 = vmatpush2.bf16.msra.mxu0 %v3071
  %3318 = vmatprep.subr.bf16.mxu0 %v3070
  %3319 = vmatpush2.bf16.msra.mxu0 %v3069
  %3320 = vmatprep.subr.bf16.mxu0 %v3068
  %3321 = vmatpush2.bf16.msra.mxu0 %v3067
  %3322 = vmatprep.subr.bf16.mxu0 %v3066
  %3323 = vmatpush2.bf16.msra.mxu0 %v3065
  %3324 = vmatprep.subr.bf16.mxu0 %v3064
  %3325 = vmatpush2.bf16.msra.mxu0 %v3063
  %3326 = vmatprep.subr.bf16.mxu0 %v3062
  %3327 = vmatpush2.bf16.msra.mxu0 %v3061
  %3328 = vmatprep.subr.bf16.mxu0 %v3060
  %3329 = vmatpush2.bf16.msra.mxu0 %v3059
  %3330 = vmatprep.subr.bf16.mxu0 %v3058
  %3331 = vmatpush2.bf16.msra.mxu0 %v3057
  %3332 = vmatprep.mubr.bf16.mxu0 %v756
  %3333 = vmatmul.mubr.bf16.gmra.mxu0 %v755
  %v3334 = vpop.f32.mrf.mxu0
  %v3335 = vadd.f32 %v3236, %v3334
  %v3336 = vpop.f32.mrf.mxu0
  %v3337 = vadd.f32 %v3238, %v3336
  %v3338 = vpop.f32.mrf.mxu0
  %v3339 = vadd.f32 %v3240, %v3338
  %v3340 = vpop.f32.mrf.mxu0
  %v3341 = vadd.f32 %v3242, %v3340
  %3342 = vmatprep.mubr.bf16.mxu0 %v762
  %3343 = vmatmul.mubr.bf16.gmra.mxu0 %v761
  %v3344 = vpop.f32.mrf.mxu0
  %v3345 = vadd.f32 %v3246, %v3344
  %v3346 = vpop.f32.mrf.mxu0
  %v3347 = vadd.f32 %v3248, %v3346
  %v3348 = vpop.f32.mrf.mxu0
  %v3349 = vadd.f32 %v3250, %v3348
  %v3350 = vpop.f32.mrf.mxu0
  %v3351 = vadd.f32 %v3252, %v3350
  %3352 = vmatprep.mubr.bf16.mxu0 %v768
  %3353 = vmatmul.mubr.bf16.gmra.mxu0 %v767
  %v3354 = vpop.f32.mrf.mxu0
  %v3355 = vadd.f32 %v3256, %v3354
  %v3356 = vpop.f32.mrf.mxu0
  %v3357 = vadd.f32 %v3258, %v3356
  %v3358 = vpop.f32.mrf.mxu0
  %v3359 = vadd.f32 %v3260, %v3358
  %v3360 = vpop.f32.mrf.mxu0
  %v3361 = vadd.f32 %v3262, %v3360
  %3362 = vmatprep.mubr.bf16.mxu0 %v774
  %3363 = vmatmul.mubr.bf16.gmra.mxu0 %v773
  %v3364 = vpop.f32.mrf.mxu0
  %v3365 = vpop.f32.mrf.mxu0
  %v3366 = vpop.f32.mrf.mxu0
  %v3367 = vpop.f32.mrf.mxu0
  %3368 = vmatprep.mubr.bf16.mxu0 %v780
  %3369 = vmatmul.mubr.bf16.gmra.mxu0 %v779
  %v3370 = vpop.f32.mrf.mxu0
  %v3371 = vadd.f32 %v3272, %v3370
  %v3372 = vpop.f32.mrf.mxu0
  %v3373 = vadd.f32 %v3274, %v3372
  %v3374 = vpop.f32.mrf.mxu0
  %v3375 = vadd.f32 %v3276, %v3374
  %v3376 = vpop.f32.mrf.mxu0
  %v3377 = vadd.f32 %v3278, %v3376
  %3378 = vmatprep.mubr.bf16.mxu0 %v2615
  %3379 = vmatmul.mubr.bf16.gmra.mxu0 %v2614
  %v3380 = vpop.f32.mrf.mxu0
  %v3381 = vadd.f32 %v3282, %v3380
  %v3382 = vpop.f32.mrf.mxu0
  %v3383 = vadd.f32 %v3284, %v3382
  %v3384 = vpop.f32.mrf.mxu0
  %v3385 = vadd.f32 %v3286, %v3384
  %v3386 = vpop.f32.mrf.mxu0
  %v3387 = vadd.f32 %v3288, %v3386
  %3388 = vmatprep.mubr.bf16.mxu0 %v2621
  %3389 = vmatmul.mubr.bf16.gmra.mxu0 %v2620
  %v3390 = vpop.f32.mrf.mxu0
  %v3391 = vadd.f32 %v3292, %v3390
  %v3392 = vpop.f32.mrf.mxu0
  %v3393 = vadd.f32 %v3294, %v3392
  %v3394 = vpop.f32.mrf.mxu0
  %v3395 = vadd.f32 %v3296, %v3394
  %v3396 = vpop.f32.mrf.mxu0
  %v3397 = vadd.f32 %v3298, %v3396
  %3398 = vdwg.mxu0
  %3399 = vmatprep.subr.bf16.mxu0 %v3088
  %3400 = vmatpush1.bf16.msra.mxu0 %v3087
  %3401 = vmatprep.subr.bf16.mxu0 %v3086
  %3402 = vmatpush1.bf16.msra.mxu0 %v3085
  %3403 = vmatprep.subr.bf16.mxu0 %v3084
  %3404 = vmatpush1.bf16.msra.mxu0 %v3083
  %3405 = vmatprep.subr.bf16.mxu0 %v3082
  %3406 = vmatpush1.bf16.msra.mxu0 %v3081
  %3407 = vmatprep.subr.bf16.mxu0 %v3080
  %3408 = vmatpush1.bf16.msra.mxu0 %v3079
  %3409 = vmatprep.subr.bf16.mxu0 %v3078
  %3410 = vmatpush1.bf16.msra.mxu0 %v3077
  %3411 = vmatprep.subr.bf16.mxu0 %v3076
  %3412 = vmatpush1.bf16.msra.mxu0 %v3075
  %3413 = vmatprep.subr.bf16.mxu0 %v3074
  %3414 = vmatpush1.bf16.msra.mxu0 %v3073
  %3415 = vmatprep.subr.bf16.mxu0 %v3104
  %3416 = vmatpush2.bf16.msra.mxu0 %v3103
  %3417 = vmatprep.subr.bf16.mxu0 %v3102
  %3418 = vmatpush2.bf16.msra.mxu0 %v3101
  %3419 = vmatprep.subr.bf16.mxu0 %v3100
  %3420 = vmatpush2.bf16.msra.mxu0 %v3099
  %3421 = vmatprep.subr.bf16.mxu0 %v3098
  %3422 = vmatpush2.bf16.msra.mxu0 %v3097
  %3423 = vmatprep.subr.bf16.mxu0 %v3096
  %3424 = vmatpush2.bf16.msra.mxu0 %v3095
  %3425 = vmatprep.subr.bf16.mxu0 %v3094
  %3426 = vmatpush2.bf16.msra.mxu0 %v3093
  %3427 = vmatprep.subr.bf16.mxu0 %v3092
  %3428 = vmatpush2.bf16.msra.mxu0 %v3091
  %3429 = vmatprep.subr.bf16.mxu0 %v3090
  %3430 = vmatpush2.bf16.msra.mxu0 %v3089
  %3431 = vmatprep.mubr.bf16.mxu0 %v758
  %3432 = vmatmul.mubr.bf16.gmra.mxu0 %v757
  %v3433 = vpop.f32.mrf.mxu0
  %v3434 = vadd.f32 %v3335, %v3433
  %v3435 = vpop.f32.mrf.mxu0
  %v3436 = vadd.f32 %v3337, %v3435
  %v3437 = vpop.f32.mrf.mxu0
  %v3438 = vadd.f32 %v3339, %v3437
  %v3439 = vpop.f32.mrf.mxu0
  %v3440 = vadd.f32 %v3341, %v3439
  %3441 = vmatprep.mubr.bf16.mxu0 %v764
  %3442 = vmatmul.mubr.bf16.gmra.mxu0 %v763
  %v3443 = vpop.f32.mrf.mxu0
  %v3444 = vadd.f32 %v3345, %v3443
  %v3445 = vpop.f32.mrf.mxu0
  %v3446 = vadd.f32 %v3347, %v3445
  %v3447 = vpop.f32.mrf.mxu0
  %v3448 = vadd.f32 %v3349, %v3447
  %v3449 = vpop.f32.mrf.mxu0
  %v3450 = vadd.f32 %v3351, %v3449
  %3451 = vmatprep.mubr.bf16.mxu0 %v770
  %3452 = vmatmul.mubr.bf16.gmra.mxu0 %v769
  %v3453 = vpop.f32.mrf.mxu0
  %v3454 = vadd.f32 %v3355, %v3453
  %v3455 = vpop.f32.mrf.mxu0
  %v3456 = vadd.f32 %v3357, %v3455
  %v3457 = vpop.f32.mrf.mxu0
  %v3458 = vadd.f32 %v3359, %v3457
  %v3459 = vpop.f32.mrf.mxu0
  %v3460 = vadd.f32 %v3361, %v3459
  %3461 = vmatprep.mubr.bf16.mxu0 %v776
  %3462 = vmatmul.mubr.bf16.gmra.mxu0 %v775
  %v3463 = vpop.f32.mrf.mxu0
  %v3464 = vpop.f32.mrf.mxu0
  %v3465 = vpop.f32.mrf.mxu0
  %v3466 = vpop.f32.mrf.mxu0
  %3467 = vmatprep.mubr.bf16.mxu0 %v782
  %3468 = vmatmul.mubr.bf16.gmra.mxu0 %v781
  %v3469 = vpop.f32.mrf.mxu0
  %v3470 = vadd.f32 %v3371, %v3469
  %v3471 = vpop.f32.mrf.mxu0
  %v3472 = vadd.f32 %v3373, %v3471
  %v3473 = vpop.f32.mrf.mxu0
  %v3474 = vadd.f32 %v3375, %v3473
  %v3475 = vpop.f32.mrf.mxu0
  %v3476 = vadd.f32 %v3377, %v3475
  %3477 = vmatprep.mubr.bf16.mxu0 %v2617
  %3478 = vmatmul.mubr.bf16.gmra.mxu0 %v2616
  %v3479 = vpop.f32.mrf.mxu0
  %v3480 = vadd.f32 %v3381, %v3479
  %v3481 = vpop.f32.mrf.mxu0
  %v3482 = vadd.f32 %v3383, %v3481
  %v3483 = vpop.f32.mrf.mxu0
  %v3484 = vadd.f32 %v3385, %v3483
  %v3485 = vpop.f32.mrf.mxu0
  %v3486 = vadd.f32 %v3387, %v3485
  %3487 = vmatprep.mubr.bf16.mxu0 %v2623
  %3488 = vmatmul.mubr.bf16.gmra.mxu0 %v2622
  %v3489 = vpop.f32.mrf.mxu0
  %v3490 = vadd.f32 %v3391, %v3489
  %v3491 = vpop.f32.mrf.mxu0
  %v3492 = vadd.f32 %v3393, %v3491
  %v3493 = vpop.f32.mrf.mxu0
  %v3494 = vadd.f32 %v3395, %v3493
  %v3495 = vpop.f32.mrf.mxu0
  %v3496 = vadd.f32 %v3397, %v3495
  %3497 = vdwg.mxu0
  %v3498 = vadd.f32 %v2532, %v3434
  %v3499 = vadd.f32 %v2534, %v3436
  %v3500 = vadd.f32 %v2536, %v3438
  %v3501 = vadd.f32 %v2538, %v3440
  %v3502 = vadd.f32 %v2542, %v3444
  %v3503 = vadd.f32 %v2544, %v3446
  %v3504 = vadd.f32 %v2546, %v3448
  %v3505 = vadd.f32 %v2548, %v3450
  %v3506 = vadd.f32 %v2552, %v3454
  %v3507 = vadd.f32 %v2554, %v3456
  %v3508 = vadd.f32 %v2556, %v3458
  %v3509 = vadd.f32 %v2558, %v3460
  %v3510 = vadd.f32 %v2568, %v3470
  %v3511 = vadd.f32 %v2570, %v3472
  %v3512 = vadd.f32 %v2572, %v3474
  %v3513 = vadd.f32 %v2574, %v3476
  %v3514 = vadd.f32 %v2578, %v3480
  %v3515 = vadd.f32 %v2580, %v3482
  %v3516 = vadd.f32 %v2582, %v3484
  %v3517 = vadd.f32 %v2584, %v3486
  %v3518 = vadd.f32 %v2588, %v3490
  %v3519 = vadd.f32 %v2590, %v3492
  %v3520 = vadd.f32 %v2592, %v3494
  %v3521 = vadd.f32 %v2594, %v3496
  %v3522 = vld [vmem:[%s6] sm:$0x3]
  %v3524 = vlaneseq
  %v3525 = vshrl.u32 %v3524, 7
  %v3526 = vsub.s32 0, %v3525
  %v3527 = vrot.slane %v3522, %v3526
  %v3528 = vlaneseq
  %v3529 = vshrl.u32 %v3528, 7
  %v3530 = vsub.s32 1, %v3529
  %v3531 = vrot.slane %v3522, %v3530
  %v3534 = vadd.f32 %v3498, %v3527
  %v3535 = vadd.f32 %v3499, %v3531
  %v3536 = vadd.f32 %v3500, %v3527
  %v3537 = vadd.f32 %v3501, %v3531
  %v3538 = vadd.f32 %v3502, %v3527
  %v3539 = vadd.f32 %v3503, %v3531
  %v3540 = vadd.f32 %v3504, %v3527
  %v3541 = vadd.f32 %v3505, %v3531
  %v3542 = vadd.f32 %v3506, %v3527
  %v3543 = vadd.f32 %v3507, %v3531
  %v3544 = vadd.f32 %v3508, %v3527
  %v3545 = vadd.f32 %v3509, %v3531
  %v3546 = vadd.f32 %v3510, %v3527
  %v3547 = vadd.f32 %v3511, %v3531
  %v3548 = vadd.f32 %v3512, %v3527
  %v3549 = vadd.f32 %v3513, %v3531
  %v3550 = vadd.f32 %v3514, %v3527
  %v3551 = vadd.f32 %v3515, %v3531
  %v3552 = vadd.f32 %v3516, %v3527
  %v3553 = vadd.f32 %v3517, %v3531
  %v3554 = vadd.f32 %v3518, %v3527
  %v3555 = vadd.f32 %v3519, %v3531
  %v3556 = vadd.f32 %v3520, %v3527
  %v3557 = vadd.f32 %v3521, %v3531
  %3558 = vst [vmem:[%s7] sm:$0x3f] %v3534
  %3559 = vst [vmem:[%s7 + $0x8] sm:$0x3f] %v3535
  %v3562 = vrot.slane %v3536, 2
  %v3563 = vrot.slane %v3537, 2
  %3566 = vst [vmem:[%s7] sm:$0xc0] %v3562
  %3567 = vst [vmem:[%s7 + $0x8] sm:$0xc0] %v3563
  %3568 = vst [vmem:[%s7 + $0x10] sm:$0xf] %v3562
  %3569 = vst [vmem:[%s7 + $0x18] sm:$0xf] %v3563
  %v3572 = vrot.slane %v3538, 4
  %v3573 = vrot.slane %v3539, 4
  %3576 = vst [vmem:[%s7 + $0x10] sm:$0xf0] %v3572
  %3577 = vst [vmem:[%s7 + $0x18] sm:$0xf0] %v3573
  %3578 = vst [vmem:[%s7 + $0x20] sm:$0x3] %v3572
  %3579 = vst [vmem:[%s7 + $0x28] sm:$0x3] %v3573
  %v3582 = vrot.slane %v3540, 6
  %v3583 = vrot.slane %v3541, 6
  %3586 = vst [vmem:[%s7 + $0x20] sm:$0xfc] %v3582
  %3587 = vst [vmem:[%s7 + $0x28] sm:$0xfc] %v3583
  %3588 = vst [vmem:[%s7 + $0x30] sm:$0x3f] %v3542
  %3589 = vst [vmem:[%s7 + $0x38] sm:$0x3f] %v3543
  %v3592 = vrot.slane %v3544, 2
  %v3593 = vrot.slane %v3545, 2
  %3596 = vst [vmem:[%s7 + $0x30] sm:$0xc0] %v3592
  %3597 = vst [vmem:[%s7 + $0x38] sm:$0xc0] %v3593
  %3598 = vst [vmem:[%s7 + $0x40] sm:$0xf] %v3592
  %3599 = vst [vmem:[%s7 + $0x48] sm:$0xf] %v3593
  %v3602 = vrot.slane %v3546, 4
  %v3603 = vrot.slane %v3547, 4
  %3606 = vst [vmem:[%s7 + $0x40] sm:$0xf0] %v3602
  %3607 = vst [vmem:[%s7 + $0x48] sm:$0xf0] %v3603
  %3608 = vst [vmem:[%s7 + $0x50] sm:$0x3] %v3602
  %3609 = vst [vmem:[%s7 + $0x58] sm:$0x3] %v3603
  %v3612 = vrot.slane %v3548, 6
  %v3613 = vrot.slane %v3549, 6
  %3616 = vst [vmem:[%s7 + $0x50] sm:$0xfc] %v3612
  %3617 = vst [vmem:[%s7 + $0x58] sm:$0xfc] %v3613
  %3618 = vst [vmem:[%s7 + $0x60] sm:$0x3f] %v3550
  %3619 = vst [vmem:[%s7 + $0x68] sm:$0x3f] %v3551
  %v3622 = vrot.slane %v3552, 2
  %v3623 = vrot.slane %v3553, 2
  %3626 = vst [vmem:[%s7 + $0x60] sm:$0xc0] %v3622
  %3627 = vst [vmem:[%s7 + $0x68] sm:$0xc0] %v3623
  %3628 = vst [vmem:[%s7 + $0x70] sm:$0xf] %v3622
  %3629 = vst [vmem:[%s7 + $0x78] sm:$0xf] %v3623
  %v3632 = vrot.slane %v3554, 4
  %v3633 = vrot.slane %v3555, 4
  %3636 = vst [vmem:[%s7 + $0x70] sm:$0xf0] %v3632
  %3637 = vst [vmem:[%s7 + $0x78] sm:$0xf0] %v3633
  %3638 = vst [vmem:[%s7 + $0x80] sm:$0x3] %v3632
  %3639 = vst [vmem:[%s7 + $0x88] sm:$0x3] %v3633
  %v3642 = vrot.slane %v3556, 6
  %v3643 = vrot.slane %v3557, 6
  %3646 = vst [vmem:[%s7 + $0x80] sm:$0xfc] %v3642
  %3647 = vst [vmem:[%s7 + $0x88] sm:$0xfc] %v3643
  // Predicated region
  $region30: #{fpn_forward.4} parent=0 // pred_check
    _
  $region31: #{fpn_forward.4} parent=0 // pred_check_branch
    %3649 = sbr.rel (0) target = $region33
  $region32: #{fpn_forward.4} parent=0 // pred_region
    _
  $region33: #{fpn_forward.4} parent=0 // pred_fallthru
    _
  // Predicated region
  $region34: #{fpn_forward.4} parent=0 // pred_check
    _
  $region35: #{fpn_forward.4} parent=0 // pred_check_branch
    %3651 = sbr.rel (0) target = $region37
  $region36: #{fpn_forward.4} parent=0 // pred_region
    _
  $region37: #{fpn_forward.4} parent=0 // pred_fallthru
    _

// kernel: fpn_forward.5
$region0: #{fpn_forward.5}
  #allocation0 [shape = 'u32[]', space=smem, size = 0x4, offset = 0x4, fixed_abs, tag = 'smem constant byte address 0x4 - core index']
  #allocation1 [shape = 'u32[144,128]{1,0:T(1,128)}', space=vmem, size = 0x12000, scoped, tag = 'internal scratch']
  %s0 = inlined_call_operand.vmem [shape: bf16[512,64], index: 0, kind: input, shape index: {}]
  %s1 = inlined_call_operand.vmem [shape: bf16[64,256], index: 1, kind: input, shape index: {}]
  %s2 = inlined_call_operand.vmem [shape: f32[1,256], index: 2, kind: input, shape index: {}, may-alias: {2,6}]
  %s3 = inlined_call_operand.vmem [shape: f32[512,128], index: 3, kind: input, shape index: {}]
  %s4 = inlined_call_operand.vmem [shape: f32[128,256], index: 4, kind: input, shape index: {}]
  %s5 = inlined_call_operand.vmem [shape: bf16[3,768,256], index: 5, kind: input, shape index: {}]
  %s6 = inlined_call_operand.vmem [shape: f32[1,256], index: 6, kind: input, shape index: {}, may-alias: {2,6}]
  %s7 = inlined_call_operand.vmem [shape: f32[392,256], index: 7, kind: output, shape index: {}]
  %s8 = sld [smem:[#allocation0]]
  $region38: #{fpn_forward.5} parent=0
    _
  %s10 = ssub.s32 1, %s8
  %s11 = scalar_select 0, %s10, %s8
  // Predicated region
  $region2: #{fpn_forward.5} parent=0 // pred_check
    _
  $region3: #{fpn_forward.5} parent=0 // pred_check_branch
    %13 = sbr.rel (0) target = $region5
  $region4: #{fpn_forward.5} parent=0 // pred_region
    _
  $region5: #{fpn_forward.5} parent=0 // pred_fallthru
    _
  // Predicated region
  $region6: #{fpn_forward.5} parent=0 // pred_check
    _
  $region7: #{fpn_forward.5} parent=0 // pred_check_branch
    %15 = sbr.rel (0) target = $region9
  $region8: #{fpn_forward.5} parent=0 // pred_region
    _
  $region9: #{fpn_forward.5} parent=0 // pred_fallthru
    _
  // Predicated region
  $region10: #{fpn_forward.5} parent=0 // pred_check
    _
  $region11: #{fpn_forward.5} parent=0 // pred_check_branch
    %17 = sbr.rel (0) target = $region13
  $region12: #{fpn_forward.5} parent=0 // pred_region
    _
  $region13: #{fpn_forward.5} parent=0 // pred_fallthru
    _
  // Predicated region
  $region14: #{fpn_forward.5} parent=0 // pred_check
    _
  $region15: #{fpn_forward.5} parent=0 // pred_check_branch
    %19 = sbr.rel (0) target = $region17
  $region16: #{fpn_forward.5} parent=0 // pred_region
    _
  $region17: #{fpn_forward.5} parent=0 // pred_fallthru
    _
  // Predicated region
  $region18: #{fpn_forward.5} parent=0 // pred_check
    _
  $region19: #{fpn_forward.5} parent=0 // pred_check_branch
    %21 = sbr.rel (0) target = $region21
  $region20: #{fpn_forward.5} parent=0 // pred_region
    _
  $region21: #{fpn_forward.5} parent=0 // pred_fallthru
    _
  // Predicated region
  $region22: #{fpn_forward.5} parent=0 // pred_check
    _
  $region23: #{fpn_forward.5} parent=0 // pred_check_branch
    %23 = sbr.rel (0) target = $region25
  $region24: #{fpn_forward.5} parent=0 // pred_region
    _
  $region25: #{fpn_forward.5} parent=0 // pred_fallthru
    _
  // Predicated region
  $region26: #{fpn_forward.5} parent=0 // pred_check
    _
  $region27: #{fpn_forward.5} parent=0 // pred_check_branch
    %25 = sbr.rel (0) target = $region29
  $region28: #{fpn_forward.5} parent=0 // pred_region
    _
  $region29: #{fpn_forward.5} parent=0 // pred_fallthru
    _
  %v27 = vld [vmem:[%s0] sm:$0xf]
  %v28 = vld [vmem:[%s0 + $0x4] sm:$0xf]
  %v29 = vld [vmem:[%s0 + $0x8] sm:$0xf]
  %v30 = vld [vmem:[%s0 + $0xc] sm:$0xf]
  %v31 = vld [vmem:[%s0 + $0x10] sm:$0xf]
  %v32 = vld [vmem:[%s0 + $0x14] sm:$0xf]
  %v33 = vld [vmem:[%s0 + $0x18] sm:$0xf]
  %v34 = vld [vmem:[%s0 + $0x1c] sm:$0xf]
  %v35 = vld [vmem:[%s0 + $0x20] sm:$0xf]
  %v36 = vld [vmem:[%s0 + $0x24] sm:$0xf]
  %v37 = vld [vmem:[%s0 + $0x28] sm:$0xf]
  %v38 = vld [vmem:[%s0 + $0x2c] sm:$0xf]
  %v39 = vld [vmem:[%s0 + $0x30] sm:$0xf]
  %v40 = vld [vmem:[%s0 + $0x34] sm:$0xf]
  %v41 = vld [vmem:[%s0 + $0x38] sm:$0xf]
  %v42 = vld [vmem:[%s0 + $0x3c] sm:$0xf]
  %v43 = vld [vmem:[%s0 + $0x40] sm:$0xf]
  %v44 = vld [vmem:[%s0 + $0x44] sm:$0xf]
  %v45 = vld [vmem:[%s0 + $0x48] sm:$0xf]
  %v46 = vld [vmem:[%s0 + $0x4c] sm:$0xf]
  %v47 = vld [vmem:[%s0 + $0x50] sm:$0xf]
  %v48 = vld [vmem:[%s0 + $0x54] sm:$0xf]
  %v49 = vld [vmem:[%s0 + $0x58] sm:$0xf]
  %v50 = vld [vmem:[%s0 + $0x5c] sm:$0xf]
  %v51 = vld [vmem:[%s0 + $0x60] sm:$0xf]
  %v52 = vld [vmem:[%s0 + $0x64] sm:$0xf]
  %v53 = vld [vmem:[%s0 + $0x68] sm:$0xf]
  %v54 = vld [vmem:[%s0 + $0x6c] sm:$0xf]
  %v55 = vld [vmem:[%s0 + $0x70] sm:$0xf]
  %v56 = vld [vmem:[%s0 + $0x74] sm:$0xf]
  %v57 = vld [vmem:[%s0 + $0x78] sm:$0xf]
  %v58 = vld [vmem:[%s0 + $0x7c] sm:$0xf]
  %v59 = vld [vmem:[%s0 + $0x80] sm:$0xf]
  %v60 = vld [vmem:[%s0 + $0x84] sm:$0xf]
  %v61 = vld [vmem:[%s0 + $0x88] sm:$0xf]
  %v62 = vld [vmem:[%s0 + $0x8c] sm:$0xf]
  %v63 = vld [vmem:[%s0 + $0x90] sm:$0xf]
  %v64 = vld [vmem:[%s0 + $0x94] sm:$0xf]
  %v65 = vld [vmem:[%s0 + $0x98] sm:$0xf]
  %v66 = vld [vmem:[%s0 + $0x9c] sm:$0xf]
  %v67 = vld [vmem:[%s0 + $0xa0] sm:$0xf]
  %v68 = vld [vmem:[%s0 + $0xa4] sm:$0xf]
  %v69 = vld [vmem:[%s0 + $0xa8] sm:$0xf]
  %v70 = vld [vmem:[%s0 + $0xac] sm:$0xf]
  %v71 = vld [vmem:[%s0 + $0xb0] sm:$0xf]
  %v72 = vld [vmem:[%s0 + $0xb4] sm:$0xf]
  %v73 = vld [vmem:[%s0 + $0xb8] sm:$0xf]
  %v74 = vld [vmem:[%s0 + $0xbc] sm:$0xf]
  %v75 = vld [vmem:[%s0 + $0xc0] sm:$0xf]
  %v76 = vld [vmem:[%s0 + $0xc4] sm:$0xf]
  %v77 = vld [vmem:[%s0 + $0xc8] sm:$0xf]
  %v78 = vld [vmem:[%s0 + $0xcc] sm:$0xf]
  %v79 = vld [vmem:[%s0 + $0xd0] sm:$0xf]
  %v80 = vld [vmem:[%s0 + $0xd4] sm:$0xf]
  %v81 = vld [vmem:[%s0 + $0xd8] sm:$0xf]
  %v82 = vld [vmem:[%s0 + $0xdc] sm:$0xf]
  %v83 = vld [vmem:[%s0 + $0xe0] sm:$0xf]
  %v84 = vld [vmem:[%s0 + $0xe4] sm:$0xf]
  %v85 = vld [vmem:[%s0 + $0xe8] sm:$0xf]
  %v86 = vld [vmem:[%s0 + $0xec] sm:$0xf]
  %v87 = vld [vmem:[%s0 + $0xf0] sm:$0xf]
  %v88 = vld [vmem:[%s0 + $0xf4] sm:$0xf]
  %v89 = vld [vmem:[%s0 + $0xf8] sm:$0xf]
  %v90 = vld [vmem:[%s0 + $0xfc] sm:$0xf]
  %v91 = vld [vmem:[%s1] sm:$0xff]
  %v92 = vld [vmem:[%s1 + $0x8] sm:$0xff]
  %v93 = vld [vmem:[%s1 + $0x10] sm:$0xff]
  %v94 = vld [vmem:[%s1 + $0x18] sm:$0xff]
  %v95 = vld [vmem:[%s1 + $0x20] sm:$0xff]
  %v96 = vld [vmem:[%s1 + $0x28] sm:$0xff]
  %v97 = vld [vmem:[%s1 + $0x30] sm:$0xff]
  %v98 = vld [vmem:[%s1 + $0x38] sm:$0xff]
  %v99 = vld [vmem:[%s2] sm:$0x3]
  %v101 = vlaneseq
  %v102 = vshrl.u32 %v101, 7
  %v103 = vsub.s32 0, %v102
  %v104 = vrot.slane %v99, %v103
  %v105 = vlaneseq
  %v106 = vshrl.u32 %v105, 7
  %v107 = vsub.s32 1, %v106
  %v108 = vrot.slane %v99, %v107
  %v175 = vunpack.c.l.b16 %v27
  %v176 = vunpack.c.l.b16 %v28
  %v177 = vunpack.c.l.b16 %v29
  %v178 = vunpack.c.l.b16 %v30
  %v179 = vunpack.c.l.b16 %v31
  %v180 = vunpack.c.l.b16 %v32
  %v181 = vunpack.c.l.b16 %v33
  %v182 = vunpack.c.l.b16 %v34
  %v183 = vunpack.c.l.b16 %v35
  %v184 = vunpack.c.l.b16 %v36
  %v185 = vunpack.c.l.b16 %v37
  %v186 = vunpack.c.l.b16 %v38
  %v187 = vunpack.c.l.b16 %v39
  %v188 = vunpack.c.l.b16 %v40
  %v189 = vunpack.c.l.b16 %v41
  %v190 = vunpack.c.l.b16 %v42
  %v191 = vunpack.c.l.b16 %v43
  %v192 = vunpack.c.l.b16 %v44
  %v193 = vunpack.c.l.b16 %v45
  %v194 = vunpack.c.l.b16 %v46
  %v195 = vunpack.c.l.b16 %v47
  %v196 = vunpack.c.l.b16 %v48
  %v197 = vunpack.c.l.b16 %v49
  %v198 = vunpack.c.l.b16 %v50
  %v199 = vunpack.c.l.b16 %v51
  %v200 = vunpack.c.l.b16 %v52
  %v201 = vunpack.c.l.b16 %v53
  %v202 = vunpack.c.l.b16 %v54
  %v203 = vunpack.c.l.b16 %v55
  %v204 = vunpack.c.l.b16 %v56
  %v205 = vunpack.c.l.b16 %v57
  %v206 = vunpack.c.l.b16 %v58
  %v207 = vunpack.c.l.b16 %v59
  %v208 = vunpack.c.l.b16 %v60
  %v209 = vunpack.c.l.b16 %v61
  %v210 = vunpack.c.l.b16 %v62
  %v211 = vunpack.c.l.b16 %v63
  %v212 = vunpack.c.l.b16 %v64
  %v213 = vunpack.c.l.b16 %v65
  %v214 = vunpack.c.l.b16 %v66
  %v215 = vunpack.c.l.b16 %v67
  %v216 = vunpack.c.l.b16 %v68
  %v217 = vunpack.c.l.b16 %v69
  %v218 = vunpack.c.l.b16 %v70
  %v219 = vunpack.c.l.b16 %v71
  %v220 = vunpack.c.l.b16 %v72
  %v221 = vunpack.c.l.b16 %v73
  %v222 = vunpack.c.l.b16 %v74
  %v223 = vunpack.c.l.b16 %v75
  %v224 = vunpack.c.l.b16 %v76
  %v225 = vunpack.c.l.b16 %v77
  %v226 = vunpack.c.l.b16 %v78
  %v227 = vunpack.c.l.b16 %v79
  %v228 = vunpack.c.l.b16 %v80
  %v229 = vunpack.c.l.b16 %v81
  %v230 = vunpack.c.l.b16 %v82
  %v231 = vunpack.c.l.b16 %v83
  %v232 = vunpack.c.l.b16 %v84
  %v233 = vunpack.c.l.b16 %v85
  %v234 = vunpack.c.l.b16 %v86
  %v235 = vunpack.c.l.b16 %v87
  %v236 = vunpack.c.l.b16 %v88
  %v237 = vunpack.c.l.b16 %v89
  %v238 = vunpack.c.l.b16 %v90
  %v239 = vpack.c.b16 %v176, %v175
  %v240 = vpack.c.b16 %v178, %v177
  %v241 = vpack.c.b16 %v180, %v179
  %v242 = vpack.c.b16 %v182, %v181
  %v243 = vpack.c.b16 %v184, %v183
  %v244 = vpack.c.b16 %v186, %v185
  %v245 = vpack.c.b16 %v188, %v187
  %v246 = vpack.c.b16 %v190, %v189
  %v247 = vpack.c.b16 %v192, %v191
  %v248 = vpack.c.b16 %v194, %v193
  %v249 = vpack.c.b16 %v196, %v195
  %v250 = vpack.c.b16 %v198, %v197
  %v251 = vpack.c.b16 %v200, %v199
  %v252 = vpack.c.b16 %v202, %v201
  %v253 = vpack.c.b16 %v204, %v203
  %v254 = vpack.c.b16 %v206, %v205
  %v255 = vpack.c.b16 %v208, %v207
  %v256 = vpack.c.b16 %v210, %v209
  %v257 = vpack.c.b16 %v212, %v211
  %v258 = vpack.c.b16 %v214, %v213
  %v259 = vpack.c.b16 %v216, %v215
  %v260 = vpack.c.b16 %v218, %v217
  %v261 = vpack.c.b16 %v220, %v219
  %v262 = vpack.c.b16 %v222, %v221
  %v263 = vpack.c.b16 %v224, %v223
  %v264 = vpack.c.b16 %v226, %v225
  %v265 = vpack.c.b16 %v228, %v227
  %v266 = vpack.c.b16 %v230, %v229
  %v267 = vpack.c.b16 %v232, %v231
  %v268 = vpack.c.b16 %v234, %v233
  %v269 = vpack.c.b16 %v236, %v235
  %v270 = vpack.c.b16 %v238, %v237
  %v279 = vunpack.c.l.b16 %v91
  %v280 = vunpack.c.h.b16 %v91
  %v281 = vunpack.c.l.b16 %v92
  %v282 = vunpack.c.h.b16 %v92
  %v283 = vunpack.c.l.b16 %v93
  %v284 = vunpack.c.h.b16 %v93
  %v285 = vunpack.c.l.b16 %v94
  %v286 = vunpack.c.h.b16 %v94
  %v287 = vunpack.c.l.b16 %v95
  %v288 = vunpack.c.h.b16 %v95
  %v289 = vunpack.c.l.b16 %v96
  %v290 = vunpack.c.h.b16 %v96
  %v291 = vunpack.c.l.b16 %v97
  %v292 = vunpack.c.h.b16 %v97
  %v293 = vunpack.c.l.b16 %v98
  %v294 = vunpack.c.h.b16 %v98
  %v295 = vpack.c.b16 %v281, %v279
  %v296 = vpack.c.b16 %v282, %v280
  %v297 = vpack.c.b16 %v285, %v283
  %v298 = vpack.c.b16 %v286, %v284
  %v299 = vpack.c.b16 %v289, %v287
  %v300 = vpack.c.b16 %v290, %v288
  %v301 = vpack.c.b16 %v293, %v291
  %v302 = vpack.c.b16 %v294, %v292
  %vm311 = vcmask 523264
  %v313 = vsel %vm311, %v239, 0
  %v316 = vsel %vm311, %v240, 0
  %v319 = vsel %vm311, %v241, 0
  %v322 = vsel %vm311, %v242, 0
  %v325 = vsel %vm311, %v243, 0
  %v328 = vsel %vm311, %v244, 0
  %v331 = vsel %vm311, %v245, 0
  %v334 = vsel %vm311, %v246, 0
  %v337 = vsel %vm311, %v247, 0
  %v340 = vsel %vm311, %v248, 0
  %v343 = vsel %vm311, %v249, 0
  %v346 = vsel %vm311, %v250, 0
  %v349 = vsel %vm311, %v251, 0
  %v352 = vsel %vm311, %v252, 0
  %v355 = vsel %vm311, %v253, 0
  %v358 = vsel %vm311, %v254, 0
  %v361 = vsel %vm311, %v255, 0
  %v364 = vsel %vm311, %v256, 0
  %v367 = vsel %vm311, %v257, 0
  %v370 = vsel %vm311, %v258, 0
  %v373 = vsel %vm311, %v259, 0
  %v376 = vsel %vm311, %v260, 0
  %v379 = vsel %vm311, %v261, 0
  %v382 = vsel %vm311, %v262, 0
  %v385 = vsel %vm311, %v263, 0
  %v388 = vsel %vm311, %v264, 0
  %v391 = vsel %vm311, %v265, 0
  %v394 = vsel %vm311, %v266, 0
  %v397 = vsel %vm311, %v267, 0
  %v400 = vsel %vm311, %v268, 0
  %v403 = vsel %vm311, %v269, 0
  %v406 = vsel %vm311, %v270, 0
  %408 = vmatprep.subr.bf16.mxu0 0
  %409 = vmatpush1.bf16.msra.mxu0 0
  %410 = vmatprep.subr.bf16.mxu0 0
  %411 = vmatpush1.bf16.msra.mxu0 0
  %412 = vmatprep.subr.bf16.mxu0 0
  %413 = vmatpush1.bf16.msra.mxu0 0
  %414 = vmatprep.subr.bf16.mxu0 0
  %415 = vmatpush1.bf16.msra.mxu0 0
  %416 = vmatprep.subr.bf16.mxu0 %v302
  %417 = vmatpush1.bf16.msra.mxu0 %v301
  %418 = vmatprep.subr.bf16.mxu0 %v300
  %419 = vmatpush1.bf16.msra.mxu0 %v299
  %420 = vmatprep.subr.bf16.mxu0 %v298
  %421 = vmatpush1.bf16.msra.mxu0 %v297
  %422 = vmatprep.subr.bf16.mxu0 %v296
  %423 = vmatpush1.bf16.msra.mxu0 %v295
  %424 = vmatprep.subr.bf16.mxu0 0
  %425 = vmatpush2.bf16.msra.mxu0 0
  %426 = vmatprep.subr.bf16.mxu0 0
  %427 = vmatpush2.bf16.msra.mxu0 0
  %428 = vmatprep.subr.bf16.mxu0 0
  %429 = vmatpush2.bf16.msra.mxu0 0
  %430 = vmatprep.subr.bf16.mxu0 0
  %431 = vmatpush2.bf16.msra.mxu0 0
  %432 = vmatprep.subr.bf16.mxu0 0
  %433 = vmatpush2.bf16.msra.mxu0 0
  %434 = vmatprep.subr.bf16.mxu0 0
  %435 = vmatpush2.bf16.msra.mxu0 0
  %436 = vmatprep.subr.bf16.mxu0 0
  %437 = vmatpush2.bf16.msra.mxu0 0
  %438 = vmatprep.subr.bf16.mxu0 0
  %439 = vmatpush2.bf16.msra.mxu0 0
  %440 = vmatprep.mubr.bf16.mxu0 0
  %441 = vmatmul.mubr.bf16.gmra.mxu0 %v313
  %v442 = vpop.f32.mrf.mxu0
  %v443 = vadd.f32 %v104, %v442
  %v444 = vpop.f32.mrf.mxu0
  %v445 = vadd.f32 %v108, %v444
  %v446 = vpop.f32.mrf.mxu0
  %v447 = vadd.f32 %v104, %v446
  %v448 = vpop.f32.mrf.mxu0
  %v449 = vadd.f32 %v108, %v448
  %450 = vmatprep.mubr.bf16.mxu0 0
  %451 = vmatmul.mubr.bf16.gmra.mxu0 %v316
  %v452 = vpop.f32.mrf.mxu0
  %v453 = vadd.f32 %v104, %v452
  %v454 = vpop.f32.mrf.mxu0
  %v455 = vadd.f32 %v108, %v454
  %v456 = vpop.f32.mrf.mxu0
  %v457 = vadd.f32 %v104, %v456
  %v458 = vpop.f32.mrf.mxu0
  %v459 = vadd.f32 %v108, %v458
  %460 = vmatprep.mubr.bf16.mxu0 0
  %461 = vmatmul.mubr.bf16.gmra.mxu0 %v319
  %v462 = vpop.f32.mrf.mxu0
  %v463 = vadd.f32 %v104, %v462
  %v464 = vpop.f32.mrf.mxu0
  %v465 = vadd.f32 %v108, %v464
  %v466 = vpop.f32.mrf.mxu0
  %v467 = vadd.f32 %v104, %v466
  %v468 = vpop.f32.mrf.mxu0
  %v469 = vadd.f32 %v108, %v468
  %470 = vmatprep.mubr.bf16.mxu0 0
  %471 = vmatmul.mubr.bf16.gmra.mxu0 %v322
  %v472 = vpop.f32.mrf.mxu0
  %v473 = vadd.f32 %v104, %v472
  %v474 = vpop.f32.mrf.mxu0
  %v475 = vadd.f32 %v108, %v474
  %v476 = vpop.f32.mrf.mxu0
  %v477 = vadd.f32 %v104, %v476
  %v478 = vpop.f32.mrf.mxu0
  %v479 = vadd.f32 %v108, %v478
  %480 = vmatprep.mubr.bf16.mxu0 0
  %481 = vmatmul.mubr.bf16.gmra.mxu0 %v325
  %v482 = vpop.f32.mrf.mxu0
  %v483 = vadd.f32 %v104, %v482
  %v484 = vpop.f32.mrf.mxu0
  %v485 = vadd.f32 %v108, %v484
  %v486 = vpop.f32.mrf.mxu0
  %v487 = vadd.f32 %v104, %v486
  %v488 = vpop.f32.mrf.mxu0
  %v489 = vadd.f32 %v108, %v488
  %490 = vmatprep.mubr.bf16.mxu0 0
  %491 = vmatmul.mubr.bf16.gmra.mxu0 %v328
  %v492 = vpop.f32.mrf.mxu0
  %v493 = vadd.f32 %v104, %v492
  %v494 = vpop.f32.mrf.mxu0
  %v495 = vadd.f32 %v108, %v494
  %v496 = vpop.f32.mrf.mxu0
  %v497 = vadd.f32 %v104, %v496
  %v498 = vpop.f32.mrf.mxu0
  %v499 = vadd.f32 %v108, %v498
  %500 = vmatprep.mubr.bf16.mxu0 0
  %501 = vmatmul.mubr.bf16.gmra.mxu0 %v331
  %v502 = vpop.f32.mrf.mxu0
  %v503 = vadd.f32 %v104, %v502
  %v504 = vpop.f32.mrf.mxu0
  %v505 = vadd.f32 %v108, %v504
  %v506 = vpop.f32.mrf.mxu0
  %v507 = vadd.f32 %v104, %v506
  %v508 = vpop.f32.mrf.mxu0
  %v509 = vadd.f32 %v108, %v508
  %510 = vmatprep.mubr.bf16.mxu0 0
  %511 = vmatmul.mubr.bf16.gmra.mxu0 %v334
  %v512 = vpop.f32.mrf.mxu0
  %v513 = vadd.f32 %v104, %v512
  %v514 = vpop.f32.mrf.mxu0
  %v515 = vadd.f32 %v108, %v514
  %v516 = vpop.f32.mrf.mxu0
  %v517 = vadd.f32 %v104, %v516
  %v518 = vpop.f32.mrf.mxu0
  %v519 = vadd.f32 %v108, %v518
  %520 = vmatprep.mubr.bf16.mxu0 0
  %521 = vmatmul.mubr.bf16.gmra.mxu0 %v337
  %v522 = vpop.f32.mrf.mxu0
  %v523 = vadd.f32 %v104, %v522
  %v524 = vpop.f32.mrf.mxu0
  %v525 = vadd.f32 %v108, %v524
  %v526 = vpop.f32.mrf.mxu0
  %v527 = vadd.f32 %v104, %v526
  %v528 = vpop.f32.mrf.mxu0
  %v529 = vadd.f32 %v108, %v528
  %530 = vmatprep.mubr.bf16.mxu0 0
  %531 = vmatmul.mubr.bf16.gmra.mxu0 %v340
  %v532 = vpop.f32.mrf.mxu0
  %v533 = vadd.f32 %v104, %v532
  %v534 = vpop.f32.mrf.mxu0
  %v535 = vadd.f32 %v108, %v534
  %v536 = vpop.f32.mrf.mxu0
  %v537 = vadd.f32 %v104, %v536
  %v538 = vpop.f32.mrf.mxu0
  %v539 = vadd.f32 %v108, %v538
  %540 = vmatprep.mubr.bf16.mxu0 0
  %541 = vmatmul.mubr.bf16.gmra.mxu0 %v343
  %v542 = vpop.f32.mrf.mxu0
  %v543 = vadd.f32 %v104, %v542
  %v544 = vpop.f32.mrf.mxu0
  %v545 = vadd.f32 %v108, %v544
  %v546 = vpop.f32.mrf.mxu0
  %v547 = vadd.f32 %v104, %v546
  %v548 = vpop.f32.mrf.mxu0
  %v549 = vadd.f32 %v108, %v548
  %550 = vmatprep.mubr.bf16.mxu0 0
  %551 = vmatmul.mubr.bf16.gmra.mxu0 %v346
  %v552 = vpop.f32.mrf.mxu0
  %v553 = vadd.f32 %v104, %v552
  %v554 = vpop.f32.mrf.mxu0
  %v555 = vadd.f32 %v108, %v554
  %v556 = vpop.f32.mrf.mxu0
  %v557 = vadd.f32 %v104, %v556
  %v558 = vpop.f32.mrf.mxu0
  %v559 = vadd.f32 %v108, %v558
  %560 = vmatprep.mubr.bf16.mxu0 0
  %561 = vmatmul.mubr.bf16.gmra.mxu0 %v349
  %v562 = vpop.f32.mrf.mxu0
  %v563 = vadd.f32 %v104, %v562
  %v564 = vpop.f32.mrf.mxu0
  %v565 = vadd.f32 %v108, %v564
  %v566 = vpop.f32.mrf.mxu0
  %v567 = vadd.f32 %v104, %v566
  %v568 = vpop.f32.mrf.mxu0
  %v569 = vadd.f32 %v108, %v568
  %570 = vmatprep.mubr.bf16.mxu0 0
  %571 = vmatmul.mubr.bf16.gmra.mxu0 %v352
  %v572 = vpop.f32.mrf.mxu0
  %v573 = vadd.f32 %v104, %v572
  %v574 = vpop.f32.mrf.mxu0
  %v575 = vadd.f32 %v108, %v574
  %v576 = vpop.f32.mrf.mxu0
  %v577 = vadd.f32 %v104, %v576
  %v578 = vpop.f32.mrf.mxu0
  %v579 = vadd.f32 %v108, %v578
  %580 = vmatprep.mubr.bf16.mxu0 0
  %581 = vmatmul.mubr.bf16.gmra.mxu0 %v355
  %v582 = vpop.f32.mrf.mxu0
  %v583 = vadd.f32 %v104, %v582
  %v584 = vpop.f32.mrf.mxu0
  %v585 = vadd.f32 %v108, %v584
  %v586 = vpop.f32.mrf.mxu0
  %v587 = vadd.f32 %v104, %v586
  %v588 = vpop.f32.mrf.mxu0
  %v589 = vadd.f32 %v108, %v588
  %590 = vmatprep.mubr.bf16.mxu0 0
  %591 = vmatmul.mubr.bf16.gmra.mxu0 %v358
  %v592 = vpop.f32.mrf.mxu0
  %v593 = vadd.f32 %v104, %v592
  %v594 = vpop.f32.mrf.mxu0
  %v595 = vadd.f32 %v108, %v594
  %v596 = vpop.f32.mrf.mxu0
  %v597 = vadd.f32 %v104, %v596
  %v598 = vpop.f32.mrf.mxu0
  %v599 = vadd.f32 %v108, %v598
  %600 = vmatprep.mubr.bf16.mxu0 0
  %601 = vmatmul.mubr.bf16.gmra.mxu0 %v361
  %v602 = vpop.f32.mrf.mxu0
  %v603 = vadd.f32 %v104, %v602
  %v604 = vpop.f32.mrf.mxu0
  %v605 = vadd.f32 %v108, %v604
  %v606 = vpop.f32.mrf.mxu0
  %v607 = vadd.f32 %v104, %v606
  %v608 = vpop.f32.mrf.mxu0
  %v609 = vadd.f32 %v108, %v608
  %610 = vmatprep.mubr.bf16.mxu0 0
  %611 = vmatmul.mubr.bf16.gmra.mxu0 %v364
  %v612 = vpop.f32.mrf.mxu0
  %v613 = vadd.f32 %v104, %v612
  %v614 = vpop.f32.mrf.mxu0
  %v615 = vadd.f32 %v108, %v614
  %v616 = vpop.f32.mrf.mxu0
  %v617 = vadd.f32 %v104, %v616
  %v618 = vpop.f32.mrf.mxu0
  %v619 = vadd.f32 %v108, %v618
  %620 = vmatprep.mubr.bf16.mxu0 0
  %621 = vmatmul.mubr.bf16.gmra.mxu0 %v367
  %v622 = vpop.f32.mrf.mxu0
  %v623 = vadd.f32 %v104, %v622
  %v624 = vpop.f32.mrf.mxu0
  %v625 = vadd.f32 %v108, %v624
  %v626 = vpop.f32.mrf.mxu0
  %v627 = vadd.f32 %v104, %v626
  %v628 = vpop.f32.mrf.mxu0
  %v629 = vadd.f32 %v108, %v628
  %630 = vmatprep.mubr.bf16.mxu0 0
  %631 = vmatmul.mubr.bf16.gmra.mxu0 %v370
  %v632 = vpop.f32.mrf.mxu0
  %v633 = vadd.f32 %v104, %v632
  %v634 = vpop.f32.mrf.mxu0
  %v635 = vadd.f32 %v108, %v634
  %v636 = vpop.f32.mrf.mxu0
  %v637 = vadd.f32 %v104, %v636
  %v638 = vpop.f32.mrf.mxu0
  %v639 = vadd.f32 %v108, %v638
  %640 = vmatprep.mubr.bf16.mxu0 0
  %641 = vmatmul.mubr.bf16.gmra.mxu0 %v373
  %v642 = vpop.f32.mrf.mxu0
  %v643 = vadd.f32 %v104, %v642
  %v644 = vpop.f32.mrf.mxu0
  %v645 = vadd.f32 %v108, %v644
  %v646 = vpop.f32.mrf.mxu0
  %v647 = vadd.f32 %v104, %v646
  %v648 = vpop.f32.mrf.mxu0
  %v649 = vadd.f32 %v108, %v648
  %650 = vmatprep.mubr.bf16.mxu0 0
  %651 = vmatmul.mubr.bf16.gmra.mxu0 %v376
  %v652 = vpop.f32.mrf.mxu0
  %v653 = vadd.f32 %v104, %v652
  %v654 = vpop.f32.mrf.mxu0
  %v655 = vadd.f32 %v108, %v654
  %v656 = vpop.f32.mrf.mxu0
  %v657 = vadd.f32 %v104, %v656
  %v658 = vpop.f32.mrf.mxu0
  %v659 = vadd.f32 %v108, %v658
  %660 = vmatprep.mubr.bf16.mxu0 0
  %661 = vmatmul.mubr.bf16.gmra.mxu0 %v379
  %v662 = vpop.f32.mrf.mxu0
  %v663 = vadd.f32 %v104, %v662
  %v664 = vpop.f32.mrf.mxu0
  %v665 = vadd.f32 %v108, %v664
  %v666 = vpop.f32.mrf.mxu0
  %v667 = vadd.f32 %v104, %v666
  %v668 = vpop.f32.mrf.mxu0
  %v669 = vadd.f32 %v108, %v668
  %670 = vmatprep.mubr.bf16.mxu0 0
  %671 = vmatmul.mubr.bf16.gmra.mxu0 %v382
  %v672 = vpop.f32.mrf.mxu0
  %v673 = vadd.f32 %v104, %v672
  %v674 = vpop.f32.mrf.mxu0
  %v675 = vadd.f32 %v108, %v674
  %v676 = vpop.f32.mrf.mxu0
  %v677 = vadd.f32 %v104, %v676
  %v678 = vpop.f32.mrf.mxu0
  %v679 = vadd.f32 %v108, %v678
  %680 = vmatprep.mubr.bf16.mxu0 0
  %681 = vmatmul.mubr.bf16.gmra.mxu0 %v385
  %v682 = vpop.f32.mrf.mxu0
  %v683 = vadd.f32 %v104, %v682
  %v684 = vpop.f32.mrf.mxu0
  %v685 = vadd.f32 %v108, %v684
  %v686 = vpop.f32.mrf.mxu0
  %v687 = vadd.f32 %v104, %v686
  %v688 = vpop.f32.mrf.mxu0
  %v689 = vadd.f32 %v108, %v688
  %690 = vmatprep.mubr.bf16.mxu0 0
  %691 = vmatmul.mubr.bf16.gmra.mxu0 %v388
  %v692 = vpop.f32.mrf.mxu0
  %v693 = vadd.f32 %v104, %v692
  %v694 = vpop.f32.mrf.mxu0
  %v695 = vadd.f32 %v108, %v694
  %v696 = vpop.f32.mrf.mxu0
  %v697 = vadd.f32 %v104, %v696
  %v698 = vpop.f32.mrf.mxu0
  %v699 = vadd.f32 %v108, %v698
  %700 = vmatprep.mubr.bf16.mxu0 0
  %701 = vmatmul.mubr.bf16.gmra.mxu0 %v391
  %v702 = vpop.f32.mrf.mxu0
  %v703 = vadd.f32 %v104, %v702
  %v704 = vpop.f32.mrf.mxu0
  %v705 = vadd.f32 %v108, %v704
  %v706 = vpop.f32.mrf.mxu0
  %v707 = vadd.f32 %v104, %v706
  %v708 = vpop.f32.mrf.mxu0
  %v709 = vadd.f32 %v108, %v708
  %710 = vmatprep.mubr.bf16.mxu0 0
  %711 = vmatmul.mubr.bf16.gmra.mxu0 %v394
  %v712 = vpop.f32.mrf.mxu0
  %v713 = vadd.f32 %v104, %v712
  %v714 = vpop.f32.mrf.mxu0
  %v715 = vadd.f32 %v108, %v714
  %v716 = vpop.f32.mrf.mxu0
  %v717 = vadd.f32 %v104, %v716
  %v718 = vpop.f32.mrf.mxu0
  %v719 = vadd.f32 %v108, %v718
  %720 = vmatprep.mubr.bf16.mxu0 0
  %721 = vmatmul.mubr.bf16.gmra.mxu0 %v397
  %v722 = vpop.f32.mrf.mxu0
  %v723 = vadd.f32 %v104, %v722
  %v724 = vpop.f32.mrf.mxu0
  %v725 = vadd.f32 %v108, %v724
  %v726 = vpop.f32.mrf.mxu0
  %v727 = vadd.f32 %v104, %v726
  %v728 = vpop.f32.mrf.mxu0
  %v729 = vadd.f32 %v108, %v728
  %730 = vmatprep.mubr.bf16.mxu0 0
  %731 = vmatmul.mubr.bf16.gmra.mxu0 %v400
  %v732 = vpop.f32.mrf.mxu0
  %v733 = vadd.f32 %v104, %v732
  %v734 = vpop.f32.mrf.mxu0
  %v735 = vadd.f32 %v108, %v734
  %v736 = vpop.f32.mrf.mxu0
  %v737 = vadd.f32 %v104, %v736
  %v738 = vpop.f32.mrf.mxu0
  %v739 = vadd.f32 %v108, %v738
  %740 = vmatprep.mubr.bf16.mxu0 0
  %741 = vmatmul.mubr.bf16.gmra.mxu0 %v403
  %v742 = vpop.f32.mrf.mxu0
  %v743 = vadd.f32 %v104, %v742
  %v744 = vpop.f32.mrf.mxu0
  %v745 = vadd.f32 %v108, %v744
  %v746 = vpop.f32.mrf.mxu0
  %v747 = vadd.f32 %v104, %v746
  %v748 = vpop.f32.mrf.mxu0
  %v749 = vadd.f32 %v108, %v748
  %750 = vmatprep.mubr.bf16.mxu0 0
  %751 = vmatmul.mubr.bf16.gmra.mxu0 %v406
  %v752 = vpop.f32.mrf.mxu0
  %v753 = vadd.f32 %v104, %v752
  %v754 = vpop.f32.mrf.mxu0
  %v755 = vadd.f32 %v108, %v754
  %v756 = vpop.f32.mrf.mxu0
  %v757 = vadd.f32 %v104, %v756
  %v758 = vpop.f32.mrf.mxu0
  %v759 = vadd.f32 %v108, %v758
  %760 = vdwg.mxu0
  %v761 = vld [vmem:[%s3] sm:$0xff]
  %v762 = vld [vmem:[%s3 + $0x8] sm:$0xff]
  %v763 = vld [vmem:[%s3 + $0x10] sm:$0xff]
  %v764 = vld [vmem:[%s3 + $0x18] sm:$0xff]
  %v765 = vld [vmem:[%s3 + $0x20] sm:$0xff]
  %v766 = vld [vmem:[%s3 + $0x28] sm:$0xff]
  %v767 = vld [vmem:[%s3 + $0x30] sm:$0xff]
  %v768 = vld [vmem:[%s3 + $0x38] sm:$0xff]
  %v769 = vld [vmem:[%s3 + $0x40] sm:$0xff]
  %v770 = vld [vmem:[%s3 + $0x48] sm:$0xff]
  %v771 = vld [vmem:[%s3 + $0x50] sm:$0xff]
  %v772 = vld [vmem:[%s3 + $0x58] sm:$0xff]
  %v773 = vld [vmem:[%s3 + $0x60] sm:$0xff]
  %v774 = vld [vmem:[%s3 + $0x68] sm:$0xff]
  %v775 = vld [vmem:[%s3 + $0x70] sm:$0xff]
  %v776 = vld [vmem:[%s3 + $0x78] sm:$0xff]
  %v777 = vld [vmem:[%s3 + $0x80] sm:$0xff]
  %v778 = vld [vmem:[%s3 + $0x88] sm:$0xff]
  %v779 = vld [vmem:[%s3 + $0x90] sm:$0xff]
  %v780 = vld [vmem:[%s3 + $0x98] sm:$0xff]
  %v781 = vld [vmem:[%s3 + $0xa0] sm:$0xff]
  %v782 = vld [vmem:[%s3 + $0xa8] sm:$0xff]
  %v783 = vld [vmem:[%s3 + $0xb0] sm:$0xff]
  %v784 = vld [vmem:[%s3 + $0xb8] sm:$0xff]
  %v785 = vld [vmem:[%s3 + $0xc0] sm:$0xff]
  %v786 = vld [vmem:[%s3 + $0xc8] sm:$0xff]
  %v787 = vld [vmem:[%s3 + $0xd0] sm:$0xff]
  %v788 = vld [vmem:[%s3 + $0xd8] sm:$0xff]
  %v789 = vld [vmem:[%s3 + $0xe0] sm:$0xff]
  %v790 = vld [vmem:[%s3 + $0xe8] sm:$0xff]
  %v791 = vld [vmem:[%s3 + $0xf0] sm:$0xff]
  %v792 = vld [vmem:[%s3 + $0xf8] sm:$0xff]
  %v793 = vld [vmem:[%s3 + $0x100] sm:$0xff]
  %v794 = vld [vmem:[%s3 + $0x108] sm:$0xff]
  %v795 = vld [vmem:[%s3 + $0x110] sm:$0xff]
  %v796 = vld [vmem:[%s3 + $0x118] sm:$0xff]
  %v797 = vld [vmem:[%s3 + $0x120] sm:$0xff]
  %v798 = vld [vmem:[%s3 + $0x128] sm:$0xff]
  %v799 = vld [vmem:[%s3 + $0x130] sm:$0xff]
  %v800 = vld [vmem:[%s3 + $0x138] sm:$0xff]
  %v801 = vld [vmem:[%s3 + $0x140] sm:$0xff]
  %v802 = vld [vmem:[%s3 + $0x148] sm:$0xff]
  %v803 = vld [vmem:[%s3 + $0x150] sm:$0xff]
  %v804 = vld [vmem:[%s3 + $0x158] sm:$0xff]
  %v805 = vld [vmem:[%s3 + $0x160] sm:$0xff]
  %v806 = vld [vmem:[%s3 + $0x168] sm:$0xff]
  %v807 = vld [vmem:[%s3 + $0x170] sm:$0xff]
  %v808 = vld [vmem:[%s3 + $0x178] sm:$0xff]
  %v809 = vld [vmem:[%s3 + $0x180] sm:$0xff]
  %v810 = vld [vmem:[%s3 + $0x188] sm:$0xff]
  %v811 = vld [vmem:[%s3 + $0x190] sm:$0xff]
  %v812 = vld [vmem:[%s3 + $0x198] sm:$0xff]
  %v813 = vld [vmem:[%s3 + $0x1a0] sm:$0xff]
  %v814 = vld [vmem:[%s3 + $0x1a8] sm:$0xff]
  %v815 = vld [vmem:[%s3 + $0x1b0] sm:$0xff]
  %v816 = vld [vmem:[%s3 + $0x1b8] sm:$0xff]
  %v817 = vld [vmem:[%s3 + $0x1c0] sm:$0xff]
  %v818 = vld [vmem:[%s3 + $0x1c8] sm:$0xff]
  %v819 = vld [vmem:[%s3 + $0x1d0] sm:$0xff]
  %v820 = vld [vmem:[%s3 + $0x1d8] sm:$0xff]
  %v821 = vld [vmem:[%s3 + $0x1e0] sm:$0xff]
  %v822 = vld [vmem:[%s3 + $0x1e8] sm:$0xff]
  %v823 = vld [vmem:[%s3 + $0x1f0] sm:$0xff]
  %v824 = vld [vmem:[%s3 + $0x1f8] sm:$0xff]
  %v825 = vld [vmem:[%s4] sm:$0xff]
  %v826 = vld [vmem:[%s4 + $0x8] sm:$0xff]
  %v827 = vld [vmem:[%s4 + $0x10] sm:$0xff]
  %v828 = vld [vmem:[%s4 + $0x18] sm:$0xff]
  %v829 = vld [vmem:[%s4 + $0x20] sm:$0xff]
  %v830 = vld [vmem:[%s4 + $0x28] sm:$0xff]
  %v831 = vld [vmem:[%s4 + $0x30] sm:$0xff]
  %v832 = vld [vmem:[%s4 + $0x38] sm:$0xff]
  %v833 = vld [vmem:[%s4 + $0x40] sm:$0xff]
  %v834 = vld [vmem:[%s4 + $0x48] sm:$0xff]
  %v835 = vld [vmem:[%s4 + $0x50] sm:$0xff]
  %v836 = vld [vmem:[%s4 + $0x58] sm:$0xff]
  %v837 = vld [vmem:[%s4 + $0x60] sm:$0xff]
  %v838 = vld [vmem:[%s4 + $0x68] sm:$0xff]
  %v839 = vld [vmem:[%s4 + $0x70] sm:$0xff]
  %v840 = vld [vmem:[%s4 + $0x78] sm:$0xff]
  %v841 = vld [vmem:[%s4 + $0x80] sm:$0xff]
  %v842 = vld [vmem:[%s4 + $0x88] sm:$0xff]
  %v843 = vld [vmem:[%s4 + $0x90] sm:$0xff]
  %v844 = vld [vmem:[%s4 + $0x98] sm:$0xff]
  %v845 = vld [vmem:[%s4 + $0xa0] sm:$0xff]
  %v846 = vld [vmem:[%s4 + $0xa8] sm:$0xff]
  %v847 = vld [vmem:[%s4 + $0xb0] sm:$0xff]
  %v848 = vld [vmem:[%s4 + $0xb8] sm:$0xff]
  %v849 = vld [vmem:[%s4 + $0xc0] sm:$0xff]
  %v850 = vld [vmem:[%s4 + $0xc8] sm:$0xff]
  %v851 = vld [vmem:[%s4 + $0xd0] sm:$0xff]
  %v852 = vld [vmem:[%s4 + $0xd8] sm:$0xff]
  %v853 = vld [vmem:[%s4 + $0xe0] sm:$0xff]
  %v854 = vld [vmem:[%s4 + $0xe8] sm:$0xff]
  %v855 = vld [vmem:[%s4 + $0xf0] sm:$0xff]
  %v856 = vld [vmem:[%s4 + $0xf8] sm:$0xff]
  %857 = vmatprep.subr.mxu0 %v856
  %858 = vmatpush1.msra.mxu0 %v855
  %859 = vmatprep.subr.mxu0 %v854
  %860 = vmatpush1.msra.mxu0 %v853
  %861 = vmatprep.subr.mxu0 %v852
  %862 = vmatpush1.msra.mxu0 %v851
  %863 = vmatprep.subr.mxu0 %v850
  %864 = vmatpush1.msra.mxu0 %v849
  %865 = vmatprep.subr.mxu0 %v848
  %866 = vmatpush1.msra.mxu0 %v847
  %867 = vmatprep.subr.mxu0 %v846
  %868 = vmatpush1.msra.mxu0 %v845
  %869 = vmatprep.subr.mxu0 %v844
  %870 = vmatpush1.msra.mxu0 %v843
  %871 = vmatprep.subr.mxu0 %v842
  %872 = vmatpush1.msra.mxu0 %v841
  %873 = vmatprep.subr.mxu0 %v840
  %874 = vmatpush1.msra.mxu0 %v839
  %875 = vmatprep.subr.mxu0 %v838
  %876 = vmatpush1.msra.mxu0 %v837
  %877 = vmatprep.subr.mxu0 %v836
  %878 = vmatpush1.msra.mxu0 %v835
  %879 = vmatprep.subr.mxu0 %v834
  %880 = vmatpush1.msra.mxu0 %v833
  %881 = vmatprep.subr.mxu0 %v832
  %882 = vmatpush1.msra.mxu0 %v831
  %883 = vmatprep.subr.mxu0 %v830
  %884 = vmatpush1.msra.mxu0 %v829
  %885 = vmatprep.subr.mxu0 %v828
  %886 = vmatpush1.msra.mxu0 %v827
  %887 = vmatprep.subr.mxu0 %v826
  %888 = vmatpush1.msra.mxu0 %v825
  %889 = vmatprep.subr.mxu0 0.0
  %890 = vmatpush2.msra.mxu0 0.0
  %891 = vmatprep.subr.mxu0 0.0
  %892 = vmatpush2.msra.mxu0 0.0
  %893 = vmatprep.subr.mxu0 0.0
  %894 = vmatpush2.msra.mxu0 0.0
  %895 = vmatprep.subr.mxu0 0.0
  %896 = vmatpush2.msra.mxu0 0.0
  %897 = vmatprep.subr.mxu0 0.0
  %898 = vmatpush2.msra.mxu0 0.0
  %899 = vmatprep.subr.mxu0 0.0
  %900 = vmatpush2.msra.mxu0 0.0
  %901 = vmatprep.subr.mxu0 0.0
  %902 = vmatpush2.msra.mxu0 0.0
  %903 = vmatprep.subr.mxu0 0.0
  %904 = vmatpush2.msra.mxu0 0.0
  %905 = vmatprep.subr.mxu0 0.0
  %906 = vmatpush2.msra.mxu0 0.0
  %907 = vmatprep.subr.mxu0 0.0
  %908 = vmatpush2.msra.mxu0 0.0
  %909 = vmatprep.subr.mxu0 0.0
  %910 = vmatpush2.msra.mxu0 0.0
  %911 = vmatprep.subr.mxu0 0.0
  %912 = vmatpush2.msra.mxu0 0.0
  %913 = vmatprep.subr.mxu0 0.0
  %914 = vmatpush2.msra.mxu0 0.0
  %915 = vmatprep.subr.mxu0 0.0
  %916 = vmatpush2.msra.mxu0 0.0
  %917 = vmatprep.subr.mxu0 0.0
  %918 = vmatpush2.msra.mxu0 0.0
  %919 = vmatprep.subr.mxu0 0.0
  %920 = vmatpush2.msra.mxu0 0.0
  %921 = vmatprep.mubr.f32.mxu0 0.0
  %922 = vmatmul.mubr.f32.gmra.mxu0 %v761
  %v923 = vpop.f32.mrf.mxu0
  %v924 = vadd.f32 0.0, %v923
  %v925 = vpop.f32.mrf.mxu0
  %v926 = vadd.f32 0.0, %v925
  %927 = vmatprep.mubr.f32.mxu0 0.0
  %928 = vmatmul.mubr.f32.gmra.mxu0 %v762
  %v929 = vpop.f32.mrf.mxu0
  %v930 = vadd.f32 0.0, %v929
  %v931 = vpop.f32.mrf.mxu0
  %v932 = vadd.f32 0.0, %v931
  %933 = vmatprep.mubr.f32.mxu0 0.0
  %934 = vmatmul.mubr.f32.gmra.mxu0 %v763
  %v935 = vpop.f32.mrf.mxu0
  %v936 = vadd.f32 0.0, %v935
  %v937 = vpop.f32.mrf.mxu0
  %v938 = vadd.f32 0.0, %v937
  %939 = vmatprep.mubr.f32.mxu0 0.0
  %940 = vmatmul.mubr.f32.gmra.mxu0 %v764
  %v941 = vpop.f32.mrf.mxu0
  %v942 = vadd.f32 0.0, %v941
  %v943 = vpop.f32.mrf.mxu0
  %v944 = vadd.f32 0.0, %v943
  %945 = vmatprep.mubr.f32.mxu0 0.0
  %946 = vmatmul.mubr.f32.gmra.mxu0 %v765
  %v947 = vpop.f32.mrf.mxu0
  %v948 = vadd.f32 0.0, %v947
  %v949 = vpop.f32.mrf.mxu0
  %v950 = vadd.f32 0.0, %v949
  %951 = vmatprep.mubr.f32.mxu0 0.0
  %952 = vmatmul.mubr.f32.gmra.mxu0 %v766
  %v953 = vpop.f32.mrf.mxu0
  %v954 = vadd.f32 0.0, %v953
  %v955 = vpop.f32.mrf.mxu0
  %v956 = vadd.f32 0.0, %v955
  %957 = vmatprep.mubr.f32.mxu0 0.0
  %958 = vmatmul.mubr.f32.gmra.mxu0 %v767
  %v959 = vpop.f32.mrf.mxu0
  %v960 = vadd.f32 0.0, %v959
  %v961 = vpop.f32.mrf.mxu0
  %v962 = vadd.f32 0.0, %v961
  %963 = vmatprep.mubr.f32.mxu0 0.0
  %964 = vmatmul.mubr.f32.gmra.mxu0 %v768
  %v965 = vpop.f32.mrf.mxu0
  %v966 = vadd.f32 0.0, %v965
  %v967 = vpop.f32.mrf.mxu0
  %v968 = vadd.f32 0.0, %v967
  %969 = vmatprep.mubr.f32.mxu0 0.0
  %970 = vmatmul.mubr.f32.gmra.mxu0 %v769
  %v971 = vpop.f32.mrf.mxu0
  %v972 = vadd.f32 0.0, %v971
  %v973 = vpop.f32.mrf.mxu0
  %v974 = vadd.f32 0.0, %v973
  %975 = vmatprep.mubr.f32.mxu0 0.0
  %976 = vmatmul.mubr.f32.gmra.mxu0 %v770
  %v977 = vpop.f32.mrf.mxu0
  %v978 = vadd.f32 0.0, %v977
  %v979 = vpop.f32.mrf.mxu0
  %v980 = vadd.f32 0.0, %v979
  %981 = vmatprep.mubr.f32.mxu0 0.0
  %982 = vmatmul.mubr.f32.gmra.mxu0 %v771
  %v983 = vpop.f32.mrf.mxu0
  %v984 = vadd.f32 0.0, %v983
  %v985 = vpop.f32.mrf.mxu0
  %v986 = vadd.f32 0.0, %v985
  %987 = vmatprep.mubr.f32.mxu0 0.0
  %988 = vmatmul.mubr.f32.gmra.mxu0 %v772
  %v989 = vpop.f32.mrf.mxu0
  %v990 = vadd.f32 0.0, %v989
  %v991 = vpop.f32.mrf.mxu0
  %v992 = vadd.f32 0.0, %v991
  %993 = vmatprep.mubr.f32.mxu0 0.0
  %994 = vmatmul.mubr.f32.gmra.mxu0 %v773
  %v995 = vpop.f32.mrf.mxu0
  %v996 = vadd.f32 0.0, %v995
  %v997 = vpop.f32.mrf.mxu0
  %v998 = vadd.f32 0.0, %v997
  %999 = vmatprep.mubr.f32.mxu0 0.0
  %1000 = vmatmul.mubr.f32.gmra.mxu0 %v774
  %v1001 = vpop.f32.mrf.mxu0
  %v1002 = vadd.f32 0.0, %v1001
  %v1003 = vpop.f32.mrf.mxu0
  %v1004 = vadd.f32 0.0, %v1003
  %1005 = vmatprep.mubr.f32.mxu0 0.0
  %1006 = vmatmul.mubr.f32.gmra.mxu0 %v775
  %v1007 = vpop.f32.mrf.mxu0
  %v1008 = vadd.f32 0.0, %v1007
  %v1009 = vpop.f32.mrf.mxu0
  %v1010 = vadd.f32 0.0, %v1009
  %1011 = vmatprep.mubr.f32.mxu0 0.0
  %1012 = vmatmul.mubr.f32.gmra.mxu0 %v776
  %v1013 = vpop.f32.mrf.mxu0
  %v1014 = vadd.f32 0.0, %v1013
  %v1015 = vpop.f32.mrf.mxu0
  %v1016 = vadd.f32 0.0, %v1015
  %1017 = vmatprep.mubr.f32.mxu0 0.0
  %1018 = vmatmul.mubr.f32.gmra.mxu0 %v777
  %v1019 = vpop.f32.mrf.mxu0
  %v1020 = vadd.f32 0.0, %v1019
  %v1021 = vpop.f32.mrf.mxu0
  %v1022 = vadd.f32 0.0, %v1021
  %1023 = vmatprep.mubr.f32.mxu0 0.0
  %1024 = vmatmul.mubr.f32.gmra.mxu0 %v778
  %v1025 = vpop.f32.mrf.mxu0
  %v1026 = vadd.f32 0.0, %v1025
  %v1027 = vpop.f32.mrf.mxu0
  %v1028 = vadd.f32 0.0, %v1027
  %1029 = vmatprep.mubr.f32.mxu0 0.0
  %1030 = vmatmul.mubr.f32.gmra.mxu0 %v779
  %v1031 = vpop.f32.mrf.mxu0
  %v1032 = vadd.f32 0.0, %v1031
  %v1033 = vpop.f32.mrf.mxu0
  %v1034 = vadd.f32 0.0, %v1033
  %1035 = vmatprep.mubr.f32.mxu0 0.0
  %1036 = vmatmul.mubr.f32.gmra.mxu0 %v780
  %v1037 = vpop.f32.mrf.mxu0
  %v1038 = vadd.f32 0.0, %v1037
  %v1039 = vpop.f32.mrf.mxu0
  %v1040 = vadd.f32 0.0, %v1039
  %1041 = vmatprep.mubr.f32.mxu0 0.0
  %1042 = vmatmul.mubr.f32.gmra.mxu0 %v781
  %v1043 = vpop.f32.mrf.mxu0
  %v1044 = vadd.f32 0.0, %v1043
  %v1045 = vpop.f32.mrf.mxu0
  %v1046 = vadd.f32 0.0, %v1045
  %1047 = vmatprep.mubr.f32.mxu0 0.0
  %1048 = vmatmul.mubr.f32.gmra.mxu0 %v782
  %v1049 = vpop.f32.mrf.mxu0
  %v1050 = vadd.f32 0.0, %v1049
  %v1051 = vpop.f32.mrf.mxu0
  %v1052 = vadd.f32 0.0, %v1051
  %1053 = vmatprep.mubr.f32.mxu0 0.0
  %1054 = vmatmul.mubr.f32.gmra.mxu0 %v783
  %v1055 = vpop.f32.mrf.mxu0
  %v1056 = vadd.f32 0.0, %v1055
  %v1057 = vpop.f32.mrf.mxu0
  %v1058 = vadd.f32 0.0, %v1057
  %1059 = vmatprep.mubr.f32.mxu0 0.0
  %1060 = vmatmul.mubr.f32.gmra.mxu0 %v784
  %v1061 = vpop.f32.mrf.mxu0
  %v1062 = vadd.f32 0.0, %v1061
  %v1063 = vpop.f32.mrf.mxu0
  %v1064 = vadd.f32 0.0, %v1063
  %1065 = vmatprep.mubr.f32.mxu0 0.0
  %1066 = vmatmul.mubr.f32.gmra.mxu0 %v785
  %v1067 = vpop.f32.mrf.mxu0
  %v1068 = vadd.f32 0.0, %v1067
  %v1069 = vpop.f32.mrf.mxu0
  %v1070 = vadd.f32 0.0, %v1069
  %1071 = vmatprep.mubr.f32.mxu0 0.0
  %1072 = vmatmul.mubr.f32.gmra.mxu0 %v786
  %v1073 = vpop.f32.mrf.mxu0
  %v1074 = vadd.f32 0.0, %v1073
  %v1075 = vpop.f32.mrf.mxu0
  %v1076 = vadd.f32 0.0, %v1075
  %1077 = vmatprep.mubr.f32.mxu0 0.0
  %1078 = vmatmul.mubr.f32.gmra.mxu0 %v787
  %v1079 = vpop.f32.mrf.mxu0
  %v1080 = vadd.f32 0.0, %v1079
  %v1081 = vpop.f32.mrf.mxu0
  %v1082 = vadd.f32 0.0, %v1081
  %1083 = vmatprep.mubr.f32.mxu0 0.0
  %1084 = vmatmul.mubr.f32.gmra.mxu0 %v788
  %v1085 = vpop.f32.mrf.mxu0
  %v1086 = vadd.f32 0.0, %v1085
  %v1087 = vpop.f32.mrf.mxu0
  %v1088 = vadd.f32 0.0, %v1087
  %1089 = vmatprep.mubr.f32.mxu0 0.0
  %1090 = vmatmul.mubr.f32.gmra.mxu0 %v789
  %v1091 = vpop.f32.mrf.mxu0
  %v1092 = vadd.f32 0.0, %v1091
  %v1093 = vpop.f32.mrf.mxu0
  %v1094 = vadd.f32 0.0, %v1093
  %1095 = vmatprep.mubr.f32.mxu0 0.0
  %1096 = vmatmul.mubr.f32.gmra.mxu0 %v790
  %v1097 = vpop.f32.mrf.mxu0
  %v1098 = vadd.f32 0.0, %v1097
  %v1099 = vpop.f32.mrf.mxu0
  %v1100 = vadd.f32 0.0, %v1099
  %1101 = vmatprep.mubr.f32.mxu0 0.0
  %1102 = vmatmul.mubr.f32.gmra.mxu0 %v791
  %v1103 = vpop.f32.mrf.mxu0
  %v1104 = vadd.f32 0.0, %v1103
  %v1105 = vpop.f32.mrf.mxu0
  %v1106 = vadd.f32 0.0, %v1105
  %1107 = vmatprep.mubr.f32.mxu0 0.0
  %1108 = vmatmul.mubr.f32.gmra.mxu0 %v792
  %v1109 = vpop.f32.mrf.mxu0
  %v1110 = vadd.f32 0.0, %v1109
  %v1111 = vpop.f32.mrf.mxu0
  %v1112 = vadd.f32 0.0, %v1111
  %1113 = vmatprep.mubr.f32.mxu0 0.0
  %1114 = vmatmul.mubr.f32.gmra.mxu0 %v793
  %v1115 = vpop.f32.mrf.mxu0
  %v1116 = vadd.f32 0.0, %v1115
  %v1117 = vpop.f32.mrf.mxu0
  %v1118 = vadd.f32 0.0, %v1117
  %1119 = vmatprep.mubr.f32.mxu0 0.0
  %1120 = vmatmul.mubr.f32.gmra.mxu0 %v794
  %v1121 = vpop.f32.mrf.mxu0
  %v1122 = vadd.f32 0.0, %v1121
  %v1123 = vpop.f32.mrf.mxu0
  %v1124 = vadd.f32 0.0, %v1123
  %1125 = vmatprep.mubr.f32.mxu0 0.0
  %1126 = vmatmul.mubr.f32.gmra.mxu0 %v795
  %v1127 = vpop.f32.mrf.mxu0
  %v1128 = vadd.f32 0.0, %v1127
  %v1129 = vpop.f32.mrf.mxu0
  %v1130 = vadd.f32 0.0, %v1129
  %1131 = vmatprep.mubr.f32.mxu0 0.0
  %1132 = vmatmul.mubr.f32.gmra.mxu0 %v796
  %v1133 = vpop.f32.mrf.mxu0
  %v1134 = vadd.f32 0.0, %v1133
  %v1135 = vpop.f32.mrf.mxu0
  %v1136 = vadd.f32 0.0, %v1135
  %1137 = vmatprep.mubr.f32.mxu0 0.0
  %1138 = vmatmul.mubr.f32.gmra.mxu0 %v797
  %v1139 = vpop.f32.mrf.mxu0
  %v1140 = vadd.f32 0.0, %v1139
  %v1141 = vpop.f32.mrf.mxu0
  %v1142 = vadd.f32 0.0, %v1141
  %1143 = vmatprep.mubr.f32.mxu0 0.0
  %1144 = vmatmul.mubr.f32.gmra.mxu0 %v798
  %v1145 = vpop.f32.mrf.mxu0
  %v1146 = vadd.f32 0.0, %v1145
  %v1147 = vpop.f32.mrf.mxu0
  %v1148 = vadd.f32 0.0, %v1147
  %1149 = vmatprep.mubr.f32.mxu0 0.0
  %1150 = vmatmul.mubr.f32.gmra.mxu0 %v799
  %v1151 = vpop.f32.mrf.mxu0
  %v1152 = vadd.f32 0.0, %v1151
  %v1153 = vpop.f32.mrf.mxu0
  %v1154 = vadd.f32 0.0, %v1153
  %1155 = vmatprep.mubr.f32.mxu0 0.0
  %1156 = vmatmul.mubr.f32.gmra.mxu0 %v800
  %v1157 = vpop.f32.mrf.mxu0
  %v1158 = vadd.f32 0.0, %v1157
  %v1159 = vpop.f32.mrf.mxu0
  %v1160 = vadd.f32 0.0, %v1159
  %1161 = vmatprep.mubr.f32.mxu0 0.0
  %1162 = vmatmul.mubr.f32.gmra.mxu0 %v801
  %v1163 = vpop.f32.mrf.mxu0
  %v1164 = vadd.f32 0.0, %v1163
  %v1165 = vpop.f32.mrf.mxu0
  %v1166 = vadd.f32 0.0, %v1165
  %1167 = vmatprep.mubr.f32.mxu0 0.0
  %1168 = vmatmul.mubr.f32.gmra.mxu0 %v802
  %v1169 = vpop.f32.mrf.mxu0
  %v1170 = vadd.f32 0.0, %v1169
  %v1171 = vpop.f32.mrf.mxu0
  %v1172 = vadd.f32 0.0, %v1171
  %1173 = vmatprep.mubr.f32.mxu0 0.0
  %1174 = vmatmul.mubr.f32.gmra.mxu0 %v803
  %v1175 = vpop.f32.mrf.mxu0
  %v1176 = vadd.f32 0.0, %v1175
  %v1177 = vpop.f32.mrf.mxu0
  %v1178 = vadd.f32 0.0, %v1177
  %1179 = vmatprep.mubr.f32.mxu0 0.0
  %1180 = vmatmul.mubr.f32.gmra.mxu0 %v804
  %v1181 = vpop.f32.mrf.mxu0
  %v1182 = vadd.f32 0.0, %v1181
  %v1183 = vpop.f32.mrf.mxu0
  %v1184 = vadd.f32 0.0, %v1183
  %1185 = vmatprep.mubr.f32.mxu0 0.0
  %1186 = vmatmul.mubr.f32.gmra.mxu0 %v805
  %v1187 = vpop.f32.mrf.mxu0
  %v1188 = vadd.f32 0.0, %v1187
  %v1189 = vpop.f32.mrf.mxu0
  %v1190 = vadd.f32 0.0, %v1189
  %1191 = vmatprep.mubr.f32.mxu0 0.0
  %1192 = vmatmul.mubr.f32.gmra.mxu0 %v806
  %v1193 = vpop.f32.mrf.mxu0
  %v1194 = vadd.f32 0.0, %v1193
  %v1195 = vpop.f32.mrf.mxu0
  %v1196 = vadd.f32 0.0, %v1195
  %1197 = vmatprep.mubr.f32.mxu0 0.0
  %1198 = vmatmul.mubr.f32.gmra.mxu0 %v807
  %v1199 = vpop.f32.mrf.mxu0
  %v1200 = vadd.f32 0.0, %v1199
  %v1201 = vpop.f32.mrf.mxu0
  %v1202 = vadd.f32 0.0, %v1201
  %1203 = vmatprep.mubr.f32.mxu0 0.0
  %1204 = vmatmul.mubr.f32.gmra.mxu0 %v808
  %v1205 = vpop.f32.mrf.mxu0
  %v1206 = vadd.f32 0.0, %v1205
  %v1207 = vpop.f32.mrf.mxu0
  %v1208 = vadd.f32 0.0, %v1207
  %1209 = vmatprep.mubr.f32.mxu0 0.0
  %1210 = vmatmul.mubr.f32.gmra.mxu0 %v809
  %v1211 = vpop.f32.mrf.mxu0
  %v1212 = vadd.f32 0.0, %v1211
  %v1213 = vpop.f32.mrf.mxu0
  %v1214 = vadd.f32 0.0, %v1213
  %1215 = vmatprep.mubr.f32.mxu0 0.0
  %1216 = vmatmul.mubr.f32.gmra.mxu0 %v810
  %v1217 = vpop.f32.mrf.mxu0
  %v1218 = vadd.f32 0.0, %v1217
  %v1219 = vpop.f32.mrf.mxu0
  %v1220 = vadd.f32 0.0, %v1219
  %1221 = vmatprep.mubr.f32.mxu0 0.0
  %1222 = vmatmul.mubr.f32.gmra.mxu0 %v811
  %v1223 = vpop.f32.mrf.mxu0
  %v1224 = vadd.f32 0.0, %v1223
  %v1225 = vpop.f32.mrf.mxu0
  %v1226 = vadd.f32 0.0, %v1225
  %1227 = vmatprep.mubr.f32.mxu0 0.0
  %1228 = vmatmul.mubr.f32.gmra.mxu0 %v812
  %v1229 = vpop.f32.mrf.mxu0
  %v1230 = vadd.f32 0.0, %v1229
  %v1231 = vpop.f32.mrf.mxu0
  %v1232 = vadd.f32 0.0, %v1231
  %1233 = vmatprep.mubr.f32.mxu0 0.0
  %1234 = vmatmul.mubr.f32.gmra.mxu0 %v813
  %v1235 = vpop.f32.mrf.mxu0
  %v1236 = vadd.f32 0.0, %v1235
  %v1237 = vpop.f32.mrf.mxu0
  %v1238 = vadd.f32 0.0, %v1237
  %1239 = vmatprep.mubr.f32.mxu0 0.0
  %1240 = vmatmul.mubr.f32.gmra.mxu0 %v814
  %v1241 = vpop.f32.mrf.mxu0
  %v1242 = vadd.f32 0.0, %v1241
  %v1243 = vpop.f32.mrf.mxu0
  %v1244 = vadd.f32 0.0, %v1243
  %1245 = vmatprep.mubr.f32.mxu0 0.0
  %1246 = vmatmul.mubr.f32.gmra.mxu0 %v815
  %v1247 = vpop.f32.mrf.mxu0
  %v1248 = vadd.f32 0.0, %v1247
  %v1249 = vpop.f32.mrf.mxu0
  %v1250 = vadd.f32 0.0, %v1249
  %1251 = vmatprep.mubr.f32.mxu0 0.0
  %1252 = vmatmul.mubr.f32.gmra.mxu0 %v816
  %v1253 = vpop.f32.mrf.mxu0
  %v1254 = vadd.f32 0.0, %v1253
  %v1255 = vpop.f32.mrf.mxu0
  %v1256 = vadd.f32 0.0, %v1255
  %1257 = vmatprep.mubr.f32.mxu0 0.0
  %1258 = vmatmul.mubr.f32.gmra.mxu0 %v817
  %v1259 = vpop.f32.mrf.mxu0
  %v1260 = vadd.f32 0.0, %v1259
  %v1261 = vpop.f32.mrf.mxu0
  %v1262 = vadd.f32 0.0, %v1261
  %1263 = vmatprep.mubr.f32.mxu0 0.0
  %1264 = vmatmul.mubr.f32.gmra.mxu0 %v818
  %v1265 = vpop.f32.mrf.mxu0
  %v1266 = vadd.f32 0.0, %v1265
  %v1267 = vpop.f32.mrf.mxu0
  %v1268 = vadd.f32 0.0, %v1267
  %1269 = vmatprep.mubr.f32.mxu0 0.0
  %1270 = vmatmul.mubr.f32.gmra.mxu0 %v819
  %v1271 = vpop.f32.mrf.mxu0
  %v1272 = vadd.f32 0.0, %v1271
  %v1273 = vpop.f32.mrf.mxu0
  %v1274 = vadd.f32 0.0, %v1273
  %1275 = vmatprep.mubr.f32.mxu0 0.0
  %1276 = vmatmul.mubr.f32.gmra.mxu0 %v820
  %v1277 = vpop.f32.mrf.mxu0
  %v1278 = vadd.f32 0.0, %v1277
  %v1279 = vpop.f32.mrf.mxu0
  %v1280 = vadd.f32 0.0, %v1279
  %1281 = vmatprep.mubr.f32.mxu0 0.0
  %1282 = vmatmul.mubr.f32.gmra.mxu0 %v821
  %v1283 = vpop.f32.mrf.mxu0
  %v1284 = vadd.f32 0.0, %v1283
  %v1285 = vpop.f32.mrf.mxu0
  %v1286 = vadd.f32 0.0, %v1285
  %1287 = vmatprep.mubr.f32.mxu0 0.0
  %1288 = vmatmul.mubr.f32.gmra.mxu0 %v822
  %v1289 = vpop.f32.mrf.mxu0
  %v1290 = vadd.f32 0.0, %v1289
  %v1291 = vpop.f32.mrf.mxu0
  %v1292 = vadd.f32 0.0, %v1291
  %1293 = vmatprep.mubr.f32.mxu0 0.0
  %1294 = vmatmul.mubr.f32.gmra.mxu0 %v823
  %v1295 = vpop.f32.mrf.mxu0
  %v1296 = vadd.f32 0.0, %v1295
  %v1297 = vpop.f32.mrf.mxu0
  %v1298 = vadd.f32 0.0, %v1297
  %1299 = vmatprep.mubr.f32.mxu0 0.0
  %1300 = vmatmul.mubr.f32.gmra.mxu0 %v824
  %v1301 = vpop.f32.mrf.mxu0
  %v1302 = vadd.f32 0.0, %v1301
  %v1303 = vpop.f32.mrf.mxu0
  %v1304 = vadd.f32 0.0, %v1303
  %1305 = vdwg.mxu0
  %v1306 = vadd.f32 %v443, %v924
  %v1307 = vadd.f32 %v445, %v926
  %v1308 = vadd.f32 %v447, %v930
  %v1309 = vadd.f32 %v449, %v932
  %v1310 = vadd.f32 %v453, %v936
  %v1311 = vadd.f32 %v455, %v938
  %v1312 = vadd.f32 %v457, %v942
  %v1313 = vadd.f32 %v459, %v944
  %v1314 = vadd.f32 %v463, %v948
  %v1315 = vadd.f32 %v465, %v950
  %v1316 = vadd.f32 %v467, %v954
  %v1317 = vadd.f32 %v469, %v956
  %v1318 = vadd.f32 %v473, %v960
  %v1319 = vadd.f32 %v475, %v962
  %v1320 = vadd.f32 %v477, %v966
  %v1321 = vadd.f32 %v479, %v968
  %v1322 = vadd.f32 %v483, %v972
  %v1323 = vadd.f32 %v485, %v974
  %v1324 = vadd.f32 %v487, %v978
  %v1325 = vadd.f32 %v489, %v980
  %v1326 = vadd.f32 %v493, %v984
  %v1327 = vadd.f32 %v495, %v986
  %v1328 = vadd.f32 %v497, %v990
  %v1329 = vadd.f32 %v499, %v992
  %v1330 = vadd.f32 %v503, %v996
  %v1331 = vadd.f32 %v505, %v998
  %v1332 = vadd.f32 %v507, %v1002
  %v1333 = vadd.f32 %v509, %v1004
  %v1334 = vadd.f32 %v513, %v1008
  %v1335 = vadd.f32 %v515, %v1010
  %v1336 = vadd.f32 %v517, %v1014
  %v1337 = vadd.f32 %v519, %v1016
  %v1338 = vadd.f32 %v523, %v1020
  %v1339 = vadd.f32 %v525, %v1022
  %v1340 = vadd.f32 %v527, %v1026
  %v1341 = vadd.f32 %v529, %v1028
  %v1342 = vadd.f32 %v533, %v1032
  %v1343 = vadd.f32 %v535, %v1034
  %v1344 = vadd.f32 %v537, %v1038
  %v1345 = vadd.f32 %v539, %v1040
  %v1346 = vadd.f32 %v543, %v1044
  %v1347 = vadd.f32 %v545, %v1046
  %v1348 = vadd.f32 %v547, %v1050
  %v1349 = vadd.f32 %v549, %v1052
  %v1350 = vadd.f32 %v553, %v1056
  %v1351 = vadd.f32 %v555, %v1058
  %v1352 = vadd.f32 %v557, %v1062
  %v1353 = vadd.f32 %v559, %v1064
  %v1354 = vadd.f32 %v563, %v1068
  %v1355 = vadd.f32 %v565, %v1070
  %v1356 = vadd.f32 %v567, %v1074
  %v1357 = vadd.f32 %v569, %v1076
  %v1358 = vadd.f32 %v573, %v1080
  %v1359 = vadd.f32 %v575, %v1082
  %v1360 = vadd.f32 %v577, %v1086
  %v1361 = vadd.f32 %v579, %v1088
  %v1362 = vadd.f32 %v583, %v1092
  %v1363 = vadd.f32 %v585, %v1094
  %v1364 = vadd.f32 %v587, %v1098
  %v1365 = vadd.f32 %v589, %v1100
  %v1366 = vadd.f32 %v593, %v1104
  %v1367 = vadd.f32 %v595, %v1106
  %v1368 = vadd.f32 %v597, %v1110
  %v1369 = vadd.f32 %v599, %v1112
  %v1370 = vadd.f32 %v603, %v1116
  %v1371 = vadd.f32 %v605, %v1118
  %v1372 = vadd.f32 %v607, %v1122
  %v1373 = vadd.f32 %v609, %v1124
  %v1374 = vadd.f32 %v613, %v1128
  %v1375 = vadd.f32 %v615, %v1130
  %v1376 = vadd.f32 %v617, %v1134
  %v1377 = vadd.f32 %v619, %v1136
  %v1378 = vadd.f32 %v623, %v1140
  %v1379 = vadd.f32 %v625, %v1142
  %v1380 = vadd.f32 %v627, %v1146
  %v1381 = vadd.f32 %v629, %v1148
  %v1382 = vadd.f32 %v633, %v1152
  %v1383 = vadd.f32 %v635, %v1154
  %v1384 = vadd.f32 %v637, %v1158
  %v1385 = vadd.f32 %v639, %v1160
  %v1386 = vadd.f32 %v643, %v1164
  %v1387 = vadd.f32 %v645, %v1166
  %v1388 = vadd.f32 %v647, %v1170
  %v1389 = vadd.f32 %v649, %v1172
  %v1390 = vadd.f32 %v653, %v1176
  %v1391 = vadd.f32 %v655, %v1178
  %v1392 = vadd.f32 %v657, %v1182
  %v1393 = vadd.f32 %v659, %v1184
  %v1394 = vadd.f32 %v663, %v1188
  %v1395 = vadd.f32 %v665, %v1190
  %v1396 = vadd.f32 %v667, %v1194
  %v1397 = vadd.f32 %v669, %v1196
  %v1398 = vadd.f32 %v673, %v1200
  %v1399 = vadd.f32 %v675, %v1202
  %v1400 = vadd.f32 %v677, %v1206
  %v1401 = vadd.f32 %v679, %v1208
  %v1402 = vadd.f32 %v683, %v1212
  %v1403 = vadd.f32 %v685, %v1214
  %v1404 = vadd.f32 %v687, %v1218
  %v1405 = vadd.f32 %v689, %v1220
  %v1406 = vadd.f32 %v693, %v1224
  %v1407 = vadd.f32 %v695, %v1226
  %v1408 = vadd.f32 %v697, %v1230
  %v1409 = vadd.f32 %v699, %v1232
  %v1410 = vadd.f32 %v703, %v1236
  %v1411 = vadd.f32 %v705, %v1238
  %v1412 = vadd.f32 %v707, %v1242
  %v1413 = vadd.f32 %v709, %v1244
  %v1414 = vadd.f32 %v713, %v1248
  %v1415 = vadd.f32 %v715, %v1250
  %v1416 = vadd.f32 %v717, %v1254
  %v1417 = vadd.f32 %v719, %v1256
  %v1418 = vadd.f32 %v723, %v1260
  %v1419 = vadd.f32 %v725, %v1262
  %v1420 = vadd.f32 %v727, %v1266
  %v1421 = vadd.f32 %v729, %v1268
  %v1422 = vadd.f32 %v733, %v1272
  %v1423 = vadd.f32 %v735, %v1274
  %v1424 = vadd.f32 %v737, %v1278
  %v1425 = vadd.f32 %v739, %v1280
  %v1426 = vadd.f32 %v743, %v1284
  %v1427 = vadd.f32 %v745, %v1286
  %v1428 = vadd.f32 %v747, %v1290
  %v1429 = vadd.f32 %v749, %v1292
  %v1430 = vadd.f32 %v753, %v1296
  %v1431 = vadd.f32 %v755, %v1298
  %v1432 = vadd.f32 %v757, %v1302
  %v1433 = vadd.f32 %v759, %v1304
  %vm1554 = vcmask 1046528
  %v1555 = vrot.slane %v1306, 1
  %v1556 = vrot.slane %v1308, 1
  %v1557 = vsel %vm1554, %v1555, %v1556
  %v1558 = vrot.slane %v1307, 1
  %v1559 = vrot.slane %v1309, 1
  %v1560 = vsel %vm1554, %v1558, %v1559
  %v1561 = vrot.slane %v1310, 1
  %v1562 = vsel %vm1554, %v1556, %v1561
  %v1563 = vrot.slane %v1311, 1
  %v1564 = vsel %vm1554, %v1559, %v1563
  %v1565 = vrot.slane %v1312, 1
  %v1566 = vsel %vm1554, %v1561, %v1565
  %v1567 = vrot.slane %v1313, 1
  %v1568 = vsel %vm1554, %v1563, %v1567
  %v1569 = vrot.slane %v1314, 1
  %v1570 = vsel %vm1554, %v1565, %v1569
  %v1571 = vrot.slane %v1315, 1
  %v1572 = vsel %vm1554, %v1567, %v1571
  %v1573 = vrot.slane %v1316, 1
  %v1574 = vsel %vm1554, %v1569, %v1573
  %v1575 = vrot.slane %v1317, 1
  %v1576 = vsel %vm1554, %v1571, %v1575
  %v1577 = vrot.slane %v1318, 1
  %v1578 = vsel %vm1554, %v1573, %v1577
  %v1579 = vrot.slane %v1319, 1
  %v1580 = vsel %vm1554, %v1575, %v1579
  %v1581 = vrot.slane %v1320, 1
  %v1582 = vsel %vm1554, %v1577, %v1581
  %v1583 = vrot.slane %v1321, 1
  %v1584 = vsel %vm1554, %v1579, %v1583
  %v1585 = vrot.slane %v1322, 1
  %v1586 = vsel %vm1554, %v1581, %v1585
  %v1587 = vrot.slane %v1323, 1
  %v1588 = vsel %vm1554, %v1583, %v1587
  %v1589 = vrot.slane %v1324, 1
  %v1590 = vsel %vm1554, %v1585, %v1589
  %v1591 = vrot.slane %v1325, 1
  %v1592 = vsel %vm1554, %v1587, %v1591
  %v1593 = vrot.slane %v1326, 1
  %v1594 = vsel %vm1554, %v1589, %v1593
  %v1595 = vrot.slane %v1327, 1
  %v1596 = vsel %vm1554, %v1591, %v1595
  %v1597 = vrot.slane %v1328, 1
  %v1598 = vsel %vm1554, %v1593, %v1597
  %v1599 = vrot.slane %v1329, 1
  %v1600 = vsel %vm1554, %v1595, %v1599
  %v1601 = vrot.slane %v1330, 1
  %v1602 = vsel %vm1554, %v1597, %v1601
  %v1603 = vrot.slane %v1331, 1
  %v1604 = vsel %vm1554, %v1599, %v1603
  %v1605 = vrot.slane %v1332, 1
  %v1606 = vsel %vm1554, %v1601, %v1605
  %v1607 = vrot.slane %v1333, 1
  %v1608 = vsel %vm1554, %v1603, %v1607
  %v1609 = vrot.slane %v1334, 1
  %v1610 = vsel %vm1554, %v1605, %v1609
  %v1611 = vrot.slane %v1335, 1
  %v1612 = vsel %vm1554, %v1607, %v1611
  %v1613 = vrot.slane %v1336, 1
  %v1614 = vsel %vm1554, %v1609, %v1613
  %v1615 = vrot.slane %v1337, 1
  %v1616 = vsel %vm1554, %v1611, %v1615
  %v1617 = vrot.slane %v1338, 1
  %v1618 = vsel %vm1554, %v1613, %v1617
  %v1619 = vrot.slane %v1339, 1
  %v1620 = vsel %vm1554, %v1615, %v1619
  %v1621 = vrot.slane %v1340, 1
  %v1622 = vsel %vm1554, %v1617, %v1621
  %v1623 = vrot.slane %v1341, 1
  %v1624 = vsel %vm1554, %v1619, %v1623
  %v1625 = vrot.slane %v1342, 1
  %v1626 = vsel %vm1554, %v1621, %v1625
  %v1627 = vrot.slane %v1343, 1
  %v1628 = vsel %vm1554, %v1623, %v1627
  %v1629 = vrot.slane %v1344, 1
  %v1630 = vsel %vm1554, %v1625, %v1629
  %v1631 = vrot.slane %v1345, 1
  %v1632 = vsel %vm1554, %v1627, %v1631
  %v1633 = vrot.slane %v1346, 1
  %v1634 = vsel %vm1554, %v1629, %v1633
  %v1635 = vrot.slane %v1347, 1
  %v1636 = vsel %vm1554, %v1631, %v1635
  %v1637 = vrot.slane %v1348, 1
  %v1638 = vsel %vm1554, %v1633, %v1637
  %v1639 = vrot.slane %v1349, 1
  %v1640 = vsel %vm1554, %v1635, %v1639
  %v1641 = vrot.slane %v1350, 1
  %v1642 = vsel %vm1554, %v1637, %v1641
  %v1643 = vrot.slane %v1351, 1
  %v1644 = vsel %vm1554, %v1639, %v1643
  %v1645 = vrot.slane %v1352, 1
  %v1646 = vsel %vm1554, %v1641, %v1645
  %v1647 = vrot.slane %v1353, 1
  %v1648 = vsel %vm1554, %v1643, %v1647
  %v1649 = vrot.slane %v1354, 1
  %v1650 = vsel %vm1554, %v1645, %v1649
  %v1651 = vrot.slane %v1355, 1
  %v1652 = vsel %vm1554, %v1647, %v1651
  %v1653 = vrot.slane %v1356, 1
  %v1654 = vsel %vm1554, %v1649, %v1653
  %v1655 = vrot.slane %v1357, 1
  %v1656 = vsel %vm1554, %v1651, %v1655
  %v1657 = vrot.slane %v1358, 1
  %v1658 = vsel %vm1554, %v1653, %v1657
  %v1659 = vrot.slane %v1359, 1
  %v1660 = vsel %vm1554, %v1655, %v1659
  %v1661 = vrot.slane %v1360, 1
  %v1662 = vsel %vm1554, %v1657, %v1661
  %v1663 = vrot.slane %v1361, 1
  %v1664 = vsel %vm1554, %v1659, %v1663
  %v1665 = vrot.slane %v1362, 1
  %v1666 = vsel %vm1554, %v1661, %v1665
  %v1667 = vrot.slane %v1363, 1
  %v1668 = vsel %vm1554, %v1663, %v1667
  %v1669 = vrot.slane %v1364, 1
  %v1670 = vsel %vm1554, %v1665, %v1669
  %v1671 = vrot.slane %v1365, 1
  %v1672 = vsel %vm1554, %v1667, %v1671
  %v1673 = vrot.slane %v1366, 1
  %v1674 = vsel %vm1554, %v1669, %v1673
  %v1675 = vrot.slane %v1367, 1
  %v1676 = vsel %vm1554, %v1671, %v1675
  %v1677 = vrot.slane %v1368, 1
  %v1678 = vsel %vm1554, %v1673, %v1677
  %v1679 = vrot.slane %v1369, 1
  %v1680 = vsel %vm1554, %v1675, %v1679
  %v1681 = vrot.slane %v1370, 1
  %v1682 = vsel %vm1554, %v1677, %v1681
  %v1683 = vrot.slane %v1371, 1
  %v1684 = vsel %vm1554, %v1679, %v1683
  %v1685 = vrot.slane %v1372, 1
  %v1686 = vsel %vm1554, %v1681, %v1685
  %v1687 = vrot.slane %v1373, 1
  %v1688 = vsel %vm1554, %v1683, %v1687
  %v1689 = vrot.slane %v1374, 1
  %v1690 = vsel %vm1554, %v1685, %v1689
  %v1691 = vrot.slane %v1375, 1
  %v1692 = vsel %vm1554, %v1687, %v1691
  %v1693 = vrot.slane %v1376, 1
  %v1694 = vsel %vm1554, %v1689, %v1693
  %v1695 = vrot.slane %v1377, 1
  %v1696 = vsel %vm1554, %v1691, %v1695
  %v1697 = vrot.slane %v1378, 1
  %v1698 = vsel %vm1554, %v1693, %v1697
  %v1699 = vrot.slane %v1379, 1
  %v1700 = vsel %vm1554, %v1695, %v1699
  %v1701 = vrot.slane %v1380, 1
  %v1702 = vsel %vm1554, %v1697, %v1701
  %v1703 = vrot.slane %v1381, 1
  %v1704 = vsel %vm1554, %v1699, %v1703
  %v1705 = vrot.slane %v1382, 1
  %v1706 = vsel %vm1554, %v1701, %v1705
  %v1707 = vrot.slane %v1383, 1
  %v1708 = vsel %vm1554, %v1703, %v1707
  %v1709 = vrot.slane %v1384, 1
  %v1710 = vsel %vm1554, %v1705, %v1709
  %v1711 = vrot.slane %v1385, 1
  %v1712 = vsel %vm1554, %v1707, %v1711
  %v1713 = vrot.slane %v1386, 1
  %v1714 = vsel %vm1554, %v1709, %v1713
  %v1715 = vrot.slane %v1387, 1
  %v1716 = vsel %vm1554, %v1711, %v1715
  %v1717 = vrot.slane %v1388, 1
  %v1718 = vsel %vm1554, %v1713, %v1717
  %v1719 = vrot.slane %v1389, 1
  %v1720 = vsel %vm1554, %v1715, %v1719
  %v1721 = vrot.slane %v1390, 1
  %v1722 = vsel %vm1554, %v1717, %v1721
  %v1723 = vrot.slane %v1391, 1
  %v1724 = vsel %vm1554, %v1719, %v1723
  %v1725 = vrot.slane %v1392, 1
  %v1726 = vsel %vm1554, %v1721, %v1725
  %v1727 = vrot.slane %v1393, 1
  %v1728 = vsel %vm1554, %v1723, %v1727
  %v1729 = vrot.slane %v1394, 1
  %v1730 = vsel %vm1554, %v1725, %v1729
  %v1731 = vrot.slane %v1395, 1
  %v1732 = vsel %vm1554, %v1727, %v1731
  %v1733 = vrot.slane %v1396, 1
  %v1734 = vsel %vm1554, %v1729, %v1733
  %v1735 = vrot.slane %v1397, 1
  %v1736 = vsel %vm1554, %v1731, %v1735
  %v1737 = vrot.slane %v1398, 1
  %v1738 = vsel %vm1554, %v1733, %v1737
  %v1739 = vrot.slane %v1399, 1
  %v1740 = vsel %vm1554, %v1735, %v1739
  %v1741 = vrot.slane %v1400, 1
  %v1742 = vsel %vm1554, %v1737, %v1741
  %v1743 = vrot.slane %v1401, 1
  %v1744 = vsel %vm1554, %v1739, %v1743
  %v1745 = vrot.slane %v1402, 1
  %v1746 = vsel %vm1554, %v1741, %v1745
  %v1747 = vrot.slane %v1403, 1
  %v1748 = vsel %vm1554, %v1743, %v1747
  %v1749 = vrot.slane %v1404, 1
  %v1750 = vsel %vm1554, %v1745, %v1749
  %v1751 = vrot.slane %v1405, 1
  %v1752 = vsel %vm1554, %v1747, %v1751
  %v1753 = vrot.slane %v1406, 1
  %v1754 = vsel %vm1554, %v1749, %v1753
  %v1755 = vrot.slane %v1407, 1
  %v1756 = vsel %vm1554, %v1751, %v1755
  %v1757 = vrot.slane %v1408, 1
  %v1758 = vsel %vm1554, %v1753, %v1757
  %v1759 = vrot.slane %v1409, 1
  %v1760 = vsel %vm1554, %v1755, %v1759
  %v1761 = vrot.slane %v1410, 1
  %v1762 = vsel %vm1554, %v1757, %v1761
  %v1763 = vrot.slane %v1411, 1
  %v1764 = vsel %vm1554, %v1759, %v1763
  %v1765 = vrot.slane %v1412, 1
  %v1766 = vsel %vm1554, %v1761, %v1765
  %v1767 = vrot.slane %v1413, 1
  %v1768 = vsel %vm1554, %v1763, %v1767
  %v1769 = vrot.slane %v1414, 1
  %v1770 = vsel %vm1554, %v1765, %v1769
  %v1771 = vrot.slane %v1415, 1
  %v1772 = vsel %vm1554, %v1767, %v1771
  %v1773 = vrot.slane %v1416, 1
  %v1774 = vsel %vm1554, %v1769, %v1773
  %v1775 = vrot.slane %v1417, 1
  %v1776 = vsel %vm1554, %v1771, %v1775
  %v1777 = vrot.slane %v1418, 1
  %v1778 = vsel %vm1554, %v1773, %v1777
  %v1779 = vrot.slane %v1419, 1
  %v1780 = vsel %vm1554, %v1775, %v1779
  %v1781 = vrot.slane %v1420, 1
  %v1782 = vsel %vm1554, %v1777, %v1781
  %v1783 = vrot.slane %v1421, 1
  %v1784 = vsel %vm1554, %v1779, %v1783
  %v1785 = vrot.slane %v1422, 1
  %v1786 = vsel %vm1554, %v1781, %v1785
  %v1787 = vrot.slane %v1423, 1
  %v1788 = vsel %vm1554, %v1783, %v1787
  %v1789 = vrot.slane %v1424, 1
  %v1790 = vsel %vm1554, %v1785, %v1789
  %v1791 = vrot.slane %v1425, 1
  %v1792 = vsel %vm1554, %v1787, %v1791
  %vm1913 = vcmask 1045504
  %v1914 = vrot.slane %v1306, 2
  %v1915 = vrot.slane %v1308, 2
  %v1916 = vsel %vm1913, %v1914, %v1915
  %v1917 = vrot.slane %v1307, 2
  %v1918 = vrot.slane %v1309, 2
  %v1919 = vsel %vm1913, %v1917, %v1918
  %v1920 = vrot.slane %v1310, 2
  %v1921 = vsel %vm1913, %v1915, %v1920
  %v1922 = vrot.slane %v1311, 2
  %v1923 = vsel %vm1913, %v1918, %v1922
  %v1924 = vrot.slane %v1312, 2
  %v1925 = vsel %vm1913, %v1920, %v1924
  %v1926 = vrot.slane %v1313, 2
  %v1927 = vsel %vm1913, %v1922, %v1926
  %v1928 = vrot.slane %v1314, 2
  %v1929 = vsel %vm1913, %v1924, %v1928
  %v1930 = vrot.slane %v1315, 2
  %v1931 = vsel %vm1913, %v1926, %v1930
  %v1932 = vrot.slane %v1316, 2
  %v1933 = vsel %vm1913, %v1928, %v1932
  %v1934 = vrot.slane %v1317, 2
  %v1935 = vsel %vm1913, %v1930, %v1934
  %v1936 = vrot.slane %v1318, 2
  %v1937 = vsel %vm1913, %v1932, %v1936
  %v1938 = vrot.slane %v1319, 2
  %v1939 = vsel %vm1913, %v1934, %v1938
  %v1940 = vrot.slane %v1320, 2
  %v1941 = vsel %vm1913, %v1936, %v1940
  %v1942 = vrot.slane %v1321, 2
  %v1943 = vsel %vm1913, %v1938, %v1942
  %v1944 = vrot.slane %v1322, 2
  %v1945 = vsel %vm1913, %v1940, %v1944
  %v1946 = vrot.slane %v1323, 2
  %v1947 = vsel %vm1913, %v1942, %v1946
  %v1948 = vrot.slane %v1324, 2
  %v1949 = vsel %vm1913, %v1944, %v1948
  %v1950 = vrot.slane %v1325, 2
  %v1951 = vsel %vm1913, %v1946, %v1950
  %v1952 = vrot.slane %v1326, 2
  %v1953 = vsel %vm1913, %v1948, %v1952
  %v1954 = vrot.slane %v1327, 2
  %v1955 = vsel %vm1913, %v1950, %v1954
  %v1956 = vrot.slane %v1328, 2
  %v1957 = vsel %vm1913, %v1952, %v1956
  %v1958 = vrot.slane %v1329, 2
  %v1959 = vsel %vm1913, %v1954, %v1958
  %v1960 = vrot.slane %v1330, 2
  %v1961 = vsel %vm1913, %v1956, %v1960
  %v1962 = vrot.slane %v1331, 2
  %v1963 = vsel %vm1913, %v1958, %v1962
  %v1964 = vrot.slane %v1332, 2
  %v1965 = vsel %vm1913, %v1960, %v1964
  %v1966 = vrot.slane %v1333, 2
  %v1967 = vsel %vm1913, %v1962, %v1966
  %v1968 = vrot.slane %v1334, 2
  %v1969 = vsel %vm1913, %v1964, %v1968
  %v1970 = vrot.slane %v1335, 2
  %v1971 = vsel %vm1913, %v1966, %v1970
  %v1972 = vrot.slane %v1336, 2
  %v1973 = vsel %vm1913, %v1968, %v1972
  %v1974 = vrot.slane %v1337, 2
  %v1975 = vsel %vm1913, %v1970, %v1974
  %v1976 = vrot.slane %v1338, 2
  %v1977 = vsel %vm1913, %v1972, %v1976
  %v1978 = vrot.slane %v1339, 2
  %v1979 = vsel %vm1913, %v1974, %v1978
  %v1980 = vrot.slane %v1340, 2
  %v1981 = vsel %vm1913, %v1976, %v1980
  %v1982 = vrot.slane %v1341, 2
  %v1983 = vsel %vm1913, %v1978, %v1982
  %v1984 = vrot.slane %v1342, 2
  %v1985 = vsel %vm1913, %v1980, %v1984
  %v1986 = vrot.slane %v1343, 2
  %v1987 = vsel %vm1913, %v1982, %v1986
  %v1988 = vrot.slane %v1344, 2
  %v1989 = vsel %vm1913, %v1984, %v1988
  %v1990 = vrot.slane %v1345, 2
  %v1991 = vsel %vm1913, %v1986, %v1990
  %v1992 = vrot.slane %v1346, 2
  %v1993 = vsel %vm1913, %v1988, %v1992
  %v1994 = vrot.slane %v1347, 2
  %v1995 = vsel %vm1913, %v1990, %v1994
  %v1996 = vrot.slane %v1348, 2
  %v1997 = vsel %vm1913, %v1992, %v1996
  %v1998 = vrot.slane %v1349, 2
  %v1999 = vsel %vm1913, %v1994, %v1998
  %v2000 = vrot.slane %v1350, 2
  %v2001 = vsel %vm1913, %v1996, %v2000
  %v2002 = vrot.slane %v1351, 2
  %v2003 = vsel %vm1913, %v1998, %v2002
  %v2004 = vrot.slane %v1352, 2
  %v2005 = vsel %vm1913, %v2000, %v2004
  %v2006 = vrot.slane %v1353, 2
  %v2007 = vsel %vm1913, %v2002, %v2006
  %v2008 = vrot.slane %v1354, 2
  %v2009 = vsel %vm1913, %v2004, %v2008
  %v2010 = vrot.slane %v1355, 2
  %v2011 = vsel %vm1913, %v2006, %v2010
  %v2012 = vrot.slane %v1356, 2
  %v2013 = vsel %vm1913, %v2008, %v2012
  %v2014 = vrot.slane %v1357, 2
  %v2015 = vsel %vm1913, %v2010, %v2014
  %v2016 = vrot.slane %v1358, 2
  %v2017 = vsel %vm1913, %v2012, %v2016
  %v2018 = vrot.slane %v1359, 2
  %v2019 = vsel %vm1913, %v2014, %v2018
  %v2020 = vrot.slane %v1360, 2
  %v2021 = vsel %vm1913, %v2016, %v2020
  %v2022 = vrot.slane %v1361, 2
  %v2023 = vsel %vm1913, %v2018, %v2022
  %v2024 = vrot.slane %v1362, 2
  %v2025 = vsel %vm1913, %v2020, %v2024
  %v2026 = vrot.slane %v1363, 2
  %v2027 = vsel %vm1913, %v2022, %v2026
  %v2028 = vrot.slane %v1364, 2
  %v2029 = vsel %vm1913, %v2024, %v2028
  %v2030 = vrot.slane %v1365, 2
  %v2031 = vsel %vm1913, %v2026, %v2030
  %v2032 = vrot.slane %v1366, 2
  %v2033 = vsel %vm1913, %v2028, %v2032
  %v2034 = vrot.slane %v1367, 2
  %v2035 = vsel %vm1913, %v2030, %v2034
  %v2036 = vrot.slane %v1368, 2
  %v2037 = vsel %vm1913, %v2032, %v2036
  %v2038 = vrot.slane %v1369, 2
  %v2039 = vsel %vm1913, %v2034, %v2038
  %v2040 = vrot.slane %v1370, 2
  %v2041 = vsel %vm1913, %v2036, %v2040
  %v2042 = vrot.slane %v1371, 2
  %v2043 = vsel %vm1913, %v2038, %v2042
  %v2044 = vrot.slane %v1372, 2
  %v2045 = vsel %vm1913, %v2040, %v2044
  %v2046 = vrot.slane %v1373, 2
  %v2047 = vsel %vm1913, %v2042, %v2046
  %v2048 = vrot.slane %v1374, 2
  %v2049 = vsel %vm1913, %v2044, %v2048
  %v2050 = vrot.slane %v1375, 2
  %v2051 = vsel %vm1913, %v2046, %v2050
  %v2052 = vrot.slane %v1376, 2
  %v2053 = vsel %vm1913, %v2048, %v2052
  %v2054 = vrot.slane %v1377, 2
  %v2055 = vsel %vm1913, %v2050, %v2054
  %v2056 = vrot.slane %v1378, 2
  %v2057 = vsel %vm1913, %v2052, %v2056
  %v2058 = vrot.slane %v1379, 2
  %v2059 = vsel %vm1913, %v2054, %v2058
  %v2060 = vrot.slane %v1380, 2
  %v2061 = vsel %vm1913, %v2056, %v2060
  %v2062 = vrot.slane %v1381, 2
  %v2063 = vsel %vm1913, %v2058, %v2062
  %v2064 = vrot.slane %v1382, 2
  %v2065 = vsel %vm1913, %v2060, %v2064
  %v2066 = vrot.slane %v1383, 2
  %v2067 = vsel %vm1913, %v2062, %v2066
  %v2068 = vrot.slane %v1384, 2
  %v2069 = vsel %vm1913, %v2064, %v2068
  %v2070 = vrot.slane %v1385, 2
  %v2071 = vsel %vm1913, %v2066, %v2070
  %v2072 = vrot.slane %v1386, 2
  %v2073 = vsel %vm1913, %v2068, %v2072
  %v2074 = vrot.slane %v1387, 2
  %v2075 = vsel %vm1913, %v2070, %v2074
  %v2076 = vrot.slane %v1388, 2
  %v2077 = vsel %vm1913, %v2072, %v2076
  %v2078 = vrot.slane %v1389, 2
  %v2079 = vsel %vm1913, %v2074, %v2078
  %v2080 = vrot.slane %v1390, 2
  %v2081 = vsel %vm1913, %v2076, %v2080
  %v2082 = vrot.slane %v1391, 2
  %v2083 = vsel %vm1913, %v2078, %v2082
  %v2084 = vrot.slane %v1392, 2
  %v2085 = vsel %vm1913, %v2080, %v2084
  %v2086 = vrot.slane %v1393, 2
  %v2087 = vsel %vm1913, %v2082, %v2086
  %v2088 = vrot.slane %v1394, 2
  %v2089 = vsel %vm1913, %v2084, %v2088
  %v2090 = vrot.slane %v1395, 2
  %v2091 = vsel %vm1913, %v2086, %v2090
  %v2092 = vrot.slane %v1396, 2
  %v2093 = vsel %vm1913, %v2088, %v2092
  %v2094 = vrot.slane %v1397, 2
  %v2095 = vsel %vm1913, %v2090, %v2094
  %v2096 = vrot.slane %v1398, 2
  %v2097 = vsel %vm1913, %v2092, %v2096
  %v2098 = vrot.slane %v1399, 2
  %v2099 = vsel %vm1913, %v2094, %v2098
  %v2100 = vrot.slane %v1400, 2
  %v2101 = vsel %vm1913, %v2096, %v2100
  %v2102 = vrot.slane %v1401, 2
  %v2103 = vsel %vm1913, %v2098, %v2102
  %v2104 = vrot.slane %v1402, 2
  %v2105 = vsel %vm1913, %v2100, %v2104
  %v2106 = vrot.slane %v1403, 2
  %v2107 = vsel %vm1913, %v2102, %v2106
  %v2108 = vrot.slane %v1404, 2
  %v2109 = vsel %vm1913, %v2104, %v2108
  %v2110 = vrot.slane %v1405, 2
  %v2111 = vsel %vm1913, %v2106, %v2110
  %v2112 = vrot.slane %v1406, 2
  %v2113 = vsel %vm1913, %v2108, %v2112
  %v2114 = vrot.slane %v1407, 2
  %v2115 = vsel %vm1913, %v2110, %v2114
  %v2116 = vrot.slane %v1408, 2
  %v2117 = vsel %vm1913, %v2112, %v2116
  %v2118 = vrot.slane %v1409, 2
  %v2119 = vsel %vm1913, %v2114, %v2118
  %v2120 = vrot.slane %v1410, 2
  %v2121 = vsel %vm1913, %v2116, %v2120
  %v2122 = vrot.slane %v1411, 2
  %v2123 = vsel %vm1913, %v2118, %v2122
  %v2124 = vrot.slane %v1412, 2
  %v2125 = vsel %vm1913, %v2120, %v2124
  %v2126 = vrot.slane %v1413, 2
  %v2127 = vsel %vm1913, %v2122, %v2126
  %v2128 = vrot.slane %v1414, 2
  %v2129 = vsel %vm1913, %v2124, %v2128
  %v2130 = vrot.slane %v1415, 2
  %v2131 = vsel %vm1913, %v2126, %v2130
  %v2132 = vrot.slane %v1416, 2
  %v2133 = vsel %vm1913, %v2128, %v2132
  %v2134 = vrot.slane %v1417, 2
  %v2135 = vsel %vm1913, %v2130, %v2134
  %v2136 = vrot.slane %v1418, 2
  %v2137 = vsel %vm1913, %v2132, %v2136
  %v2138 = vrot.slane %v1419, 2
  %v2139 = vsel %vm1913, %v2134, %v2138
  %v2140 = vrot.slane %v1420, 2
  %v2141 = vsel %vm1913, %v2136, %v2140
  %v2142 = vrot.slane %v1421, 2
  %v2143 = vsel %vm1913, %v2138, %v2142
  %v2144 = vrot.slane %v1422, 2
  %v2145 = vsel %vm1913, %v2140, %v2144
  %v2146 = vrot.slane %v1423, 2
  %v2147 = vsel %vm1913, %v2142, %v2146
  %v2148 = vrot.slane %v1424, 2
  %v2149 = vsel %vm1913, %v2144, %v2148
  %v2150 = vrot.slane %v1425, 2
  %v2151 = vsel %vm1913, %v2146, %v2150
  %v2272 = vpack.c.bf16 %v1308, %v1306
  %v2273 = vpack.c.bf16 %v1309, %v1307
  %v2274 = vpack.c.bf16 %v1562, %v1557
  %v2275 = vpack.c.bf16 %v1564, %v1560
  %v2276 = vpack.c.bf16 %v1921, %v1916
  %v2277 = vpack.c.bf16 %v1923, %v1919
  %v2278 = vpack.c.bf16 %v1312, %v1310
  %v2279 = vpack.c.bf16 %v1313, %v1311
  %v2280 = vpack.c.bf16 %v1570, %v1566
  %v2281 = vpack.c.bf16 %v1572, %v1568
  %v2282 = vpack.c.bf16 %v1929, %v1925
  %v2283 = vpack.c.bf16 %v1931, %v1927
  %v2284 = vpack.c.bf16 %v1316, %v1314
  %v2285 = vpack.c.bf16 %v1317, %v1315
  %v2286 = vpack.c.bf16 %v1578, %v1574
  %v2287 = vpack.c.bf16 %v1580, %v1576
  %v2288 = vpack.c.bf16 %v1937, %v1933
  %v2289 = vpack.c.bf16 %v1939, %v1935
  %v2290 = vpack.c.bf16 %v1320, %v1318
  %v2291 = vpack.c.bf16 %v1321, %v1319
  %v2292 = vpack.c.bf16 %v1586, %v1582
  %v2293 = vpack.c.bf16 %v1588, %v1584
  %v2294 = vpack.c.bf16 %v1945, %v1941
  %v2295 = vpack.c.bf16 %v1947, %v1943
  %v2296 = vpack.c.bf16 %v1324, %v1322
  %v2297 = vpack.c.bf16 %v1325, %v1323
  %v2298 = vpack.c.bf16 %v1594, %v1590
  %v2299 = vpack.c.bf16 %v1596, %v1592
  %v2300 = vpack.c.bf16 %v1953, %v1949
  %v2301 = vpack.c.bf16 %v1955, %v1951
  %v2302 = vpack.c.bf16 %v1328, %v1326
  %v2303 = vpack.c.bf16 %v1329, %v1327
  %v2304 = vpack.c.bf16 %v1602, %v1598
  %v2305 = vpack.c.bf16 %v1604, %v1600
  %v2306 = vpack.c.bf16 %v1961, %v1957
  %v2307 = vpack.c.bf16 %v1963, %v1959
  %v2308 = vpack.c.bf16 %v1332, %v1330
  %v2309 = vpack.c.bf16 %v1333, %v1331
  %v2310 = vpack.c.bf16 %v1610, %v1606
  %v2311 = vpack.c.bf16 %v1612, %v1608
  %v2312 = vpack.c.bf16 %v1969, %v1965
  %v2313 = vpack.c.bf16 %v1971, %v1967
  %v2314 = vpack.c.bf16 %v1336, %v1334
  %v2315 = vpack.c.bf16 %v1337, %v1335
  %v2316 = vpack.c.bf16 %v1618, %v1614
  %v2317 = vpack.c.bf16 %v1620, %v1616
  %v2318 = vpack.c.bf16 %v1977, %v1973
  %v2319 = vpack.c.bf16 %v1979, %v1975
  %v2320 = vpack.c.bf16 %v1340, %v1338
  %v2321 = vpack.c.bf16 %v1341, %v1339
  %v2322 = vpack.c.bf16 %v1626, %v1622
  %v2323 = vpack.c.bf16 %v1628, %v1624
  %v2324 = vpack.c.bf16 %v1985, %v1981
  %v2325 = vpack.c.bf16 %v1987, %v1983
  %v2326 = vpack.c.bf16 %v1344, %v1342
  %v2327 = vpack.c.bf16 %v1345, %v1343
  %v2328 = vpack.c.bf16 %v1634, %v1630
  %v2329 = vpack.c.bf16 %v1636, %v1632
  %v2330 = vpack.c.bf16 %v1993, %v1989
  %v2331 = vpack.c.bf16 %v1995, %v1991
  %v2332 = vpack.c.bf16 %v1348, %v1346
  %v2333 = vpack.c.bf16 %v1349, %v1347
  %v2334 = vpack.c.bf16 %v1642, %v1638
  %v2335 = vpack.c.bf16 %v1644, %v1640
  %v2336 = vpack.c.bf16 %v2001, %v1997
  %v2337 = vpack.c.bf16 %v2003, %v1999
  %v2338 = vpack.c.bf16 %v1352, %v1350
  %v2339 = vpack.c.bf16 %v1353, %v1351
  %v2340 = vpack.c.bf16 %v1650, %v1646
  %v2341 = vpack.c.bf16 %v1652, %v1648
  %v2342 = vpack.c.bf16 %v2009, %v2005
  %v2343 = vpack.c.bf16 %v2011, %v2007
  %v2344 = vpack.c.bf16 %v1356, %v1354
  %v2345 = vpack.c.bf16 %v1357, %v1355
  %v2346 = vpack.c.bf16 %v1658, %v1654
  %v2347 = vpack.c.bf16 %v1660, %v1656
  %v2348 = vpack.c.bf16 %v2017, %v2013
  %v2349 = vpack.c.bf16 %v2019, %v2015
  %v2350 = vpack.c.bf16 %v1360, %v1358
  %v2351 = vpack.c.bf16 %v1361, %v1359
  %v2352 = vpack.c.bf16 %v1666, %v1662
  %v2353 = vpack.c.bf16 %v1668, %v1664
  %v2354 = vpack.c.bf16 %v2025, %v2021
  %v2355 = vpack.c.bf16 %v2027, %v2023
  %v2356 = vpack.c.bf16 %v1364, %v1362
  %v2357 = vpack.c.bf16 %v1365, %v1363
  %v2358 = vpack.c.bf16 %v1674, %v1670
  %v2359 = vpack.c.bf16 %v1676, %v1672
  %v2360 = vpack.c.bf16 %v2033, %v2029
  %v2361 = vpack.c.bf16 %v2035, %v2031
  %v2362 = vpack.c.bf16 %v1368, %v1366
  %v2363 = vpack.c.bf16 %v1369, %v1367
  %v2364 = vpack.c.bf16 %v1682, %v1678
  %v2365 = vpack.c.bf16 %v1684, %v1680
  %v2366 = vpack.c.bf16 %v2041, %v2037
  %v2367 = vpack.c.bf16 %v2043, %v2039
  %v2368 = vpack.c.bf16 %v1372, %v1370
  %v2369 = vpack.c.bf16 %v1373, %v1371
  %v2370 = vpack.c.bf16 %v1690, %v1686
  %v2371 = vpack.c.bf16 %v1692, %v1688
  %v2372 = vpack.c.bf16 %v2049, %v2045
  %v2373 = vpack.c.bf16 %v2051, %v2047
  %v2374 = vpack.c.bf16 %v1376, %v1374
  %v2375 = vpack.c.bf16 %v1377, %v1375
  %v2376 = vpack.c.bf16 %v1698, %v1694
  %v2377 = vpack.c.bf16 %v1700, %v1696
  %v2378 = vpack.c.bf16 %v2057, %v2053
  %v2379 = vpack.c.bf16 %v2059, %v2055
  %v2380 = vpack.c.bf16 %v1380, %v1378
  %v2381 = vpack.c.bf16 %v1381, %v1379
  %v2382 = vpack.c.bf16 %v1706, %v1702
  %v2383 = vpack.c.bf16 %v1708, %v1704
  %v2384 = vpack.c.bf16 %v2065, %v2061
  %v2385 = vpack.c.bf16 %v2067, %v2063
  %v2386 = vpack.c.bf16 %v1384, %v1382
  %v2387 = vpack.c.bf16 %v1385, %v1383
  %v2388 = vpack.c.bf16 %v1714, %v1710
  %v2389 = vpack.c.bf16 %v1716, %v1712
  %v2390 = vpack.c.bf16 %v2073, %v2069
  %v2391 = vpack.c.bf16 %v2075, %v2071
  %v2392 = vpack.c.bf16 %v1388, %v1386
  %v2393 = vpack.c.bf16 %v1389, %v1387
  %v2394 = vpack.c.bf16 %v1722, %v1718
  %v2395 = vpack.c.bf16 %v1724, %v1720
  %v2396 = vpack.c.bf16 %v2081, %v2077
  %v2397 = vpack.c.bf16 %v2083, %v2079
  %v2398 = vpack.c.bf16 %v1392, %v1390
  %v2399 = vpack.c.bf16 %v1393, %v1391
  %v2400 = vpack.c.bf16 %v1730, %v1726
  %v2401 = vpack.c.bf16 %v1732, %v1728
  %v2402 = vpack.c.bf16 %v2089, %v2085
  %v2403 = vpack.c.bf16 %v2091, %v2087
  %v2404 = vpack.c.bf16 %v1396, %v1394
  %v2405 = vpack.c.bf16 %v1397, %v1395
  %v2406 = vpack.c.bf16 %v1738, %v1734
  %v2407 = vpack.c.bf16 %v1740, %v1736
  %v2408 = vpack.c.bf16 %v2097, %v2093
  %v2409 = vpack.c.bf16 %v2099, %v2095
  %v2410 = vpack.c.bf16 %v1400, %v1398
  %v2411 = vpack.c.bf16 %v1401, %v1399
  %v2412 = vpack.c.bf16 %v1746, %v1742
  %v2413 = vpack.c.bf16 %v1748, %v1744
  %v2414 = vpack.c.bf16 %v2105, %v2101
  %v2415 = vpack.c.bf16 %v2107, %v2103
  %v2416 = vpack.c.bf16 %v1404, %v1402
  %v2417 = vpack.c.bf16 %v1405, %v1403
  %v2418 = vpack.c.bf16 %v1754, %v1750
  %v2419 = vpack.c.bf16 %v1756, %v1752
  %v2420 = vpack.c.bf16 %v2113, %v2109
  %v2421 = vpack.c.bf16 %v2115, %v2111
  %v2422 = vpack.c.bf16 %v1408, %v1406
  %v2423 = vpack.c.bf16 %v1409, %v1407
  %v2424 = vpack.c.bf16 %v1762, %v1758
  %v2425 = vpack.c.bf16 %v1764, %v1760
  %v2426 = vpack.c.bf16 %v2121, %v2117
  %v2427 = vpack.c.bf16 %v2123, %v2119
  %v2428 = vpack.c.bf16 %v1412, %v1410
  %v2429 = vpack.c.bf16 %v1413, %v1411
  %v2430 = vpack.c.bf16 %v1770, %v1766
  %v2431 = vpack.c.bf16 %v1772, %v1768
  %v2432 = vpack.c.bf16 %v2129, %v2125
  %v2433 = vpack.c.bf16 %v2131, %v2127
  %v2434 = vpack.c.bf16 %v1416, %v1414
  %v2435 = vpack.c.bf16 %v1417, %v1415
  %v2436 = vpack.c.bf16 %v1778, %v1774
  %v2437 = vpack.c.bf16 %v1780, %v1776
  %v2438 = vpack.c.bf16 %v2137, %v2133
  %v2439 = vpack.c.bf16 %v2139, %v2135
  %v2440 = vpack.c.bf16 %v1420, %v1418
  %v2441 = vpack.c.bf16 %v1421, %v1419
  %v2442 = vpack.c.bf16 %v1786, %v1782
  %v2443 = vpack.c.bf16 %v1788, %v1784
  %v2444 = vpack.c.bf16 %v2145, %v2141
  %v2445 = vpack.c.bf16 %v2147, %v2143
  %v2446 = vpack.c.bf16 %v1424, %v1422
  %v2447 = vpack.c.bf16 %v1425, %v1423
  %v2448 = vpack.c.bf16 %v1789, %v1790
  %v2449 = vpack.c.bf16 %v1791, %v1792
  %v2450 = vpack.c.bf16 %v2148, %v2149
  %v2451 = vpack.c.bf16 %v2150, %v2151
  %v2452 = vld [vmem:[%s5] sm:$0xff]
  %v2453 = vld [vmem:[%s5 + $0x8] sm:$0xff]
  %v2454 = vld [vmem:[%s5 + $0x10] sm:$0xff]
  %v2455 = vld [vmem:[%s5 + $0x18] sm:$0xff]
  %v2456 = vld [vmem:[%s5 + $0x20] sm:$0xff]
  %v2457 = vld [vmem:[%s5 + $0x28] sm:$0xff]
  %v2458 = vld [vmem:[%s5 + $0x30] sm:$0xff]
  %v2459 = vld [vmem:[%s5 + $0x38] sm:$0xff]
  %v2460 = vld [vmem:[%s5 + $0x40] sm:$0xff]
  %v2461 = vld [vmem:[%s5 + $0x48] sm:$0xff]
  %v2462 = vld [vmem:[%s5 + $0x50] sm:$0xff]
  %v2463 = vld [vmem:[%s5 + $0x58] sm:$0xff]
  %v2464 = vld [vmem:[%s5 + $0x60] sm:$0xff]
  %v2465 = vld [vmem:[%s5 + $0x68] sm:$0xff]
  %v2466 = vld [vmem:[%s5 + $0x70] sm:$0xff]
  %v2467 = vld [vmem:[%s5 + $0x78] sm:$0xff]
  %v2468 = vld [vmem:[%s5 + $0x80] sm:$0xff]
  %v2469 = vld [vmem:[%s5 + $0x88] sm:$0xff]
  %v2470 = vld [vmem:[%s5 + $0x90] sm:$0xff]
  %v2471 = vld [vmem:[%s5 + $0x98] sm:$0xff]
  %v2472 = vld [vmem:[%s5 + $0xa0] sm:$0xff]
  %v2473 = vld [vmem:[%s5 + $0xa8] sm:$0xff]
  %v2474 = vld [vmem:[%s5 + $0xb0] sm:$0xff]
  %v2475 = vld [vmem:[%s5 + $0xb8] sm:$0xff]
  %v2476 = vld [vmem:[%s5 + $0xc0] sm:$0xff]
  %v2477 = vld [vmem:[%s5 + $0xc8] sm:$0xff]
  %v2478 = vld [vmem:[%s5 + $0xd0] sm:$0xff]
  %v2479 = vld [vmem:[%s5 + $0xd8] sm:$0xff]
  %v2480 = vld [vmem:[%s5 + $0xe0] sm:$0xff]
  %v2481 = vld [vmem:[%s5 + $0xe8] sm:$0xff]
  %v2482 = vld [vmem:[%s5 + $0xf0] sm:$0xff]
  %v2483 = vld [vmem:[%s5 + $0xf8] sm:$0xff]
  %v2484 = vld [vmem:[%s5 + $0x100] sm:$0xff]
  %v2485 = vld [vmem:[%s5 + $0x108] sm:$0xff]
  %v2486 = vld [vmem:[%s5 + $0x110] sm:$0xff]
  %v2487 = vld [vmem:[%s5 + $0x118] sm:$0xff]
  %v2488 = vld [vmem:[%s5 + $0x120] sm:$0xff]
  %v2489 = vld [vmem:[%s5 + $0x128] sm:$0xff]
  %v2490 = vld [vmem:[%s5 + $0x130] sm:$0xff]
  %v2491 = vld [vmem:[%s5 + $0x138] sm:$0xff]
  %v2492 = vld [vmem:[%s5 + $0x140] sm:$0xff]
  %v2493 = vld [vmem:[%s5 + $0x148] sm:$0xff]
  %v2494 = vld [vmem:[%s5 + $0x150] sm:$0xff]
  %v2495 = vld [vmem:[%s5 + $0x158] sm:$0xff]
  %v2496 = vld [vmem:[%s5 + $0x160] sm:$0xff]
  %v2497 = vld [vmem:[%s5 + $0x168] sm:$0xff]
  %v2498 = vld [vmem:[%s5 + $0x170] sm:$0xff]
  %v2499 = vld [vmem:[%s5 + $0x178] sm:$0xff]
  %v2500 = vld [vmem:[%s5 + $0x180] sm:$0xff]
  %v2501 = vld [vmem:[%s5 + $0x188] sm:$0xff]
  %v2502 = vld [vmem:[%s5 + $0x190] sm:$0xff]
  %v2503 = vld [vmem:[%s5 + $0x198] sm:$0xff]
  %v2504 = vld [vmem:[%s5 + $0x1a0] sm:$0xff]
  %v2505 = vld [vmem:[%s5 + $0x1a8] sm:$0xff]
  %v2506 = vld [vmem:[%s5 + $0x1b0] sm:$0xff]
  %v2507 = vld [vmem:[%s5 + $0x1b8] sm:$0xff]
  %v2508 = vld [vmem:[%s5 + $0x1c0] sm:$0xff]
  %v2509 = vld [vmem:[%s5 + $0x1c8] sm:$0xff]
  %v2510 = vld [vmem:[%s5 + $0x1d0] sm:$0xff]
  %v2511 = vld [vmem:[%s5 + $0x1d8] sm:$0xff]
  %v2512 = vld [vmem:[%s5 + $0x1e0] sm:$0xff]
  %v2513 = vld [vmem:[%s5 + $0x1e8] sm:$0xff]
  %v2514 = vld [vmem:[%s5 + $0x1f0] sm:$0xff]
  %v2515 = vld [vmem:[%s5 + $0x1f8] sm:$0xff]
  %v2516 = vld [vmem:[%s5 + $0x200] sm:$0xff]
  %v2517 = vld [vmem:[%s5 + $0x208] sm:$0xff]
  %v2518 = vld [vmem:[%s5 + $0x210] sm:$0xff]
  %v2519 = vld [vmem:[%s5 + $0x218] sm:$0xff]
  %v2520 = vld [vmem:[%s5 + $0x220] sm:$0xff]
  %v2521 = vld [vmem:[%s5 + $0x228] sm:$0xff]
  %v2522 = vld [vmem:[%s5 + $0x230] sm:$0xff]
  %v2523 = vld [vmem:[%s5 + $0x238] sm:$0xff]
  %v2524 = vld [vmem:[%s5 + $0x240] sm:$0xff]
  %v2525 = vld [vmem:[%s5 + $0x248] sm:$0xff]
  %v2526 = vld [vmem:[%s5 + $0x250] sm:$0xff]
  %v2527 = vld [vmem:[%s5 + $0x258] sm:$0xff]
  %v2528 = vld [vmem:[%s5 + $0x260] sm:$0xff]
  %v2529 = vld [vmem:[%s5 + $0x268] sm:$0xff]
  %v2530 = vld [vmem:[%s5 + $0x270] sm:$0xff]
  %v2531 = vld [vmem:[%s5 + $0x278] sm:$0xff]
  %v2532 = vld [vmem:[%s5 + $0x280] sm:$0xff]
  %v2533 = vld [vmem:[%s5 + $0x288] sm:$0xff]
  %v2534 = vld [vmem:[%s5 + $0x290] sm:$0xff]
  %v2535 = vld [vmem:[%s5 + $0x298] sm:$0xff]
  %v2536 = vld [vmem:[%s5 + $0x2a0] sm:$0xff]
  %v2537 = vld [vmem:[%s5 + $0x2a8] sm:$0xff]
  %v2538 = vld [vmem:[%s5 + $0x2b0] sm:$0xff]
  %v2539 = vld [vmem:[%s5 + $0x2b8] sm:$0xff]
  %v2540 = vld [vmem:[%s5 + $0x2c0] sm:$0xff]
  %v2541 = vld [vmem:[%s5 + $0x2c8] sm:$0xff]
  %v2542 = vld [vmem:[%s5 + $0x2d0] sm:$0xff]
  %v2543 = vld [vmem:[%s5 + $0x2d8] sm:$0xff]
  %v2544 = vld [vmem:[%s5 + $0x2e0] sm:$0xff]
  %v2545 = vld [vmem:[%s5 + $0x2e8] sm:$0xff]
  %v2546 = vld [vmem:[%s5 + $0x2f0] sm:$0xff]
  %v2547 = vld [vmem:[%s5 + $0x2f8] sm:$0xff]
  %v2552 = vrot.slane %v1426, 1
  %v2553 = vsel %vm1554, %v1789, %v2552
  %v2554 = vrot.slane %v1427, 1
  %v2555 = vsel %vm1554, %v1791, %v2554
  %v2556 = vrot.slane %v1428, 1
  %v2557 = vsel %vm1554, %v2552, %v2556
  %v2558 = vrot.slane %v1429, 1
  %v2559 = vsel %vm1554, %v2554, %v2558
  %v2566 = vrot.slane %v1426, 2
  %v2567 = vsel %vm1913, %v2148, %v2566
  %v2568 = vrot.slane %v1427, 2
  %v2569 = vsel %vm1913, %v2150, %v2568
  %v2570 = vrot.slane %v1428, 2
  %v2571 = vsel %vm1913, %v2566, %v2570
  %v2572 = vrot.slane %v1429, 2
  %v2573 = vsel %vm1913, %v2568, %v2572
  %v2580 = vpack.c.bf16 %v2553, %v1790
  %v2581 = vpack.c.bf16 %v2555, %v1792
  %v2582 = vpack.c.bf16 %v2567, %v2149
  %v2583 = vpack.c.bf16 %v2569, %v2151
  %v2584 = vpack.c.bf16 %v1428, %v1426
  %v2585 = vpack.c.bf16 %v1429, %v1427
  %v2586 = vpack.c.bf16 %v2556, %v2557
  %v2587 = vpack.c.bf16 %v2558, %v2559
  %v2588 = vpack.c.bf16 %v2570, %v2571
  %v2589 = vpack.c.bf16 %v2572, %v2573
  %s2590 = scalar_lea.vmem %s5, 768
  %v2591 = vld [vmem:[%s2590] sm:$0xff]
  %v2592 = vld [vmem:[%s2590 + $0x8] sm:$0xff]
  %v2593 = vld [vmem:[%s2590 + $0x10] sm:$0xff]
  %v2594 = vld [vmem:[%s2590 + $0x18] sm:$0xff]
  %v2595 = vld [vmem:[%s2590 + $0x20] sm:$0xff]
  %v2596 = vld [vmem:[%s2590 + $0x28] sm:$0xff]
  %v2597 = vld [vmem:[%s2590 + $0x30] sm:$0xff]
  %v2598 = vld [vmem:[%s2590 + $0x38] sm:$0xff]
  %v2599 = vld [vmem:[%s2590 + $0x40] sm:$0xff]
  %v2600 = vld [vmem:[%s2590 + $0x48] sm:$0xff]
  %v2601 = vld [vmem:[%s2590 + $0x50] sm:$0xff]
  %v2602 = vld [vmem:[%s2590 + $0x58] sm:$0xff]
  %v2603 = vld [vmem:[%s2590 + $0x60] sm:$0xff]
  %v2604 = vld [vmem:[%s2590 + $0x68] sm:$0xff]
  %v2605 = vld [vmem:[%s2590 + $0x70] sm:$0xff]
  %v2606 = vld [vmem:[%s2590 + $0x78] sm:$0xff]
  %v2607 = vld [vmem:[%s2590 + $0x80] sm:$0xff]
  %v2608 = vld [vmem:[%s2590 + $0x88] sm:$0xff]
  %v2609 = vld [vmem:[%s2590 + $0x90] sm:$0xff]
  %v2610 = vld [vmem:[%s2590 + $0x98] sm:$0xff]
  %v2611 = vld [vmem:[%s2590 + $0xa0] sm:$0xff]
  %v2612 = vld [vmem:[%s2590 + $0xa8] sm:$0xff]
  %v2613 = vld [vmem:[%s2590 + $0xb0] sm:$0xff]
  %v2614 = vld [vmem:[%s2590 + $0xb8] sm:$0xff]
  %v2615 = vld [vmem:[%s2590 + $0xc0] sm:$0xff]
  %v2616 = vld [vmem:[%s2590 + $0xc8] sm:$0xff]
  %v2617 = vld [vmem:[%s2590 + $0xd0] sm:$0xff]
  %v2618 = vld [vmem:[%s2590 + $0xd8] sm:$0xff]
  %v2619 = vld [vmem:[%s2590 + $0xe0] sm:$0xff]
  %v2620 = vld [vmem:[%s2590 + $0xe8] sm:$0xff]
  %v2621 = vld [vmem:[%s2590 + $0xf0] sm:$0xff]
  %v2622 = vld [vmem:[%s2590 + $0xf8] sm:$0xff]
  %v2623 = vld [vmem:[%s2590 + $0x100] sm:$0xff]
  %v2624 = vld [vmem:[%s2590 + $0x108] sm:$0xff]
  %v2625 = vld [vmem:[%s2590 + $0x110] sm:$0xff]
  %v2626 = vld [vmem:[%s2590 + $0x118] sm:$0xff]
  %v2627 = vld [vmem:[%s2590 + $0x120] sm:$0xff]
  %v2628 = vld [vmem:[%s2590 + $0x128] sm:$0xff]
  %v2629 = vld [vmem:[%s2590 + $0x130] sm:$0xff]
  %v2630 = vld [vmem:[%s2590 + $0x138] sm:$0xff]
  %v2631 = vld [vmem:[%s2590 + $0x140] sm:$0xff]
  %v2632 = vld [vmem:[%s2590 + $0x148] sm:$0xff]
  %v2633 = vld [vmem:[%s2590 + $0x150] sm:$0xff]
  %v2634 = vld [vmem:[%s2590 + $0x158] sm:$0xff]
  %v2635 = vld [vmem:[%s2590 + $0x160] sm:$0xff]
  %v2636 = vld [vmem:[%s2590 + $0x168] sm:$0xff]
  %v2637 = vld [vmem:[%s2590 + $0x170] sm:$0xff]
  %v2638 = vld [vmem:[%s2590 + $0x178] sm:$0xff]
  %v2639 = vld [vmem:[%s2590 + $0x180] sm:$0xff]
  %v2640 = vld [vmem:[%s2590 + $0x188] sm:$0xff]
  %v2641 = vld [vmem:[%s2590 + $0x190] sm:$0xff]
  %v2642 = vld [vmem:[%s2590 + $0x198] sm:$0xff]
  %v2643 = vld [vmem:[%s2590 + $0x1a0] sm:$0xff]
  %v2644 = vld [vmem:[%s2590 + $0x1a8] sm:$0xff]
  %v2645 = vld [vmem:[%s2590 + $0x1b0] sm:$0xff]
  %v2646 = vld [vmem:[%s2590 + $0x1b8] sm:$0xff]
  %v2647 = vld [vmem:[%s2590 + $0x1c0] sm:$0xff]
  %v2648 = vld [vmem:[%s2590 + $0x1c8] sm:$0xff]
  %v2649 = vld [vmem:[%s2590 + $0x1d0] sm:$0xff]
  %v2650 = vld [vmem:[%s2590 + $0x1d8] sm:$0xff]
  %v2651 = vld [vmem:[%s2590 + $0x1e0] sm:$0xff]
  %v2652 = vld [vmem:[%s2590 + $0x1e8] sm:$0xff]
  %v2653 = vld [vmem:[%s2590 + $0x1f0] sm:$0xff]
  %v2654 = vld [vmem:[%s2590 + $0x1f8] sm:$0xff]
  %v2655 = vld [vmem:[%s2590 + $0x200] sm:$0xff]
  %v2656 = vld [vmem:[%s2590 + $0x208] sm:$0xff]
  %v2657 = vld [vmem:[%s2590 + $0x210] sm:$0xff]
  %v2658 = vld [vmem:[%s2590 + $0x218] sm:$0xff]
  %v2659 = vld [vmem:[%s2590 + $0x220] sm:$0xff]
  %v2660 = vld [vmem:[%s2590 + $0x228] sm:$0xff]
  %v2661 = vld [vmem:[%s2590 + $0x230] sm:$0xff]
  %v2662 = vld [vmem:[%s2590 + $0x238] sm:$0xff]
  %v2663 = vld [vmem:[%s2590 + $0x240] sm:$0xff]
  %v2664 = vld [vmem:[%s2590 + $0x248] sm:$0xff]
  %v2665 = vld [vmem:[%s2590 + $0x250] sm:$0xff]
  %v2666 = vld [vmem:[%s2590 + $0x258] sm:$0xff]
  %v2667 = vld [vmem:[%s2590 + $0x260] sm:$0xff]
  %v2668 = vld [vmem:[%s2590 + $0x268] sm:$0xff]
  %v2669 = vld [vmem:[%s2590 + $0x270] sm:$0xff]
  %v2670 = vld [vmem:[%s2590 + $0x278] sm:$0xff]
  %v2671 = vld [vmem:[%s2590 + $0x280] sm:$0xff]
  %v2672 = vld [vmem:[%s2590 + $0x288] sm:$0xff]
  %v2673 = vld [vmem:[%s2590 + $0x290] sm:$0xff]
  %v2674 = vld [vmem:[%s2590 + $0x298] sm:$0xff]
  %v2675 = vld [vmem:[%s2590 + $0x2a0] sm:$0xff]
  %v2676 = vld [vmem:[%s2590 + $0x2a8] sm:$0xff]
  %v2677 = vld [vmem:[%s2590 + $0x2b0] sm:$0xff]
  %v2678 = vld [vmem:[%s2590 + $0x2b8] sm:$0xff]
  %v2679 = vld [vmem:[%s2590 + $0x2c0] sm:$0xff]
  %v2680 = vld [vmem:[%s2590 + $0x2c8] sm:$0xff]
  %v2681 = vld [vmem:[%s2590 + $0x2d0] sm:$0xff]
  %v2682 = vld [vmem:[%s2590 + $0x2d8] sm:$0xff]
  %v2683 = vld [vmem:[%s2590 + $0x2e0] sm:$0xff]
  %v2684 = vld [vmem:[%s2590 + $0x2e8] sm:$0xff]
  %v2685 = vld [vmem:[%s2590 + $0x2f0] sm:$0xff]
  %v2686 = vld [vmem:[%s2590 + $0x2f8] sm:$0xff]
  %v2783 = vunpack.c.l.b16 %v2591
  %v2784 = vunpack.c.h.b16 %v2591
  %v2785 = vunpack.c.l.b16 %v2592
  %v2786 = vunpack.c.h.b16 %v2592
  %v2787 = vunpack.c.l.b16 %v2593
  %v2788 = vunpack.c.h.b16 %v2593
  %v2789 = vunpack.c.l.b16 %v2594
  %v2790 = vunpack.c.h.b16 %v2594
  %v2791 = vunpack.c.l.b16 %v2595
  %v2792 = vunpack.c.h.b16 %v2595
  %v2793 = vunpack.c.l.b16 %v2596
  %v2794 = vunpack.c.h.b16 %v2596
  %v2795 = vunpack.c.l.b16 %v2597
  %v2796 = vunpack.c.h.b16 %v2597
  %v2797 = vunpack.c.l.b16 %v2598
  %v2798 = vunpack.c.h.b16 %v2598
  %v2799 = vunpack.c.l.b16 %v2599
  %v2800 = vunpack.c.h.b16 %v2599
  %v2801 = vunpack.c.l.b16 %v2600
  %v2802 = vunpack.c.h.b16 %v2600
  %v2803 = vunpack.c.l.b16 %v2601
  %v2804 = vunpack.c.h.b16 %v2601
  %v2805 = vunpack.c.l.b16 %v2602
  %v2806 = vunpack.c.h.b16 %v2602
  %v2807 = vunpack.c.l.b16 %v2603
  %v2808 = vunpack.c.h.b16 %v2603
  %v2809 = vunpack.c.l.b16 %v2604
  %v2810 = vunpack.c.h.b16 %v2604
  %v2811 = vunpack.c.l.b16 %v2605
  %v2812 = vunpack.c.h.b16 %v2605
  %v2813 = vunpack.c.l.b16 %v2606
  %v2814 = vunpack.c.h.b16 %v2606
  %v2815 = vunpack.c.l.b16 %v2607
  %v2816 = vunpack.c.h.b16 %v2607
  %v2817 = vunpack.c.l.b16 %v2608
  %v2818 = vunpack.c.h.b16 %v2608
  %v2819 = vunpack.c.l.b16 %v2609
  %v2820 = vunpack.c.h.b16 %v2609
  %v2821 = vunpack.c.l.b16 %v2610
  %v2822 = vunpack.c.h.b16 %v2610
  %v2823 = vunpack.c.l.b16 %v2611
  %v2824 = vunpack.c.h.b16 %v2611
  %v2825 = vunpack.c.l.b16 %v2612
  %v2826 = vunpack.c.h.b16 %v2612
  %v2827 = vunpack.c.l.b16 %v2613
  %v2828 = vunpack.c.h.b16 %v2613
  %v2829 = vunpack.c.l.b16 %v2614
  %v2830 = vunpack.c.h.b16 %v2614
  %v2831 = vunpack.c.l.b16 %v2615
  %v2832 = vunpack.c.h.b16 %v2615
  %v2833 = vunpack.c.l.b16 %v2616
  %v2834 = vunpack.c.h.b16 %v2616
  %v2835 = vunpack.c.l.b16 %v2617
  %v2836 = vunpack.c.h.b16 %v2617
  %v2837 = vunpack.c.l.b16 %v2618
  %v2838 = vunpack.c.h.b16 %v2618
  %v2839 = vunpack.c.l.b16 %v2619
  %v2840 = vunpack.c.h.b16 %v2619
  %v2841 = vunpack.c.l.b16 %v2620
  %v2842 = vunpack.c.h.b16 %v2620
  %v2843 = vunpack.c.l.b16 %v2621
  %v2844 = vunpack.c.h.b16 %v2621
  %v2845 = vunpack.c.l.b16 %v2622
  %v2846 = vunpack.c.h.b16 %v2622
  %v2847 = vunpack.c.l.b16 %v2623
  %v2848 = vunpack.c.h.b16 %v2623
  %v2849 = vunpack.c.l.b16 %v2624
  %v2850 = vunpack.c.h.b16 %v2624
  %v2851 = vunpack.c.l.b16 %v2625
  %v2852 = vunpack.c.h.b16 %v2625
  %v2853 = vunpack.c.l.b16 %v2626
  %v2854 = vunpack.c.h.b16 %v2626
  %v2855 = vunpack.c.l.b16 %v2627
  %v2856 = vunpack.c.h.b16 %v2627
  %v2857 = vunpack.c.l.b16 %v2628
  %v2858 = vunpack.c.h.b16 %v2628
  %v2859 = vunpack.c.l.b16 %v2629
  %v2860 = vunpack.c.h.b16 %v2629
  %v2861 = vunpack.c.l.b16 %v2630
  %v2862 = vunpack.c.h.b16 %v2630
  %v2863 = vunpack.c.l.b16 %v2631
  %v2864 = vunpack.c.h.b16 %v2631
  %v2865 = vunpack.c.l.b16 %v2632
  %v2866 = vunpack.c.h.b16 %v2632
  %v2867 = vunpack.c.l.b16 %v2633
  %v2868 = vunpack.c.h.b16 %v2633
  %v2869 = vunpack.c.l.b16 %v2634
  %v2870 = vunpack.c.h.b16 %v2634
  %v2871 = vunpack.c.l.b16 %v2635
  %v2872 = vunpack.c.h.b16 %v2635
  %v2873 = vunpack.c.l.b16 %v2636
  %v2874 = vunpack.c.h.b16 %v2636
  %v2875 = vunpack.c.l.b16 %v2637
  %v2876 = vunpack.c.h.b16 %v2637
  %v2877 = vunpack.c.l.b16 %v2638
  %v2878 = vunpack.c.h.b16 %v2638
  %v2879 = vunpack.c.l.b16 %v2639
  %v2880 = vunpack.c.h.b16 %v2639
  %v2881 = vunpack.c.l.b16 %v2640
  %v2882 = vunpack.c.h.b16 %v2640
  %v2883 = vunpack.c.l.b16 %v2641
  %v2884 = vunpack.c.h.b16 %v2641
  %v2885 = vunpack.c.l.b16 %v2642
  %v2886 = vunpack.c.h.b16 %v2642
  %v2887 = vunpack.c.l.b16 %v2643
  %v2888 = vunpack.c.h.b16 %v2643
  %v2889 = vunpack.c.l.b16 %v2644
  %v2890 = vunpack.c.h.b16 %v2644
  %v2891 = vunpack.c.l.b16 %v2645
  %v2892 = vunpack.c.h.b16 %v2645
  %v2893 = vunpack.c.l.b16 %v2646
  %v2894 = vunpack.c.h.b16 %v2646
  %v2895 = vunpack.c.l.b16 %v2647
  %v2896 = vunpack.c.h.b16 %v2647
  %v2897 = vunpack.c.l.b16 %v2648
  %v2898 = vunpack.c.h.b16 %v2648
  %v2899 = vunpack.c.l.b16 %v2649
  %v2900 = vunpack.c.h.b16 %v2649
  %v2901 = vunpack.c.l.b16 %v2650
  %v2902 = vunpack.c.h.b16 %v2650
  %v2903 = vunpack.c.l.b16 %v2651
  %v2904 = vunpack.c.h.b16 %v2651
  %v2905 = vunpack.c.l.b16 %v2652
  %v2906 = vunpack.c.h.b16 %v2652
  %v2907 = vunpack.c.l.b16 %v2653
  %v2908 = vunpack.c.h.b16 %v2653
  %v2909 = vunpack.c.l.b16 %v2654
  %v2910 = vunpack.c.h.b16 %v2654
  %v2911 = vunpack.c.l.b16 %v2655
  %v2912 = vunpack.c.h.b16 %v2655
  %v2913 = vunpack.c.l.b16 %v2656
  %v2914 = vunpack.c.h.b16 %v2656
  %v2915 = vunpack.c.l.b16 %v2657
  %v2916 = vunpack.c.h.b16 %v2657
  %v2917 = vunpack.c.l.b16 %v2658
  %v2918 = vunpack.c.h.b16 %v2658
  %v2919 = vunpack.c.l.b16 %v2659
  %v2920 = vunpack.c.h.b16 %v2659
  %v2921 = vunpack.c.l.b16 %v2660
  %v2922 = vunpack.c.h.b16 %v2660
  %v2923 = vunpack.c.l.b16 %v2661
  %v2924 = vunpack.c.h.b16 %v2661
  %v2925 = vunpack.c.l.b16 %v2662
  %v2926 = vunpack.c.h.b16 %v2662
  %v2927 = vunpack.c.l.b16 %v2663
  %v2928 = vunpack.c.h.b16 %v2663
  %v2929 = vunpack.c.l.b16 %v2664
  %v2930 = vunpack.c.h.b16 %v2664
  %v2931 = vunpack.c.l.b16 %v2665
  %v2932 = vunpack.c.h.b16 %v2665
  %v2933 = vunpack.c.l.b16 %v2666
  %v2934 = vunpack.c.h.b16 %v2666
  %v2935 = vunpack.c.l.b16 %v2667
  %v2936 = vunpack.c.h.b16 %v2667
  %v2937 = vunpack.c.l.b16 %v2668
  %v2938 = vunpack.c.h.b16 %v2668
  %v2939 = vunpack.c.l.b16 %v2669
  %v2940 = vunpack.c.h.b16 %v2669
  %v2941 = vunpack.c.l.b16 %v2670
  %v2942 = vunpack.c.h.b16 %v2670
  %v2943 = vunpack.c.l.b16 %v2671
  %v2944 = vunpack.c.h.b16 %v2671
  %v2945 = vunpack.c.l.b16 %v2672
  %v2946 = vunpack.c.h.b16 %v2672
  %v2947 = vunpack.c.l.b16 %v2673
  %v2948 = vunpack.c.h.b16 %v2673
  %v2949 = vunpack.c.l.b16 %v2674
  %v2950 = vunpack.c.h.b16 %v2674
  %v2951 = vunpack.c.l.b16 %v2675
  %v2952 = vunpack.c.h.b16 %v2675
  %v2953 = vunpack.c.l.b16 %v2676
  %v2954 = vunpack.c.h.b16 %v2676
  %v2955 = vunpack.c.l.b16 %v2677
  %v2956 = vunpack.c.h.b16 %v2677
  %v2957 = vunpack.c.l.b16 %v2678
  %v2958 = vunpack.c.h.b16 %v2678
  %v2959 = vunpack.c.l.b16 %v2679
  %v2960 = vunpack.c.h.b16 %v2679
  %v2961 = vunpack.c.l.b16 %v2680
  %v2962 = vunpack.c.h.b16 %v2680
  %v2963 = vunpack.c.l.b16 %v2681
  %v2964 = vunpack.c.h.b16 %v2681
  %v2965 = vunpack.c.l.b16 %v2682
  %v2966 = vunpack.c.h.b16 %v2682
  %v2967 = vunpack.c.l.b16 %v2683
  %v2968 = vunpack.c.h.b16 %v2683
  %v2969 = vunpack.c.l.b16 %v2684
  %v2970 = vunpack.c.h.b16 %v2684
  %v2971 = vunpack.c.l.b16 %v2685
  %v2972 = vunpack.c.h.b16 %v2685
  %v2973 = vunpack.c.l.b16 %v2686
  %v2974 = vunpack.c.h.b16 %v2686
  %v2975 = vpack.c.b16 %v2785, %v2783
  %v2976 = vpack.c.b16 %v2786, %v2784
  %v2977 = vpack.c.b16 %v2789, %v2787
  %v2978 = vpack.c.b16 %v2790, %v2788
  %v2979 = vpack.c.b16 %v2793, %v2791
  %v2980 = vpack.c.b16 %v2794, %v2792
  %v2981 = vpack.c.b16 %v2797, %v2795
  %v2982 = vpack.c.b16 %v2798, %v2796
  %v2983 = vpack.c.b16 %v2801, %v2799
  %v2984 = vpack.c.b16 %v2802, %v2800
  %v2985 = vpack.c.b16 %v2805, %v2803
  %v2986 = vpack.c.b16 %v2806, %v2804
  %v2987 = vpack.c.b16 %v2809, %v2807
  %v2988 = vpack.c.b16 %v2810, %v2808
  %v2989 = vpack.c.b16 %v2813, %v2811
  %v2990 = vpack.c.b16 %v2814, %v2812
  %v2991 = vpack.c.b16 %v2817, %v2815
  %v2992 = vpack.c.b16 %v2818, %v2816
  %v2993 = vpack.c.b16 %v2821, %v2819
  %v2994 = vpack.c.b16 %v2822, %v2820
  %v2995 = vpack.c.b16 %v2825, %v2823
  %v2996 = vpack.c.b16 %v2826, %v2824
  %v2997 = vpack.c.b16 %v2829, %v2827
  %v2998 = vpack.c.b16 %v2830, %v2828
  %v2999 = vpack.c.b16 %v2833, %v2831
  %v3000 = vpack.c.b16 %v2834, %v2832
  %v3001 = vpack.c.b16 %v2837, %v2835
  %v3002 = vpack.c.b16 %v2838, %v2836
  %v3003 = vpack.c.b16 %v2841, %v2839
  %v3004 = vpack.c.b16 %v2842, %v2840
  %v3005 = vpack.c.b16 %v2845, %v2843
  %v3006 = vpack.c.b16 %v2846, %v2844
  %v3007 = vpack.c.b16 %v2849, %v2847
  %v3008 = vpack.c.b16 %v2850, %v2848
  %v3009 = vpack.c.b16 %v2853, %v2851
  %v3010 = vpack.c.b16 %v2854, %v2852
  %v3011 = vpack.c.b16 %v2857, %v2855
  %v3012 = vpack.c.b16 %v2858, %v2856
  %v3013 = vpack.c.b16 %v2861, %v2859
  %v3014 = vpack.c.b16 %v2862, %v2860
  %v3015 = vpack.c.b16 %v2865, %v2863
  %v3016 = vpack.c.b16 %v2866, %v2864
  %v3017 = vpack.c.b16 %v2869, %v2867
  %v3018 = vpack.c.b16 %v2870, %v2868
  %v3019 = vpack.c.b16 %v2873, %v2871
  %v3020 = vpack.c.b16 %v2874, %v2872
  %v3021 = vpack.c.b16 %v2877, %v2875
  %v3022 = vpack.c.b16 %v2878, %v2876
  %v3023 = vpack.c.b16 %v2881, %v2879
  %v3024 = vpack.c.b16 %v2882, %v2880
  %v3025 = vpack.c.b16 %v2885, %v2883
  %v3026 = vpack.c.b16 %v2886, %v2884
  %v3027 = vpack.c.b16 %v2889, %v2887
  %v3028 = vpack.c.b16 %v2890, %v2888
  %v3029 = vpack.c.b16 %v2893, %v2891
  %v3030 = vpack.c.b16 %v2894, %v2892
  %v3031 = vpack.c.b16 %v2897, %v2895
  %v3032 = vpack.c.b16 %v2898, %v2896
  %v3033 = vpack.c.b16 %v2901, %v2899
  %v3034 = vpack.c.b16 %v2902, %v2900
  %v3035 = vpack.c.b16 %v2905, %v2903
  %v3036 = vpack.c.b16 %v2906, %v2904
  %v3037 = vpack.c.b16 %v2909, %v2907
  %v3038 = vpack.c.b16 %v2910, %v2908
  %v3039 = vpack.c.b16 %v2913, %v2911
  %v3040 = vpack.c.b16 %v2914, %v2912
  %v3041 = vpack.c.b16 %v2917, %v2915
  %v3042 = vpack.c.b16 %v2918, %v2916
  %v3043 = vpack.c.b16 %v2921, %v2919
  %v3044 = vpack.c.b16 %v2922, %v2920
  %v3045 = vpack.c.b16 %v2925, %v2923
  %v3046 = vpack.c.b16 %v2926, %v2924
  %v3047 = vpack.c.b16 %v2929, %v2927
  %v3048 = vpack.c.b16 %v2930, %v2928
  %v3049 = vpack.c.b16 %v2933, %v2931
  %v3050 = vpack.c.b16 %v2934, %v2932
  %v3051 = vpack.c.b16 %v2937, %v2935
  %v3052 = vpack.c.b16 %v2938, %v2936
  %v3053 = vpack.c.b16 %v2941, %v2939
  %v3054 = vpack.c.b16 %v2942, %v2940
  %v3055 = vpack.c.b16 %v2945, %v2943
  %v3056 = vpack.c.b16 %v2946, %v2944
  %v3057 = vpack.c.b16 %v2949, %v2947
  %v3058 = vpack.c.b16 %v2950, %v2948
  %v3059 = vpack.c.b16 %v2953, %v2951
  %v3060 = vpack.c.b16 %v2954, %v2952
  %v3061 = vpack.c.b16 %v2957, %v2955
  %v3062 = vpack.c.b16 %v2958, %v2956
  %v3063 = vpack.c.b16 %v2961, %v2959
  %v3064 = vpack.c.b16 %v2962, %v2960
  %v3065 = vpack.c.b16 %v2965, %v2963
  %v3066 = vpack.c.b16 %v2966, %v2964
  %v3067 = vpack.c.b16 %v2969, %v2967
  %v3068 = vpack.c.b16 %v2970, %v2968
  %v3069 = vpack.c.b16 %v2973, %v2971
  %v3070 = vpack.c.b16 %v2974, %v2972
  %3167 = vmatprep.subr.bf16.mxu0 %v2990
  %3168 = vmatpush1.bf16.msra.mxu0 %v2989
  %3169 = vmatprep.subr.bf16.mxu0 %v2988
  %3170 = vmatpush1.bf16.msra.mxu0 %v2987
  %3171 = vmatprep.subr.bf16.mxu0 %v2986
  %3172 = vmatpush1.bf16.msra.mxu0 %v2985
  %3173 = vmatprep.subr.bf16.mxu0 %v2984
  %3174 = vmatpush1.bf16.msra.mxu0 %v2983
  %3175 = vmatprep.subr.bf16.mxu0 %v2982
  %3176 = vmatpush1.bf16.msra.mxu0 %v2981
  %3177 = vmatprep.subr.bf16.mxu0 %v2980
  %3178 = vmatpush1.bf16.msra.mxu0 %v2979
  %3179 = vmatprep.subr.bf16.mxu0 %v2978
  %3180 = vmatpush1.bf16.msra.mxu0 %v2977
  %3181 = vmatprep.subr.bf16.mxu0 %v2976
  %3182 = vmatpush1.bf16.msra.mxu0 %v2975
  %3183 = vmatprep.subr.bf16.mxu0 %v3006
  %3184 = vmatpush2.bf16.msra.mxu0 %v3005
  %3185 = vmatprep.subr.bf16.mxu0 %v3004
  %3186 = vmatpush2.bf16.msra.mxu0 %v3003
  %3187 = vmatprep.subr.bf16.mxu0 %v3002
  %3188 = vmatpush2.bf16.msra.mxu0 %v3001
  %3189 = vmatprep.subr.bf16.mxu0 %v3000
  %3190 = vmatpush2.bf16.msra.mxu0 %v2999
  %3191 = vmatprep.subr.bf16.mxu0 %v2998
  %3192 = vmatpush2.bf16.msra.mxu0 %v2997
  %3193 = vmatprep.subr.bf16.mxu0 %v2996
  %3194 = vmatpush2.bf16.msra.mxu0 %v2995
  %3195 = vmatprep.subr.bf16.mxu0 %v2994
  %3196 = vmatpush2.bf16.msra.mxu0 %v2993
  %3197 = vmatprep.subr.bf16.mxu0 %v2992
  %3198 = vmatpush2.bf16.msra.mxu0 %v2991
  %3199 = vmatprep.mubr.bf16.mxu0 %v2279
  %3200 = vmatmul.mubr.bf16.gmra.mxu0 %v2278
  %v3201 = vpop.f32.mrf.mxu0
  %v3202 = vadd.f32 0.0, %v3201
  %v3203 = vpop.f32.mrf.mxu0
  %v3204 = vadd.f32 0.0, %v3203
  %v3205 = vpop.f32.mrf.mxu0
  %v3206 = vadd.f32 0.0, %v3205
  %v3207 = vpop.f32.mrf.mxu0
  %v3208 = vadd.f32 0.0, %v3207
  %3209 = vmatprep.mubr.bf16.mxu0 %v2285
  %3210 = vmatmul.mubr.bf16.gmra.mxu0 %v2284
  %v3211 = vpop.f32.mrf.mxu0
  %v3212 = vadd.f32 0.0, %v3211
  %v3213 = vpop.f32.mrf.mxu0
  %v3214 = vadd.f32 0.0, %v3213
  %v3215 = vpop.f32.mrf.mxu0
  %v3216 = vadd.f32 0.0, %v3215
  %v3217 = vpop.f32.mrf.mxu0
  %v3218 = vadd.f32 0.0, %v3217
  %3219 = vmatprep.mubr.bf16.mxu0 %v2291
  %3220 = vmatmul.mubr.bf16.gmra.mxu0 %v2290
  %v3221 = vpop.f32.mrf.mxu0
  %v3222 = vadd.f32 0.0, %v3221
  %v3223 = vpop.f32.mrf.mxu0
  %v3224 = vadd.f32 0.0, %v3223
  %v3225 = vpop.f32.mrf.mxu0
  %v3226 = vadd.f32 0.0, %v3225
  %v3227 = vpop.f32.mrf.mxu0
  %v3228 = vadd.f32 0.0, %v3227
  %3229 = vmatprep.mubr.bf16.mxu0 %v2297
  %3230 = vmatmul.mubr.bf16.gmra.mxu0 %v2296
  %v3231 = vpop.f32.mrf.mxu0
  %v3232 = vadd.f32 0.0, %v3231
  %v3233 = vpop.f32.mrf.mxu0
  %v3234 = vadd.f32 0.0, %v3233
  %v3235 = vpop.f32.mrf.mxu0
  %v3236 = vadd.f32 0.0, %v3235
  %v3237 = vpop.f32.mrf.mxu0
  %v3238 = vadd.f32 0.0, %v3237
  %3239 = vmatprep.mubr.bf16.mxu0 %v2303
  %3240 = vmatmul.mubr.bf16.gmra.mxu0 %v2302
  %v3241 = vpop.f32.mrf.mxu0
  %v3242 = vadd.f32 0.0, %v3241
  %v3243 = vpop.f32.mrf.mxu0
  %v3244 = vadd.f32 0.0, %v3243
  %v3245 = vpop.f32.mrf.mxu0
  %v3246 = vadd.f32 0.0, %v3245
  %v3247 = vpop.f32.mrf.mxu0
  %v3248 = vadd.f32 0.0, %v3247
  %3249 = vmatprep.mubr.bf16.mxu0 %v2309
  %3250 = vmatmul.mubr.bf16.gmra.mxu0 %v2308
  %v3251 = vpop.f32.mrf.mxu0
  %v3252 = vadd.f32 0.0, %v3251
  %v3253 = vpop.f32.mrf.mxu0
  %v3254 = vadd.f32 0.0, %v3253
  %v3255 = vpop.f32.mrf.mxu0
  %v3256 = vadd.f32 0.0, %v3255
  %v3257 = vpop.f32.mrf.mxu0
  %v3258 = vadd.f32 0.0, %v3257
  %3259 = vmatprep.mubr.bf16.mxu0 %v2315
  %3260 = vmatmul.mubr.bf16.gmra.mxu0 %v2314
  %v3261 = vpop.f32.mrf.mxu0
  %v3262 = vadd.f32 0.0, %v3261
  %v3263 = vpop.f32.mrf.mxu0
  %v3264 = vadd.f32 0.0, %v3263
  %v3265 = vpop.f32.mrf.mxu0
  %v3266 = vadd.f32 0.0, %v3265
  %v3267 = vpop.f32.mrf.mxu0
  %v3268 = vadd.f32 0.0, %v3267
  %3269 = vmatprep.mubr.bf16.mxu0 %v2321
  %3270 = vmatmul.mubr.bf16.gmra.mxu0 %v2320
  %v3271 = vpop.f32.mrf.mxu0
  %v3272 = vadd.f32 0.0, %v3271
  %v3273 = vpop.f32.mrf.mxu0
  %v3274 = vadd.f32 0.0, %v3273
  %v3275 = vpop.f32.mrf.mxu0
  %v3276 = vadd.f32 0.0, %v3275
  %v3277 = vpop.f32.mrf.mxu0
  %v3278 = vadd.f32 0.0, %v3277
  %3279 = vmatprep.mubr.bf16.mxu0 %v2327
  %3280 = vmatmul.mubr.bf16.gmra.mxu0 %v2326
  %v3281 = vpop.f32.mrf.mxu0
  %v3282 = vadd.f32 0.0, %v3281
  %v3283 = vpop.f32.mrf.mxu0
  %v3284 = vadd.f32 0.0, %v3283
  %v3285 = vpop.f32.mrf.mxu0
  %v3286 = vadd.f32 0.0, %v3285
  %v3287 = vpop.f32.mrf.mxu0
  %v3288 = vadd.f32 0.0, %v3287
  %3289 = vmatprep.mubr.bf16.mxu0 %v2333
  %3290 = vmatmul.mubr.bf16.gmra.mxu0 %v2332
  %v3291 = vpop.f32.mrf.mxu0
  %v3292 = vadd.f32 0.0, %v3291
  %v3293 = vpop.f32.mrf.mxu0
  %v3294 = vadd.f32 0.0, %v3293
  %v3295 = vpop.f32.mrf.mxu0
  %v3296 = vadd.f32 0.0, %v3295
  %v3297 = vpop.f32.mrf.mxu0
  %v3298 = vadd.f32 0.0, %v3297
  %3299 = vmatprep.mubr.bf16.mxu0 %v2339
  %3300 = vmatmul.mubr.bf16.gmra.mxu0 %v2338
  %v3301 = vpop.f32.mrf.mxu0
  %v3302 = vadd.f32 0.0, %v3301
  %v3303 = vpop.f32.mrf.mxu0
  %v3304 = vadd.f32 0.0, %v3303
  %v3305 = vpop.f32.mrf.mxu0
  %v3306 = vadd.f32 0.0, %v3305
  %v3307 = vpop.f32.mrf.mxu0
  %v3308 = vadd.f32 0.0, %v3307
  %3309 = vmatprep.mubr.bf16.mxu0 %v2345
  %3310 = vmatmul.mubr.bf16.gmra.mxu0 %v2344
  %v3311 = vpop.f32.mrf.mxu0
  %v3312 = vadd.f32 0.0, %v3311
  %v3313 = vpop.f32.mrf.mxu0
  %v3314 = vadd.f32 0.0, %v3313
  %v3315 = vpop.f32.mrf.mxu0
  %v3316 = vadd.f32 0.0, %v3315
  %v3317 = vpop.f32.mrf.mxu0
  %v3318 = vadd.f32 0.0, %v3317
  %3319 = vmatprep.mubr.bf16.mxu0 %v2351
  %3320 = vmatmul.mubr.bf16.gmra.mxu0 %v2350
  %v3321 = vpop.f32.mrf.mxu0
  %v3322 = vadd.f32 0.0, %v3321
  %v3323 = vpop.f32.mrf.mxu0
  %v3324 = vadd.f32 0.0, %v3323
  %v3325 = vpop.f32.mrf.mxu0
  %v3326 = vadd.f32 0.0, %v3325
  %v3327 = vpop.f32.mrf.mxu0
  %v3328 = vadd.f32 0.0, %v3327
  %3329 = vmatprep.mubr.bf16.mxu0 %v2357
  %3330 = vmatmul.mubr.bf16.gmra.mxu0 %v2356
  %v3331 = vpop.f32.mrf.mxu0
  %v3332 = vadd.f32 0.0, %v3331
  %v3333 = vpop.f32.mrf.mxu0
  %v3334 = vadd.f32 0.0, %v3333
  %v3335 = vpop.f32.mrf.mxu0
  %v3336 = vadd.f32 0.0, %v3335
  %v3337 = vpop.f32.mrf.mxu0
  %v3338 = vadd.f32 0.0, %v3337
  %3339 = vmatprep.mubr.bf16.mxu0 %v2363
  %3340 = vmatmul.mubr.bf16.gmra.mxu0 %v2362
  %v3341 = vpop.f32.mrf.mxu0
  %v3342 = vpop.f32.mrf.mxu0
  %v3343 = vpop.f32.mrf.mxu0
  %v3344 = vpop.f32.mrf.mxu0
  %3345 = vmatprep.mubr.bf16.mxu0 %v2369
  %3346 = vmatmul.mubr.bf16.gmra.mxu0 %v2368
  %v3347 = vpop.f32.mrf.mxu0
  %v3348 = vpop.f32.mrf.mxu0
  %v3349 = vpop.f32.mrf.mxu0
  %v3350 = vpop.f32.mrf.mxu0
  %3351 = vmatprep.mubr.bf16.mxu0 %v2375
  %3352 = vmatmul.mubr.bf16.gmra.mxu0 %v2374
  %v3353 = vpop.f32.mrf.mxu0
  %v3354 = vadd.f32 0.0, %v3353
  %v3355 = vpop.f32.mrf.mxu0
  %v3356 = vadd.f32 0.0, %v3355
  %v3357 = vpop.f32.mrf.mxu0
  %v3358 = vadd.f32 0.0, %v3357
  %v3359 = vpop.f32.mrf.mxu0
  %v3360 = vadd.f32 0.0, %v3359
  %3361 = vmatprep.mubr.bf16.mxu0 %v2381
  %3362 = vmatmul.mubr.bf16.gmra.mxu0 %v2380
  %v3363 = vpop.f32.mrf.mxu0
  %v3364 = vadd.f32 0.0, %v3363
  %v3365 = vpop.f32.mrf.mxu0
  %v3366 = vadd.f32 0.0, %v3365
  %v3367 = vpop.f32.mrf.mxu0
  %v3368 = vadd.f32 0.0, %v3367
  %v3369 = vpop.f32.mrf.mxu0
  %v3370 = vadd.f32 0.0, %v3369
  %3371 = vmatprep.mubr.bf16.mxu0 %v2387
  %3372 = vmatmul.mubr.bf16.gmra.mxu0 %v2386
  %v3373 = vpop.f32.mrf.mxu0
  %v3374 = vadd.f32 0.0, %v3373
  %v3375 = vpop.f32.mrf.mxu0
  %v3376 = vadd.f32 0.0, %v3375
  %v3377 = vpop.f32.mrf.mxu0
  %v3378 = vadd.f32 0.0, %v3377
  %v3379 = vpop.f32.mrf.mxu0
  %v3380 = vadd.f32 0.0, %v3379
  %3381 = vmatprep.mubr.bf16.mxu0 %v2393
  %3382 = vmatmul.mubr.bf16.gmra.mxu0 %v2392
  %v3383 = vpop.f32.mrf.mxu0
  %v3384 = vadd.f32 0.0, %v3383
  %v3385 = vpop.f32.mrf.mxu0
  %v3386 = vadd.f32 0.0, %v3385
  %v3387 = vpop.f32.mrf.mxu0
  %v3388 = vadd.f32 0.0, %v3387
  %v3389 = vpop.f32.mrf.mxu0
  %v3390 = vadd.f32 0.0, %v3389
  %3391 = vmatprep.mubr.bf16.mxu0 %v2399
  %3392 = vmatmul.mubr.bf16.gmra.mxu0 %v2398
  %v3393 = vpop.f32.mrf.mxu0
  %v3394 = vadd.f32 0.0, %v3393
  %v3395 = vpop.f32.mrf.mxu0
  %v3396 = vadd.f32 0.0, %v3395
  %v3397 = vpop.f32.mrf.mxu0
  %v3398 = vadd.f32 0.0, %v3397
  %v3399 = vpop.f32.mrf.mxu0
  %v3400 = vadd.f32 0.0, %v3399
  %3401 = vmatprep.mubr.bf16.mxu0 %v2405
  %3402 = vmatmul.mubr.bf16.gmra.mxu0 %v2404
  %v3403 = vpop.f32.mrf.mxu0
  %v3404 = vadd.f32 0.0, %v3403
  %v3405 = vpop.f32.mrf.mxu0
  %v3406 = vadd.f32 0.0, %v3405
  %v3407 = vpop.f32.mrf.mxu0
  %v3408 = vadd.f32 0.0, %v3407
  %v3409 = vpop.f32.mrf.mxu0
  %v3410 = vadd.f32 0.0, %v3409
  %3411 = vmatprep.mubr.bf16.mxu0 %v2411
  %3412 = vmatmul.mubr.bf16.gmra.mxu0 %v2410
  %v3413 = vpop.f32.mrf.mxu0
  %v3414 = vadd.f32 0.0, %v3413
  %v3415 = vpop.f32.mrf.mxu0
  %v3416 = vadd.f32 0.0, %v3415
  %v3417 = vpop.f32.mrf.mxu0
  %v3418 = vadd.f32 0.0, %v3417
  %v3419 = vpop.f32.mrf.mxu0
  %v3420 = vadd.f32 0.0, %v3419
  %3421 = vmatprep.mubr.bf16.mxu0 %v2417
  %3422 = vmatmul.mubr.bf16.gmra.mxu0 %v2416
  %v3423 = vpop.f32.mrf.mxu0
  %v3424 = vadd.f32 0.0, %v3423
  %v3425 = vpop.f32.mrf.mxu0
  %v3426 = vadd.f32 0.0, %v3425
  %v3427 = vpop.f32.mrf.mxu0
  %v3428 = vadd.f32 0.0, %v3427
  %v3429 = vpop.f32.mrf.mxu0
  %v3430 = vadd.f32 0.0, %v3429
  %3431 = vmatprep.mubr.bf16.mxu0 %v2423
  %3432 = vmatmul.mubr.bf16.gmra.mxu0 %v2422
  %v3433 = vpop.f32.mrf.mxu0
  %v3434 = vadd.f32 0.0, %v3433
  %v3435 = vpop.f32.mrf.mxu0
  %v3436 = vadd.f32 0.0, %v3435
  %v3437 = vpop.f32.mrf.mxu0
  %v3438 = vadd.f32 0.0, %v3437
  %v3439 = vpop.f32.mrf.mxu0
  %v3440 = vadd.f32 0.0, %v3439
  %3441 = vmatprep.mubr.bf16.mxu0 %v2429
  %3442 = vmatmul.mubr.bf16.gmra.mxu0 %v2428
  %v3443 = vpop.f32.mrf.mxu0
  %v3444 = vadd.f32 0.0, %v3443
  %v3445 = vpop.f32.mrf.mxu0
  %v3446 = vadd.f32 0.0, %v3445
  %v3447 = vpop.f32.mrf.mxu0
  %v3448 = vadd.f32 0.0, %v3447
  %v3449 = vpop.f32.mrf.mxu0
  %v3450 = vadd.f32 0.0, %v3449
  %3451 = vmatprep.mubr.bf16.mxu0 %v2435
  %3452 = vmatmul.mubr.bf16.gmra.mxu0 %v2434
  %v3453 = vpop.f32.mrf.mxu0
  %v3454 = vadd.f32 0.0, %v3453
  %v3455 = vpop.f32.mrf.mxu0
  %v3456 = vadd.f32 0.0, %v3455
  %v3457 = vpop.f32.mrf.mxu0
  %v3458 = vadd.f32 0.0, %v3457
  %v3459 = vpop.f32.mrf.mxu0
  %v3460 = vadd.f32 0.0, %v3459
  %3461 = vmatprep.mubr.bf16.mxu0 %v2441
  %3462 = vmatmul.mubr.bf16.gmra.mxu0 %v2440
  %v3463 = vpop.f32.mrf.mxu0
  %v3464 = vadd.f32 0.0, %v3463
  %v3465 = vpop.f32.mrf.mxu0
  %v3466 = vadd.f32 0.0, %v3465
  %v3467 = vpop.f32.mrf.mxu0
  %v3468 = vadd.f32 0.0, %v3467
  %v3469 = vpop.f32.mrf.mxu0
  %v3470 = vadd.f32 0.0, %v3469
  %3471 = vmatprep.mubr.bf16.mxu0 %v2447
  %3472 = vmatmul.mubr.bf16.gmra.mxu0 %v2446
  %v3473 = vpop.f32.mrf.mxu0
  %v3474 = vadd.f32 0.0, %v3473
  %v3475 = vpop.f32.mrf.mxu0
  %v3476 = vadd.f32 0.0, %v3475
  %v3477 = vpop.f32.mrf.mxu0
  %v3478 = vadd.f32 0.0, %v3477
  %v3479 = vpop.f32.mrf.mxu0
  %v3480 = vadd.f32 0.0, %v3479
  %3481 = vmatprep.mubr.bf16.mxu0 %v2585
  %3482 = vmatmul.mubr.bf16.gmra.mxu0 %v2584
  %v3483 = vpop.f32.mrf.mxu0
  %v3484 = vadd.f32 0.0, %v3483
  %v3485 = vpop.f32.mrf.mxu0
  %v3486 = vadd.f32 0.0, %v3485
  %v3487 = vpop.f32.mrf.mxu0
  %v3488 = vadd.f32 0.0, %v3487
  %v3489 = vpop.f32.mrf.mxu0
  %v3490 = vadd.f32 0.0, %v3489
  %3491 = vdwg.mxu0
  %3492 = vmatprep.subr.bf16.mxu0 %v3022
  %3493 = vmatpush1.bf16.msra.mxu0 %v3021
  %3494 = vmatprep.subr.bf16.mxu0 %v3020
  %3495 = vmatpush1.bf16.msra.mxu0 %v3019
  %3496 = vmatprep.subr.bf16.mxu0 %v3018
  %3497 = vmatpush1.bf16.msra.mxu0 %v3017
  %3498 = vmatprep.subr.bf16.mxu0 %v3016
  %3499 = vmatpush1.bf16.msra.mxu0 %v3015
  %3500 = vmatprep.subr.bf16.mxu0 %v3014
  %3501 = vmatpush1.bf16.msra.mxu0 %v3013
  %3502 = vmatprep.subr.bf16.mxu0 %v3012
  %3503 = vmatpush1.bf16.msra.mxu0 %v3011
  %3504 = vmatprep.subr.bf16.mxu0 %v3010
  %3505 = vmatpush1.bf16.msra.mxu0 %v3009
  %3506 = vmatprep.subr.bf16.mxu0 %v3008
  %3507 = vmatpush1.bf16.msra.mxu0 %v3007
  %3508 = vmatprep.subr.bf16.mxu0 %v3038
  %3509 = vmatpush2.bf16.msra.mxu0 %v3037
  %3510 = vmatprep.subr.bf16.mxu0 %v3036
  %3511 = vmatpush2.bf16.msra.mxu0 %v3035
  %3512 = vmatprep.subr.bf16.mxu0 %v3034
  %3513 = vmatpush2.bf16.msra.mxu0 %v3033
  %3514 = vmatprep.subr.bf16.mxu0 %v3032
  %3515 = vmatpush2.bf16.msra.mxu0 %v3031
  %3516 = vmatprep.subr.bf16.mxu0 %v3030
  %3517 = vmatpush2.bf16.msra.mxu0 %v3029
  %3518 = vmatprep.subr.bf16.mxu0 %v3028
  %3519 = vmatpush2.bf16.msra.mxu0 %v3027
  %3520 = vmatprep.subr.bf16.mxu0 %v3026
  %3521 = vmatpush2.bf16.msra.mxu0 %v3025
  %3522 = vmatprep.subr.bf16.mxu0 %v3024
  %3523 = vmatpush2.bf16.msra.mxu0 %v3023
  %3524 = vmatprep.mubr.bf16.mxu0 %v2281
  %3525 = vmatmul.mubr.bf16.gmra.mxu0 %v2280
  %v3526 = vpop.f32.mrf.mxu0
  %v3527 = vadd.f32 %v3202, %v3526
  %v3528 = vpop.f32.mrf.mxu0
  %v3529 = vadd.f32 %v3204, %v3528
  %v3530 = vpop.f32.mrf.mxu0
  %v3531 = vadd.f32 %v3206, %v3530
  %v3532 = vpop.f32.mrf.mxu0
  %v3533 = vadd.f32 %v3208, %v3532
  %3534 = vmatprep.mubr.bf16.mxu0 %v2287
  %3535 = vmatmul.mubr.bf16.gmra.mxu0 %v2286
  %v3536 = vpop.f32.mrf.mxu0
  %v3537 = vadd.f32 %v3212, %v3536
  %v3538 = vpop.f32.mrf.mxu0
  %v3539 = vadd.f32 %v3214, %v3538
  %v3540 = vpop.f32.mrf.mxu0
  %v3541 = vadd.f32 %v3216, %v3540
  %v3542 = vpop.f32.mrf.mxu0
  %v3543 = vadd.f32 %v3218, %v3542
  %3544 = vmatprep.mubr.bf16.mxu0 %v2293
  %3545 = vmatmul.mubr.bf16.gmra.mxu0 %v2292
  %v3546 = vpop.f32.mrf.mxu0
  %v3547 = vadd.f32 %v3222, %v3546
  %v3548 = vpop.f32.mrf.mxu0
  %v3549 = vadd.f32 %v3224, %v3548
  %v3550 = vpop.f32.mrf.mxu0
  %v3551 = vadd.f32 %v3226, %v3550
  %v3552 = vpop.f32.mrf.mxu0
  %v3553 = vadd.f32 %v3228, %v3552
  %3554 = vmatprep.mubr.bf16.mxu0 %v2299
  %3555 = vmatmul.mubr.bf16.gmra.mxu0 %v2298
  %v3556 = vpop.f32.mrf.mxu0
  %v3557 = vadd.f32 %v3232, %v3556
  %v3558 = vpop.f32.mrf.mxu0
  %v3559 = vadd.f32 %v3234, %v3558
  %v3560 = vpop.f32.mrf.mxu0
  %v3561 = vadd.f32 %v3236, %v3560
  %v3562 = vpop.f32.mrf.mxu0
  %v3563 = vadd.f32 %v3238, %v3562
  %3564 = vmatprep.mubr.bf16.mxu0 %v2305
  %3565 = vmatmul.mubr.bf16.gmra.mxu0 %v2304
  %v3566 = vpop.f32.mrf.mxu0
  %v3567 = vadd.f32 %v3242, %v3566
  %v3568 = vpop.f32.mrf.mxu0
  %v3569 = vadd.f32 %v3244, %v3568
  %v3570 = vpop.f32.mrf.mxu0
  %v3571 = vadd.f32 %v3246, %v3570
  %v3572 = vpop.f32.mrf.mxu0
  %v3573 = vadd.f32 %v3248, %v3572
  %3574 = vmatprep.mubr.bf16.mxu0 %v2311
  %3575 = vmatmul.mubr.bf16.gmra.mxu0 %v2310
  %v3576 = vpop.f32.mrf.mxu0
  %v3577 = vadd.f32 %v3252, %v3576
  %v3578 = vpop.f32.mrf.mxu0
  %v3579 = vadd.f32 %v3254, %v3578
  %v3580 = vpop.f32.mrf.mxu0
  %v3581 = vadd.f32 %v3256, %v3580
  %v3582 = vpop.f32.mrf.mxu0
  %v3583 = vadd.f32 %v3258, %v3582
  %3584 = vmatprep.mubr.bf16.mxu0 %v2317
  %3585 = vmatmul.mubr.bf16.gmra.mxu0 %v2316
  %v3586 = vpop.f32.mrf.mxu0
  %v3587 = vadd.f32 %v3262, %v3586
  %v3588 = vpop.f32.mrf.mxu0
  %v3589 = vadd.f32 %v3264, %v3588
  %v3590 = vpop.f32.mrf.mxu0
  %v3591 = vadd.f32 %v3266, %v3590
  %v3592 = vpop.f32.mrf.mxu0
  %v3593 = vadd.f32 %v3268, %v3592
  %3594 = vmatprep.mubr.bf16.mxu0 %v2323
  %3595 = vmatmul.mubr.bf16.gmra.mxu0 %v2322
  %v3596 = vpop.f32.mrf.mxu0
  %v3597 = vadd.f32 %v3272, %v3596
  %v3598 = vpop.f32.mrf.mxu0
  %v3599 = vadd.f32 %v3274, %v3598
  %v3600 = vpop.f32.mrf.mxu0
  %v3601 = vadd.f32 %v3276, %v3600
  %v3602 = vpop.f32.mrf.mxu0
  %v3603 = vadd.f32 %v3278, %v3602
  %3604 = vmatprep.mubr.bf16.mxu0 %v2329
  %3605 = vmatmul.mubr.bf16.gmra.mxu0 %v2328
  %v3606 = vpop.f32.mrf.mxu0
  %v3607 = vadd.f32 %v3282, %v3606
  %v3608 = vpop.f32.mrf.mxu0
  %v3609 = vadd.f32 %v3284, %v3608
  %v3610 = vpop.f32.mrf.mxu0
  %v3611 = vadd.f32 %v3286, %v3610
  %v3612 = vpop.f32.mrf.mxu0
  %v3613 = vadd.f32 %v3288, %v3612
  %3614 = vmatprep.mubr.bf16.mxu0 %v2335
  %3615 = vmatmul.mubr.bf16.gmra.mxu0 %v2334
  %v3616 = vpop.f32.mrf.mxu0
  %v3617 = vadd.f32 %v3292, %v3616
  %v3618 = vpop.f32.mrf.mxu0
  %v3619 = vadd.f32 %v3294, %v3618
  %v3620 = vpop.f32.mrf.mxu0
  %v3621 = vadd.f32 %v3296, %v3620
  %v3622 = vpop.f32.mrf.mxu0
  %v3623 = vadd.f32 %v3298, %v3622
  %3624 = vmatprep.mubr.bf16.mxu0 %v2341
  %3625 = vmatmul.mubr.bf16.gmra.mxu0 %v2340
  %v3626 = vpop.f32.mrf.mxu0
  %v3627 = vadd.f32 %v3302, %v3626
  %v3628 = vpop.f32.mrf.mxu0
  %v3629 = vadd.f32 %v3304, %v3628
  %v3630 = vpop.f32.mrf.mxu0
  %v3631 = vadd.f32 %v3306, %v3630
  %v3632 = vpop.f32.mrf.mxu0
  %v3633 = vadd.f32 %v3308, %v3632
  %3634 = vmatprep.mubr.bf16.mxu0 %v2347
  %3635 = vmatmul.mubr.bf16.gmra.mxu0 %v2346
  %v3636 = vpop.f32.mrf.mxu0
  %v3637 = vadd.f32 %v3312, %v3636
  %v3638 = vpop.f32.mrf.mxu0
  %v3639 = vadd.f32 %v3314, %v3638
  %v3640 = vpop.f32.mrf.mxu0
  %v3641 = vadd.f32 %v3316, %v3640
  %v3642 = vpop.f32.mrf.mxu0
  %v3643 = vadd.f32 %v3318, %v3642
  %3644 = vmatprep.mubr.bf16.mxu0 %v2353
  %3645 = vmatmul.mubr.bf16.gmra.mxu0 %v2352
  %v3646 = vpop.f32.mrf.mxu0
  %v3647 = vadd.f32 %v3322, %v3646
  %v3648 = vpop.f32.mrf.mxu0
  %v3649 = vadd.f32 %v3324, %v3648
  %v3650 = vpop.f32.mrf.mxu0
  %v3651 = vadd.f32 %v3326, %v3650
  %v3652 = vpop.f32.mrf.mxu0
  %v3653 = vadd.f32 %v3328, %v3652
  %3654 = vmatprep.mubr.bf16.mxu0 %v2359
  %3655 = vmatmul.mubr.bf16.gmra.mxu0 %v2358
  %v3656 = vpop.f32.mrf.mxu0
  %v3657 = vadd.f32 %v3332, %v3656
  %v3658 = vpop.f32.mrf.mxu0
  %v3659 = vadd.f32 %v3334, %v3658
  %v3660 = vpop.f32.mrf.mxu0
  %v3661 = vadd.f32 %v3336, %v3660
  %v3662 = vpop.f32.mrf.mxu0
  %v3663 = vadd.f32 %v3338, %v3662
  %3664 = vmatprep.mubr.bf16.mxu0 %v2365
  %3665 = vmatmul.mubr.bf16.gmra.mxu0 %v2364
  %v3666 = vpop.f32.mrf.mxu0
  %v3667 = vpop.f32.mrf.mxu0
  %v3668 = vpop.f32.mrf.mxu0
  %v3669 = vpop.f32.mrf.mxu0
  %3670 = vmatprep.mubr.bf16.mxu0 %v2371
  %3671 = vmatmul.mubr.bf16.gmra.mxu0 %v2370
  %v3672 = vpop.f32.mrf.mxu0
  %v3673 = vpop.f32.mrf.mxu0
  %v3674 = vpop.f32.mrf.mxu0
  %v3675 = vpop.f32.mrf.mxu0
  %3676 = vmatprep.mubr.bf16.mxu0 %v2377
  %3677 = vmatmul.mubr.bf16.gmra.mxu0 %v2376
  %v3678 = vpop.f32.mrf.mxu0
  %v3679 = vadd.f32 %v3354, %v3678
  %v3680 = vpop.f32.mrf.mxu0
  %v3681 = vadd.f32 %v3356, %v3680
  %v3682 = vpop.f32.mrf.mxu0
  %v3683 = vadd.f32 %v3358, %v3682
  %v3684 = vpop.f32.mrf.mxu0
  %v3685 = vadd.f32 %v3360, %v3684
  %3686 = vmatprep.mubr.bf16.mxu0 %v2383
  %3687 = vmatmul.mubr.bf16.gmra.mxu0 %v2382
  %v3688 = vpop.f32.mrf.mxu0
  %v3689 = vadd.f32 %v3364, %v3688
  %v3690 = vpop.f32.mrf.mxu0
  %v3691 = vadd.f32 %v3366, %v3690
  %v3692 = vpop.f32.mrf.mxu0
  %v3693 = vadd.f32 %v3368, %v3692
  %v3694 = vpop.f32.mrf.mxu0
  %v3695 = vadd.f32 %v3370, %v3694
  %3696 = vmatprep.mubr.bf16.mxu0 %v2389
  %3697 = vmatmul.mubr.bf16.gmra.mxu0 %v2388
  %v3698 = vpop.f32.mrf.mxu0
  %v3699 = vadd.f32 %v3374, %v3698
  %v3700 = vpop.f32.mrf.mxu0
  %v3701 = vadd.f32 %v3376, %v3700
  %v3702 = vpop.f32.mrf.mxu0
  %v3703 = vadd.f32 %v3378, %v3702
  %v3704 = vpop.f32.mrf.mxu0
  %v3705 = vadd.f32 %v3380, %v3704
  %3706 = vmatprep.mubr.bf16.mxu0 %v2395
  %3707 = vmatmul.mubr.bf16.gmra.mxu0 %v2394
  %v3708 = vpop.f32.mrf.mxu0
  %v3709 = vadd.f32 %v3384, %v3708
  %v3710 = vpop.f32.mrf.mxu0
  %v3711 = vadd.f32 %v3386, %v3710
  %v3712 = vpop.f32.mrf.mxu0
  %v3713 = vadd.f32 %v3388, %v3712
  %v3714 = vpop.f32.mrf.mxu0
  %v3715 = vadd.f32 %v3390, %v3714
  %3716 = vmatprep.mubr.bf16.mxu0 %v2401
  %3717 = vmatmul.mubr.bf16.gmra.mxu0 %v2400
  %v3718 = vpop.f32.mrf.mxu0
  %v3719 = vadd.f32 %v3394, %v3718
  %v3720 = vpop.f32.mrf.mxu0
  %v3721 = vadd.f32 %v3396, %v3720
  %v3722 = vpop.f32.mrf.mxu0
  %v3723 = vadd.f32 %v3398, %v3722
  %v3724 = vpop.f32.mrf.mxu0
  %v3725 = vadd.f32 %v3400, %v3724
  %3726 = vmatprep.mubr.bf16.mxu0 %v2407
  %3727 = vmatmul.mubr.bf16.gmra.mxu0 %v2406
  %v3728 = vpop.f32.mrf.mxu0
  %v3729 = vadd.f32 %v3404, %v3728
  %v3730 = vpop.f32.mrf.mxu0
  %v3731 = vadd.f32 %v3406, %v3730
  %v3732 = vpop.f32.mrf.mxu0
  %v3733 = vadd.f32 %v3408, %v3732
  %v3734 = vpop.f32.mrf.mxu0
  %v3735 = vadd.f32 %v3410, %v3734
  %3736 = vmatprep.mubr.bf16.mxu0 %v2413
  %3737 = vmatmul.mubr.bf16.gmra.mxu0 %v2412
  %v3738 = vpop.f32.mrf.mxu0
  %v3739 = vadd.f32 %v3414, %v3738
  %v3740 = vpop.f32.mrf.mxu0
  %v3741 = vadd.f32 %v3416, %v3740
  %v3742 = vpop.f32.mrf.mxu0
  %v3743 = vadd.f32 %v3418, %v3742
  %v3744 = vpop.f32.mrf.mxu0
  %v3745 = vadd.f32 %v3420, %v3744
  %3746 = vmatprep.mubr.bf16.mxu0 %v2419
  %3747 = vmatmul.mubr.bf16.gmra.mxu0 %v2418
  %v3748 = vpop.f32.mrf.mxu0
  %v3749 = vadd.f32 %v3424, %v3748
  %v3750 = vpop.f32.mrf.mxu0
  %v3751 = vadd.f32 %v3426, %v3750
  %v3752 = vpop.f32.mrf.mxu0
  %v3753 = vadd.f32 %v3428, %v3752
  %v3754 = vpop.f32.mrf.mxu0
  %v3755 = vadd.f32 %v3430, %v3754
  %3756 = vmatprep.mubr.bf16.mxu0 %v2425
  %3757 = vmatmul.mubr.bf16.gmra.mxu0 %v2424
  %v3758 = vpop.f32.mrf.mxu0
  %v3759 = vadd.f32 %v3434, %v3758
  %v3760 = vpop.f32.mrf.mxu0
  %v3761 = vadd.f32 %v3436, %v3760
  %v3762 = vpop.f32.mrf.mxu0
  %v3763 = vadd.f32 %v3438, %v3762
  %v3764 = vpop.f32.mrf.mxu0
  %v3765 = vadd.f32 %v3440, %v3764
  %3766 = vmatprep.mubr.bf16.mxu0 %v2431
  %3767 = vmatmul.mubr.bf16.gmra.mxu0 %v2430
  %v3768 = vpop.f32.mrf.mxu0
  %v3769 = vadd.f32 %v3444, %v3768
  %v3770 = vpop.f32.mrf.mxu0
  %v3771 = vadd.f32 %v3446, %v3770
  %v3772 = vpop.f32.mrf.mxu0
  %v3773 = vadd.f32 %v3448, %v3772
  %v3774 = vpop.f32.mrf.mxu0
  %v3775 = vadd.f32 %v3450, %v3774
  %3776 = vmatprep.mubr.bf16.mxu0 %v2437
  %3777 = vmatmul.mubr.bf16.gmra.mxu0 %v2436
  %v3778 = vpop.f32.mrf.mxu0
  %v3779 = vadd.f32 %v3454, %v3778
  %v3780 = vpop.f32.mrf.mxu0
  %v3781 = vadd.f32 %v3456, %v3780
  %v3782 = vpop.f32.mrf.mxu0
  %v3783 = vadd.f32 %v3458, %v3782
  %v3784 = vpop.f32.mrf.mxu0
  %v3785 = vadd.f32 %v3460, %v3784
  %3786 = vmatprep.mubr.bf16.mxu0 %v2443
  %3787 = vmatmul.mubr.bf16.gmra.mxu0 %v2442
  %v3788 = vpop.f32.mrf.mxu0
  %v3789 = vadd.f32 %v3464, %v3788
  %v3790 = vpop.f32.mrf.mxu0
  %v3791 = vadd.f32 %v3466, %v3790
  %v3792 = vpop.f32.mrf.mxu0
  %v3793 = vadd.f32 %v3468, %v3792
  %v3794 = vpop.f32.mrf.mxu0
  %v3795 = vadd.f32 %v3470, %v3794
  %3796 = vmatprep.mubr.bf16.mxu0 %v2581
  %3797 = vmatmul.mubr.bf16.gmra.mxu0 %v2580
  %v3798 = vpop.f32.mrf.mxu0
  %v3799 = vadd.f32 %v3474, %v3798
  %v3800 = vpop.f32.mrf.mxu0
  %v3801 = vadd.f32 %v3476, %v3800
  %v3802 = vpop.f32.mrf.mxu0
  %v3803 = vadd.f32 %v3478, %v3802
  %v3804 = vpop.f32.mrf.mxu0
  %v3805 = vadd.f32 %v3480, %v3804
  %3806 = vmatprep.mubr.bf16.mxu0 %v2587
  %3807 = vmatmul.mubr.bf16.gmra.mxu0 %v2586
  %v3808 = vpop.f32.mrf.mxu0
  %v3809 = vadd.f32 %v3484, %v3808
  %v3810 = vpop.f32.mrf.mxu0
  %v3811 = vadd.f32 %v3486, %v3810
  %v3812 = vpop.f32.mrf.mxu0
  %v3813 = vadd.f32 %v3488, %v3812
  %v3814 = vpop.f32.mrf.mxu0
  %v3815 = vadd.f32 %v3490, %v3814
  %3816 = vdwg.mxu0
  %3817 = vmatprep.subr.bf16.mxu0 %v3054
  %3818 = vmatpush1.bf16.msra.mxu0 %v3053
  %3819 = vmatprep.subr.bf16.mxu0 %v3052
  %3820 = vmatpush1.bf16.msra.mxu0 %v3051
  %3821 = vmatprep.subr.bf16.mxu0 %v3050
  %3822 = vmatpush1.bf16.msra.mxu0 %v3049
  %3823 = vmatprep.subr.bf16.mxu0 %v3048
  %3824 = vmatpush1.bf16.msra.mxu0 %v3047
  %3825 = vmatprep.subr.bf16.mxu0 %v3046
  %3826 = vmatpush1.bf16.msra.mxu0 %v3045
  %3827 = vmatprep.subr.bf16.mxu0 %v3044
  %3828 = vmatpush1.bf16.msra.mxu0 %v3043
  %3829 = vmatprep.subr.bf16.mxu0 %v3042
  %3830 = vmatpush1.bf16.msra.mxu0 %v3041
  %3831 = vmatprep.subr.bf16.mxu0 %v3040
  %3832 = vmatpush1.bf16.msra.mxu0 %v3039
  %3833 = vmatprep.subr.bf16.mxu0 %v3070
  %3834 = vmatpush2.bf16.msra.mxu0 %v3069
  %3835 = vmatprep.subr.bf16.mxu0 %v3068
  %3836 = vmatpush2.bf16.msra.mxu0 %v3067
  %3837 = vmatprep.subr.bf16.mxu0 %v3066
  %3838 = vmatpush2.bf16.msra.mxu0 %v3065
  %3839 = vmatprep.subr.bf16.mxu0 %v3064
  %3840 = vmatpush2.bf16.msra.mxu0 %v3063
  %3841 = vmatprep.subr.bf16.mxu0 %v3062
  %3842 = vmatpush2.bf16.msra.mxu0 %v3061
  %3843 = vmatprep.subr.bf16.mxu0 %v3060
  %3844 = vmatpush2.bf16.msra.mxu0 %v3059
  %3845 = vmatprep.subr.bf16.mxu0 %v3058
  %3846 = vmatpush2.bf16.msra.mxu0 %v3057
  %3847 = vmatprep.subr.bf16.mxu0 %v3056
  %3848 = vmatpush2.bf16.msra.mxu0 %v3055
  %3849 = vmatprep.mubr.bf16.mxu0 %v2283
  %3850 = vmatmul.mubr.bf16.gmra.mxu0 %v2282
  %v3851 = vpop.f32.mrf.mxu0
  %v3852 = vadd.f32 %v3527, %v3851
  %v3853 = vpop.f32.mrf.mxu0
  %v3854 = vadd.f32 %v3529, %v3853
  %v3855 = vpop.f32.mrf.mxu0
  %v3856 = vadd.f32 %v3531, %v3855
  %v3857 = vpop.f32.mrf.mxu0
  %v3858 = vadd.f32 %v3533, %v3857
  %3859 = vmatprep.mubr.bf16.mxu0 %v2289
  %3860 = vmatmul.mubr.bf16.gmra.mxu0 %v2288
  %v3861 = vpop.f32.mrf.mxu0
  %v3862 = vadd.f32 %v3537, %v3861
  %v3863 = vpop.f32.mrf.mxu0
  %v3864 = vadd.f32 %v3539, %v3863
  %v3865 = vpop.f32.mrf.mxu0
  %v3866 = vadd.f32 %v3541, %v3865
  %v3867 = vpop.f32.mrf.mxu0
  %v3868 = vadd.f32 %v3543, %v3867
  %3869 = vmatprep.mubr.bf16.mxu0 %v2295
  %3870 = vmatmul.mubr.bf16.gmra.mxu0 %v2294
  %v3871 = vpop.f32.mrf.mxu0
  %v3872 = vadd.f32 %v3547, %v3871
  %v3873 = vpop.f32.mrf.mxu0
  %v3874 = vadd.f32 %v3549, %v3873
  %v3875 = vpop.f32.mrf.mxu0
  %v3876 = vadd.f32 %v3551, %v3875
  %v3877 = vpop.f32.mrf.mxu0
  %v3878 = vadd.f32 %v3553, %v3877
  %3879 = vmatprep.mubr.bf16.mxu0 %v2301
  %3880 = vmatmul.mubr.bf16.gmra.mxu0 %v2300
  %v3881 = vpop.f32.mrf.mxu0
  %v3882 = vadd.f32 %v3557, %v3881
  %v3883 = vpop.f32.mrf.mxu0
  %v3884 = vadd.f32 %v3559, %v3883
  %v3885 = vpop.f32.mrf.mxu0
  %v3886 = vadd.f32 %v3561, %v3885
  %v3887 = vpop.f32.mrf.mxu0
  %v3888 = vadd.f32 %v3563, %v3887
  %3889 = vmatprep.mubr.bf16.mxu0 %v2307
  %3890 = vmatmul.mubr.bf16.gmra.mxu0 %v2306
  %v3891 = vpop.f32.mrf.mxu0
  %v3892 = vadd.f32 %v3567, %v3891
  %v3893 = vpop.f32.mrf.mxu0
  %v3894 = vadd.f32 %v3569, %v3893
  %v3895 = vpop.f32.mrf.mxu0
  %v3896 = vadd.f32 %v3571, %v3895
  %v3897 = vpop.f32.mrf.mxu0
  %v3898 = vadd.f32 %v3573, %v3897
  %3899 = vmatprep.mubr.bf16.mxu0 %v2313
  %3900 = vmatmul.mubr.bf16.gmra.mxu0 %v2312
  %v3901 = vpop.f32.mrf.mxu0
  %v3902 = vadd.f32 %v3577, %v3901
  %v3903 = vpop.f32.mrf.mxu0
  %v3904 = vadd.f32 %v3579, %v3903
  %v3905 = vpop.f32.mrf.mxu0
  %v3906 = vadd.f32 %v3581, %v3905
  %v3907 = vpop.f32.mrf.mxu0
  %v3908 = vadd.f32 %v3583, %v3907
  %3909 = vmatprep.mubr.bf16.mxu0 %v2319
  %3910 = vmatmul.mubr.bf16.gmra.mxu0 %v2318
  %v3911 = vpop.f32.mrf.mxu0
  %v3912 = vadd.f32 %v3587, %v3911
  %v3913 = vpop.f32.mrf.mxu0
  %v3914 = vadd.f32 %v3589, %v3913
  %v3915 = vpop.f32.mrf.mxu0
  %v3916 = vadd.f32 %v3591, %v3915
  %v3917 = vpop.f32.mrf.mxu0
  %v3918 = vadd.f32 %v3593, %v3917
  %3919 = vmatprep.mubr.bf16.mxu0 %v2325
  %3920 = vmatmul.mubr.bf16.gmra.mxu0 %v2324
  %v3921 = vpop.f32.mrf.mxu0
  %v3922 = vadd.f32 %v3597, %v3921
  %v3923 = vpop.f32.mrf.mxu0
  %v3924 = vadd.f32 %v3599, %v3923
  %v3925 = vpop.f32.mrf.mxu0
  %v3926 = vadd.f32 %v3601, %v3925
  %v3927 = vpop.f32.mrf.mxu0
  %v3928 = vadd.f32 %v3603, %v3927
  %3929 = vmatprep.mubr.bf16.mxu0 %v2331
  %3930 = vmatmul.mubr.bf16.gmra.mxu0 %v2330
  %v3931 = vpop.f32.mrf.mxu0
  %v3932 = vadd.f32 %v3607, %v3931
  %v3933 = vpop.f32.mrf.mxu0
  %v3934 = vadd.f32 %v3609, %v3933
  %v3935 = vpop.f32.mrf.mxu0
  %v3936 = vadd.f32 %v3611, %v3935
  %v3937 = vpop.f32.mrf.mxu0
  %v3938 = vadd.f32 %v3613, %v3937
  %3939 = vmatprep.mubr.bf16.mxu0 %v2337
  %3940 = vmatmul.mubr.bf16.gmra.mxu0 %v2336
  %v3941 = vpop.f32.mrf.mxu0
  %v3942 = vadd.f32 %v3617, %v3941
  %v3943 = vpop.f32.mrf.mxu0
  %v3944 = vadd.f32 %v3619, %v3943
  %v3945 = vpop.f32.mrf.mxu0
  %v3946 = vadd.f32 %v3621, %v3945
  %v3947 = vpop.f32.mrf.mxu0
  %v3948 = vadd.f32 %v3623, %v3947
  %3949 = vmatprep.mubr.bf16.mxu0 %v2343
  %3950 = vmatmul.mubr.bf16.gmra.mxu0 %v2342
  %v3951 = vpop.f32.mrf.mxu0
  %v3952 = vadd.f32 %v3627, %v3951
  %v3953 = vpop.f32.mrf.mxu0
  %v3954 = vadd.f32 %v3629, %v3953
  %v3955 = vpop.f32.mrf.mxu0
  %v3956 = vadd.f32 %v3631, %v3955
  %v3957 = vpop.f32.mrf.mxu0
  %v3958 = vadd.f32 %v3633, %v3957
  %3959 = vmatprep.mubr.bf16.mxu0 %v2349
  %3960 = vmatmul.mubr.bf16.gmra.mxu0 %v2348
  %v3961 = vpop.f32.mrf.mxu0
  %v3962 = vadd.f32 %v3637, %v3961
  %v3963 = vpop.f32.mrf.mxu0
  %v3964 = vadd.f32 %v3639, %v3963
  %v3965 = vpop.f32.mrf.mxu0
  %v3966 = vadd.f32 %v3641, %v3965
  %v3967 = vpop.f32.mrf.mxu0
  %v3968 = vadd.f32 %v3643, %v3967
  %3969 = vmatprep.mubr.bf16.mxu0 %v2355
  %3970 = vmatmul.mubr.bf16.gmra.mxu0 %v2354
  %v3971 = vpop.f32.mrf.mxu0
  %v3972 = vadd.f32 %v3647, %v3971
  %v3973 = vpop.f32.mrf.mxu0
  %v3974 = vadd.f32 %v3649, %v3973
  %v3975 = vpop.f32.mrf.mxu0
  %v3976 = vadd.f32 %v3651, %v3975
  %v3977 = vpop.f32.mrf.mxu0
  %v3978 = vadd.f32 %v3653, %v3977
  %3979 = vmatprep.mubr.bf16.mxu0 %v2361
  %3980 = vmatmul.mubr.bf16.gmra.mxu0 %v2360
  %v3981 = vpop.f32.mrf.mxu0
  %v3982 = vadd.f32 %v3657, %v3981
  %v3983 = vpop.f32.mrf.mxu0
  %v3984 = vadd.f32 %v3659, %v3983
  %v3985 = vpop.f32.mrf.mxu0
  %v3986 = vadd.f32 %v3661, %v3985
  %v3987 = vpop.f32.mrf.mxu0
  %v3988 = vadd.f32 %v3663, %v3987
  %3989 = vmatprep.mubr.bf16.mxu0 %v2367
  %3990 = vmatmul.mubr.bf16.gmra.mxu0 %v2366
  %v3991 = vpop.f32.mrf.mxu0
  %v3992 = vpop.f32.mrf.mxu0
  %v3993 = vpop.f32.mrf.mxu0
  %v3994 = vpop.f32.mrf.mxu0
  %3995 = vmatprep.mubr.bf16.mxu0 %v2373
  %3996 = vmatmul.mubr.bf16.gmra.mxu0 %v2372
  %v3997 = vpop.f32.mrf.mxu0
  %v3998 = vpop.f32.mrf.mxu0
  %v3999 = vpop.f32.mrf.mxu0
  %v4000 = vpop.f32.mrf.mxu0
  %4001 = vmatprep.mubr.bf16.mxu0 %v2379
  %4002 = vmatmul.mubr.bf16.gmra.mxu0 %v2378
  %v4003 = vpop.f32.mrf.mxu0
  %v4004 = vadd.f32 %v3679, %v4003
  %v4005 = vpop.f32.mrf.mxu0
  %v4006 = vadd.f32 %v3681, %v4005
  %v4007 = vpop.f32.mrf.mxu0
  %v4008 = vadd.f32 %v3683, %v4007
  %v4009 = vpop.f32.mrf.mxu0
  %v4010 = vadd.f32 %v3685, %v4009
  %4011 = vmatprep.mubr.bf16.mxu0 %v2385
  %4012 = vmatmul.mubr.bf16.gmra.mxu0 %v2384
  %v4013 = vpop.f32.mrf.mxu0
  %v4014 = vadd.f32 %v3689, %v4013
  %v4015 = vpop.f32.mrf.mxu0
  %v4016 = vadd.f32 %v3691, %v4015
  %v4017 = vpop.f32.mrf.mxu0
  %v4018 = vadd.f32 %v3693, %v4017
  %v4019 = vpop.f32.mrf.mxu0
  %v4020 = vadd.f32 %v3695, %v4019
  %4021 = vmatprep.mubr.bf16.mxu0 %v2391
  %4022 = vmatmul.mubr.bf16.gmra.mxu0 %v2390
  %v4023 = vpop.f32.mrf.mxu0
  %v4024 = vadd.f32 %v3699, %v4023
  %v4025 = vpop.f32.mrf.mxu0
  %v4026 = vadd.f32 %v3701, %v4025
  %v4027 = vpop.f32.mrf.mxu0
  %v4028 = vadd.f32 %v3703, %v4027
  %v4029 = vpop.f32.mrf.mxu0
  %v4030 = vadd.f32 %v3705, %v4029
  %4031 = vmatprep.mubr.bf16.mxu0 %v2397
  %4032 = vmatmul.mubr.bf16.gmra.mxu0 %v2396
  %v4033 = vpop.f32.mrf.mxu0
  %v4034 = vadd.f32 %v3709, %v4033
  %v4035 = vpop.f32.mrf.mxu0
  %v4036 = vadd.f32 %v3711, %v4035
  %v4037 = vpop.f32.mrf.mxu0
  %v4038 = vadd.f32 %v3713, %v4037
  %v4039 = vpop.f32.mrf.mxu0
  %v4040 = vadd.f32 %v3715, %v4039
  %4041 = vmatprep.mubr.bf16.mxu0 %v2403
  %4042 = vmatmul.mubr.bf16.gmra.mxu0 %v2402
  %v4043 = vpop.f32.mrf.mxu0
  %v4044 = vadd.f32 %v3719, %v4043
  %v4045 = vpop.f32.mrf.mxu0
  %v4046 = vadd.f32 %v3721, %v4045
  %v4047 = vpop.f32.mrf.mxu0
  %v4048 = vadd.f32 %v3723, %v4047
  %v4049 = vpop.f32.mrf.mxu0
  %v4050 = vadd.f32 %v3725, %v4049
  %4051 = vmatprep.mubr.bf16.mxu0 %v2409
  %4052 = vmatmul.mubr.bf16.gmra.mxu0 %v2408
  %v4053 = vpop.f32.mrf.mxu0
  %v4054 = vadd.f32 %v3729, %v4053
  %v4055 = vpop.f32.mrf.mxu0
  %v4056 = vadd.f32 %v3731, %v4055
  %v4057 = vpop.f32.mrf.mxu0
  %v4058 = vadd.f32 %v3733, %v4057
  %v4059 = vpop.f32.mrf.mxu0
  %v4060 = vadd.f32 %v3735, %v4059
  %4061 = vmatprep.mubr.bf16.mxu0 %v2415
  %4062 = vmatmul.mubr.bf16.gmra.mxu0 %v2414
  %v4063 = vpop.f32.mrf.mxu0
  %v4064 = vadd.f32 %v3739, %v4063
  %v4065 = vpop.f32.mrf.mxu0
  %v4066 = vadd.f32 %v3741, %v4065
  %v4067 = vpop.f32.mrf.mxu0
  %v4068 = vadd.f32 %v3743, %v4067
  %v4069 = vpop.f32.mrf.mxu0
  %v4070 = vadd.f32 %v3745, %v4069
  %4071 = vmatprep.mubr.bf16.mxu0 %v2421
  %4072 = vmatmul.mubr.bf16.gmra.mxu0 %v2420
  %v4073 = vpop.f32.mrf.mxu0
  %v4074 = vadd.f32 %v3749, %v4073
  %v4075 = vpop.f32.mrf.mxu0
  %v4076 = vadd.f32 %v3751, %v4075
  %v4077 = vpop.f32.mrf.mxu0
  %v4078 = vadd.f32 %v3753, %v4077
  %v4079 = vpop.f32.mrf.mxu0
  %v4080 = vadd.f32 %v3755, %v4079
  %4081 = vmatprep.mubr.bf16.mxu0 %v2427
  %4082 = vmatmul.mubr.bf16.gmra.mxu0 %v2426
  %v4083 = vpop.f32.mrf.mxu0
  %v4084 = vadd.f32 %v3759, %v4083
  %v4085 = vpop.f32.mrf.mxu0
  %v4086 = vadd.f32 %v3761, %v4085
  %v4087 = vpop.f32.mrf.mxu0
  %v4088 = vadd.f32 %v3763, %v4087
  %v4089 = vpop.f32.mrf.mxu0
  %v4090 = vadd.f32 %v3765, %v4089
  %4091 = vmatprep.mubr.bf16.mxu0 %v2433
  %4092 = vmatmul.mubr.bf16.gmra.mxu0 %v2432
  %v4093 = vpop.f32.mrf.mxu0
  %v4094 = vadd.f32 %v3769, %v4093
  %v4095 = vpop.f32.mrf.mxu0
  %v4096 = vadd.f32 %v3771, %v4095
  %v4097 = vpop.f32.mrf.mxu0
  %v4098 = vadd.f32 %v3773, %v4097
  %v4099 = vpop.f32.mrf.mxu0
  %v4100 = vadd.f32 %v3775, %v4099
  %4101 = vmatprep.mubr.bf16.mxu0 %v2439
  %4102 = vmatmul.mubr.bf16.gmra.mxu0 %v2438
  %v4103 = vpop.f32.mrf.mxu0
  %v4104 = vadd.f32 %v3779, %v4103
  %v4105 = vpop.f32.mrf.mxu0
  %v4106 = vadd.f32 %v3781, %v4105
  %v4107 = vpop.f32.mrf.mxu0
  %v4108 = vadd.f32 %v3783, %v4107
  %v4109 = vpop.f32.mrf.mxu0
  %v4110 = vadd.f32 %v3785, %v4109
  %4111 = vmatprep.mubr.bf16.mxu0 %v2445
  %4112 = vmatmul.mubr.bf16.gmra.mxu0 %v2444
  %v4113 = vpop.f32.mrf.mxu0
  %v4114 = vadd.f32 %v3789, %v4113
  %v4115 = vpop.f32.mrf.mxu0
  %v4116 = vadd.f32 %v3791, %v4115
  %v4117 = vpop.f32.mrf.mxu0
  %v4118 = vadd.f32 %v3793, %v4117
  %v4119 = vpop.f32.mrf.mxu0
  %v4120 = vadd.f32 %v3795, %v4119
  %4121 = vmatprep.mubr.bf16.mxu0 %v2583
  %4122 = vmatmul.mubr.bf16.gmra.mxu0 %v2582
  %v4123 = vpop.f32.mrf.mxu0
  %v4124 = vadd.f32 %v3799, %v4123
  %v4125 = vpop.f32.mrf.mxu0
  %v4126 = vadd.f32 %v3801, %v4125
  %v4127 = vpop.f32.mrf.mxu0
  %v4128 = vadd.f32 %v3803, %v4127
  %v4129 = vpop.f32.mrf.mxu0
  %v4130 = vadd.f32 %v3805, %v4129
  %4131 = vmatprep.mubr.bf16.mxu0 %v2589
  %4132 = vmatmul.mubr.bf16.gmra.mxu0 %v2588
  %v4133 = vpop.f32.mrf.mxu0
  %v4134 = vadd.f32 %v3809, %v4133
  %v4135 = vpop.f32.mrf.mxu0
  %v4136 = vadd.f32 %v3811, %v4135
  %v4137 = vpop.f32.mrf.mxu0
  %v4138 = vadd.f32 %v3813, %v4137
  %v4139 = vpop.f32.mrf.mxu0
  %v4140 = vadd.f32 %v3815, %v4139
  %4141 = vdwg.mxu0
  %v4238 = vunpack.c.l.b16 %v2452
  %v4239 = vunpack.c.h.b16 %v2452
  %v4240 = vunpack.c.l.b16 %v2453
  %v4241 = vunpack.c.h.b16 %v2453
  %v4242 = vunpack.c.l.b16 %v2454
  %v4243 = vunpack.c.h.b16 %v2454
  %v4244 = vunpack.c.l.b16 %v2455
  %v4245 = vunpack.c.h.b16 %v2455
  %v4246 = vunpack.c.l.b16 %v2456
  %v4247 = vunpack.c.h.b16 %v2456
  %v4248 = vunpack.c.l.b16 %v2457
  %v4249 = vunpack.c.h.b16 %v2457
  %v4250 = vunpack.c.l.b16 %v2458
  %v4251 = vunpack.c.h.b16 %v2458
  %v4252 = vunpack.c.l.b16 %v2459
  %v4253 = vunpack.c.h.b16 %v2459
  %v4254 = vunpack.c.l.b16 %v2460
  %v4255 = vunpack.c.h.b16 %v2460
  %v4256 = vunpack.c.l.b16 %v2461
  %v4257 = vunpack.c.h.b16 %v2461
  %v4258 = vunpack.c.l.b16 %v2462
  %v4259 = vunpack.c.h.b16 %v2462
  %v4260 = vunpack.c.l.b16 %v2463
  %v4261 = vunpack.c.h.b16 %v2463
  %v4262 = vunpack.c.l.b16 %v2464
  %v4263 = vunpack.c.h.b16 %v2464
  %v4264 = vunpack.c.l.b16 %v2465
  %v4265 = vunpack.c.h.b16 %v2465
  %v4266 = vunpack.c.l.b16 %v2466
  %v4267 = vunpack.c.h.b16 %v2466
  %v4268 = vunpack.c.l.b16 %v2467
  %v4269 = vunpack.c.h.b16 %v2467
  %v4270 = vunpack.c.l.b16 %v2468
  %v4271 = vunpack.c.h.b16 %v2468
  %v4272 = vunpack.c.l.b16 %v2469
  %v4273 = vunpack.c.h.b16 %v2469
  %v4274 = vunpack.c.l.b16 %v2470
  %v4275 = vunpack.c.h.b16 %v2470
  %v4276 = vunpack.c.l.b16 %v2471
  %v4277 = vunpack.c.h.b16 %v2471
  %v4278 = vunpack.c.l.b16 %v2472
  %v4279 = vunpack.c.h.b16 %v2472
  %v4280 = vunpack.c.l.b16 %v2473
  %v4281 = vunpack.c.h.b16 %v2473
  %v4282 = vunpack.c.l.b16 %v2474
  %v4283 = vunpack.c.h.b16 %v2474
  %v4284 = vunpack.c.l.b16 %v2475
  %v4285 = vunpack.c.h.b16 %v2475
  %v4286 = vunpack.c.l.b16 %v2476
  %v4287 = vunpack.c.h.b16 %v2476
  %v4288 = vunpack.c.l.b16 %v2477
  %v4289 = vunpack.c.h.b16 %v2477
  %v4290 = vunpack.c.l.b16 %v2478
  %v4291 = vunpack.c.h.b16 %v2478
  %v4292 = vunpack.c.l.b16 %v2479
  %v4293 = vunpack.c.h.b16 %v2479
  %v4294 = vunpack.c.l.b16 %v2480
  %v4295 = vunpack.c.h.b16 %v2480
  %v4296 = vunpack.c.l.b16 %v2481
  %v4297 = vunpack.c.h.b16 %v2481
  %v4298 = vunpack.c.l.b16 %v2482
  %v4299 = vunpack.c.h.b16 %v2482
  %v4300 = vunpack.c.l.b16 %v2483
  %v4301 = vunpack.c.h.b16 %v2483
  %v4302 = vunpack.c.l.b16 %v2484
  %v4303 = vunpack.c.h.b16 %v2484
  %v4304 = vunpack.c.l.b16 %v2485
  %v4305 = vunpack.c.h.b16 %v2485
  %v4306 = vunpack.c.l.b16 %v2486
  %v4307 = vunpack.c.h.b16 %v2486
  %v4308 = vunpack.c.l.b16 %v2487
  %v4309 = vunpack.c.h.b16 %v2487
  %v4310 = vunpack.c.l.b16 %v2488
  %v4311 = vunpack.c.h.b16 %v2488
  %v4312 = vunpack.c.l.b16 %v2489
  %v4313 = vunpack.c.h.b16 %v2489
  %v4314 = vunpack.c.l.b16 %v2490
  %v4315 = vunpack.c.h.b16 %v2490
  %v4316 = vunpack.c.l.b16 %v2491
  %v4317 = vunpack.c.h.b16 %v2491
  %v4318 = vunpack.c.l.b16 %v2492
  %v4319 = vunpack.c.h.b16 %v2492
  %v4320 = vunpack.c.l.b16 %v2493
  %v4321 = vunpack.c.h.b16 %v2493
  %v4322 = vunpack.c.l.b16 %v2494
  %v4323 = vunpack.c.h.b16 %v2494
  %v4324 = vunpack.c.l.b16 %v2495
  %v4325 = vunpack.c.h.b16 %v2495
  %v4326 = vunpack.c.l.b16 %v2496
  %v4327 = vunpack.c.h.b16 %v2496
  %v4328 = vunpack.c.l.b16 %v2497
  %v4329 = vunpack.c.h.b16 %v2497
  %v4330 = vunpack.c.l.b16 %v2498
  %v4331 = vunpack.c.h.b16 %v2498
  %v4332 = vunpack.c.l.b16 %v2499
  %v4333 = vunpack.c.h.b16 %v2499
  %v4334 = vunpack.c.l.b16 %v2500
  %v4335 = vunpack.c.h.b16 %v2500
  %v4336 = vunpack.c.l.b16 %v2501
  %v4337 = vunpack.c.h.b16 %v2501
  %v4338 = vunpack.c.l.b16 %v2502
  %v4339 = vunpack.c.h.b16 %v2502
  %v4340 = vunpack.c.l.b16 %v2503
  %v4341 = vunpack.c.h.b16 %v2503
  %v4342 = vunpack.c.l.b16 %v2504
  %v4343 = vunpack.c.h.b16 %v2504
  %v4344 = vunpack.c.l.b16 %v2505
  %v4345 = vunpack.c.h.b16 %v2505
  %v4346 = vunpack.c.l.b16 %v2506
  %v4347 = vunpack.c.h.b16 %v2506
  %v4348 = vunpack.c.l.b16 %v2507
  %v4349 = vunpack.c.h.b16 %v2507
  %v4350 = vunpack.c.l.b16 %v2508
  %v4351 = vunpack.c.h.b16 %v2508
  %v4352 = vunpack.c.l.b16 %v2509
  %v4353 = vunpack.c.h.b16 %v2509
  %v4354 = vunpack.c.l.b16 %v2510
  %v4355 = vunpack.c.h.b16 %v2510
  %v4356 = vunpack.c.l.b16 %v2511
  %v4357 = vunpack.c.h.b16 %v2511
  %v4358 = vunpack.c.l.b16 %v2512
  %v4359 = vunpack.c.h.b16 %v2512
  %v4360 = vunpack.c.l.b16 %v2513
  %v4361 = vunpack.c.h.b16 %v2513
  %v4362 = vunpack.c.l.b16 %v2514
  %v4363 = vunpack.c.h.b16 %v2514
  %v4364 = vunpack.c.l.b16 %v2515
  %v4365 = vunpack.c.h.b16 %v2515
  %v4366 = vunpack.c.l.b16 %v2516
  %v4367 = vunpack.c.h.b16 %v2516
  %v4368 = vunpack.c.l.b16 %v2517
  %v4369 = vunpack.c.h.b16 %v2517
  %v4370 = vunpack.c.l.b16 %v2518
  %v4371 = vunpack.c.h.b16 %v2518
  %v4372 = vunpack.c.l.b16 %v2519
  %v4373 = vunpack.c.h.b16 %v2519
  %v4374 = vunpack.c.l.b16 %v2520
  %v4375 = vunpack.c.h.b16 %v2520
  %v4376 = vunpack.c.l.b16 %v2521
  %v4377 = vunpack.c.h.b16 %v2521
  %v4378 = vunpack.c.l.b16 %v2522
  %v4379 = vunpack.c.h.b16 %v2522
  %v4380 = vunpack.c.l.b16 %v2523
  %v4381 = vunpack.c.h.b16 %v2523
  %v4382 = vunpack.c.l.b16 %v2524
  %v4383 = vunpack.c.h.b16 %v2524
  %v4384 = vunpack.c.l.b16 %v2525
  %v4385 = vunpack.c.h.b16 %v2525
  %v4386 = vunpack.c.l.b16 %v2526
  %v4387 = vunpack.c.h.b16 %v2526
  %v4388 = vunpack.c.l.b16 %v2527
  %v4389 = vunpack.c.h.b16 %v2527
  %v4390 = vunpack.c.l.b16 %v2528
  %v4391 = vunpack.c.h.b16 %v2528
  %v4392 = vunpack.c.l.b16 %v2529
  %v4393 = vunpack.c.h.b16 %v2529
  %v4394 = vunpack.c.l.b16 %v2530
  %v4395 = vunpack.c.h.b16 %v2530
  %v4396 = vunpack.c.l.b16 %v2531
  %v4397 = vunpack.c.h.b16 %v2531
  %v4398 = vunpack.c.l.b16 %v2532
  %v4399 = vunpack.c.h.b16 %v2532
  %v4400 = vunpack.c.l.b16 %v2533
  %v4401 = vunpack.c.h.b16 %v2533
  %v4402 = vunpack.c.l.b16 %v2534
  %v4403 = vunpack.c.h.b16 %v2534
  %v4404 = vunpack.c.l.b16 %v2535
  %v4405 = vunpack.c.h.b16 %v2535
  %v4406 = vunpack.c.l.b16 %v2536
  %v4407 = vunpack.c.h.b16 %v2536
  %v4408 = vunpack.c.l.b16 %v2537
  %v4409 = vunpack.c.h.b16 %v2537
  %v4410 = vunpack.c.l.b16 %v2538
  %v4411 = vunpack.c.h.b16 %v2538
  %v4412 = vunpack.c.l.b16 %v2539
  %v4413 = vunpack.c.h.b16 %v2539
  %v4414 = vunpack.c.l.b16 %v2540
  %v4415 = vunpack.c.h.b16 %v2540
  %v4416 = vunpack.c.l.b16 %v2541
  %v4417 = vunpack.c.h.b16 %v2541
  %v4418 = vunpack.c.l.b16 %v2542
  %v4419 = vunpack.c.h.b16 %v2542
  %v4420 = vunpack.c.l.b16 %v2543
  %v4421 = vunpack.c.h.b16 %v2543
  %v4422 = vunpack.c.l.b16 %v2544
  %v4423 = vunpack.c.h.b16 %v2544
  %v4424 = vunpack.c.l.b16 %v2545
  %v4425 = vunpack.c.h.b16 %v2545
  %v4426 = vunpack.c.l.b16 %v2546
  %v4427 = vunpack.c.h.b16 %v2546
  %v4428 = vunpack.c.l.b16 %v2547
  %v4429 = vunpack.c.h.b16 %v2547
  %v4430 = vpack.c.b16 %v4240, %v4238
  %v4431 = vpack.c.b16 %v4241, %v4239
  %v4432 = vpack.c.b16 %v4244, %v4242
  %v4433 = vpack.c.b16 %v4245, %v4243
  %v4434 = vpack.c.b16 %v4248, %v4246
  %v4435 = vpack.c.b16 %v4249, %v4247
  %v4436 = vpack.c.b16 %v4252, %v4250
  %v4437 = vpack.c.b16 %v4253, %v4251
  %v4438 = vpack.c.b16 %v4256, %v4254
  %v4439 = vpack.c.b16 %v4257, %v4255
  %v4440 = vpack.c.b16 %v4260, %v4258
  %v4441 = vpack.c.b16 %v4261, %v4259
  %v4442 = vpack.c.b16 %v4264, %v4262
  %v4443 = vpack.c.b16 %v4265, %v4263
  %v4444 = vpack.c.b16 %v4268, %v4266
  %v4445 = vpack.c.b16 %v4269, %v4267
  %v4446 = vpack.c.b16 %v4272, %v4270
  %v4447 = vpack.c.b16 %v4273, %v4271
  %v4448 = vpack.c.b16 %v4276, %v4274
  %v4449 = vpack.c.b16 %v4277, %v4275
  %v4450 = vpack.c.b16 %v4280, %v4278
  %v4451 = vpack.c.b16 %v4281, %v4279
  %v4452 = vpack.c.b16 %v4284, %v4282
  %v4453 = vpack.c.b16 %v4285, %v4283
  %v4454 = vpack.c.b16 %v4288, %v4286
  %v4455 = vpack.c.b16 %v4289, %v4287
  %v4456 = vpack.c.b16 %v4292, %v4290
  %v4457 = vpack.c.b16 %v4293, %v4291
  %v4458 = vpack.c.b16 %v4296, %v4294
  %v4459 = vpack.c.b16 %v4297, %v4295
  %v4460 = vpack.c.b16 %v4300, %v4298
  %v4461 = vpack.c.b16 %v4301, %v4299
  %v4462 = vpack.c.b16 %v4304, %v4302
  %v4463 = vpack.c.b16 %v4305, %v4303
  %v4464 = vpack.c.b16 %v4308, %v4306
  %v4465 = vpack.c.b16 %v4309, %v4307
  %v4466 = vpack.c.b16 %v4312, %v4310
  %v4467 = vpack.c.b16 %v4313, %v4311
  %v4468 = vpack.c.b16 %v4316, %v4314
  %v4469 = vpack.c.b16 %v4317, %v4315
  %v4470 = vpack.c.b16 %v4320, %v4318
  %v4471 = vpack.c.b16 %v4321, %v4319
  %v4472 = vpack.c.b16 %v4324, %v4322
  %v4473 = vpack.c.b16 %v4325, %v4323
  %v4474 = vpack.c.b16 %v4328, %v4326
  %v4475 = vpack.c.b16 %v4329, %v4327
  %v4476 = vpack.c.b16 %v4332, %v4330
  %v4477 = vpack.c.b16 %v4333, %v4331
  %v4478 = vpack.c.b16 %v4336, %v4334
  %v4479 = vpack.c.b16 %v4337, %v4335
  %v4480 = vpack.c.b16 %v4340, %v4338
  %v4481 = vpack.c.b16 %v4341, %v4339
  %v4482 = vpack.c.b16 %v4344, %v4342
  %v4483 = vpack.c.b16 %v4345, %v4343
  %v4484 = vpack.c.b16 %v4348, %v4346
  %v4485 = vpack.c.b16 %v4349, %v4347
  %v4486 = vpack.c.b16 %v4352, %v4350
  %v4487 = vpack.c.b16 %v4353, %v4351
  %v4488 = vpack.c.b16 %v4356, %v4354
  %v4489 = vpack.c.b16 %v4357, %v4355
  %v4490 = vpack.c.b16 %v4360, %v4358
  %v4491 = vpack.c.b16 %v4361, %v4359
  %v4492 = vpack.c.b16 %v4364, %v4362
  %v4493 = vpack.c.b16 %v4365, %v4363
  %v4494 = vpack.c.b16 %v4368, %v4366
  %v4495 = vpack.c.b16 %v4369, %v4367
  %v4496 = vpack.c.b16 %v4372, %v4370
  %v4497 = vpack.c.b16 %v4373, %v4371
  %v4498 = vpack.c.b16 %v4376, %v4374
  %v4499 = vpack.c.b16 %v4377, %v4375
  %v4500 = vpack.c.b16 %v4380, %v4378
  %v4501 = vpack.c.b16 %v4381, %v4379
  %v4502 = vpack.c.b16 %v4384, %v4382
  %v4503 = vpack.c.b16 %v4385, %v4383
  %v4504 = vpack.c.b16 %v4388, %v4386
  %v4505 = vpack.c.b16 %v4389, %v4387
  %v4506 = vpack.c.b16 %v4392, %v4390
  %v4507 = vpack.c.b16 %v4393, %v4391
  %v4508 = vpack.c.b16 %v4396, %v4394
  %v4509 = vpack.c.b16 %v4397, %v4395
  %v4510 = vpack.c.b16 %v4400, %v4398
  %v4511 = vpack.c.b16 %v4401, %v4399
  %v4512 = vpack.c.b16 %v4404, %v4402
  %v4513 = vpack.c.b16 %v4405, %v4403
  %v4514 = vpack.c.b16 %v4408, %v4406
  %v4515 = vpack.c.b16 %v4409, %v4407
  %v4516 = vpack.c.b16 %v4412, %v4410
  %v4517 = vpack.c.b16 %v4413, %v4411
  %v4518 = vpack.c.b16 %v4416, %v4414
  %v4519 = vpack.c.b16 %v4417, %v4415
  %v4520 = vpack.c.b16 %v4420, %v4418
  %v4521 = vpack.c.b16 %v4421, %v4419
  %v4522 = vpack.c.b16 %v4424, %v4422
  %v4523 = vpack.c.b16 %v4425, %v4423
  %v4524 = vpack.c.b16 %v4428, %v4426
  %v4525 = vpack.c.b16 %v4429, %v4427
  %4622 = vmatprep.subr.bf16.mxu0 %v4445
  %4623 = vmatpush1.bf16.msra.mxu0 %v4444
  %4624 = vmatprep.subr.bf16.mxu0 %v4443
  %4625 = vmatpush1.bf16.msra.mxu0 %v4442
  %4626 = vmatprep.subr.bf16.mxu0 %v4441
  %4627 = vmatpush1.bf16.msra.mxu0 %v4440
  %4628 = vmatprep.subr.bf16.mxu0 %v4439
  %4629 = vmatpush1.bf16.msra.mxu0 %v4438
  %4630 = vmatprep.subr.bf16.mxu0 %v4437
  %4631 = vmatpush1.bf16.msra.mxu0 %v4436
  %4632 = vmatprep.subr.bf16.mxu0 %v4435
  %4633 = vmatpush1.bf16.msra.mxu0 %v4434
  %4634 = vmatprep.subr.bf16.mxu0 %v4433
  %4635 = vmatpush1.bf16.msra.mxu0 %v4432
  %4636 = vmatprep.subr.bf16.mxu0 %v4431
  %4637 = vmatpush1.bf16.msra.mxu0 %v4430
  %4638 = vmatprep.subr.bf16.mxu0 %v4461
  %4639 = vmatpush2.bf16.msra.mxu0 %v4460
  %4640 = vmatprep.subr.bf16.mxu0 %v4459
  %4641 = vmatpush2.bf16.msra.mxu0 %v4458
  %4642 = vmatprep.subr.bf16.mxu0 %v4457
  %4643 = vmatpush2.bf16.msra.mxu0 %v4456
  %4644 = vmatprep.subr.bf16.mxu0 %v4455
  %4645 = vmatpush2.bf16.msra.mxu0 %v4454
  %4646 = vmatprep.subr.bf16.mxu0 %v4453
  %4647 = vmatpush2.bf16.msra.mxu0 %v4452
  %4648 = vmatprep.subr.bf16.mxu0 %v4451
  %4649 = vmatpush2.bf16.msra.mxu0 %v4450
  %4650 = vmatprep.subr.bf16.mxu0 %v4449
  %4651 = vmatpush2.bf16.msra.mxu0 %v4448
  %4652 = vmatprep.subr.bf16.mxu0 %v4447
  %4653 = vmatpush2.bf16.msra.mxu0 %v4446
  %4654 = vmatprep.mubr.bf16.mxu0 %v2273
  %4655 = vmatmul.mubr.bf16.gmra.mxu0 %v2272
  %v4656 = vpop.f32.mrf.mxu0
  %v4657 = vadd.f32 %v3852, %v4656
  %v4658 = vpop.f32.mrf.mxu0
  %v4659 = vadd.f32 %v3854, %v4658
  %v4660 = vpop.f32.mrf.mxu0
  %v4661 = vadd.f32 %v3856, %v4660
  %v4662 = vpop.f32.mrf.mxu0
  %v4663 = vadd.f32 %v3858, %v4662
  %4664 = vmatprep.mubr.bf16.mxu0 %v2279
  %4665 = vmatmul.mubr.bf16.gmra.mxu0 %v2278
  %v4666 = vpop.f32.mrf.mxu0
  %v4667 = vadd.f32 %v3862, %v4666
  %v4668 = vpop.f32.mrf.mxu0
  %v4669 = vadd.f32 %v3864, %v4668
  %v4670 = vpop.f32.mrf.mxu0
  %v4671 = vadd.f32 %v3866, %v4670
  %v4672 = vpop.f32.mrf.mxu0
  %v4673 = vadd.f32 %v3868, %v4672
  %4674 = vmatprep.mubr.bf16.mxu0 %v2285
  %4675 = vmatmul.mubr.bf16.gmra.mxu0 %v2284
  %v4676 = vpop.f32.mrf.mxu0
  %v4677 = vadd.f32 %v3872, %v4676
  %v4678 = vpop.f32.mrf.mxu0
  %v4679 = vadd.f32 %v3874, %v4678
  %v4680 = vpop.f32.mrf.mxu0
  %v4681 = vadd.f32 %v3876, %v4680
  %v4682 = vpop.f32.mrf.mxu0
  %v4683 = vadd.f32 %v3878, %v4682
  %4684 = vmatprep.mubr.bf16.mxu0 %v2291
  %4685 = vmatmul.mubr.bf16.gmra.mxu0 %v2290
  %v4686 = vpop.f32.mrf.mxu0
  %v4687 = vadd.f32 %v3882, %v4686
  %v4688 = vpop.f32.mrf.mxu0
  %v4689 = vadd.f32 %v3884, %v4688
  %v4690 = vpop.f32.mrf.mxu0
  %v4691 = vadd.f32 %v3886, %v4690
  %v4692 = vpop.f32.mrf.mxu0
  %v4693 = vadd.f32 %v3888, %v4692
  %4694 = vmatprep.mubr.bf16.mxu0 %v2297
  %4695 = vmatmul.mubr.bf16.gmra.mxu0 %v2296
  %v4696 = vpop.f32.mrf.mxu0
  %v4697 = vadd.f32 %v3892, %v4696
  %v4698 = vpop.f32.mrf.mxu0
  %v4699 = vadd.f32 %v3894, %v4698
  %v4700 = vpop.f32.mrf.mxu0
  %v4701 = vadd.f32 %v3896, %v4700
  %v4702 = vpop.f32.mrf.mxu0
  %v4703 = vadd.f32 %v3898, %v4702
  %4704 = vmatprep.mubr.bf16.mxu0 %v2303
  %4705 = vmatmul.mubr.bf16.gmra.mxu0 %v2302
  %v4706 = vpop.f32.mrf.mxu0
  %v4707 = vadd.f32 %v3902, %v4706
  %v4708 = vpop.f32.mrf.mxu0
  %v4709 = vadd.f32 %v3904, %v4708
  %v4710 = vpop.f32.mrf.mxu0
  %v4711 = vadd.f32 %v3906, %v4710
  %v4712 = vpop.f32.mrf.mxu0
  %v4713 = vadd.f32 %v3908, %v4712
  %4714 = vmatprep.mubr.bf16.mxu0 %v2309
  %4715 = vmatmul.mubr.bf16.gmra.mxu0 %v2308
  %v4716 = vpop.f32.mrf.mxu0
  %v4717 = vadd.f32 %v3912, %v4716
  %v4718 = vpop.f32.mrf.mxu0
  %v4719 = vadd.f32 %v3914, %v4718
  %v4720 = vpop.f32.mrf.mxu0
  %v4721 = vadd.f32 %v3916, %v4720
  %v4722 = vpop.f32.mrf.mxu0
  %v4723 = vadd.f32 %v3918, %v4722
  %4724 = vmatprep.mubr.bf16.mxu0 %v2315
  %4725 = vmatmul.mubr.bf16.gmra.mxu0 %v2314
  %v4726 = vpop.f32.mrf.mxu0
  %v4727 = vadd.f32 %v3922, %v4726
  %v4728 = vpop.f32.mrf.mxu0
  %v4729 = vadd.f32 %v3924, %v4728
  %v4730 = vpop.f32.mrf.mxu0
  %v4731 = vadd.f32 %v3926, %v4730
  %v4732 = vpop.f32.mrf.mxu0
  %v4733 = vadd.f32 %v3928, %v4732
  %4734 = vmatprep.mubr.bf16.mxu0 %v2321
  %4735 = vmatmul.mubr.bf16.gmra.mxu0 %v2320
  %v4736 = vpop.f32.mrf.mxu0
  %v4737 = vadd.f32 %v3932, %v4736
  %v4738 = vpop.f32.mrf.mxu0
  %v4739 = vadd.f32 %v3934, %v4738
  %v4740 = vpop.f32.mrf.mxu0
  %v4741 = vadd.f32 %v3936, %v4740
  %v4742 = vpop.f32.mrf.mxu0
  %v4743 = vadd.f32 %v3938, %v4742
  %4744 = vmatprep.mubr.bf16.mxu0 %v2327
  %4745 = vmatmul.mubr.bf16.gmra.mxu0 %v2326
  %v4746 = vpop.f32.mrf.mxu0
  %v4747 = vadd.f32 %v3942, %v4746
  %v4748 = vpop.f32.mrf.mxu0
  %v4749 = vadd.f32 %v3944, %v4748
  %v4750 = vpop.f32.mrf.mxu0
  %v4751 = vadd.f32 %v3946, %v4750
  %v4752 = vpop.f32.mrf.mxu0
  %v4753 = vadd.f32 %v3948, %v4752
  %4754 = vmatprep.mubr.bf16.mxu0 %v2333
  %4755 = vmatmul.mubr.bf16.gmra.mxu0 %v2332
  %v4756 = vpop.f32.mrf.mxu0
  %v4757 = vadd.f32 %v3952, %v4756
  %v4758 = vpop.f32.mrf.mxu0
  %v4759 = vadd.f32 %v3954, %v4758
  %v4760 = vpop.f32.mrf.mxu0
  %v4761 = vadd.f32 %v3956, %v4760
  %v4762 = vpop.f32.mrf.mxu0
  %v4763 = vadd.f32 %v3958, %v4762
  %4764 = vmatprep.mubr.bf16.mxu0 %v2339
  %4765 = vmatmul.mubr.bf16.gmra.mxu0 %v2338
  %v4766 = vpop.f32.mrf.mxu0
  %v4767 = vadd.f32 %v3962, %v4766
  %v4768 = vpop.f32.mrf.mxu0
  %v4769 = vadd.f32 %v3964, %v4768
  %v4770 = vpop.f32.mrf.mxu0
  %v4771 = vadd.f32 %v3966, %v4770
  %v4772 = vpop.f32.mrf.mxu0
  %v4773 = vadd.f32 %v3968, %v4772
  %4774 = vmatprep.mubr.bf16.mxu0 %v2345
  %4775 = vmatmul.mubr.bf16.gmra.mxu0 %v2344
  %v4776 = vpop.f32.mrf.mxu0
  %v4777 = vadd.f32 %v3972, %v4776
  %v4778 = vpop.f32.mrf.mxu0
  %v4779 = vadd.f32 %v3974, %v4778
  %v4780 = vpop.f32.mrf.mxu0
  %v4781 = vadd.f32 %v3976, %v4780
  %v4782 = vpop.f32.mrf.mxu0
  %v4783 = vadd.f32 %v3978, %v4782
  %4784 = vmatprep.mubr.bf16.mxu0 %v2351
  %4785 = vmatmul.mubr.bf16.gmra.mxu0 %v2350
  %v4786 = vpop.f32.mrf.mxu0
  %v4787 = vadd.f32 %v3982, %v4786
  %v4788 = vpop.f32.mrf.mxu0
  %v4789 = vadd.f32 %v3984, %v4788
  %v4790 = vpop.f32.mrf.mxu0
  %v4791 = vadd.f32 %v3986, %v4790
  %v4792 = vpop.f32.mrf.mxu0
  %v4793 = vadd.f32 %v3988, %v4792
  %4794 = vmatprep.mubr.bf16.mxu0 %v2357
  %4795 = vmatmul.mubr.bf16.gmra.mxu0 %v2356
  %v4796 = vpop.f32.mrf.mxu0
  %v4797 = vpop.f32.mrf.mxu0
  %v4798 = vpop.f32.mrf.mxu0
  %v4799 = vpop.f32.mrf.mxu0
  %4800 = vmatprep.mubr.bf16.mxu0 %v2363
  %4801 = vmatmul.mubr.bf16.gmra.mxu0 %v2362
  %v4802 = vpop.f32.mrf.mxu0
  %v4803 = vpop.f32.mrf.mxu0
  %v4804 = vpop.f32.mrf.mxu0
  %v4805 = vpop.f32.mrf.mxu0
  %4806 = vmatprep.mubr.bf16.mxu0 %v2369
  %4807 = vmatmul.mubr.bf16.gmra.mxu0 %v2368
  %v4808 = vpop.f32.mrf.mxu0
  %v4809 = vadd.f32 %v4004, %v4808
  %v4810 = vpop.f32.mrf.mxu0
  %v4811 = vadd.f32 %v4006, %v4810
  %v4812 = vpop.f32.mrf.mxu0
  %v4813 = vadd.f32 %v4008, %v4812
  %v4814 = vpop.f32.mrf.mxu0
  %v4815 = vadd.f32 %v4010, %v4814
  %4816 = vmatprep.mubr.bf16.mxu0 %v2375
  %4817 = vmatmul.mubr.bf16.gmra.mxu0 %v2374
  %v4818 = vpop.f32.mrf.mxu0
  %v4819 = vadd.f32 %v4014, %v4818
  %v4820 = vpop.f32.mrf.mxu0
  %v4821 = vadd.f32 %v4016, %v4820
  %v4822 = vpop.f32.mrf.mxu0
  %v4823 = vadd.f32 %v4018, %v4822
  %v4824 = vpop.f32.mrf.mxu0
  %v4825 = vadd.f32 %v4020, %v4824
  %4826 = vmatprep.mubr.bf16.mxu0 %v2381
  %4827 = vmatmul.mubr.bf16.gmra.mxu0 %v2380
  %v4828 = vpop.f32.mrf.mxu0
  %v4829 = vadd.f32 %v4024, %v4828
  %v4830 = vpop.f32.mrf.mxu0
  %v4831 = vadd.f32 %v4026, %v4830
  %v4832 = vpop.f32.mrf.mxu0
  %v4833 = vadd.f32 %v4028, %v4832
  %v4834 = vpop.f32.mrf.mxu0
  %v4835 = vadd.f32 %v4030, %v4834
  %4836 = vmatprep.mubr.bf16.mxu0 %v2387
  %4837 = vmatmul.mubr.bf16.gmra.mxu0 %v2386
  %v4838 = vpop.f32.mrf.mxu0
  %v4839 = vadd.f32 %v4034, %v4838
  %v4840 = vpop.f32.mrf.mxu0
  %v4841 = vadd.f32 %v4036, %v4840
  %v4842 = vpop.f32.mrf.mxu0
  %v4843 = vadd.f32 %v4038, %v4842
  %v4844 = vpop.f32.mrf.mxu0
  %v4845 = vadd.f32 %v4040, %v4844
  %4846 = vmatprep.mubr.bf16.mxu0 %v2393
  %4847 = vmatmul.mubr.bf16.gmra.mxu0 %v2392
  %v4848 = vpop.f32.mrf.mxu0
  %v4849 = vadd.f32 %v4044, %v4848
  %v4850 = vpop.f32.mrf.mxu0
  %v4851 = vadd.f32 %v4046, %v4850
  %v4852 = vpop.f32.mrf.mxu0
  %v4853 = vadd.f32 %v4048, %v4852
  %v4854 = vpop.f32.mrf.mxu0
  %v4855 = vadd.f32 %v4050, %v4854
  %4856 = vmatprep.mubr.bf16.mxu0 %v2399
  %4857 = vmatmul.mubr.bf16.gmra.mxu0 %v2398
  %v4858 = vpop.f32.mrf.mxu0
  %v4859 = vadd.f32 %v4054, %v4858
  %v4860 = vpop.f32.mrf.mxu0
  %v4861 = vadd.f32 %v4056, %v4860
  %v4862 = vpop.f32.mrf.mxu0
  %v4863 = vadd.f32 %v4058, %v4862
  %v4864 = vpop.f32.mrf.mxu0
  %v4865 = vadd.f32 %v4060, %v4864
  %4866 = vmatprep.mubr.bf16.mxu0 %v2405
  %4867 = vmatmul.mubr.bf16.gmra.mxu0 %v2404
  %v4868 = vpop.f32.mrf.mxu0
  %v4869 = vadd.f32 %v4064, %v4868
  %v4870 = vpop.f32.mrf.mxu0
  %v4871 = vadd.f32 %v4066, %v4870
  %v4872 = vpop.f32.mrf.mxu0
  %v4873 = vadd.f32 %v4068, %v4872
  %v4874 = vpop.f32.mrf.mxu0
  %v4875 = vadd.f32 %v4070, %v4874
  %4876 = vmatprep.mubr.bf16.mxu0 %v2411
  %4877 = vmatmul.mubr.bf16.gmra.mxu0 %v2410
  %v4878 = vpop.f32.mrf.mxu0
  %v4879 = vadd.f32 %v4074, %v4878
  %v4880 = vpop.f32.mrf.mxu0
  %v4881 = vadd.f32 %v4076, %v4880
  %v4882 = vpop.f32.mrf.mxu0
  %v4883 = vadd.f32 %v4078, %v4882
  %v4884 = vpop.f32.mrf.mxu0
  %v4885 = vadd.f32 %v4080, %v4884
  %4886 = vmatprep.mubr.bf16.mxu0 %v2417
  %4887 = vmatmul.mubr.bf16.gmra.mxu0 %v2416
  %v4888 = vpop.f32.mrf.mxu0
  %v4889 = vadd.f32 %v4084, %v4888
  %v4890 = vpop.f32.mrf.mxu0
  %v4891 = vadd.f32 %v4086, %v4890
  %v4892 = vpop.f32.mrf.mxu0
  %v4893 = vadd.f32 %v4088, %v4892
  %v4894 = vpop.f32.mrf.mxu0
  %v4895 = vadd.f32 %v4090, %v4894
  %4896 = vmatprep.mubr.bf16.mxu0 %v2423
  %4897 = vmatmul.mubr.bf16.gmra.mxu0 %v2422
  %v4898 = vpop.f32.mrf.mxu0
  %v4899 = vadd.f32 %v4094, %v4898
  %v4900 = vpop.f32.mrf.mxu0
  %v4901 = vadd.f32 %v4096, %v4900
  %v4902 = vpop.f32.mrf.mxu0
  %v4903 = vadd.f32 %v4098, %v4902
  %v4904 = vpop.f32.mrf.mxu0
  %v4905 = vadd.f32 %v4100, %v4904
  %4906 = vmatprep.mubr.bf16.mxu0 %v2429
  %4907 = vmatmul.mubr.bf16.gmra.mxu0 %v2428
  %v4908 = vpop.f32.mrf.mxu0
  %v4909 = vadd.f32 %v4104, %v4908
  %v4910 = vpop.f32.mrf.mxu0
  %v4911 = vadd.f32 %v4106, %v4910
  %v4912 = vpop.f32.mrf.mxu0
  %v4913 = vadd.f32 %v4108, %v4912
  %v4914 = vpop.f32.mrf.mxu0
  %v4915 = vadd.f32 %v4110, %v4914
  %4916 = vmatprep.mubr.bf16.mxu0 %v2435
  %4917 = vmatmul.mubr.bf16.gmra.mxu0 %v2434
  %v4918 = vpop.f32.mrf.mxu0
  %v4919 = vadd.f32 %v4114, %v4918
  %v4920 = vpop.f32.mrf.mxu0
  %v4921 = vadd.f32 %v4116, %v4920
  %v4922 = vpop.f32.mrf.mxu0
  %v4923 = vadd.f32 %v4118, %v4922
  %v4924 = vpop.f32.mrf.mxu0
  %v4925 = vadd.f32 %v4120, %v4924
  %4926 = vmatprep.mubr.bf16.mxu0 %v2441
  %4927 = vmatmul.mubr.bf16.gmra.mxu0 %v2440
  %v4928 = vpop.f32.mrf.mxu0
  %v4929 = vadd.f32 %v4124, %v4928
  %v4930 = vpop.f32.mrf.mxu0
  %v4931 = vadd.f32 %v4126, %v4930
  %v4932 = vpop.f32.mrf.mxu0
  %v4933 = vadd.f32 %v4128, %v4932
  %v4934 = vpop.f32.mrf.mxu0
  %v4935 = vadd.f32 %v4130, %v4934
  %4936 = vmatprep.mubr.bf16.mxu0 %v2447
  %4937 = vmatmul.mubr.bf16.gmra.mxu0 %v2446
  %v4938 = vpop.f32.mrf.mxu0
  %v4939 = vadd.f32 %v4134, %v4938
  %v4940 = vpop.f32.mrf.mxu0
  %v4941 = vadd.f32 %v4136, %v4940
  %v4942 = vpop.f32.mrf.mxu0
  %v4943 = vadd.f32 %v4138, %v4942
  %v4944 = vpop.f32.mrf.mxu0
  %v4945 = vadd.f32 %v4140, %v4944
  %4946 = vdwg.mxu0
  %4947 = vmatprep.subr.bf16.mxu0 %v4477
  %4948 = vmatpush1.bf16.msra.mxu0 %v4476
  %4949 = vmatprep.subr.bf16.mxu0 %v4475
  %4950 = vmatpush1.bf16.msra.mxu0 %v4474
  %4951 = vmatprep.subr.bf16.mxu0 %v4473
  %4952 = vmatpush1.bf16.msra.mxu0 %v4472
  %4953 = vmatprep.subr.bf16.mxu0 %v4471
  %4954 = vmatpush1.bf16.msra.mxu0 %v4470
  %4955 = vmatprep.subr.bf16.mxu0 %v4469
  %4956 = vmatpush1.bf16.msra.mxu0 %v4468
  %4957 = vmatprep.subr.bf16.mxu0 %v4467
  %4958 = vmatpush1.bf16.msra.mxu0 %v4466
  %4959 = vmatprep.subr.bf16.mxu0 %v4465
  %4960 = vmatpush1.bf16.msra.mxu0 %v4464
  %4961 = vmatprep.subr.bf16.mxu0 %v4463
  %4962 = vmatpush1.bf16.msra.mxu0 %v4462
  %4963 = vmatprep.subr.bf16.mxu0 %v4493
  %4964 = vmatpush2.bf16.msra.mxu0 %v4492
  %4965 = vmatprep.subr.bf16.mxu0 %v4491
  %4966 = vmatpush2.bf16.msra.mxu0 %v4490
  %4967 = vmatprep.subr.bf16.mxu0 %v4489
  %4968 = vmatpush2.bf16.msra.mxu0 %v4488
  %4969 = vmatprep.subr.bf16.mxu0 %v4487
  %4970 = vmatpush2.bf16.msra.mxu0 %v4486
  %4971 = vmatprep.subr.bf16.mxu0 %v4485
  %4972 = vmatpush2.bf16.msra.mxu0 %v4484
  %4973 = vmatprep.subr.bf16.mxu0 %v4483
  %4974 = vmatpush2.bf16.msra.mxu0 %v4482
  %4975 = vmatprep.subr.bf16.mxu0 %v4481
  %4976 = vmatpush2.bf16.msra.mxu0 %v4480
  %4977 = vmatprep.subr.bf16.mxu0 %v4479
  %4978 = vmatpush2.bf16.msra.mxu0 %v4478
  %4979 = vmatprep.mubr.bf16.mxu0 %v2275
  %4980 = vmatmul.mubr.bf16.gmra.mxu0 %v2274
  %v4981 = vpop.f32.mrf.mxu0
  %v4982 = vadd.f32 %v4657, %v4981
  %v4983 = vpop.f32.mrf.mxu0
  %v4984 = vadd.f32 %v4659, %v4983
  %v4985 = vpop.f32.mrf.mxu0
  %v4986 = vadd.f32 %v4661, %v4985
  %v4987 = vpop.f32.mrf.mxu0
  %v4988 = vadd.f32 %v4663, %v4987
  %4989 = vmatprep.mubr.bf16.mxu0 %v2281
  %4990 = vmatmul.mubr.bf16.gmra.mxu0 %v2280
  %v4991 = vpop.f32.mrf.mxu0
  %v4992 = vadd.f32 %v4667, %v4991
  %v4993 = vpop.f32.mrf.mxu0
  %v4994 = vadd.f32 %v4669, %v4993
  %v4995 = vpop.f32.mrf.mxu0
  %v4996 = vadd.f32 %v4671, %v4995
  %v4997 = vpop.f32.mrf.mxu0
  %v4998 = vadd.f32 %v4673, %v4997
  %4999 = vmatprep.mubr.bf16.mxu0 %v2287
  %5000 = vmatmul.mubr.bf16.gmra.mxu0 %v2286
  %v5001 = vpop.f32.mrf.mxu0
  %v5002 = vadd.f32 %v4677, %v5001
  %v5003 = vpop.f32.mrf.mxu0
  %v5004 = vadd.f32 %v4679, %v5003
  %v5005 = vpop.f32.mrf.mxu0
  %v5006 = vadd.f32 %v4681, %v5005
  %v5007 = vpop.f32.mrf.mxu0
  %v5008 = vadd.f32 %v4683, %v5007
  %5009 = vmatprep.mubr.bf16.mxu0 %v2293
  %5010 = vmatmul.mubr.bf16.gmra.mxu0 %v2292
  %v5011 = vpop.f32.mrf.mxu0
  %v5012 = vadd.f32 %v4687, %v5011
  %v5013 = vpop.f32.mrf.mxu0
  %v5014 = vadd.f32 %v4689, %v5013
  %v5015 = vpop.f32.mrf.mxu0
  %v5016 = vadd.f32 %v4691, %v5015
  %v5017 = vpop.f32.mrf.mxu0
  %v5018 = vadd.f32 %v4693, %v5017
  %5019 = vmatprep.mubr.bf16.mxu0 %v2299
  %5020 = vmatmul.mubr.bf16.gmra.mxu0 %v2298
  %v5021 = vpop.f32.mrf.mxu0
  %v5022 = vadd.f32 %v4697, %v5021
  %v5023 = vpop.f32.mrf.mxu0
  %v5024 = vadd.f32 %v4699, %v5023
  %v5025 = vpop.f32.mrf.mxu0
  %v5026 = vadd.f32 %v4701, %v5025
  %v5027 = vpop.f32.mrf.mxu0
  %v5028 = vadd.f32 %v4703, %v5027
  %5029 = vmatprep.mubr.bf16.mxu0 %v2305
  %5030 = vmatmul.mubr.bf16.gmra.mxu0 %v2304
  %v5031 = vpop.f32.mrf.mxu0
  %v5032 = vadd.f32 %v4707, %v5031
  %v5033 = vpop.f32.mrf.mxu0
  %v5034 = vadd.f32 %v4709, %v5033
  %v5035 = vpop.f32.mrf.mxu0
  %v5036 = vadd.f32 %v4711, %v5035
  %v5037 = vpop.f32.mrf.mxu0
  %v5038 = vadd.f32 %v4713, %v5037
  %5039 = vmatprep.mubr.bf16.mxu0 %v2311
  %5040 = vmatmul.mubr.bf16.gmra.mxu0 %v2310
  %v5041 = vpop.f32.mrf.mxu0
  %v5042 = vadd.f32 %v4717, %v5041
  %v5043 = vpop.f32.mrf.mxu0
  %v5044 = vadd.f32 %v4719, %v5043
  %v5045 = vpop.f32.mrf.mxu0
  %v5046 = vadd.f32 %v4721, %v5045
  %v5047 = vpop.f32.mrf.mxu0
  %v5048 = vadd.f32 %v4723, %v5047
  %5049 = vmatprep.mubr.bf16.mxu0 %v2317
  %5050 = vmatmul.mubr.bf16.gmra.mxu0 %v2316
  %v5051 = vpop.f32.mrf.mxu0
  %v5052 = vadd.f32 %v4727, %v5051
  %v5053 = vpop.f32.mrf.mxu0
  %v5054 = vadd.f32 %v4729, %v5053
  %v5055 = vpop.f32.mrf.mxu0
  %v5056 = vadd.f32 %v4731, %v5055
  %v5057 = vpop.f32.mrf.mxu0
  %v5058 = vadd.f32 %v4733, %v5057
  %5059 = vmatprep.mubr.bf16.mxu0 %v2323
  %5060 = vmatmul.mubr.bf16.gmra.mxu0 %v2322
  %v5061 = vpop.f32.mrf.mxu0
  %v5062 = vadd.f32 %v4737, %v5061
  %v5063 = vpop.f32.mrf.mxu0
  %v5064 = vadd.f32 %v4739, %v5063
  %v5065 = vpop.f32.mrf.mxu0
  %v5066 = vadd.f32 %v4741, %v5065
  %v5067 = vpop.f32.mrf.mxu0
  %v5068 = vadd.f32 %v4743, %v5067
  %5069 = vmatprep.mubr.bf16.mxu0 %v2329
  %5070 = vmatmul.mubr.bf16.gmra.mxu0 %v2328
  %v5071 = vpop.f32.mrf.mxu0
  %v5072 = vadd.f32 %v4747, %v5071
  %v5073 = vpop.f32.mrf.mxu0
  %v5074 = vadd.f32 %v4749, %v5073
  %v5075 = vpop.f32.mrf.mxu0
  %v5076 = vadd.f32 %v4751, %v5075
  %v5077 = vpop.f32.mrf.mxu0
  %v5078 = vadd.f32 %v4753, %v5077
  %5079 = vmatprep.mubr.bf16.mxu0 %v2335
  %5080 = vmatmul.mubr.bf16.gmra.mxu0 %v2334
  %v5081 = vpop.f32.mrf.mxu0
  %v5082 = vadd.f32 %v4757, %v5081
  %v5083 = vpop.f32.mrf.mxu0
  %v5084 = vadd.f32 %v4759, %v5083
  %v5085 = vpop.f32.mrf.mxu0
  %v5086 = vadd.f32 %v4761, %v5085
  %v5087 = vpop.f32.mrf.mxu0
  %v5088 = vadd.f32 %v4763, %v5087
  %5089 = vmatprep.mubr.bf16.mxu0 %v2341
  %5090 = vmatmul.mubr.bf16.gmra.mxu0 %v2340
  %v5091 = vpop.f32.mrf.mxu0
  %v5092 = vadd.f32 %v4767, %v5091
  %v5093 = vpop.f32.mrf.mxu0
  %v5094 = vadd.f32 %v4769, %v5093
  %v5095 = vpop.f32.mrf.mxu0
  %v5096 = vadd.f32 %v4771, %v5095
  %v5097 = vpop.f32.mrf.mxu0
  %v5098 = vadd.f32 %v4773, %v5097
  %5099 = vmatprep.mubr.bf16.mxu0 %v2347
  %5100 = vmatmul.mubr.bf16.gmra.mxu0 %v2346
  %v5101 = vpop.f32.mrf.mxu0
  %v5102 = vadd.f32 %v4777, %v5101
  %v5103 = vpop.f32.mrf.mxu0
  %v5104 = vadd.f32 %v4779, %v5103
  %v5105 = vpop.f32.mrf.mxu0
  %v5106 = vadd.f32 %v4781, %v5105
  %v5107 = vpop.f32.mrf.mxu0
  %v5108 = vadd.f32 %v4783, %v5107
  %5109 = vmatprep.mubr.bf16.mxu0 %v2353
  %5110 = vmatmul.mubr.bf16.gmra.mxu0 %v2352
  %v5111 = vpop.f32.mrf.mxu0
  %v5112 = vadd.f32 %v4787, %v5111
  %v5113 = vpop.f32.mrf.mxu0
  %v5114 = vadd.f32 %v4789, %v5113
  %v5115 = vpop.f32.mrf.mxu0
  %v5116 = vadd.f32 %v4791, %v5115
  %v5117 = vpop.f32.mrf.mxu0
  %v5118 = vadd.f32 %v4793, %v5117
  %5119 = vmatprep.mubr.bf16.mxu0 %v2359
  %5120 = vmatmul.mubr.bf16.gmra.mxu0 %v2358
  %v5121 = vpop.f32.mrf.mxu0
  %v5122 = vpop.f32.mrf.mxu0
  %v5123 = vpop.f32.mrf.mxu0
  %v5124 = vpop.f32.mrf.mxu0
  %5125 = vmatprep.mubr.bf16.mxu0 %v2365
  %5126 = vmatmul.mubr.bf16.gmra.mxu0 %v2364
  %v5127 = vpop.f32.mrf.mxu0
  %v5128 = vpop.f32.mrf.mxu0
  %v5129 = vpop.f32.mrf.mxu0
  %v5130 = vpop.f32.mrf.mxu0
  %5131 = vmatprep.mubr.bf16.mxu0 %v2371
  %5132 = vmatmul.mubr.bf16.gmra.mxu0 %v2370
  %v5133 = vpop.f32.mrf.mxu0
  %v5134 = vadd.f32 %v4809, %v5133
  %v5135 = vpop.f32.mrf.mxu0
  %v5136 = vadd.f32 %v4811, %v5135
  %v5137 = vpop.f32.mrf.mxu0
  %v5138 = vadd.f32 %v4813, %v5137
  %v5139 = vpop.f32.mrf.mxu0
  %v5140 = vadd.f32 %v4815, %v5139
  %5141 = vmatprep.mubr.bf16.mxu0 %v2377
  %5142 = vmatmul.mubr.bf16.gmra.mxu0 %v2376
  %v5143 = vpop.f32.mrf.mxu0
  %v5144 = vadd.f32 %v4819, %v5143
  %v5145 = vpop.f32.mrf.mxu0
  %v5146 = vadd.f32 %v4821, %v5145
  %v5147 = vpop.f32.mrf.mxu0
  %v5148 = vadd.f32 %v4823, %v5147
  %v5149 = vpop.f32.mrf.mxu0
  %v5150 = vadd.f32 %v4825, %v5149
  %5151 = vmatprep.mubr.bf16.mxu0 %v2383
  %5152 = vmatmul.mubr.bf16.gmra.mxu0 %v2382
  %v5153 = vpop.f32.mrf.mxu0
  %v5154 = vadd.f32 %v4829, %v5153
  %v5155 = vpop.f32.mrf.mxu0
  %v5156 = vadd.f32 %v4831, %v5155
  %v5157 = vpop.f32.mrf.mxu0
  %v5158 = vadd.f32 %v4833, %v5157
  %v5159 = vpop.f32.mrf.mxu0
  %v5160 = vadd.f32 %v4835, %v5159
  %5161 = vmatprep.mubr.bf16.mxu0 %v2389
  %5162 = vmatmul.mubr.bf16.gmra.mxu0 %v2388
  %v5163 = vpop.f32.mrf.mxu0
  %v5164 = vadd.f32 %v4839, %v5163
  %v5165 = vpop.f32.mrf.mxu0
  %v5166 = vadd.f32 %v4841, %v5165
  %v5167 = vpop.f32.mrf.mxu0
  %v5168 = vadd.f32 %v4843, %v5167
  %v5169 = vpop.f32.mrf.mxu0
  %v5170 = vadd.f32 %v4845, %v5169
  %5171 = vmatprep.mubr.bf16.mxu0 %v2395
  %5172 = vmatmul.mubr.bf16.gmra.mxu0 %v2394
  %v5173 = vpop.f32.mrf.mxu0
  %v5174 = vadd.f32 %v4849, %v5173
  %v5175 = vpop.f32.mrf.mxu0
  %v5176 = vadd.f32 %v4851, %v5175
  %v5177 = vpop.f32.mrf.mxu0
  %v5178 = vadd.f32 %v4853, %v5177
  %v5179 = vpop.f32.mrf.mxu0
  %v5180 = vadd.f32 %v4855, %v5179
  %5181 = vmatprep.mubr.bf16.mxu0 %v2401
  %5182 = vmatmul.mubr.bf16.gmra.mxu0 %v2400
  %v5183 = vpop.f32.mrf.mxu0
  %v5184 = vadd.f32 %v4859, %v5183
  %v5185 = vpop.f32.mrf.mxu0
  %v5186 = vadd.f32 %v4861, %v5185
  %v5187 = vpop.f32.mrf.mxu0
  %v5188 = vadd.f32 %v4863, %v5187
  %v5189 = vpop.f32.mrf.mxu0
  %v5190 = vadd.f32 %v4865, %v5189
  %5191 = vmatprep.mubr.bf16.mxu0 %v2407
  %5192 = vmatmul.mubr.bf16.gmra.mxu0 %v2406
  %v5193 = vpop.f32.mrf.mxu0
  %v5194 = vadd.f32 %v4869, %v5193
  %v5195 = vpop.f32.mrf.mxu0
  %v5196 = vadd.f32 %v4871, %v5195
  %v5197 = vpop.f32.mrf.mxu0
  %v5198 = vadd.f32 %v4873, %v5197
  %v5199 = vpop.f32.mrf.mxu0
  %v5200 = vadd.f32 %v4875, %v5199
  %5201 = vmatprep.mubr.bf16.mxu0 %v2413
  %5202 = vmatmul.mubr.bf16.gmra.mxu0 %v2412
  %v5203 = vpop.f32.mrf.mxu0
  %v5204 = vadd.f32 %v4879, %v5203
  %v5205 = vpop.f32.mrf.mxu0
  %v5206 = vadd.f32 %v4881, %v5205
  %v5207 = vpop.f32.mrf.mxu0
  %v5208 = vadd.f32 %v4883, %v5207
  %v5209 = vpop.f32.mrf.mxu0
  %v5210 = vadd.f32 %v4885, %v5209
  %5211 = vmatprep.mubr.bf16.mxu0 %v2419
  %5212 = vmatmul.mubr.bf16.gmra.mxu0 %v2418
  %v5213 = vpop.f32.mrf.mxu0
  %v5214 = vadd.f32 %v4889, %v5213
  %v5215 = vpop.f32.mrf.mxu0
  %v5216 = vadd.f32 %v4891, %v5215
  %v5217 = vpop.f32.mrf.mxu0
  %v5218 = vadd.f32 %v4893, %v5217
  %v5219 = vpop.f32.mrf.mxu0
  %v5220 = vadd.f32 %v4895, %v5219
  %5221 = vmatprep.mubr.bf16.mxu0 %v2425
  %5222 = vmatmul.mubr.bf16.gmra.mxu0 %v2424
  %v5223 = vpop.f32.mrf.mxu0
  %v5224 = vadd.f32 %v4899, %v5223
  %v5225 = vpop.f32.mrf.mxu0
  %v5226 = vadd.f32 %v4901, %v5225
  %v5227 = vpop.f32.mrf.mxu0
  %v5228 = vadd.f32 %v4903, %v5227
  %v5229 = vpop.f32.mrf.mxu0
  %v5230 = vadd.f32 %v4905, %v5229
  %5231 = vmatprep.mubr.bf16.mxu0 %v2431
  %5232 = vmatmul.mubr.bf16.gmra.mxu0 %v2430
  %v5233 = vpop.f32.mrf.mxu0
  %v5234 = vadd.f32 %v4909, %v5233
  %v5235 = vpop.f32.mrf.mxu0
  %v5236 = vadd.f32 %v4911, %v5235
  %v5237 = vpop.f32.mrf.mxu0
  %v5238 = vadd.f32 %v4913, %v5237
  %v5239 = vpop.f32.mrf.mxu0
  %v5240 = vadd.f32 %v4915, %v5239
  %5241 = vmatprep.mubr.bf16.mxu0 %v2437
  %5242 = vmatmul.mubr.bf16.gmra.mxu0 %v2436
  %v5243 = vpop.f32.mrf.mxu0
  %v5244 = vadd.f32 %v4919, %v5243
  %v5245 = vpop.f32.mrf.mxu0
  %v5246 = vadd.f32 %v4921, %v5245
  %v5247 = vpop.f32.mrf.mxu0
  %v5248 = vadd.f32 %v4923, %v5247
  %v5249 = vpop.f32.mrf.mxu0
  %v5250 = vadd.f32 %v4925, %v5249
  %5251 = vmatprep.mubr.bf16.mxu0 %v2443
  %5252 = vmatmul.mubr.bf16.gmra.mxu0 %v2442
  %v5253 = vpop.f32.mrf.mxu0
  %v5254 = vadd.f32 %v4929, %v5253
  %v5255 = vpop.f32.mrf.mxu0
  %v5256 = vadd.f32 %v4931, %v5255
  %v5257 = vpop.f32.mrf.mxu0
  %v5258 = vadd.f32 %v4933, %v5257
  %v5259 = vpop.f32.mrf.mxu0
  %v5260 = vadd.f32 %v4935, %v5259
  %5261 = vmatprep.mubr.bf16.mxu0 %v2449
  %5262 = vmatmul.mubr.bf16.gmra.mxu0 %v2448
  %v5263 = vpop.f32.mrf.mxu0
  %v5264 = vadd.f32 %v4939, %v5263
  %v5265 = vpop.f32.mrf.mxu0
  %v5266 = vadd.f32 %v4941, %v5265
  %v5267 = vpop.f32.mrf.mxu0
  %v5268 = vadd.f32 %v4943, %v5267
  %v5269 = vpop.f32.mrf.mxu0
  %v5270 = vadd.f32 %v4945, %v5269
  %5271 = vdwg.mxu0
  %5272 = vmatprep.subr.bf16.mxu0 %v4509
  %5273 = vmatpush1.bf16.msra.mxu0 %v4508
  %5274 = vmatprep.subr.bf16.mxu0 %v4507
  %5275 = vmatpush1.bf16.msra.mxu0 %v4506
  %5276 = vmatprep.subr.bf16.mxu0 %v4505
  %5277 = vmatpush1.bf16.msra.mxu0 %v4504
  %5278 = vmatprep.subr.bf16.mxu0 %v4503
  %5279 = vmatpush1.bf16.msra.mxu0 %v4502
  %5280 = vmatprep.subr.bf16.mxu0 %v4501
  %5281 = vmatpush1.bf16.msra.mxu0 %v4500
  %5282 = vmatprep.subr.bf16.mxu0 %v4499
  %5283 = vmatpush1.bf16.msra.mxu0 %v4498
  %5284 = vmatprep.subr.bf16.mxu0 %v4497
  %5285 = vmatpush1.bf16.msra.mxu0 %v4496
  %5286 = vmatprep.subr.bf16.mxu0 %v4495
  %5287 = vmatpush1.bf16.msra.mxu0 %v4494
  %5288 = vmatprep.subr.bf16.mxu0 %v4525
  %5289 = vmatpush2.bf16.msra.mxu0 %v4524
  %5290 = vmatprep.subr.bf16.mxu0 %v4523
  %5291 = vmatpush2.bf16.msra.mxu0 %v4522
  %5292 = vmatprep.subr.bf16.mxu0 %v4521
  %5293 = vmatpush2.bf16.msra.mxu0 %v4520
  %5294 = vmatprep.subr.bf16.mxu0 %v4519
  %5295 = vmatpush2.bf16.msra.mxu0 %v4518
  %5296 = vmatprep.subr.bf16.mxu0 %v4517
  %5297 = vmatpush2.bf16.msra.mxu0 %v4516
  %5298 = vmatprep.subr.bf16.mxu0 %v4515
  %5299 = vmatpush2.bf16.msra.mxu0 %v4514
  %5300 = vmatprep.subr.bf16.mxu0 %v4513
  %5301 = vmatpush2.bf16.msra.mxu0 %v4512
  %5302 = vmatprep.subr.bf16.mxu0 %v4511
  %5303 = vmatpush2.bf16.msra.mxu0 %v4510
  %5304 = vmatprep.mubr.bf16.mxu0 %v2277
  %5305 = vmatmul.mubr.bf16.gmra.mxu0 %v2276
  %v5306 = vpop.f32.mrf.mxu0
  %v5307 = vadd.f32 %v4982, %v5306
  %v5308 = vpop.f32.mrf.mxu0
  %v5309 = vadd.f32 %v4984, %v5308
  %v5310 = vpop.f32.mrf.mxu0
  %v5311 = vadd.f32 %v4986, %v5310
  %v5312 = vpop.f32.mrf.mxu0
  %v5313 = vadd.f32 %v4988, %v5312
  %5314 = vmatprep.mubr.bf16.mxu0 %v2283
  %5315 = vmatmul.mubr.bf16.gmra.mxu0 %v2282
  %v5316 = vpop.f32.mrf.mxu0
  %v5317 = vadd.f32 %v4992, %v5316
  %v5318 = vpop.f32.mrf.mxu0
  %v5319 = vadd.f32 %v4994, %v5318
  %v5320 = vpop.f32.mrf.mxu0
  %v5321 = vadd.f32 %v4996, %v5320
  %v5322 = vpop.f32.mrf.mxu0
  %v5323 = vadd.f32 %v4998, %v5322
  %5324 = vmatprep.mubr.bf16.mxu0 %v2289
  %5325 = vmatmul.mubr.bf16.gmra.mxu0 %v2288
  %v5326 = vpop.f32.mrf.mxu0
  %v5327 = vadd.f32 %v5002, %v5326
  %v5328 = vpop.f32.mrf.mxu0
  %v5329 = vadd.f32 %v5004, %v5328
  %v5330 = vpop.f32.mrf.mxu0
  %v5331 = vadd.f32 %v5006, %v5330
  %v5332 = vpop.f32.mrf.mxu0
  %v5333 = vadd.f32 %v5008, %v5332
  %5334 = vmatprep.mubr.bf16.mxu0 %v2295
  %5335 = vmatmul.mubr.bf16.gmra.mxu0 %v2294
  %v5336 = vpop.f32.mrf.mxu0
  %v5337 = vadd.f32 %v5012, %v5336
  %v5338 = vpop.f32.mrf.mxu0
  %v5339 = vadd.f32 %v5014, %v5338
  %v5340 = vpop.f32.mrf.mxu0
  %v5341 = vadd.f32 %v5016, %v5340
  %v5342 = vpop.f32.mrf.mxu0
  %v5343 = vadd.f32 %v5018, %v5342
  %5344 = vmatprep.mubr.bf16.mxu0 %v2301
  %5345 = vmatmul.mubr.bf16.gmra.mxu0 %v2300
  %v5346 = vpop.f32.mrf.mxu0
  %v5347 = vadd.f32 %v5022, %v5346
  %v5348 = vpop.f32.mrf.mxu0
  %v5349 = vadd.f32 %v5024, %v5348
  %v5350 = vpop.f32.mrf.mxu0
  %v5351 = vadd.f32 %v5026, %v5350
  %v5352 = vpop.f32.mrf.mxu0
  %v5353 = vadd.f32 %v5028, %v5352
  %5354 = vmatprep.mubr.bf16.mxu0 %v2307
  %5355 = vmatmul.mubr.bf16.gmra.mxu0 %v2306
  %v5356 = vpop.f32.mrf.mxu0
  %v5357 = vadd.f32 %v5032, %v5356
  %v5358 = vpop.f32.mrf.mxu0
  %v5359 = vadd.f32 %v5034, %v5358
  %v5360 = vpop.f32.mrf.mxu0
  %v5361 = vadd.f32 %v5036, %v5360
  %v5362 = vpop.f32.mrf.mxu0
  %v5363 = vadd.f32 %v5038, %v5362
  %5364 = vmatprep.mubr.bf16.mxu0 %v2313
  %5365 = vmatmul.mubr.bf16.gmra.mxu0 %v2312
  %v5366 = vpop.f32.mrf.mxu0
  %v5367 = vadd.f32 %v5042, %v5366
  %v5368 = vpop.f32.mrf.mxu0
  %v5369 = vadd.f32 %v5044, %v5368
  %v5370 = vpop.f32.mrf.mxu0
  %v5371 = vadd.f32 %v5046, %v5370
  %v5372 = vpop.f32.mrf.mxu0
  %v5373 = vadd.f32 %v5048, %v5372
  %5374 = vmatprep.mubr.bf16.mxu0 %v2319
  %5375 = vmatmul.mubr.bf16.gmra.mxu0 %v2318
  %v5376 = vpop.f32.mrf.mxu0
  %v5377 = vadd.f32 %v5052, %v5376
  %v5378 = vpop.f32.mrf.mxu0
  %v5379 = vadd.f32 %v5054, %v5378
  %v5380 = vpop.f32.mrf.mxu0
  %v5381 = vadd.f32 %v5056, %v5380
  %v5382 = vpop.f32.mrf.mxu0
  %v5383 = vadd.f32 %v5058, %v5382
  %5384 = vmatprep.mubr.bf16.mxu0 %v2325
  %5385 = vmatmul.mubr.bf16.gmra.mxu0 %v2324
  %v5386 = vpop.f32.mrf.mxu0
  %v5387 = vadd.f32 %v5062, %v5386
  %v5388 = vpop.f32.mrf.mxu0
  %v5389 = vadd.f32 %v5064, %v5388
  %v5390 = vpop.f32.mrf.mxu0
  %v5391 = vadd.f32 %v5066, %v5390
  %v5392 = vpop.f32.mrf.mxu0
  %v5393 = vadd.f32 %v5068, %v5392
  %5394 = vmatprep.mubr.bf16.mxu0 %v2331
  %5395 = vmatmul.mubr.bf16.gmra.mxu0 %v2330
  %v5396 = vpop.f32.mrf.mxu0
  %v5397 = vadd.f32 %v5072, %v5396
  %v5398 = vpop.f32.mrf.mxu0
  %v5399 = vadd.f32 %v5074, %v5398
  %v5400 = vpop.f32.mrf.mxu0
  %v5401 = vadd.f32 %v5076, %v5400
  %v5402 = vpop.f32.mrf.mxu0
  %v5403 = vadd.f32 %v5078, %v5402
  %5404 = vmatprep.mubr.bf16.mxu0 %v2337
  %5405 = vmatmul.mubr.bf16.gmra.mxu0 %v2336
  %v5406 = vpop.f32.mrf.mxu0
  %v5407 = vadd.f32 %v5082, %v5406
  %v5408 = vpop.f32.mrf.mxu0
  %v5409 = vadd.f32 %v5084, %v5408
  %v5410 = vpop.f32.mrf.mxu0
  %v5411 = vadd.f32 %v5086, %v5410
  %v5412 = vpop.f32.mrf.mxu0
  %v5413 = vadd.f32 %v5088, %v5412
  %5414 = vmatprep.mubr.bf16.mxu0 %v2343
  %5415 = vmatmul.mubr.bf16.gmra.mxu0 %v2342
  %v5416 = vpop.f32.mrf.mxu0
  %v5417 = vadd.f32 %v5092, %v5416
  %v5418 = vpop.f32.mrf.mxu0
  %v5419 = vadd.f32 %v5094, %v5418
  %v5420 = vpop.f32.mrf.mxu0
  %v5421 = vadd.f32 %v5096, %v5420
  %v5422 = vpop.f32.mrf.mxu0
  %v5423 = vadd.f32 %v5098, %v5422
  %5424 = vmatprep.mubr.bf16.mxu0 %v2349
  %5425 = vmatmul.mubr.bf16.gmra.mxu0 %v2348
  %v5426 = vpop.f32.mrf.mxu0
  %v5427 = vadd.f32 %v5102, %v5426
  %v5428 = vpop.f32.mrf.mxu0
  %v5429 = vadd.f32 %v5104, %v5428
  %v5430 = vpop.f32.mrf.mxu0
  %v5431 = vadd.f32 %v5106, %v5430
  %v5432 = vpop.f32.mrf.mxu0
  %v5433 = vadd.f32 %v5108, %v5432
  %5434 = vmatprep.mubr.bf16.mxu0 %v2355
  %5435 = vmatmul.mubr.bf16.gmra.mxu0 %v2354
  %v5436 = vpop.f32.mrf.mxu0
  %v5437 = vadd.f32 %v5112, %v5436
  %v5438 = vpop.f32.mrf.mxu0
  %v5439 = vadd.f32 %v5114, %v5438
  %v5440 = vpop.f32.mrf.mxu0
  %v5441 = vadd.f32 %v5116, %v5440
  %v5442 = vpop.f32.mrf.mxu0
  %v5443 = vadd.f32 %v5118, %v5442
  %5444 = vmatprep.mubr.bf16.mxu0 %v2361
  %5445 = vmatmul.mubr.bf16.gmra.mxu0 %v2360
  %v5446 = vpop.f32.mrf.mxu0
  %v5447 = vpop.f32.mrf.mxu0
  %v5448 = vpop.f32.mrf.mxu0
  %v5449 = vpop.f32.mrf.mxu0
  %5450 = vmatprep.mubr.bf16.mxu0 %v2367
  %5451 = vmatmul.mubr.bf16.gmra.mxu0 %v2366
  %v5452 = vpop.f32.mrf.mxu0
  %v5453 = vpop.f32.mrf.mxu0
  %v5454 = vpop.f32.mrf.mxu0
  %v5455 = vpop.f32.mrf.mxu0
  %5456 = vmatprep.mubr.bf16.mxu0 %v2373
  %5457 = vmatmul.mubr.bf16.gmra.mxu0 %v2372
  %v5458 = vpop.f32.mrf.mxu0
  %v5459 = vadd.f32 %v5134, %v5458
  %v5460 = vpop.f32.mrf.mxu0
  %v5461 = vadd.f32 %v5136, %v5460
  %v5462 = vpop.f32.mrf.mxu0
  %v5463 = vadd.f32 %v5138, %v5462
  %v5464 = vpop.f32.mrf.mxu0
  %v5465 = vadd.f32 %v5140, %v5464
  %5466 = vmatprep.mubr.bf16.mxu0 %v2379
  %5467 = vmatmul.mubr.bf16.gmra.mxu0 %v2378
  %v5468 = vpop.f32.mrf.mxu0
  %v5469 = vadd.f32 %v5144, %v5468
  %v5470 = vpop.f32.mrf.mxu0
  %v5471 = vadd.f32 %v5146, %v5470
  %v5472 = vpop.f32.mrf.mxu0
  %v5473 = vadd.f32 %v5148, %v5472
  %v5474 = vpop.f32.mrf.mxu0
  %v5475 = vadd.f32 %v5150, %v5474
  %5476 = vmatprep.mubr.bf16.mxu0 %v2385
  %5477 = vmatmul.mubr.bf16.gmra.mxu0 %v2384
  %v5478 = vpop.f32.mrf.mxu0
  %v5479 = vadd.f32 %v5154, %v5478
  %v5480 = vpop.f32.mrf.mxu0
  %v5481 = vadd.f32 %v5156, %v5480
  %v5482 = vpop.f32.mrf.mxu0
  %v5483 = vadd.f32 %v5158, %v5482
  %v5484 = vpop.f32.mrf.mxu0
  %v5485 = vadd.f32 %v5160, %v5484
  %5486 = vmatprep.mubr.bf16.mxu0 %v2391
  %5487 = vmatmul.mubr.bf16.gmra.mxu0 %v2390
  %v5488 = vpop.f32.mrf.mxu0
  %v5489 = vadd.f32 %v5164, %v5488
  %v5490 = vpop.f32.mrf.mxu0
  %v5491 = vadd.f32 %v5166, %v5490
  %v5492 = vpop.f32.mrf.mxu0
  %v5493 = vadd.f32 %v5168, %v5492
  %v5494 = vpop.f32.mrf.mxu0
  %v5495 = vadd.f32 %v5170, %v5494
  %5496 = vmatprep.mubr.bf16.mxu0 %v2397
  %5497 = vmatmul.mubr.bf16.gmra.mxu0 %v2396
  %v5498 = vpop.f32.mrf.mxu0
  %v5499 = vadd.f32 %v5174, %v5498
  %v5500 = vpop.f32.mrf.mxu0
  %v5501 = vadd.f32 %v5176, %v5500
  %v5502 = vpop.f32.mrf.mxu0
  %v5503 = vadd.f32 %v5178, %v5502
  %v5504 = vpop.f32.mrf.mxu0
  %v5505 = vadd.f32 %v5180, %v5504
  %5506 = vmatprep.mubr.bf16.mxu0 %v2403
  %5507 = vmatmul.mubr.bf16.gmra.mxu0 %v2402
  %v5508 = vpop.f32.mrf.mxu0
  %v5509 = vadd.f32 %v5184, %v5508
  %v5510 = vpop.f32.mrf.mxu0
  %v5511 = vadd.f32 %v5186, %v5510
  %v5512 = vpop.f32.mrf.mxu0
  %v5513 = vadd.f32 %v5188, %v5512
  %v5514 = vpop.f32.mrf.mxu0
  %v5515 = vadd.f32 %v5190, %v5514
  %5516 = vmatprep.mubr.bf16.mxu0 %v2409
  %5517 = vmatmul.mubr.bf16.gmra.mxu0 %v2408
  %v5518 = vpop.f32.mrf.mxu0
  %v5519 = vadd.f32 %v5194, %v5518
  %v5520 = vpop.f32.mrf.mxu0
  %v5521 = vadd.f32 %v5196, %v5520
  %v5522 = vpop.f32.mrf.mxu0
  %v5523 = vadd.f32 %v5198, %v5522
  %v5524 = vpop.f32.mrf.mxu0
  %v5525 = vadd.f32 %v5200, %v5524
  %5526 = vmatprep.mubr.bf16.mxu0 %v2415
  %5527 = vmatmul.mubr.bf16.gmra.mxu0 %v2414
  %v5528 = vpop.f32.mrf.mxu0
  %v5529 = vadd.f32 %v5204, %v5528
  %v5530 = vpop.f32.mrf.mxu0
  %v5531 = vadd.f32 %v5206, %v5530
  %v5532 = vpop.f32.mrf.mxu0
  %v5533 = vadd.f32 %v5208, %v5532
  %v5534 = vpop.f32.mrf.mxu0
  %v5535 = vadd.f32 %v5210, %v5534
  %5536 = vmatprep.mubr.bf16.mxu0 %v2421
  %5537 = vmatmul.mubr.bf16.gmra.mxu0 %v2420
  %v5538 = vpop.f32.mrf.mxu0
  %v5539 = vadd.f32 %v5214, %v5538
  %v5540 = vpop.f32.mrf.mxu0
  %v5541 = vadd.f32 %v5216, %v5540
  %v5542 = vpop.f32.mrf.mxu0
  %v5543 = vadd.f32 %v5218, %v5542
  %v5544 = vpop.f32.mrf.mxu0
  %v5545 = vadd.f32 %v5220, %v5544
  %5546 = vmatprep.mubr.bf16.mxu0 %v2427
  %5547 = vmatmul.mubr.bf16.gmra.mxu0 %v2426
  %v5548 = vpop.f32.mrf.mxu0
  %v5549 = vadd.f32 %v5224, %v5548
  %v5550 = vpop.f32.mrf.mxu0
  %v5551 = vadd.f32 %v5226, %v5550
  %v5552 = vpop.f32.mrf.mxu0
  %v5553 = vadd.f32 %v5228, %v5552
  %v5554 = vpop.f32.mrf.mxu0
  %v5555 = vadd.f32 %v5230, %v5554
  %5556 = vmatprep.mubr.bf16.mxu0 %v2433
  %5557 = vmatmul.mubr.bf16.gmra.mxu0 %v2432
  %v5558 = vpop.f32.mrf.mxu0
  %v5559 = vadd.f32 %v5234, %v5558
  %v5560 = vpop.f32.mrf.mxu0
  %v5561 = vadd.f32 %v5236, %v5560
  %v5562 = vpop.f32.mrf.mxu0
  %v5563 = vadd.f32 %v5238, %v5562
  %v5564 = vpop.f32.mrf.mxu0
  %v5565 = vadd.f32 %v5240, %v5564
  %5566 = vmatprep.mubr.bf16.mxu0 %v2439
  %5567 = vmatmul.mubr.bf16.gmra.mxu0 %v2438
  %v5568 = vpop.f32.mrf.mxu0
  %v5569 = vadd.f32 %v5244, %v5568
  %v5570 = vpop.f32.mrf.mxu0
  %v5571 = vadd.f32 %v5246, %v5570
  %v5572 = vpop.f32.mrf.mxu0
  %v5573 = vadd.f32 %v5248, %v5572
  %v5574 = vpop.f32.mrf.mxu0
  %v5575 = vadd.f32 %v5250, %v5574
  %5576 = vmatprep.mubr.bf16.mxu0 %v2445
  %5577 = vmatmul.mubr.bf16.gmra.mxu0 %v2444
  %v5578 = vpop.f32.mrf.mxu0
  %v5579 = vadd.f32 %v5254, %v5578
  %v5580 = vpop.f32.mrf.mxu0
  %v5581 = vadd.f32 %v5256, %v5580
  %v5582 = vpop.f32.mrf.mxu0
  %v5583 = vadd.f32 %v5258, %v5582
  %v5584 = vpop.f32.mrf.mxu0
  %v5585 = vadd.f32 %v5260, %v5584
  %5586 = vmatprep.mubr.bf16.mxu0 %v2451
  %5587 = vmatmul.mubr.bf16.gmra.mxu0 %v2450
  %v5588 = vpop.f32.mrf.mxu0
  %v5589 = vadd.f32 %v5264, %v5588
  %v5590 = vpop.f32.mrf.mxu0
  %v5591 = vadd.f32 %v5266, %v5590
  %v5592 = vpop.f32.mrf.mxu0
  %v5593 = vadd.f32 %v5268, %v5592
  %v5594 = vpop.f32.mrf.mxu0
  %v5595 = vadd.f32 %v5270, %v5594
  %5596 = vdwg.mxu0
  %v5601 = vrot.slane %v1430, 1
  %v5602 = vsel %vm1554, %v2556, %v5601
  %v5603 = vrot.slane %v1431, 1
  %v5604 = vsel %vm1554, %v2558, %v5603
  %v5605 = vrot.slane %v1432, 1
  %v5606 = vsel %vm1554, %v5601, %v5605
  %v5607 = vrot.slane %v1433, 1
  %v5608 = vsel %vm1554, %v5603, %v5607
  %v5615 = vrot.slane %v1430, 2
  %v5616 = vsel %vm1913, %v2570, %v5615
  %v5617 = vrot.slane %v1431, 2
  %v5618 = vsel %vm1913, %v2572, %v5617
  %v5619 = vrot.slane %v1432, 2
  %v5620 = vsel %vm1913, %v5615, %v5619
  %v5621 = vrot.slane %v1433, 2
  %v5622 = vsel %vm1913, %v5617, %v5621
  %v5629 = vpack.c.bf16 %v5602, %v2557
  %v5630 = vpack.c.bf16 %v5604, %v2559
  %v5631 = vpack.c.bf16 %v5616, %v2571
  %v5632 = vpack.c.bf16 %v5618, %v2573
  %v5633 = vpack.c.bf16 %v1432, %v1430
  %v5634 = vpack.c.bf16 %v1433, %v1431
  %v5635 = vpack.c.bf16 %v5605, %v5606
  %v5636 = vpack.c.bf16 %v5607, %v5608
  %v5637 = vpack.c.bf16 %v5619, %v5620
  %v5638 = vpack.c.bf16 %v5621, %v5622
  %s5639 = scalar_lea.vmem %s5, 1536
  %v5640 = vld [vmem:[%s5639] sm:$0xff]
  %v5641 = vld [vmem:[%s5639 + $0x8] sm:$0xff]
  %v5642 = vld [vmem:[%s5639 + $0x10] sm:$0xff]
  %v5643 = vld [vmem:[%s5639 + $0x18] sm:$0xff]
  %v5644 = vld [vmem:[%s5639 + $0x20] sm:$0xff]
  %v5645 = vld [vmem:[%s5639 + $0x28] sm:$0xff]
  %v5646 = vld [vmem:[%s5639 + $0x30] sm:$0xff]
  %v5647 = vld [vmem:[%s5639 + $0x38] sm:$0xff]
  %v5648 = vld [vmem:[%s5639 + $0x40] sm:$0xff]
  %v5649 = vld [vmem:[%s5639 + $0x48] sm:$0xff]
  %v5650 = vld [vmem:[%s5639 + $0x50] sm:$0xff]
  %v5651 = vld [vmem:[%s5639 + $0x58] sm:$0xff]
  %v5652 = vld [vmem:[%s5639 + $0x60] sm:$0xff]
  %v5653 = vld [vmem:[%s5639 + $0x68] sm:$0xff]
  %v5654 = vld [vmem:[%s5639 + $0x70] sm:$0xff]
  %v5655 = vld [vmem:[%s5639 + $0x78] sm:$0xff]
  %v5656 = vld [vmem:[%s5639 + $0x80] sm:$0xff]
  %v5657 = vld [vmem:[%s5639 + $0x88] sm:$0xff]
  %v5658 = vld [vmem:[%s5639 + $0x90] sm:$0xff]
  %v5659 = vld [vmem:[%s5639 + $0x98] sm:$0xff]
  %v5660 = vld [vmem:[%s5639 + $0xa0] sm:$0xff]
  %v5661 = vld [vmem:[%s5639 + $0xa8] sm:$0xff]
  %v5662 = vld [vmem:[%s5639 + $0xb0] sm:$0xff]
  %v5663 = vld [vmem:[%s5639 + $0xb8] sm:$0xff]
  %v5664 = vld [vmem:[%s5639 + $0xc0] sm:$0xff]
  %v5665 = vld [vmem:[%s5639 + $0xc8] sm:$0xff]
  %v5666 = vld [vmem:[%s5639 + $0xd0] sm:$0xff]
  %v5667 = vld [vmem:[%s5639 + $0xd8] sm:$0xff]
  %v5668 = vld [vmem:[%s5639 + $0xe0] sm:$0xff]
  %v5669 = vld [vmem:[%s5639 + $0xe8] sm:$0xff]
  %v5670 = vld [vmem:[%s5639 + $0xf0] sm:$0xff]
  %v5671 = vld [vmem:[%s5639 + $0xf8] sm:$0xff]
  %v5672 = vld [vmem:[%s5639 + $0x100] sm:$0xff]
  %v5673 = vld [vmem:[%s5639 + $0x108] sm:$0xff]
  %v5674 = vld [vmem:[%s5639 + $0x110] sm:$0xff]
  %v5675 = vld [vmem:[%s5639 + $0x118] sm:$0xff]
  %v5676 = vld [vmem:[%s5639 + $0x120] sm:$0xff]
  %v5677 = vld [vmem:[%s5639 + $0x128] sm:$0xff]
  %v5678 = vld [vmem:[%s5639 + $0x130] sm:$0xff]
  %v5679 = vld [vmem:[%s5639 + $0x138] sm:$0xff]
  %v5680 = vld [vmem:[%s5639 + $0x140] sm:$0xff]
  %v5681 = vld [vmem:[%s5639 + $0x148] sm:$0xff]
  %v5682 = vld [vmem:[%s5639 + $0x150] sm:$0xff]
  %v5683 = vld [vmem:[%s5639 + $0x158] sm:$0xff]
  %v5684 = vld [vmem:[%s5639 + $0x160] sm:$0xff]
  %v5685 = vld [vmem:[%s5639 + $0x168] sm:$0xff]
  %v5686 = vld [vmem:[%s5639 + $0x170] sm:$0xff]
  %v5687 = vld [vmem:[%s5639 + $0x178] sm:$0xff]
  %v5688 = vld [vmem:[%s5639 + $0x180] sm:$0xff]
  %v5689 = vld [vmem:[%s5639 + $0x188] sm:$0xff]
  %v5690 = vld [vmem:[%s5639 + $0x190] sm:$0xff]
  %v5691 = vld [vmem:[%s5639 + $0x198] sm:$0xff]
  %v5692 = vld [vmem:[%s5639 + $0x1a0] sm:$0xff]
  %v5693 = vld [vmem:[%s5639 + $0x1a8] sm:$0xff]
  %v5694 = vld [vmem:[%s5639 + $0x1b0] sm:$0xff]
  %v5695 = vld [vmem:[%s5639 + $0x1b8] sm:$0xff]
  %v5696 = vld [vmem:[%s5639 + $0x1c0] sm:$0xff]
  %v5697 = vld [vmem:[%s5639 + $0x1c8] sm:$0xff]
  %v5698 = vld [vmem:[%s5639 + $0x1d0] sm:$0xff]
  %v5699 = vld [vmem:[%s5639 + $0x1d8] sm:$0xff]
  %v5700 = vld [vmem:[%s5639 + $0x1e0] sm:$0xff]
  %v5701 = vld [vmem:[%s5639 + $0x1e8] sm:$0xff]
  %v5702 = vld [vmem:[%s5639 + $0x1f0] sm:$0xff]
  %v5703 = vld [vmem:[%s5639 + $0x1f8] sm:$0xff]
  %v5704 = vld [vmem:[%s5639 + $0x200] sm:$0xff]
  %v5705 = vld [vmem:[%s5639 + $0x208] sm:$0xff]
  %v5706 = vld [vmem:[%s5639 + $0x210] sm:$0xff]
  %v5707 = vld [vmem:[%s5639 + $0x218] sm:$0xff]
  %v5708 = vld [vmem:[%s5639 + $0x220] sm:$0xff]
  %v5709 = vld [vmem:[%s5639 + $0x228] sm:$0xff]
  %v5710 = vld [vmem:[%s5639 + $0x230] sm:$0xff]
  %v5711 = vld [vmem:[%s5639 + $0x238] sm:$0xff]
  %v5712 = vld [vmem:[%s5639 + $0x240] sm:$0xff]
  %v5713 = vld [vmem:[%s5639 + $0x248] sm:$0xff]
  %v5714 = vld [vmem:[%s5639 + $0x250] sm:$0xff]
  %v5715 = vld [vmem:[%s5639 + $0x258] sm:$0xff]
  %v5716 = vld [vmem:[%s5639 + $0x260] sm:$0xff]
  %v5717 = vld [vmem:[%s5639 + $0x268] sm:$0xff]
  %v5718 = vld [vmem:[%s5639 + $0x270] sm:$0xff]
  %v5719 = vld [vmem:[%s5639 + $0x278] sm:$0xff]
  %v5720 = vld [vmem:[%s5639 + $0x280] sm:$0xff]
  %v5721 = vld [vmem:[%s5639 + $0x288] sm:$0xff]
  %v5722 = vld [vmem:[%s5639 + $0x290] sm:$0xff]
  %v5723 = vld [vmem:[%s5639 + $0x298] sm:$0xff]
  %v5724 = vld [vmem:[%s5639 + $0x2a0] sm:$0xff]
  %v5725 = vld [vmem:[%s5639 + $0x2a8] sm:$0xff]
  %v5726 = vld [vmem:[%s5639 + $0x2b0] sm:$0xff]
  %v5727 = vld [vmem:[%s5639 + $0x2b8] sm:$0xff]
  %v5728 = vld [vmem:[%s5639 + $0x2c0] sm:$0xff]
  %v5729 = vld [vmem:[%s5639 + $0x2c8] sm:$0xff]
  %v5730 = vld [vmem:[%s5639 + $0x2d0] sm:$0xff]
  %v5731 = vld [vmem:[%s5639 + $0x2d8] sm:$0xff]
  %v5732 = vld [vmem:[%s5639 + $0x2e0] sm:$0xff]
  %v5733 = vld [vmem:[%s5639 + $0x2e8] sm:$0xff]
  %v5734 = vld [vmem:[%s5639 + $0x2f0] sm:$0xff]
  %v5735 = vld [vmem:[%s5639 + $0x2f8] sm:$0xff]
  %v5832 = vunpack.c.l.b16 %v5640
  %v5833 = vunpack.c.h.b16 %v5640
  %v5834 = vunpack.c.l.b16 %v5641
  %v5835 = vunpack.c.h.b16 %v5641
  %v5836 = vunpack.c.l.b16 %v5642
  %v5837 = vunpack.c.h.b16 %v5642
  %v5838 = vunpack.c.l.b16 %v5643
  %v5839 = vunpack.c.h.b16 %v5643
  %v5840 = vunpack.c.l.b16 %v5644
  %v5841 = vunpack.c.h.b16 %v5644
  %v5842 = vunpack.c.l.b16 %v5645
  %v5843 = vunpack.c.h.b16 %v5645
  %v5844 = vunpack.c.l.b16 %v5646
  %v5845 = vunpack.c.h.b16 %v5646
  %v5846 = vunpack.c.l.b16 %v5647
  %v5847 = vunpack.c.h.b16 %v5647
  %v5848 = vunpack.c.l.b16 %v5648
  %v5849 = vunpack.c.h.b16 %v5648
  %v5850 = vunpack.c.l.b16 %v5649
  %v5851 = vunpack.c.h.b16 %v5649
  %v5852 = vunpack.c.l.b16 %v5650
  %v5853 = vunpack.c.h.b16 %v5650
  %v5854 = vunpack.c.l.b16 %v5651
  %v5855 = vunpack.c.h.b16 %v5651
  %v5856 = vunpack.c.l.b16 %v5652
  %v5857 = vunpack.c.h.b16 %v5652
  %v5858 = vunpack.c.l.b16 %v5653
  %v5859 = vunpack.c.h.b16 %v5653
  %v5860 = vunpack.c.l.b16 %v5654
  %v5861 = vunpack.c.h.b16 %v5654
  %v5862 = vunpack.c.l.b16 %v5655
  %v5863 = vunpack.c.h.b16 %v5655
  %v5864 = vunpack.c.l.b16 %v5656
  %v5865 = vunpack.c.h.b16 %v5656
  %v5866 = vunpack.c.l.b16 %v5657
  %v5867 = vunpack.c.h.b16 %v5657
  %v5868 = vunpack.c.l.b16 %v5658
  %v5869 = vunpack.c.h.b16 %v5658
  %v5870 = vunpack.c.l.b16 %v5659
  %v5871 = vunpack.c.h.b16 %v5659
  %v5872 = vunpack.c.l.b16 %v5660
  %v5873 = vunpack.c.h.b16 %v5660
  %v5874 = vunpack.c.l.b16 %v5661
  %v5875 = vunpack.c.h.b16 %v5661
  %v5876 = vunpack.c.l.b16 %v5662
  %v5877 = vunpack.c.h.b16 %v5662
  %v5878 = vunpack.c.l.b16 %v5663
  %v5879 = vunpack.c.h.b16 %v5663
  %v5880 = vunpack.c.l.b16 %v5664
  %v5881 = vunpack.c.h.b16 %v5664
  %v5882 = vunpack.c.l.b16 %v5665
  %v5883 = vunpack.c.h.b16 %v5665
  %v5884 = vunpack.c.l.b16 %v5666
  %v5885 = vunpack.c.h.b16 %v5666
  %v5886 = vunpack.c.l.b16 %v5667
  %v5887 = vunpack.c.h.b16 %v5667
  %v5888 = vunpack.c.l.b16 %v5668
  %v5889 = vunpack.c.h.b16 %v5668
  %v5890 = vunpack.c.l.b16 %v5669
  %v5891 = vunpack.c.h.b16 %v5669
  %v5892 = vunpack.c.l.b16 %v5670
  %v5893 = vunpack.c.h.b16 %v5670
  %v5894 = vunpack.c.l.b16 %v5671
  %v5895 = vunpack.c.h.b16 %v5671
  %v5896 = vunpack.c.l.b16 %v5672
  %v5897 = vunpack.c.h.b16 %v5672
  %v5898 = vunpack.c.l.b16 %v5673
  %v5899 = vunpack.c.h.b16 %v5673
  %v5900 = vunpack.c.l.b16 %v5674
  %v5901 = vunpack.c.h.b16 %v5674
  %v5902 = vunpack.c.l.b16 %v5675
  %v5903 = vunpack.c.h.b16 %v5675
  %v5904 = vunpack.c.l.b16 %v5676
  %v5905 = vunpack.c.h.b16 %v5676
  %v5906 = vunpack.c.l.b16 %v5677
  %v5907 = vunpack.c.h.b16 %v5677
  %v5908 = vunpack.c.l.b16 %v5678
  %v5909 = vunpack.c.h.b16 %v5678
  %v5910 = vunpack.c.l.b16 %v5679
  %v5911 = vunpack.c.h.b16 %v5679
  %v5912 = vunpack.c.l.b16 %v5680
  %v5913 = vunpack.c.h.b16 %v5680
  %v5914 = vunpack.c.l.b16 %v5681
  %v5915 = vunpack.c.h.b16 %v5681
  %v5916 = vunpack.c.l.b16 %v5682
  %v5917 = vunpack.c.h.b16 %v5682
  %v5918 = vunpack.c.l.b16 %v5683
  %v5919 = vunpack.c.h.b16 %v5683
  %v5920 = vunpack.c.l.b16 %v5684
  %v5921 = vunpack.c.h.b16 %v5684
  %v5922 = vunpack.c.l.b16 %v5685
  %v5923 = vunpack.c.h.b16 %v5685
  %v5924 = vunpack.c.l.b16 %v5686
  %v5925 = vunpack.c.h.b16 %v5686
  %v5926 = vunpack.c.l.b16 %v5687
  %v5927 = vunpack.c.h.b16 %v5687
  %v5928 = vunpack.c.l.b16 %v5688
  %v5929 = vunpack.c.h.b16 %v5688
  %v5930 = vunpack.c.l.b16 %v5689
  %v5931 = vunpack.c.h.b16 %v5689
  %v5932 = vunpack.c.l.b16 %v5690
  %v5933 = vunpack.c.h.b16 %v5690
  %v5934 = vunpack.c.l.b16 %v5691
  %v5935 = vunpack.c.h.b16 %v5691
  %v5936 = vunpack.c.l.b16 %v5692
  %v5937 = vunpack.c.h.b16 %v5692
  %v5938 = vunpack.c.l.b16 %v5693
  %v5939 = vunpack.c.h.b16 %v5693
  %v5940 = vunpack.c.l.b16 %v5694
  %v5941 = vunpack.c.h.b16 %v5694
  %v5942 = vunpack.c.l.b16 %v5695
  %v5943 = vunpack.c.h.b16 %v5695
  %v5944 = vunpack.c.l.b16 %v5696
  %v5945 = vunpack.c.h.b16 %v5696
  %v5946 = vunpack.c.l.b16 %v5697
  %v5947 = vunpack.c.h.b16 %v5697
  %v5948 = vunpack.c.l.b16 %v5698
  %v5949 = vunpack.c.h.b16 %v5698
  %v5950 = vunpack.c.l.b16 %v5699
  %v5951 = vunpack.c.h.b16 %v5699
  %v5952 = vunpack.c.l.b16 %v5700
  %v5953 = vunpack.c.h.b16 %v5700
  %v5954 = vunpack.c.l.b16 %v5701
  %v5955 = vunpack.c.h.b16 %v5701
  %v5956 = vunpack.c.l.b16 %v5702
  %v5957 = vunpack.c.h.b16 %v5702
  %v5958 = vunpack.c.l.b16 %v5703
  %v5959 = vunpack.c.h.b16 %v5703
  %v5960 = vunpack.c.l.b16 %v5704
  %v5961 = vunpack.c.h.b16 %v5704
  %v5962 = vunpack.c.l.b16 %v5705
  %v5963 = vunpack.c.h.b16 %v5705
  %v5964 = vunpack.c.l.b16 %v5706
  %v5965 = vunpack.c.h.b16 %v5706
  %v5966 = vunpack.c.l.b16 %v5707
  %v5967 = vunpack.c.h.b16 %v5707
  %v5968 = vunpack.c.l.b16 %v5708
  %v5969 = vunpack.c.h.b16 %v5708
  %v5970 = vunpack.c.l.b16 %v5709
  %v5971 = vunpack.c.h.b16 %v5709
  %v5972 = vunpack.c.l.b16 %v5710
  %v5973 = vunpack.c.h.b16 %v5710
  %v5974 = vunpack.c.l.b16 %v5711
  %v5975 = vunpack.c.h.b16 %v5711
  %v5976 = vunpack.c.l.b16 %v5712
  %v5977 = vunpack.c.h.b16 %v5712
  %v5978 = vunpack.c.l.b16 %v5713
  %v5979 = vunpack.c.h.b16 %v5713
  %v5980 = vunpack.c.l.b16 %v5714
  %v5981 = vunpack.c.h.b16 %v5714
  %v5982 = vunpack.c.l.b16 %v5715
  %v5983 = vunpack.c.h.b16 %v5715
  %v5984 = vunpack.c.l.b16 %v5716
  %v5985 = vunpack.c.h.b16 %v5716
  %v5986 = vunpack.c.l.b16 %v5717
  %v5987 = vunpack.c.h.b16 %v5717
  %v5988 = vunpack.c.l.b16 %v5718
  %v5989 = vunpack.c.h.b16 %v5718
  %v5990 = vunpack.c.l.b16 %v5719
  %v5991 = vunpack.c.h.b16 %v5719
  %v5992 = vunpack.c.l.b16 %v5720
  %v5993 = vunpack.c.h.b16 %v5720
  %v5994 = vunpack.c.l.b16 %v5721
  %v5995 = vunpack.c.h.b16 %v5721
  %v5996 = vunpack.c.l.b16 %v5722
  %v5997 = vunpack.c.h.b16 %v5722
  %v5998 = vunpack.c.l.b16 %v5723
  %v5999 = vunpack.c.h.b16 %v5723
  %v6000 = vunpack.c.l.b16 %v5724
  %v6001 = vunpack.c.h.b16 %v5724
  %v6002 = vunpack.c.l.b16 %v5725
  %v6003 = vunpack.c.h.b16 %v5725
  %v6004 = vunpack.c.l.b16 %v5726
  %v6005 = vunpack.c.h.b16 %v5726
  %v6006 = vunpack.c.l.b16 %v5727
  %v6007 = vunpack.c.h.b16 %v5727
  %v6008 = vunpack.c.l.b16 %v5728
  %v6009 = vunpack.c.h.b16 %v5728
  %v6010 = vunpack.c.l.b16 %v5729
  %v6011 = vunpack.c.h.b16 %v5729
  %v6012 = vunpack.c.l.b16 %v5730
  %v6013 = vunpack.c.h.b16 %v5730
  %v6014 = vunpack.c.l.b16 %v5731
  %v6015 = vunpack.c.h.b16 %v5731
  %v6016 = vunpack.c.l.b16 %v5732
  %v6017 = vunpack.c.h.b16 %v5732
  %v6018 = vunpack.c.l.b16 %v5733
  %v6019 = vunpack.c.h.b16 %v5733
  %v6020 = vunpack.c.l.b16 %v5734
  %v6021 = vunpack.c.h.b16 %v5734
  %v6022 = vunpack.c.l.b16 %v5735
  %v6023 = vunpack.c.h.b16 %v5735
  %v6024 = vpack.c.b16 %v5834, %v5832
  %v6025 = vpack.c.b16 %v5835, %v5833
  %v6026 = vpack.c.b16 %v5838, %v5836
  %v6027 = vpack.c.b16 %v5839, %v5837
  %v6028 = vpack.c.b16 %v5842, %v5840
  %v6029 = vpack.c.b16 %v5843, %v5841
  %v6030 = vpack.c.b16 %v5846, %v5844
  %v6031 = vpack.c.b16 %v5847, %v5845
  %v6032 = vpack.c.b16 %v5850, %v5848
  %v6033 = vpack.c.b16 %v5851, %v5849
  %v6034 = vpack.c.b16 %v5854, %v5852
  %v6035 = vpack.c.b16 %v5855, %v5853
  %v6036 = vpack.c.b16 %v5858, %v5856
  %v6037 = vpack.c.b16 %v5859, %v5857
  %v6038 = vpack.c.b16 %v5862, %v5860
  %v6039 = vpack.c.b16 %v5863, %v5861
  %v6040 = vpack.c.b16 %v5866, %v5864
  %v6041 = vpack.c.b16 %v5867, %v5865
  %v6042 = vpack.c.b16 %v5870, %v5868
  %v6043 = vpack.c.b16 %v5871, %v5869
  %v6044 = vpack.c.b16 %v5874, %v5872
  %v6045 = vpack.c.b16 %v5875, %v5873
  %v6046 = vpack.c.b16 %v5878, %v5876
  %v6047 = vpack.c.b16 %v5879, %v5877
  %v6048 = vpack.c.b16 %v5882, %v5880
  %v6049 = vpack.c.b16 %v5883, %v5881
  %v6050 = vpack.c.b16 %v5886, %v5884
  %v6051 = vpack.c.b16 %v5887, %v5885
  %v6052 = vpack.c.b16 %v5890, %v5888
  %v6053 = vpack.c.b16 %v5891, %v5889
  %v6054 = vpack.c.b16 %v5894, %v5892
  %v6055 = vpack.c.b16 %v5895, %v5893
  %v6056 = vpack.c.b16 %v5898, %v5896
  %v6057 = vpack.c.b16 %v5899, %v5897
  %v6058 = vpack.c.b16 %v5902, %v5900
  %v6059 = vpack.c.b16 %v5903, %v5901
  %v6060 = vpack.c.b16 %v5906, %v5904
  %v6061 = vpack.c.b16 %v5907, %v5905
  %v6062 = vpack.c.b16 %v5910, %v5908
  %v6063 = vpack.c.b16 %v5911, %v5909
  %v6064 = vpack.c.b16 %v5914, %v5912
  %v6065 = vpack.c.b16 %v5915, %v5913
  %v6066 = vpack.c.b16 %v5918, %v5916
  %v6067 = vpack.c.b16 %v5919, %v5917
  %v6068 = vpack.c.b16 %v5922, %v5920
  %v6069 = vpack.c.b16 %v5923, %v5921
  %v6070 = vpack.c.b16 %v5926, %v5924
  %v6071 = vpack.c.b16 %v5927, %v5925
  %v6072 = vpack.c.b16 %v5930, %v5928
  %v6073 = vpack.c.b16 %v5931, %v5929
  %v6074 = vpack.c.b16 %v5934, %v5932
  %v6075 = vpack.c.b16 %v5935, %v5933
  %v6076 = vpack.c.b16 %v5938, %v5936
  %v6077 = vpack.c.b16 %v5939, %v5937
  %v6078 = vpack.c.b16 %v5942, %v5940
  %v6079 = vpack.c.b16 %v5943, %v5941
  %v6080 = vpack.c.b16 %v5946, %v5944
  %v6081 = vpack.c.b16 %v5947, %v5945
  %v6082 = vpack.c.b16 %v5950, %v5948
  %v6083 = vpack.c.b16 %v5951, %v5949
  %v6084 = vpack.c.b16 %v5954, %v5952
  %v6085 = vpack.c.b16 %v5955, %v5953
  %v6086 = vpack.c.b16 %v5958, %v5956
  %v6087 = vpack.c.b16 %v5959, %v5957
  %v6088 = vpack.c.b16 %v5962, %v5960
  %v6089 = vpack.c.b16 %v5963, %v5961
  %v6090 = vpack.c.b16 %v5966, %v5964
  %v6091 = vpack.c.b16 %v5967, %v5965
  %v6092 = vpack.c.b16 %v5970, %v5968
  %v6093 = vpack.c.b16 %v5971, %v5969
  %v6094 = vpack.c.b16 %v5974, %v5972
  %v6095 = vpack.c.b16 %v5975, %v5973
  %v6096 = vpack.c.b16 %v5978, %v5976
  %v6097 = vpack.c.b16 %v5979, %v5977
  %v6098 = vpack.c.b16 %v5982, %v5980
  %v6099 = vpack.c.b16 %v5983, %v5981
  %v6100 = vpack.c.b16 %v5986, %v5984
  %v6101 = vpack.c.b16 %v5987, %v5985
  %v6102 = vpack.c.b16 %v5990, %v5988
  %v6103 = vpack.c.b16 %v5991, %v5989
  %v6104 = vpack.c.b16 %v5994, %v5992
  %v6105 = vpack.c.b16 %v5995, %v5993
  %v6106 = vpack.c.b16 %v5998, %v5996
  %v6107 = vpack.c.b16 %v5999, %v5997
  %v6108 = vpack.c.b16 %v6002, %v6000
  %v6109 = vpack.c.b16 %v6003, %v6001
  %v6110 = vpack.c.b16 %v6006, %v6004
  %v6111 = vpack.c.b16 %v6007, %v6005
  %v6112 = vpack.c.b16 %v6010, %v6008
  %v6113 = vpack.c.b16 %v6011, %v6009
  %v6114 = vpack.c.b16 %v6014, %v6012
  %v6115 = vpack.c.b16 %v6015, %v6013
  %v6116 = vpack.c.b16 %v6018, %v6016
  %v6117 = vpack.c.b16 %v6019, %v6017
  %v6118 = vpack.c.b16 %v6022, %v6020
  %v6119 = vpack.c.b16 %v6023, %v6021
  %6216 = vmatprep.subr.bf16.mxu0 %v6039
  %6217 = vmatpush1.bf16.msra.mxu0 %v6038
  %6218 = vmatprep.subr.bf16.mxu0 %v6037
  %6219 = vmatpush1.bf16.msra.mxu0 %v6036
  %6220 = vmatprep.subr.bf16.mxu0 %v6035
  %6221 = vmatpush1.bf16.msra.mxu0 %v6034
  %6222 = vmatprep.subr.bf16.mxu0 %v6033
  %6223 = vmatpush1.bf16.msra.mxu0 %v6032
  %6224 = vmatprep.subr.bf16.mxu0 %v6031
  %6225 = vmatpush1.bf16.msra.mxu0 %v6030
  %6226 = vmatprep.subr.bf16.mxu0 %v6029
  %6227 = vmatpush1.bf16.msra.mxu0 %v6028
  %6228 = vmatprep.subr.bf16.mxu0 %v6027
  %6229 = vmatpush1.bf16.msra.mxu0 %v6026
  %6230 = vmatprep.subr.bf16.mxu0 %v6025
  %6231 = vmatpush1.bf16.msra.mxu0 %v6024
  %6232 = vmatprep.subr.bf16.mxu0 %v6055
  %6233 = vmatpush2.bf16.msra.mxu0 %v6054
  %6234 = vmatprep.subr.bf16.mxu0 %v6053
  %6235 = vmatpush2.bf16.msra.mxu0 %v6052
  %6236 = vmatprep.subr.bf16.mxu0 %v6051
  %6237 = vmatpush2.bf16.msra.mxu0 %v6050
  %6238 = vmatprep.subr.bf16.mxu0 %v6049
  %6239 = vmatpush2.bf16.msra.mxu0 %v6048
  %6240 = vmatprep.subr.bf16.mxu0 %v6047
  %6241 = vmatpush2.bf16.msra.mxu0 %v6046
  %6242 = vmatprep.subr.bf16.mxu0 %v6045
  %6243 = vmatpush2.bf16.msra.mxu0 %v6044
  %6244 = vmatprep.subr.bf16.mxu0 %v6043
  %6245 = vmatpush2.bf16.msra.mxu0 %v6042
  %6246 = vmatprep.subr.bf16.mxu0 %v6041
  %6247 = vmatpush2.bf16.msra.mxu0 %v6040
  %6248 = vmatprep.mubr.bf16.mxu0 %v2285
  %6249 = vmatmul.mubr.bf16.gmra.mxu0 %v2284
  %v6250 = vpop.f32.mrf.mxu0
  %v6251 = vadd.f32 0.0, %v6250
  %v6252 = vpop.f32.mrf.mxu0
  %v6253 = vadd.f32 0.0, %v6252
  %v6254 = vpop.f32.mrf.mxu0
  %v6255 = vadd.f32 0.0, %v6254
  %v6256 = vpop.f32.mrf.mxu0
  %v6257 = vadd.f32 0.0, %v6256
  %6258 = vmatprep.mubr.bf16.mxu0 %v2291
  %6259 = vmatmul.mubr.bf16.gmra.mxu0 %v2290
  %v6260 = vpop.f32.mrf.mxu0
  %v6261 = vadd.f32 0.0, %v6260
  %v6262 = vpop.f32.mrf.mxu0
  %v6263 = vadd.f32 0.0, %v6262
  %v6264 = vpop.f32.mrf.mxu0
  %v6265 = vadd.f32 0.0, %v6264
  %v6266 = vpop.f32.mrf.mxu0
  %v6267 = vadd.f32 0.0, %v6266
  %6268 = vmatprep.mubr.bf16.mxu0 %v2297
  %6269 = vmatmul.mubr.bf16.gmra.mxu0 %v2296
  %v6270 = vpop.f32.mrf.mxu0
  %v6271 = vadd.f32 0.0, %v6270
  %v6272 = vpop.f32.mrf.mxu0
  %v6273 = vadd.f32 0.0, %v6272
  %v6274 = vpop.f32.mrf.mxu0
  %v6275 = vadd.f32 0.0, %v6274
  %v6276 = vpop.f32.mrf.mxu0
  %v6277 = vadd.f32 0.0, %v6276
  %6278 = vmatprep.mubr.bf16.mxu0 %v2303
  %6279 = vmatmul.mubr.bf16.gmra.mxu0 %v2302
  %v6280 = vpop.f32.mrf.mxu0
  %v6281 = vadd.f32 0.0, %v6280
  %v6282 = vpop.f32.mrf.mxu0
  %v6283 = vadd.f32 0.0, %v6282
  %v6284 = vpop.f32.mrf.mxu0
  %v6285 = vadd.f32 0.0, %v6284
  %v6286 = vpop.f32.mrf.mxu0
  %v6287 = vadd.f32 0.0, %v6286
  %6288 = vmatprep.mubr.bf16.mxu0 %v2309
  %6289 = vmatmul.mubr.bf16.gmra.mxu0 %v2308
  %v6290 = vpop.f32.mrf.mxu0
  %v6291 = vadd.f32 0.0, %v6290
  %v6292 = vpop.f32.mrf.mxu0
  %v6293 = vadd.f32 0.0, %v6292
  %v6294 = vpop.f32.mrf.mxu0
  %v6295 = vadd.f32 0.0, %v6294
  %v6296 = vpop.f32.mrf.mxu0
  %v6297 = vadd.f32 0.0, %v6296
  %6298 = vmatprep.mubr.bf16.mxu0 %v2315
  %6299 = vmatmul.mubr.bf16.gmra.mxu0 %v2314
  %v6300 = vpop.f32.mrf.mxu0
  %v6301 = vadd.f32 0.0, %v6300
  %v6302 = vpop.f32.mrf.mxu0
  %v6303 = vadd.f32 0.0, %v6302
  %v6304 = vpop.f32.mrf.mxu0
  %v6305 = vadd.f32 0.0, %v6304
  %v6306 = vpop.f32.mrf.mxu0
  %v6307 = vadd.f32 0.0, %v6306
  %6308 = vmatprep.mubr.bf16.mxu0 %v2321
  %6309 = vmatmul.mubr.bf16.gmra.mxu0 %v2320
  %v6310 = vpop.f32.mrf.mxu0
  %v6311 = vadd.f32 0.0, %v6310
  %v6312 = vpop.f32.mrf.mxu0
  %v6313 = vadd.f32 0.0, %v6312
  %v6314 = vpop.f32.mrf.mxu0
  %v6315 = vadd.f32 0.0, %v6314
  %v6316 = vpop.f32.mrf.mxu0
  %v6317 = vadd.f32 0.0, %v6316
  %6318 = vmatprep.mubr.bf16.mxu0 %v2327
  %6319 = vmatmul.mubr.bf16.gmra.mxu0 %v2326
  %v6320 = vpop.f32.mrf.mxu0
  %v6321 = vadd.f32 0.0, %v6320
  %v6322 = vpop.f32.mrf.mxu0
  %v6323 = vadd.f32 0.0, %v6322
  %v6324 = vpop.f32.mrf.mxu0
  %v6325 = vadd.f32 0.0, %v6324
  %v6326 = vpop.f32.mrf.mxu0
  %v6327 = vadd.f32 0.0, %v6326
  %6328 = vmatprep.mubr.bf16.mxu0 %v2333
  %6329 = vmatmul.mubr.bf16.gmra.mxu0 %v2332
  %v6330 = vpop.f32.mrf.mxu0
  %v6331 = vadd.f32 0.0, %v6330
  %v6332 = vpop.f32.mrf.mxu0
  %v6333 = vadd.f32 0.0, %v6332
  %v6334 = vpop.f32.mrf.mxu0
  %v6335 = vadd.f32 0.0, %v6334
  %v6336 = vpop.f32.mrf.mxu0
  %v6337 = vadd.f32 0.0, %v6336
  %6338 = vmatprep.mubr.bf16.mxu0 %v2339
  %6339 = vmatmul.mubr.bf16.gmra.mxu0 %v2338
  %v6340 = vpop.f32.mrf.mxu0
  %v6341 = vadd.f32 0.0, %v6340
  %v6342 = vpop.f32.mrf.mxu0
  %v6343 = vadd.f32 0.0, %v6342
  %v6344 = vpop.f32.mrf.mxu0
  %v6345 = vadd.f32 0.0, %v6344
  %v6346 = vpop.f32.mrf.mxu0
  %v6347 = vadd.f32 0.0, %v6346
  %6348 = vmatprep.mubr.bf16.mxu0 %v2345
  %6349 = vmatmul.mubr.bf16.gmra.mxu0 %v2344
  %v6350 = vpop.f32.mrf.mxu0
  %v6351 = vadd.f32 0.0, %v6350
  %v6352 = vpop.f32.mrf.mxu0
  %v6353 = vadd.f32 0.0, %v6352
  %v6354 = vpop.f32.mrf.mxu0
  %v6355 = vadd.f32 0.0, %v6354
  %v6356 = vpop.f32.mrf.mxu0
  %v6357 = vadd.f32 0.0, %v6356
  %6358 = vmatprep.mubr.bf16.mxu0 %v2351
  %6359 = vmatmul.mubr.bf16.gmra.mxu0 %v2350
  %v6360 = vpop.f32.mrf.mxu0
  %v6361 = vadd.f32 0.0, %v6360
  %v6362 = vpop.f32.mrf.mxu0
  %v6363 = vadd.f32 0.0, %v6362
  %v6364 = vpop.f32.mrf.mxu0
  %v6365 = vadd.f32 0.0, %v6364
  %v6366 = vpop.f32.mrf.mxu0
  %v6367 = vadd.f32 0.0, %v6366
  %6368 = vmatprep.mubr.bf16.mxu0 %v2357
  %6369 = vmatmul.mubr.bf16.gmra.mxu0 %v2356
  %v6370 = vpop.f32.mrf.mxu0
  %v6371 = vadd.f32 0.0, %v6370
  %v6372 = vpop.f32.mrf.mxu0
  %v6373 = vadd.f32 0.0, %v6372
  %v6374 = vpop.f32.mrf.mxu0
  %v6375 = vadd.f32 0.0, %v6374
  %v6376 = vpop.f32.mrf.mxu0
  %v6377 = vadd.f32 0.0, %v6376
  %6378 = vmatprep.mubr.bf16.mxu0 %v2363
  %6379 = vmatmul.mubr.bf16.gmra.mxu0 %v2362
  %v6380 = vpop.f32.mrf.mxu0
  %v6381 = vadd.f32 0.0, %v6380
  %v6382 = vpop.f32.mrf.mxu0
  %v6383 = vadd.f32 0.0, %v6382
  %v6384 = vpop.f32.mrf.mxu0
  %v6385 = vadd.f32 0.0, %v6384
  %v6386 = vpop.f32.mrf.mxu0
  %v6387 = vadd.f32 0.0, %v6386
  %6388 = vmatprep.mubr.bf16.mxu0 %v2369
  %6389 = vmatmul.mubr.bf16.gmra.mxu0 %v2368
  %v6390 = vpop.f32.mrf.mxu0
  %v6391 = vpop.f32.mrf.mxu0
  %v6392 = vpop.f32.mrf.mxu0
  %v6393 = vpop.f32.mrf.mxu0
  %6394 = vmatprep.mubr.bf16.mxu0 %v2375
  %6395 = vmatmul.mubr.bf16.gmra.mxu0 %v2374
  %v6396 = vpop.f32.mrf.mxu0
  %v6397 = vpop.f32.mrf.mxu0
  %v6398 = vpop.f32.mrf.mxu0
  %v6399 = vpop.f32.mrf.mxu0
  %6400 = vmatprep.mubr.bf16.mxu0 %v2381
  %6401 = vmatmul.mubr.bf16.gmra.mxu0 %v2380
  %v6402 = vpop.f32.mrf.mxu0
  %v6403 = vadd.f32 0.0, %v6402
  %v6404 = vpop.f32.mrf.mxu0
  %v6405 = vadd.f32 0.0, %v6404
  %v6406 = vpop.f32.mrf.mxu0
  %v6407 = vadd.f32 0.0, %v6406
  %v6408 = vpop.f32.mrf.mxu0
  %v6409 = vadd.f32 0.0, %v6408
  %6410 = vmatprep.mubr.bf16.mxu0 %v2387
  %6411 = vmatmul.mubr.bf16.gmra.mxu0 %v2386
  %v6412 = vpop.f32.mrf.mxu0
  %v6413 = vadd.f32 0.0, %v6412
  %v6414 = vpop.f32.mrf.mxu0
  %v6415 = vadd.f32 0.0, %v6414
  %v6416 = vpop.f32.mrf.mxu0
  %v6417 = vadd.f32 0.0, %v6416
  %v6418 = vpop.f32.mrf.mxu0
  %v6419 = vadd.f32 0.0, %v6418
  %6420 = vmatprep.mubr.bf16.mxu0 %v2393
  %6421 = vmatmul.mubr.bf16.gmra.mxu0 %v2392
  %v6422 = vpop.f32.mrf.mxu0
  %v6423 = vadd.f32 0.0, %v6422
  %v6424 = vpop.f32.mrf.mxu0
  %v6425 = vadd.f32 0.0, %v6424
  %v6426 = vpop.f32.mrf.mxu0
  %v6427 = vadd.f32 0.0, %v6426
  %v6428 = vpop.f32.mrf.mxu0
  %v6429 = vadd.f32 0.0, %v6428
  %6430 = vmatprep.mubr.bf16.mxu0 %v2399
  %6431 = vmatmul.mubr.bf16.gmra.mxu0 %v2398
  %v6432 = vpop.f32.mrf.mxu0
  %v6433 = vadd.f32 0.0, %v6432
  %v6434 = vpop.f32.mrf.mxu0
  %v6435 = vadd.f32 0.0, %v6434
  %v6436 = vpop.f32.mrf.mxu0
  %v6437 = vadd.f32 0.0, %v6436
  %v6438 = vpop.f32.mrf.mxu0
  %v6439 = vadd.f32 0.0, %v6438
  %6440 = vmatprep.mubr.bf16.mxu0 %v2405
  %6441 = vmatmul.mubr.bf16.gmra.mxu0 %v2404
  %v6442 = vpop.f32.mrf.mxu0
  %v6443 = vadd.f32 0.0, %v6442
  %v6444 = vpop.f32.mrf.mxu0
  %v6445 = vadd.f32 0.0, %v6444
  %v6446 = vpop.f32.mrf.mxu0
  %v6447 = vadd.f32 0.0, %v6446
  %v6448 = vpop.f32.mrf.mxu0
  %v6449 = vadd.f32 0.0, %v6448
  %6450 = vmatprep.mubr.bf16.mxu0 %v2411
  %6451 = vmatmul.mubr.bf16.gmra.mxu0 %v2410
  %v6452 = vpop.f32.mrf.mxu0
  %v6453 = vadd.f32 0.0, %v6452
  %v6454 = vpop.f32.mrf.mxu0
  %v6455 = vadd.f32 0.0, %v6454
  %v6456 = vpop.f32.mrf.mxu0
  %v6457 = vadd.f32 0.0, %v6456
  %v6458 = vpop.f32.mrf.mxu0
  %v6459 = vadd.f32 0.0, %v6458
  %6460 = vmatprep.mubr.bf16.mxu0 %v2417
  %6461 = vmatmul.mubr.bf16.gmra.mxu0 %v2416
  %v6462 = vpop.f32.mrf.mxu0
  %v6463 = vadd.f32 0.0, %v6462
  %v6464 = vpop.f32.mrf.mxu0
  %v6465 = vadd.f32 0.0, %v6464
  %v6466 = vpop.f32.mrf.mxu0
  %v6467 = vadd.f32 0.0, %v6466
  %v6468 = vpop.f32.mrf.mxu0
  %v6469 = vadd.f32 0.0, %v6468
  %6470 = vmatprep.mubr.bf16.mxu0 %v2423
  %6471 = vmatmul.mubr.bf16.gmra.mxu0 %v2422
  %v6472 = vpop.f32.mrf.mxu0
  %v6473 = vadd.f32 0.0, %v6472
  %v6474 = vpop.f32.mrf.mxu0
  %v6475 = vadd.f32 0.0, %v6474
  %v6476 = vpop.f32.mrf.mxu0
  %v6477 = vadd.f32 0.0, %v6476
  %v6478 = vpop.f32.mrf.mxu0
  %v6479 = vadd.f32 0.0, %v6478
  %6480 = vmatprep.mubr.bf16.mxu0 %v2429
  %6481 = vmatmul.mubr.bf16.gmra.mxu0 %v2428
  %v6482 = vpop.f32.mrf.mxu0
  %v6483 = vadd.f32 0.0, %v6482
  %v6484 = vpop.f32.mrf.mxu0
  %v6485 = vadd.f32 0.0, %v6484
  %v6486 = vpop.f32.mrf.mxu0
  %v6487 = vadd.f32 0.0, %v6486
  %v6488 = vpop.f32.mrf.mxu0
  %v6489 = vadd.f32 0.0, %v6488
  %6490 = vmatprep.mubr.bf16.mxu0 %v2435
  %6491 = vmatmul.mubr.bf16.gmra.mxu0 %v2434
  %v6492 = vpop.f32.mrf.mxu0
  %v6493 = vadd.f32 0.0, %v6492
  %v6494 = vpop.f32.mrf.mxu0
  %v6495 = vadd.f32 0.0, %v6494
  %v6496 = vpop.f32.mrf.mxu0
  %v6497 = vadd.f32 0.0, %v6496
  %v6498 = vpop.f32.mrf.mxu0
  %v6499 = vadd.f32 0.0, %v6498
  %6500 = vmatprep.mubr.bf16.mxu0 %v2441
  %6501 = vmatmul.mubr.bf16.gmra.mxu0 %v2440
  %v6502 = vpop.f32.mrf.mxu0
  %v6503 = vadd.f32 0.0, %v6502
  %v6504 = vpop.f32.mrf.mxu0
  %v6505 = vadd.f32 0.0, %v6504
  %v6506 = vpop.f32.mrf.mxu0
  %v6507 = vadd.f32 0.0, %v6506
  %v6508 = vpop.f32.mrf.mxu0
  %v6509 = vadd.f32 0.0, %v6508
  %6510 = vmatprep.mubr.bf16.mxu0 %v2447
  %6511 = vmatmul.mubr.bf16.gmra.mxu0 %v2446
  %v6512 = vpop.f32.mrf.mxu0
  %v6513 = vadd.f32 0.0, %v6512
  %v6514 = vpop.f32.mrf.mxu0
  %v6515 = vadd.f32 0.0, %v6514
  %v6516 = vpop.f32.mrf.mxu0
  %v6517 = vadd.f32 0.0, %v6516
  %v6518 = vpop.f32.mrf.mxu0
  %v6519 = vadd.f32 0.0, %v6518
  %6520 = vmatprep.mubr.bf16.mxu0 %v2585
  %6521 = vmatmul.mubr.bf16.gmra.mxu0 %v2584
  %v6522 = vpop.f32.mrf.mxu0
  %v6523 = vadd.f32 0.0, %v6522
  %v6524 = vpop.f32.mrf.mxu0
  %v6525 = vadd.f32 0.0, %v6524
  %v6526 = vpop.f32.mrf.mxu0
  %v6527 = vadd.f32 0.0, %v6526
  %v6528 = vpop.f32.mrf.mxu0
  %v6529 = vadd.f32 0.0, %v6528
  %6530 = vmatprep.mubr.bf16.mxu0 %v5634
  %6531 = vmatmul.mubr.bf16.gmra.mxu0 %v5633
  %v6532 = vpop.f32.mrf.mxu0
  %v6533 = vadd.f32 0.0, %v6532
  %v6534 = vpop.f32.mrf.mxu0
  %v6535 = vadd.f32 0.0, %v6534
  %v6536 = vpop.f32.mrf.mxu0
  %v6537 = vadd.f32 0.0, %v6536
  %v6538 = vpop.f32.mrf.mxu0
  %v6539 = vadd.f32 0.0, %v6538
  %6540 = vdwg.mxu0
  %6541 = vmatprep.subr.bf16.mxu0 %v6071
  %6542 = vmatpush1.bf16.msra.mxu0 %v6070
  %6543 = vmatprep.subr.bf16.mxu0 %v6069
  %6544 = vmatpush1.bf16.msra.mxu0 %v6068
  %6545 = vmatprep.subr.bf16.mxu0 %v6067
  %6546 = vmatpush1.bf16.msra.mxu0 %v6066
  %6547 = vmatprep.subr.bf16.mxu0 %v6065
  %6548 = vmatpush1.bf16.msra.mxu0 %v6064
  %6549 = vmatprep.subr.bf16.mxu0 %v6063
  %6550 = vmatpush1.bf16.msra.mxu0 %v6062
  %6551 = vmatprep.subr.bf16.mxu0 %v6061
  %6552 = vmatpush1.bf16.msra.mxu0 %v6060
  %6553 = vmatprep.subr.bf16.mxu0 %v6059
  %6554 = vmatpush1.bf16.msra.mxu0 %v6058
  %6555 = vmatprep.subr.bf16.mxu0 %v6057
  %6556 = vmatpush1.bf16.msra.mxu0 %v6056
  %6557 = vmatprep.subr.bf16.mxu0 %v6087
  %6558 = vmatpush2.bf16.msra.mxu0 %v6086
  %6559 = vmatprep.subr.bf16.mxu0 %v6085
  %6560 = vmatpush2.bf16.msra.mxu0 %v6084
  %6561 = vmatprep.subr.bf16.mxu0 %v6083
  %6562 = vmatpush2.bf16.msra.mxu0 %v6082
  %6563 = vmatprep.subr.bf16.mxu0 %v6081
  %6564 = vmatpush2.bf16.msra.mxu0 %v6080
  %6565 = vmatprep.subr.bf16.mxu0 %v6079
  %6566 = vmatpush2.bf16.msra.mxu0 %v6078
  %6567 = vmatprep.subr.bf16.mxu0 %v6077
  %6568 = vmatpush2.bf16.msra.mxu0 %v6076
  %6569 = vmatprep.subr.bf16.mxu0 %v6075
  %6570 = vmatpush2.bf16.msra.mxu0 %v6074
  %6571 = vmatprep.subr.bf16.mxu0 %v6073
  %6572 = vmatpush2.bf16.msra.mxu0 %v6072
  %6573 = vmatprep.mubr.bf16.mxu0 %v2287
  %6574 = vmatmul.mubr.bf16.gmra.mxu0 %v2286
  %v6575 = vpop.f32.mrf.mxu0
  %v6576 = vadd.f32 %v6251, %v6575
  %v6577 = vpop.f32.mrf.mxu0
  %v6578 = vadd.f32 %v6253, %v6577
  %v6579 = vpop.f32.mrf.mxu0
  %v6580 = vadd.f32 %v6255, %v6579
  %v6581 = vpop.f32.mrf.mxu0
  %v6582 = vadd.f32 %v6257, %v6581
  %6583 = vmatprep.mubr.bf16.mxu0 %v2293
  %6584 = vmatmul.mubr.bf16.gmra.mxu0 %v2292
  %v6585 = vpop.f32.mrf.mxu0
  %v6586 = vadd.f32 %v6261, %v6585
  %v6587 = vpop.f32.mrf.mxu0
  %v6588 = vadd.f32 %v6263, %v6587
  %v6589 = vpop.f32.mrf.mxu0
  %v6590 = vadd.f32 %v6265, %v6589
  %v6591 = vpop.f32.mrf.mxu0
  %v6592 = vadd.f32 %v6267, %v6591
  %6593 = vmatprep.mubr.bf16.mxu0 %v2299
  %6594 = vmatmul.mubr.bf16.gmra.mxu0 %v2298
  %v6595 = vpop.f32.mrf.mxu0
  %v6596 = vadd.f32 %v6271, %v6595
  %v6597 = vpop.f32.mrf.mxu0
  %v6598 = vadd.f32 %v6273, %v6597
  %v6599 = vpop.f32.mrf.mxu0
  %v6600 = vadd.f32 %v6275, %v6599
  %v6601 = vpop.f32.mrf.mxu0
  %v6602 = vadd.f32 %v6277, %v6601
  %6603 = vmatprep.mubr.bf16.mxu0 %v2305
  %6604 = vmatmul.mubr.bf16.gmra.mxu0 %v2304
  %v6605 = vpop.f32.mrf.mxu0
  %v6606 = vadd.f32 %v6281, %v6605
  %v6607 = vpop.f32.mrf.mxu0
  %v6608 = vadd.f32 %v6283, %v6607
  %v6609 = vpop.f32.mrf.mxu0
  %v6610 = vadd.f32 %v6285, %v6609
  %v6611 = vpop.f32.mrf.mxu0
  %v6612 = vadd.f32 %v6287, %v6611
  %6613 = vmatprep.mubr.bf16.mxu0 %v2311
  %6614 = vmatmul.mubr.bf16.gmra.mxu0 %v2310
  %v6615 = vpop.f32.mrf.mxu0
  %v6616 = vadd.f32 %v6291, %v6615
  %v6617 = vpop.f32.mrf.mxu0
  %v6618 = vadd.f32 %v6293, %v6617
  %v6619 = vpop.f32.mrf.mxu0
  %v6620 = vadd.f32 %v6295, %v6619
  %v6621 = vpop.f32.mrf.mxu0
  %v6622 = vadd.f32 %v6297, %v6621
  %6623 = vmatprep.mubr.bf16.mxu0 %v2317
  %6624 = vmatmul.mubr.bf16.gmra.mxu0 %v2316
  %v6625 = vpop.f32.mrf.mxu0
  %v6626 = vadd.f32 %v6301, %v6625
  %v6627 = vpop.f32.mrf.mxu0
  %v6628 = vadd.f32 %v6303, %v6627
  %v6629 = vpop.f32.mrf.mxu0
  %v6630 = vadd.f32 %v6305, %v6629
  %v6631 = vpop.f32.mrf.mxu0
  %v6632 = vadd.f32 %v6307, %v6631
  %6633 = vmatprep.mubr.bf16.mxu0 %v2323
  %6634 = vmatmul.mubr.bf16.gmra.mxu0 %v2322
  %v6635 = vpop.f32.mrf.mxu0
  %v6636 = vadd.f32 %v6311, %v6635
  %v6637 = vpop.f32.mrf.mxu0
  %v6638 = vadd.f32 %v6313, %v6637
  %v6639 = vpop.f32.mrf.mxu0
  %v6640 = vadd.f32 %v6315, %v6639
  %v6641 = vpop.f32.mrf.mxu0
  %v6642 = vadd.f32 %v6317, %v6641
  %6643 = vmatprep.mubr.bf16.mxu0 %v2329
  %6644 = vmatmul.mubr.bf16.gmra.mxu0 %v2328
  %v6645 = vpop.f32.mrf.mxu0
  %v6646 = vadd.f32 %v6321, %v6645
  %v6647 = vpop.f32.mrf.mxu0
  %v6648 = vadd.f32 %v6323, %v6647
  %v6649 = vpop.f32.mrf.mxu0
  %v6650 = vadd.f32 %v6325, %v6649
  %v6651 = vpop.f32.mrf.mxu0
  %v6652 = vadd.f32 %v6327, %v6651
  %6653 = vmatprep.mubr.bf16.mxu0 %v2335
  %6654 = vmatmul.mubr.bf16.gmra.mxu0 %v2334
  %v6655 = vpop.f32.mrf.mxu0
  %v6656 = vadd.f32 %v6331, %v6655
  %v6657 = vpop.f32.mrf.mxu0
  %v6658 = vadd.f32 %v6333, %v6657
  %v6659 = vpop.f32.mrf.mxu0
  %v6660 = vadd.f32 %v6335, %v6659
  %v6661 = vpop.f32.mrf.mxu0
  %v6662 = vadd.f32 %v6337, %v6661
  %6663 = vmatprep.mubr.bf16.mxu0 %v2341
  %6664 = vmatmul.mubr.bf16.gmra.mxu0 %v2340
  %v6665 = vpop.f32.mrf.mxu0
  %v6666 = vadd.f32 %v6341, %v6665
  %v6667 = vpop.f32.mrf.mxu0
  %v6668 = vadd.f32 %v6343, %v6667
  %v6669 = vpop.f32.mrf.mxu0
  %v6670 = vadd.f32 %v6345, %v6669
  %v6671 = vpop.f32.mrf.mxu0
  %v6672 = vadd.f32 %v6347, %v6671
  %6673 = vmatprep.mubr.bf16.mxu0 %v2347
  %6674 = vmatmul.mubr.bf16.gmra.mxu0 %v2346
  %v6675 = vpop.f32.mrf.mxu0
  %v6676 = vadd.f32 %v6351, %v6675
  %v6677 = vpop.f32.mrf.mxu0
  %v6678 = vadd.f32 %v6353, %v6677
  %v6679 = vpop.f32.mrf.mxu0
  %v6680 = vadd.f32 %v6355, %v6679
  %v6681 = vpop.f32.mrf.mxu0
  %v6682 = vadd.f32 %v6357, %v6681
  %6683 = vmatprep.mubr.bf16.mxu0 %v2353
  %6684 = vmatmul.mubr.bf16.gmra.mxu0 %v2352
  %v6685 = vpop.f32.mrf.mxu0
  %v6686 = vadd.f32 %v6361, %v6685
  %v6687 = vpop.f32.mrf.mxu0
  %v6688 = vadd.f32 %v6363, %v6687
  %v6689 = vpop.f32.mrf.mxu0
  %v6690 = vadd.f32 %v6365, %v6689
  %v6691 = vpop.f32.mrf.mxu0
  %v6692 = vadd.f32 %v6367, %v6691
  %6693 = vmatprep.mubr.bf16.mxu0 %v2359
  %6694 = vmatmul.mubr.bf16.gmra.mxu0 %v2358
  %v6695 = vpop.f32.mrf.mxu0
  %v6696 = vadd.f32 %v6371, %v6695
  %v6697 = vpop.f32.mrf.mxu0
  %v6698 = vadd.f32 %v6373, %v6697
  %v6699 = vpop.f32.mrf.mxu0
  %v6700 = vadd.f32 %v6375, %v6699
  %v6701 = vpop.f32.mrf.mxu0
  %v6702 = vadd.f32 %v6377, %v6701
  %6703 = vmatprep.mubr.bf16.mxu0 %v2365
  %6704 = vmatmul.mubr.bf16.gmra.mxu0 %v2364
  %v6705 = vpop.f32.mrf.mxu0
  %v6706 = vadd.f32 %v6381, %v6705
  %v6707 = vpop.f32.mrf.mxu0
  %v6708 = vadd.f32 %v6383, %v6707
  %v6709 = vpop.f32.mrf.mxu0
  %v6710 = vadd.f32 %v6385, %v6709
  %v6711 = vpop.f32.mrf.mxu0
  %v6712 = vadd.f32 %v6387, %v6711
  %6713 = vmatprep.mubr.bf16.mxu0 %v2371
  %6714 = vmatmul.mubr.bf16.gmra.mxu0 %v2370
  %v6715 = vpop.f32.mrf.mxu0
  %v6716 = vpop.f32.mrf.mxu0
  %v6717 = vpop.f32.mrf.mxu0
  %v6718 = vpop.f32.mrf.mxu0
  %6719 = vmatprep.mubr.bf16.mxu0 %v2377
  %6720 = vmatmul.mubr.bf16.gmra.mxu0 %v2376
  %v6721 = vpop.f32.mrf.mxu0
  %v6722 = vpop.f32.mrf.mxu0
  %v6723 = vpop.f32.mrf.mxu0
  %v6724 = vpop.f32.mrf.mxu0
  %6725 = vmatprep.mubr.bf16.mxu0 %v2383
  %6726 = vmatmul.mubr.bf16.gmra.mxu0 %v2382
  %v6727 = vpop.f32.mrf.mxu0
  %v6728 = vadd.f32 %v6403, %v6727
  %v6729 = vpop.f32.mrf.mxu0
  %v6730 = vadd.f32 %v6405, %v6729
  %v6731 = vpop.f32.mrf.mxu0
  %v6732 = vadd.f32 %v6407, %v6731
  %v6733 = vpop.f32.mrf.mxu0
  %v6734 = vadd.f32 %v6409, %v6733
  %6735 = vmatprep.mubr.bf16.mxu0 %v2389
  %6736 = vmatmul.mubr.bf16.gmra.mxu0 %v2388
  %v6737 = vpop.f32.mrf.mxu0
  %v6738 = vadd.f32 %v6413, %v6737
  %v6739 = vpop.f32.mrf.mxu0
  %v6740 = vadd.f32 %v6415, %v6739
  %v6741 = vpop.f32.mrf.mxu0
  %v6742 = vadd.f32 %v6417, %v6741
  %v6743 = vpop.f32.mrf.mxu0
  %v6744 = vadd.f32 %v6419, %v6743
  %6745 = vmatprep.mubr.bf16.mxu0 %v2395
  %6746 = vmatmul.mubr.bf16.gmra.mxu0 %v2394
  %v6747 = vpop.f32.mrf.mxu0
  %v6748 = vadd.f32 %v6423, %v6747
  %v6749 = vpop.f32.mrf.mxu0
  %v6750 = vadd.f32 %v6425, %v6749
  %v6751 = vpop.f32.mrf.mxu0
  %v6752 = vadd.f32 %v6427, %v6751
  %v6753 = vpop.f32.mrf.mxu0
  %v6754 = vadd.f32 %v6429, %v6753
  %6755 = vmatprep.mubr.bf16.mxu0 %v2401
  %6756 = vmatmul.mubr.bf16.gmra.mxu0 %v2400
  %v6757 = vpop.f32.mrf.mxu0
  %v6758 = vadd.f32 %v6433, %v6757
  %v6759 = vpop.f32.mrf.mxu0
  %v6760 = vadd.f32 %v6435, %v6759
  %v6761 = vpop.f32.mrf.mxu0
  %v6762 = vadd.f32 %v6437, %v6761
  %v6763 = vpop.f32.mrf.mxu0
  %v6764 = vadd.f32 %v6439, %v6763
  %6765 = vmatprep.mubr.bf16.mxu0 %v2407
  %6766 = vmatmul.mubr.bf16.gmra.mxu0 %v2406
  %v6767 = vpop.f32.mrf.mxu0
  %v6768 = vadd.f32 %v6443, %v6767
  %v6769 = vpop.f32.mrf.mxu0
  %v6770 = vadd.f32 %v6445, %v6769
  %v6771 = vpop.f32.mrf.mxu0
  %v6772 = vadd.f32 %v6447, %v6771
  %v6773 = vpop.f32.mrf.mxu0
  %v6774 = vadd.f32 %v6449, %v6773
  %6775 = vmatprep.mubr.bf16.mxu0 %v2413
  %6776 = vmatmul.mubr.bf16.gmra.mxu0 %v2412
  %v6777 = vpop.f32.mrf.mxu0
  %v6778 = vadd.f32 %v6453, %v6777
  %v6779 = vpop.f32.mrf.mxu0
  %v6780 = vadd.f32 %v6455, %v6779
  %v6781 = vpop.f32.mrf.mxu0
  %v6782 = vadd.f32 %v6457, %v6781
  %v6783 = vpop.f32.mrf.mxu0
  %v6784 = vadd.f32 %v6459, %v6783
  %6785 = vmatprep.mubr.bf16.mxu0 %v2419
  %6786 = vmatmul.mubr.bf16.gmra.mxu0 %v2418
  %v6787 = vpop.f32.mrf.mxu0
  %v6788 = vadd.f32 %v6463, %v6787
  %v6789 = vpop.f32.mrf.mxu0
  %v6790 = vadd.f32 %v6465, %v6789
  %v6791 = vpop.f32.mrf.mxu0
  %v6792 = vadd.f32 %v6467, %v6791
  %v6793 = vpop.f32.mrf.mxu0
  %v6794 = vadd.f32 %v6469, %v6793
  %6795 = vmatprep.mubr.bf16.mxu0 %v2425
  %6796 = vmatmul.mubr.bf16.gmra.mxu0 %v2424
  %v6797 = vpop.f32.mrf.mxu0
  %v6798 = vadd.f32 %v6473, %v6797
  %v6799 = vpop.f32.mrf.mxu0
  %v6800 = vadd.f32 %v6475, %v6799
  %v6801 = vpop.f32.mrf.mxu0
  %v6802 = vadd.f32 %v6477, %v6801
  %v6803 = vpop.f32.mrf.mxu0
  %v6804 = vadd.f32 %v6479, %v6803
  %6805 = vmatprep.mubr.bf16.mxu0 %v2431
  %6806 = vmatmul.mubr.bf16.gmra.mxu0 %v2430
  %v6807 = vpop.f32.mrf.mxu0
  %v6808 = vadd.f32 %v6483, %v6807
  %v6809 = vpop.f32.mrf.mxu0
  %v6810 = vadd.f32 %v6485, %v6809
  %v6811 = vpop.f32.mrf.mxu0
  %v6812 = vadd.f32 %v6487, %v6811
  %v6813 = vpop.f32.mrf.mxu0
  %v6814 = vadd.f32 %v6489, %v6813
  %6815 = vmatprep.mubr.bf16.mxu0 %v2437
  %6816 = vmatmul.mubr.bf16.gmra.mxu0 %v2436
  %v6817 = vpop.f32.mrf.mxu0
  %v6818 = vadd.f32 %v6493, %v6817
  %v6819 = vpop.f32.mrf.mxu0
  %v6820 = vadd.f32 %v6495, %v6819
  %v6821 = vpop.f32.mrf.mxu0
  %v6822 = vadd.f32 %v6497, %v6821
  %v6823 = vpop.f32.mrf.mxu0
  %v6824 = vadd.f32 %v6499, %v6823
  %6825 = vmatprep.mubr.bf16.mxu0 %v2443
  %6826 = vmatmul.mubr.bf16.gmra.mxu0 %v2442
  %v6827 = vpop.f32.mrf.mxu0
  %v6828 = vadd.f32 %v6503, %v6827
  %v6829 = vpop.f32.mrf.mxu0
  %v6830 = vadd.f32 %v6505, %v6829
  %v6831 = vpop.f32.mrf.mxu0
  %v6832 = vadd.f32 %v6507, %v6831
  %v6833 = vpop.f32.mrf.mxu0
  %v6834 = vadd.f32 %v6509, %v6833
  %6835 = vmatprep.mubr.bf16.mxu0 %v2581
  %6836 = vmatmul.mubr.bf16.gmra.mxu0 %v2580
  %v6837 = vpop.f32.mrf.mxu0
  %v6838 = vadd.f32 %v6513, %v6837
  %v6839 = vpop.f32.mrf.mxu0
  %v6840 = vadd.f32 %v6515, %v6839
  %v6841 = vpop.f32.mrf.mxu0
  %v6842 = vadd.f32 %v6517, %v6841
  %v6843 = vpop.f32.mrf.mxu0
  %v6844 = vadd.f32 %v6519, %v6843
  %6845 = vmatprep.mubr.bf16.mxu0 %v5630
  %6846 = vmatmul.mubr.bf16.gmra.mxu0 %v5629
  %v6847 = vpop.f32.mrf.mxu0
  %v6848 = vadd.f32 %v6523, %v6847
  %v6849 = vpop.f32.mrf.mxu0
  %v6850 = vadd.f32 %v6525, %v6849
  %v6851 = vpop.f32.mrf.mxu0
  %v6852 = vadd.f32 %v6527, %v6851
  %v6853 = vpop.f32.mrf.mxu0
  %v6854 = vadd.f32 %v6529, %v6853
  %6855 = vmatprep.mubr.bf16.mxu0 %v5636
  %6856 = vmatmul.mubr.bf16.gmra.mxu0 %v5635
  %v6857 = vpop.f32.mrf.mxu0
  %v6858 = vadd.f32 %v6533, %v6857
  %v6859 = vpop.f32.mrf.mxu0
  %v6860 = vadd.f32 %v6535, %v6859
  %v6861 = vpop.f32.mrf.mxu0
  %v6862 = vadd.f32 %v6537, %v6861
  %v6863 = vpop.f32.mrf.mxu0
  %v6864 = vadd.f32 %v6539, %v6863
  %6865 = vdwg.mxu0
  %6866 = vmatprep.subr.bf16.mxu0 %v6103
  %6867 = vmatpush1.bf16.msra.mxu0 %v6102
  %6868 = vmatprep.subr.bf16.mxu0 %v6101
  %6869 = vmatpush1.bf16.msra.mxu0 %v6100
  %6870 = vmatprep.subr.bf16.mxu0 %v6099
  %6871 = vmatpush1.bf16.msra.mxu0 %v6098
  %6872 = vmatprep.subr.bf16.mxu0 %v6097
  %6873 = vmatpush1.bf16.msra.mxu0 %v6096
  %6874 = vmatprep.subr.bf16.mxu0 %v6095
  %6875 = vmatpush1.bf16.msra.mxu0 %v6094
  %6876 = vmatprep.subr.bf16.mxu0 %v6093
  %6877 = vmatpush1.bf16.msra.mxu0 %v6092
  %6878 = vmatprep.subr.bf16.mxu0 %v6091
  %6879 = vmatpush1.bf16.msra.mxu0 %v6090
  %6880 = vmatprep.subr.bf16.mxu0 %v6089
  %6881 = vmatpush1.bf16.msra.mxu0 %v6088
  %6882 = vmatprep.subr.bf16.mxu0 %v6119
  %6883 = vmatpush2.bf16.msra.mxu0 %v6118
  %6884 = vmatprep.subr.bf16.mxu0 %v6117
  %6885 = vmatpush2.bf16.msra.mxu0 %v6116
  %6886 = vmatprep.subr.bf16.mxu0 %v6115
  %6887 = vmatpush2.bf16.msra.mxu0 %v6114
  %6888 = vmatprep.subr.bf16.mxu0 %v6113
  %6889 = vmatpush2.bf16.msra.mxu0 %v6112
  %6890 = vmatprep.subr.bf16.mxu0 %v6111
  %6891 = vmatpush2.bf16.msra.mxu0 %v6110
  %6892 = vmatprep.subr.bf16.mxu0 %v6109
  %6893 = vmatpush2.bf16.msra.mxu0 %v6108
  %6894 = vmatprep.subr.bf16.mxu0 %v6107
  %6895 = vmatpush2.bf16.msra.mxu0 %v6106
  %6896 = vmatprep.subr.bf16.mxu0 %v6105
  %6897 = vmatpush2.bf16.msra.mxu0 %v6104
  %6898 = vmatprep.mubr.bf16.mxu0 %v2289
  %6899 = vmatmul.mubr.bf16.gmra.mxu0 %v2288
  %v6900 = vpop.f32.mrf.mxu0
  %v6901 = vadd.f32 %v6576, %v6900
  %v6902 = vpop.f32.mrf.mxu0
  %v6903 = vadd.f32 %v6578, %v6902
  %v6904 = vpop.f32.mrf.mxu0
  %v6905 = vadd.f32 %v6580, %v6904
  %v6906 = vpop.f32.mrf.mxu0
  %v6907 = vadd.f32 %v6582, %v6906
  %6908 = vmatprep.mubr.bf16.mxu0 %v2295
  %6909 = vmatmul.mubr.bf16.gmra.mxu0 %v2294
  %v6910 = vpop.f32.mrf.mxu0
  %v6911 = vadd.f32 %v6586, %v6910
  %v6912 = vpop.f32.mrf.mxu0
  %v6913 = vadd.f32 %v6588, %v6912
  %v6914 = vpop.f32.mrf.mxu0
  %v6915 = vadd.f32 %v6590, %v6914
  %v6916 = vpop.f32.mrf.mxu0
  %v6917 = vadd.f32 %v6592, %v6916
  %6918 = vmatprep.mubr.bf16.mxu0 %v2301
  %6919 = vmatmul.mubr.bf16.gmra.mxu0 %v2300
  %v6920 = vpop.f32.mrf.mxu0
  %v6921 = vadd.f32 %v6596, %v6920
  %v6922 = vpop.f32.mrf.mxu0
  %v6923 = vadd.f32 %v6598, %v6922
  %v6924 = vpop.f32.mrf.mxu0
  %v6925 = vadd.f32 %v6600, %v6924
  %v6926 = vpop.f32.mrf.mxu0
  %v6927 = vadd.f32 %v6602, %v6926
  %6928 = vmatprep.mubr.bf16.mxu0 %v2307
  %6929 = vmatmul.mubr.bf16.gmra.mxu0 %v2306
  %v6930 = vpop.f32.mrf.mxu0
  %v6931 = vadd.f32 %v6606, %v6930
  %v6932 = vpop.f32.mrf.mxu0
  %v6933 = vadd.f32 %v6608, %v6932
  %v6934 = vpop.f32.mrf.mxu0
  %v6935 = vadd.f32 %v6610, %v6934
  %v6936 = vpop.f32.mrf.mxu0
  %v6937 = vadd.f32 %v6612, %v6936
  %6938 = vmatprep.mubr.bf16.mxu0 %v2313
  %6939 = vmatmul.mubr.bf16.gmra.mxu0 %v2312
  %v6940 = vpop.f32.mrf.mxu0
  %v6941 = vadd.f32 %v6616, %v6940
  %v6942 = vpop.f32.mrf.mxu0
  %v6943 = vadd.f32 %v6618, %v6942
  %v6944 = vpop.f32.mrf.mxu0
  %v6945 = vadd.f32 %v6620, %v6944
  %v6946 = vpop.f32.mrf.mxu0
  %v6947 = vadd.f32 %v6622, %v6946
  %6948 = vmatprep.mubr.bf16.mxu0 %v2319
  %6949 = vmatmul.mubr.bf16.gmra.mxu0 %v2318
  %v6950 = vpop.f32.mrf.mxu0
  %v6951 = vadd.f32 %v6626, %v6950
  %v6952 = vpop.f32.mrf.mxu0
  %v6953 = vadd.f32 %v6628, %v6952
  %v6954 = vpop.f32.mrf.mxu0
  %v6955 = vadd.f32 %v6630, %v6954
  %v6956 = vpop.f32.mrf.mxu0
  %v6957 = vadd.f32 %v6632, %v6956
  %6958 = vmatprep.mubr.bf16.mxu0 %v2325
  %6959 = vmatmul.mubr.bf16.gmra.mxu0 %v2324
  %v6960 = vpop.f32.mrf.mxu0
  %v6961 = vadd.f32 %v6636, %v6960
  %v6962 = vpop.f32.mrf.mxu0
  %v6963 = vadd.f32 %v6638, %v6962
  %v6964 = vpop.f32.mrf.mxu0
  %v6965 = vadd.f32 %v6640, %v6964
  %v6966 = vpop.f32.mrf.mxu0
  %v6967 = vadd.f32 %v6642, %v6966
  %6968 = vmatprep.mubr.bf16.mxu0 %v2331
  %6969 = vmatmul.mubr.bf16.gmra.mxu0 %v2330
  %v6970 = vpop.f32.mrf.mxu0
  %v6971 = vadd.f32 %v6646, %v6970
  %v6972 = vpop.f32.mrf.mxu0
  %v6973 = vadd.f32 %v6648, %v6972
  %v6974 = vpop.f32.mrf.mxu0
  %v6975 = vadd.f32 %v6650, %v6974
  %v6976 = vpop.f32.mrf.mxu0
  %v6977 = vadd.f32 %v6652, %v6976
  %6978 = vmatprep.mubr.bf16.mxu0 %v2337
  %6979 = vmatmul.mubr.bf16.gmra.mxu0 %v2336
  %v6980 = vpop.f32.mrf.mxu0
  %v6981 = vadd.f32 %v6656, %v6980
  %v6982 = vpop.f32.mrf.mxu0
  %v6983 = vadd.f32 %v6658, %v6982
  %v6984 = vpop.f32.mrf.mxu0
  %v6985 = vadd.f32 %v6660, %v6984
  %v6986 = vpop.f32.mrf.mxu0
  %v6987 = vadd.f32 %v6662, %v6986
  %6988 = vmatprep.mubr.bf16.mxu0 %v2343
  %6989 = vmatmul.mubr.bf16.gmra.mxu0 %v2342
  %v6990 = vpop.f32.mrf.mxu0
  %v6991 = vadd.f32 %v6666, %v6990
  %v6992 = vpop.f32.mrf.mxu0
  %v6993 = vadd.f32 %v6668, %v6992
  %v6994 = vpop.f32.mrf.mxu0
  %v6995 = vadd.f32 %v6670, %v6994
  %v6996 = vpop.f32.mrf.mxu0
  %v6997 = vadd.f32 %v6672, %v6996
  %6998 = vmatprep.mubr.bf16.mxu0 %v2349
  %6999 = vmatmul.mubr.bf16.gmra.mxu0 %v2348
  %v7000 = vpop.f32.mrf.mxu0
  %v7001 = vadd.f32 %v6676, %v7000
  %v7002 = vpop.f32.mrf.mxu0
  %v7003 = vadd.f32 %v6678, %v7002
  %v7004 = vpop.f32.mrf.mxu0
  %v7005 = vadd.f32 %v6680, %v7004
  %v7006 = vpop.f32.mrf.mxu0
  %v7007 = vadd.f32 %v6682, %v7006
  %7008 = vmatprep.mubr.bf16.mxu0 %v2355
  %7009 = vmatmul.mubr.bf16.gmra.mxu0 %v2354
  %v7010 = vpop.f32.mrf.mxu0
  %v7011 = vadd.f32 %v6686, %v7010
  %v7012 = vpop.f32.mrf.mxu0
  %v7013 = vadd.f32 %v6688, %v7012
  %v7014 = vpop.f32.mrf.mxu0
  %v7015 = vadd.f32 %v6690, %v7014
  %v7016 = vpop.f32.mrf.mxu0
  %v7017 = vadd.f32 %v6692, %v7016
  %7018 = vmatprep.mubr.bf16.mxu0 %v2361
  %7019 = vmatmul.mubr.bf16.gmra.mxu0 %v2360
  %v7020 = vpop.f32.mrf.mxu0
  %v7021 = vadd.f32 %v6696, %v7020
  %v7022 = vpop.f32.mrf.mxu0
  %v7023 = vadd.f32 %v6698, %v7022
  %v7024 = vpop.f32.mrf.mxu0
  %v7025 = vadd.f32 %v6700, %v7024
  %v7026 = vpop.f32.mrf.mxu0
  %v7027 = vadd.f32 %v6702, %v7026
  %7028 = vmatprep.mubr.bf16.mxu0 %v2367
  %7029 = vmatmul.mubr.bf16.gmra.mxu0 %v2366
  %v7030 = vpop.f32.mrf.mxu0
  %v7031 = vadd.f32 %v6706, %v7030
  %v7032 = vpop.f32.mrf.mxu0
  %v7033 = vadd.f32 %v6708, %v7032
  %v7034 = vpop.f32.mrf.mxu0
  %v7035 = vadd.f32 %v6710, %v7034
  %v7036 = vpop.f32.mrf.mxu0
  %v7037 = vadd.f32 %v6712, %v7036
  %7038 = vmatprep.mubr.bf16.mxu0 %v2373
  %7039 = vmatmul.mubr.bf16.gmra.mxu0 %v2372
  %v7040 = vpop.f32.mrf.mxu0
  %v7041 = vpop.f32.mrf.mxu0
  %v7042 = vpop.f32.mrf.mxu0
  %v7043 = vpop.f32.mrf.mxu0
  %7044 = vmatprep.mubr.bf16.mxu0 %v2379
  %7045 = vmatmul.mubr.bf16.gmra.mxu0 %v2378
  %v7046 = vpop.f32.mrf.mxu0
  %v7047 = vpop.f32.mrf.mxu0
  %v7048 = vpop.f32.mrf.mxu0
  %v7049 = vpop.f32.mrf.mxu0
  %7050 = vmatprep.mubr.bf16.mxu0 %v2385
  %7051 = vmatmul.mubr.bf16.gmra.mxu0 %v2384
  %v7052 = vpop.f32.mrf.mxu0
  %v7053 = vadd.f32 %v6728, %v7052
  %v7054 = vpop.f32.mrf.mxu0
  %v7055 = vadd.f32 %v6730, %v7054
  %v7056 = vpop.f32.mrf.mxu0
  %v7057 = vadd.f32 %v6732, %v7056
  %v7058 = vpop.f32.mrf.mxu0
  %v7059 = vadd.f32 %v6734, %v7058
  %7060 = vmatprep.mubr.bf16.mxu0 %v2391
  %7061 = vmatmul.mubr.bf16.gmra.mxu0 %v2390
  %v7062 = vpop.f32.mrf.mxu0
  %v7063 = vadd.f32 %v6738, %v7062
  %v7064 = vpop.f32.mrf.mxu0
  %v7065 = vadd.f32 %v6740, %v7064
  %v7066 = vpop.f32.mrf.mxu0
  %v7067 = vadd.f32 %v6742, %v7066
  %v7068 = vpop.f32.mrf.mxu0
  %v7069 = vadd.f32 %v6744, %v7068
  %7070 = vmatprep.mubr.bf16.mxu0 %v2397
  %7071 = vmatmul.mubr.bf16.gmra.mxu0 %v2396
  %v7072 = vpop.f32.mrf.mxu0
  %v7073 = vadd.f32 %v6748, %v7072
  %v7074 = vpop.f32.mrf.mxu0
  %v7075 = vadd.f32 %v6750, %v7074
  %v7076 = vpop.f32.mrf.mxu0
  %v7077 = vadd.f32 %v6752, %v7076
  %v7078 = vpop.f32.mrf.mxu0
  %v7079 = vadd.f32 %v6754, %v7078
  %7080 = vmatprep.mubr.bf16.mxu0 %v2403
  %7081 = vmatmul.mubr.bf16.gmra.mxu0 %v2402
  %v7082 = vpop.f32.mrf.mxu0
  %v7083 = vadd.f32 %v6758, %v7082
  %v7084 = vpop.f32.mrf.mxu0
  %v7085 = vadd.f32 %v6760, %v7084
  %v7086 = vpop.f32.mrf.mxu0
  %v7087 = vadd.f32 %v6762, %v7086
  %v7088 = vpop.f32.mrf.mxu0
  %v7089 = vadd.f32 %v6764, %v7088
  %7090 = vmatprep.mubr.bf16.mxu0 %v2409
  %7091 = vmatmul.mubr.bf16.gmra.mxu0 %v2408
  %v7092 = vpop.f32.mrf.mxu0
  %v7093 = vadd.f32 %v6768, %v7092
  %v7094 = vpop.f32.mrf.mxu0
  %v7095 = vadd.f32 %v6770, %v7094
  %v7096 = vpop.f32.mrf.mxu0
  %v7097 = vadd.f32 %v6772, %v7096
  %v7098 = vpop.f32.mrf.mxu0
  %v7099 = vadd.f32 %v6774, %v7098
  %7100 = vmatprep.mubr.bf16.mxu0 %v2415
  %7101 = vmatmul.mubr.bf16.gmra.mxu0 %v2414
  %v7102 = vpop.f32.mrf.mxu0
  %v7103 = vadd.f32 %v6778, %v7102
  %v7104 = vpop.f32.mrf.mxu0
  %v7105 = vadd.f32 %v6780, %v7104
  %v7106 = vpop.f32.mrf.mxu0
  %v7107 = vadd.f32 %v6782, %v7106
  %v7108 = vpop.f32.mrf.mxu0
  %v7109 = vadd.f32 %v6784, %v7108
  %7110 = vmatprep.mubr.bf16.mxu0 %v2421
  %7111 = vmatmul.mubr.bf16.gmra.mxu0 %v2420
  %v7112 = vpop.f32.mrf.mxu0
  %v7113 = vadd.f32 %v6788, %v7112
  %v7114 = vpop.f32.mrf.mxu0
  %v7115 = vadd.f32 %v6790, %v7114
  %v7116 = vpop.f32.mrf.mxu0
  %v7117 = vadd.f32 %v6792, %v7116
  %v7118 = vpop.f32.mrf.mxu0
  %v7119 = vadd.f32 %v6794, %v7118
  %7120 = vmatprep.mubr.bf16.mxu0 %v2427
  %7121 = vmatmul.mubr.bf16.gmra.mxu0 %v2426
  %v7122 = vpop.f32.mrf.mxu0
  %v7123 = vadd.f32 %v6798, %v7122
  %v7124 = vpop.f32.mrf.mxu0
  %v7125 = vadd.f32 %v6800, %v7124
  %v7126 = vpop.f32.mrf.mxu0
  %v7127 = vadd.f32 %v6802, %v7126
  %v7128 = vpop.f32.mrf.mxu0
  %v7129 = vadd.f32 %v6804, %v7128
  %7130 = vmatprep.mubr.bf16.mxu0 %v2433
  %7131 = vmatmul.mubr.bf16.gmra.mxu0 %v2432
  %v7132 = vpop.f32.mrf.mxu0
  %v7133 = vadd.f32 %v6808, %v7132
  %v7134 = vpop.f32.mrf.mxu0
  %v7135 = vadd.f32 %v6810, %v7134
  %v7136 = vpop.f32.mrf.mxu0
  %v7137 = vadd.f32 %v6812, %v7136
  %v7138 = vpop.f32.mrf.mxu0
  %v7139 = vadd.f32 %v6814, %v7138
  %7140 = vmatprep.mubr.bf16.mxu0 %v2439
  %7141 = vmatmul.mubr.bf16.gmra.mxu0 %v2438
  %v7142 = vpop.f32.mrf.mxu0
  %v7143 = vadd.f32 %v6818, %v7142
  %v7144 = vpop.f32.mrf.mxu0
  %v7145 = vadd.f32 %v6820, %v7144
  %v7146 = vpop.f32.mrf.mxu0
  %v7147 = vadd.f32 %v6822, %v7146
  %v7148 = vpop.f32.mrf.mxu0
  %v7149 = vadd.f32 %v6824, %v7148
  %7150 = vmatprep.mubr.bf16.mxu0 %v2445
  %7151 = vmatmul.mubr.bf16.gmra.mxu0 %v2444
  %v7152 = vpop.f32.mrf.mxu0
  %v7153 = vadd.f32 %v6828, %v7152
  %v7154 = vpop.f32.mrf.mxu0
  %v7155 = vadd.f32 %v6830, %v7154
  %v7156 = vpop.f32.mrf.mxu0
  %v7157 = vadd.f32 %v6832, %v7156
  %v7158 = vpop.f32.mrf.mxu0
  %v7159 = vadd.f32 %v6834, %v7158
  %7160 = vmatprep.mubr.bf16.mxu0 %v2583
  %7161 = vmatmul.mubr.bf16.gmra.mxu0 %v2582
  %v7162 = vpop.f32.mrf.mxu0
  %v7163 = vadd.f32 %v6838, %v7162
  %v7164 = vpop.f32.mrf.mxu0
  %v7165 = vadd.f32 %v6840, %v7164
  %v7166 = vpop.f32.mrf.mxu0
  %v7167 = vadd.f32 %v6842, %v7166
  %v7168 = vpop.f32.mrf.mxu0
  %v7169 = vadd.f32 %v6844, %v7168
  %7170 = vmatprep.mubr.bf16.mxu0 %v5632
  %7171 = vmatmul.mubr.bf16.gmra.mxu0 %v5631
  %v7172 = vpop.f32.mrf.mxu0
  %v7173 = vadd.f32 %v6848, %v7172
  %v7174 = vpop.f32.mrf.mxu0
  %v7175 = vadd.f32 %v6850, %v7174
  %v7176 = vpop.f32.mrf.mxu0
  %v7177 = vadd.f32 %v6852, %v7176
  %v7178 = vpop.f32.mrf.mxu0
  %v7179 = vadd.f32 %v6854, %v7178
  %7180 = vmatprep.mubr.bf16.mxu0 %v5638
  %7181 = vmatmul.mubr.bf16.gmra.mxu0 %v5637
  %v7182 = vpop.f32.mrf.mxu0
  %v7183 = vadd.f32 %v6858, %v7182
  %v7184 = vpop.f32.mrf.mxu0
  %v7185 = vadd.f32 %v6860, %v7184
  %v7186 = vpop.f32.mrf.mxu0
  %v7187 = vadd.f32 %v6862, %v7186
  %v7188 = vpop.f32.mrf.mxu0
  %v7189 = vadd.f32 %v6864, %v7188
  %7190 = vdwg.mxu0
  %v7191 = vadd.f32 %v5307, %v6901
  %v7192 = vadd.f32 %v5309, %v6903
  %v7193 = vadd.f32 %v5311, %v6905
  %v7194 = vadd.f32 %v5313, %v6907
  %v7195 = vadd.f32 %v5317, %v6911
  %v7196 = vadd.f32 %v5319, %v6913
  %v7197 = vadd.f32 %v5321, %v6915
  %v7198 = vadd.f32 %v5323, %v6917
  %v7199 = vadd.f32 %v5327, %v6921
  %v7200 = vadd.f32 %v5329, %v6923
  %v7201 = vadd.f32 %v5331, %v6925
  %v7202 = vadd.f32 %v5333, %v6927
  %v7203 = vadd.f32 %v5337, %v6931
  %v7204 = vadd.f32 %v5339, %v6933
  %v7205 = vadd.f32 %v5341, %v6935
  %v7206 = vadd.f32 %v5343, %v6937
  %v7207 = vadd.f32 %v5347, %v6941
  %v7208 = vadd.f32 %v5349, %v6943
  %v7209 = vadd.f32 %v5351, %v6945
  %v7210 = vadd.f32 %v5353, %v6947
  %v7211 = vadd.f32 %v5357, %v6951
  %v7212 = vadd.f32 %v5359, %v6953
  %v7213 = vadd.f32 %v5361, %v6955
  %v7214 = vadd.f32 %v5363, %v6957
  %v7215 = vadd.f32 %v5367, %v6961
  %v7216 = vadd.f32 %v5369, %v6963
  %v7217 = vadd.f32 %v5371, %v6965
  %v7218 = vadd.f32 %v5373, %v6967
  %v7219 = vadd.f32 %v5377, %v6971
  %v7220 = vadd.f32 %v5379, %v6973
  %v7221 = vadd.f32 %v5381, %v6975
  %v7222 = vadd.f32 %v5383, %v6977
  %v7223 = vadd.f32 %v5387, %v6981
  %v7224 = vadd.f32 %v5389, %v6983
  %v7225 = vadd.f32 %v5391, %v6985
  %v7226 = vadd.f32 %v5393, %v6987
  %v7227 = vadd.f32 %v5397, %v6991
  %v7228 = vadd.f32 %v5399, %v6993
  %v7229 = vadd.f32 %v5401, %v6995
  %v7230 = vadd.f32 %v5403, %v6997
  %v7231 = vadd.f32 %v5407, %v7001
  %v7232 = vadd.f32 %v5409, %v7003
  %v7233 = vadd.f32 %v5411, %v7005
  %v7234 = vadd.f32 %v5413, %v7007
  %v7235 = vadd.f32 %v5417, %v7011
  %v7236 = vadd.f32 %v5419, %v7013
  %v7237 = vadd.f32 %v5421, %v7015
  %v7238 = vadd.f32 %v5423, %v7017
  %v7239 = vadd.f32 %v5427, %v7021
  %v7240 = vadd.f32 %v5429, %v7023
  %v7241 = vadd.f32 %v5431, %v7025
  %v7242 = vadd.f32 %v5433, %v7027
  %v7243 = vadd.f32 %v5437, %v7031
  %v7244 = vadd.f32 %v5439, %v7033
  %v7245 = vadd.f32 %v5441, %v7035
  %v7246 = vadd.f32 %v5443, %v7037
  %v7247 = vadd.f32 %v5459, %v7053
  %v7248 = vadd.f32 %v5461, %v7055
  %v7249 = vadd.f32 %v5463, %v7057
  %v7250 = vadd.f32 %v5465, %v7059
  %v7251 = vadd.f32 %v5469, %v7063
  %v7252 = vadd.f32 %v5471, %v7065
  %v7253 = vadd.f32 %v5473, %v7067
  %v7254 = vadd.f32 %v5475, %v7069
  %v7255 = vadd.f32 %v5479, %v7073
  %v7256 = vadd.f32 %v5481, %v7075
  %v7257 = vadd.f32 %v5483, %v7077
  %v7258 = vadd.f32 %v5485, %v7079
  %v7259 = vadd.f32 %v5489, %v7083
  %v7260 = vadd.f32 %v5491, %v7085
  %v7261 = vadd.f32 %v5493, %v7087
  %v7262 = vadd.f32 %v5495, %v7089
  %v7263 = vadd.f32 %v5499, %v7093
  %v7264 = vadd.f32 %v5501, %v7095
  %v7265 = vadd.f32 %v5503, %v7097
  %v7266 = vadd.f32 %v5505, %v7099
  %v7267 = vadd.f32 %v5509, %v7103
  %v7268 = vadd.f32 %v5511, %v7105
  %v7269 = vadd.f32 %v5513, %v7107
  %v7270 = vadd.f32 %v5515, %v7109
  %v7271 = vadd.f32 %v5519, %v7113
  %v7272 = vadd.f32 %v5521, %v7115
  %v7273 = vadd.f32 %v5523, %v7117
  %v7274 = vadd.f32 %v5525, %v7119
  %v7275 = vadd.f32 %v5529, %v7123
  %v7276 = vadd.f32 %v5531, %v7125
  %v7277 = vadd.f32 %v5533, %v7127
  %v7278 = vadd.f32 %v5535, %v7129
  %v7279 = vadd.f32 %v5539, %v7133
  %v7280 = vadd.f32 %v5541, %v7135
  %v7281 = vadd.f32 %v5543, %v7137
  %v7282 = vadd.f32 %v5545, %v7139
  %v7283 = vadd.f32 %v5549, %v7143
  %v7284 = vadd.f32 %v5551, %v7145
  %v7285 = vadd.f32 %v5553, %v7147
  %v7286 = vadd.f32 %v5555, %v7149
  %v7287 = vadd.f32 %v5559, %v7153
  %v7288 = vadd.f32 %v5561, %v7155
  %v7289 = vadd.f32 %v5563, %v7157
  %v7290 = vadd.f32 %v5565, %v7159
  %v7291 = vadd.f32 %v5569, %v7163
  %v7292 = vadd.f32 %v5571, %v7165
  %v7293 = vadd.f32 %v5573, %v7167
  %v7294 = vadd.f32 %v5575, %v7169
  %v7295 = vadd.f32 %v5579, %v7173
  %v7296 = vadd.f32 %v5581, %v7175
  %v7297 = vadd.f32 %v5583, %v7177
  %v7298 = vadd.f32 %v5585, %v7179
  %v7299 = vadd.f32 %v5589, %v7183
  %v7300 = vadd.f32 %v5591, %v7185
  %v7301 = vadd.f32 %v5593, %v7187
  %v7302 = vadd.f32 %v5595, %v7189
  %v7303 = vld [vmem:[%s6] sm:$0x3]
  %v7305 = vlaneseq
  %v7306 = vshrl.u32 %v7305, 7
  %v7307 = vsub.s32 0, %v7306
  %v7308 = vrot.slane %v7303, %v7307
  %v7309 = vlaneseq
  %v7310 = vshrl.u32 %v7309, 7
  %v7311 = vsub.s32 1, %v7310
  %v7312 = vrot.slane %v7303, %v7311
  %v7315 = vadd.f32 %v7191, %v7308
  %v7316 = vadd.f32 %v7192, %v7312
  %v7317 = vadd.f32 %v7193, %v7308
  %v7318 = vadd.f32 %v7194, %v7312
  %v7319 = vadd.f32 %v7195, %v7308
  %v7320 = vadd.f32 %v7196, %v7312
  %v7321 = vadd.f32 %v7197, %v7308
  %v7322 = vadd.f32 %v7198, %v7312
  %v7323 = vadd.f32 %v7199, %v7308
  %v7324 = vadd.f32 %v7200, %v7312
  %v7325 = vadd.f32 %v7201, %v7308
  %v7326 = vadd.f32 %v7202, %v7312
  %v7327 = vadd.f32 %v7203, %v7308
  %v7328 = vadd.f32 %v7204, %v7312
  %v7329 = vadd.f32 %v7205, %v7308
  %v7330 = vadd.f32 %v7206, %v7312
  %v7331 = vadd.f32 %v7207, %v7308
  %v7332 = vadd.f32 %v7208, %v7312
  %v7333 = vadd.f32 %v7209, %v7308
  %v7334 = vadd.f32 %v7210, %v7312
  %v7335 = vadd.f32 %v7211, %v7308
  %v7336 = vadd.f32 %v7212, %v7312
  %v7337 = vadd.f32 %v7213, %v7308
  %v7338 = vadd.f32 %v7214, %v7312
  %v7339 = vadd.f32 %v7215, %v7308
  %v7340 = vadd.f32 %v7216, %v7312
  %v7341 = vadd.f32 %v7217, %v7308
  %v7342 = vadd.f32 %v7218, %v7312
  %v7343 = vadd.f32 %v7219, %v7308
  %v7344 = vadd.f32 %v7220, %v7312
  %v7345 = vadd.f32 %v7221, %v7308
  %v7346 = vadd.f32 %v7222, %v7312
  %v7347 = vadd.f32 %v7223, %v7308
  %v7348 = vadd.f32 %v7224, %v7312
  %v7349 = vadd.f32 %v7225, %v7308
  %v7350 = vadd.f32 %v7226, %v7312
  %v7351 = vadd.f32 %v7227, %v7308
  %v7352 = vadd.f32 %v7228, %v7312
  %v7353 = vadd.f32 %v7229, %v7308
  %v7354 = vadd.f32 %v7230, %v7312
  %v7355 = vadd.f32 %v7231, %v7308
  %v7356 = vadd.f32 %v7232, %v7312
  %v7357 = vadd.f32 %v7233, %v7308
  %v7358 = vadd.f32 %v7234, %v7312
  %v7359 = vadd.f32 %v7235, %v7308
  %v7360 = vadd.f32 %v7236, %v7312
  %v7361 = vadd.f32 %v7237, %v7308
  %v7362 = vadd.f32 %v7238, %v7312
  %v7363 = vadd.f32 %v7239, %v7308
  %v7364 = vadd.f32 %v7240, %v7312
  %v7365 = vadd.f32 %v7241, %v7308
  %v7366 = vadd.f32 %v7242, %v7312
  %v7367 = vadd.f32 %v7243, %v7308
  %v7368 = vadd.f32 %v7244, %v7312
  %v7369 = vadd.f32 %v7245, %v7308
  %v7370 = vadd.f32 %v7246, %v7312
  %v7371 = vadd.f32 %v7247, %v7308
  %v7372 = vadd.f32 %v7248, %v7312
  %v7373 = vadd.f32 %v7249, %v7308
  %v7374 = vadd.f32 %v7250, %v7312
  %v7375 = vadd.f32 %v7251, %v7308
  %v7376 = vadd.f32 %v7252, %v7312
  %v7377 = vadd.f32 %v7253, %v7308
  %v7378 = vadd.f32 %v7254, %v7312
  %v7379 = vadd.f32 %v7255, %v7308
  %v7380 = vadd.f32 %v7256, %v7312
  %v7381 = vadd.f32 %v7257, %v7308
  %v7382 = vadd.f32 %v7258, %v7312
  %v7383 = vadd.f32 %v7259, %v7308
  %v7384 = vadd.f32 %v7260, %v7312
  %v7385 = vadd.f32 %v7261, %v7308
  %v7386 = vadd.f32 %v7262, %v7312
  %v7387 = vadd.f32 %v7263, %v7308
  %v7388 = vadd.f32 %v7264, %v7312
  %v7389 = vadd.f32 %v7265, %v7308
  %v7390 = vadd.f32 %v7266, %v7312
  %v7391 = vadd.f32 %v7267, %v7308
  %v7392 = vadd.f32 %v7268, %v7312
  %v7393 = vadd.f32 %v7269, %v7308
  %v7394 = vadd.f32 %v7270, %v7312
  %v7395 = vadd.f32 %v7271, %v7308
  %v7396 = vadd.f32 %v7272, %v7312
  %v7397 = vadd.f32 %v7273, %v7308
  %v7398 = vadd.f32 %v7274, %v7312
  %v7399 = vadd.f32 %v7275, %v7308
  %v7400 = vadd.f32 %v7276, %v7312
  %v7401 = vadd.f32 %v7277, %v7308
  %v7402 = vadd.f32 %v7278, %v7312
  %v7403 = vadd.f32 %v7279, %v7308
  %v7404 = vadd.f32 %v7280, %v7312
  %v7405 = vadd.f32 %v7281, %v7308
  %v7406 = vadd.f32 %v7282, %v7312
  %v7407 = vadd.f32 %v7283, %v7308
  %v7408 = vadd.f32 %v7284, %v7312
  %v7409 = vadd.f32 %v7285, %v7308
  %v7410 = vadd.f32 %v7286, %v7312
  %v7411 = vadd.f32 %v7287, %v7308
  %v7412 = vadd.f32 %v7288, %v7312
  %v7413 = vadd.f32 %v7289, %v7308
  %v7414 = vadd.f32 %v7290, %v7312
  %v7415 = vadd.f32 %v7291, %v7308
  %v7416 = vadd.f32 %v7292, %v7312
  %v7417 = vadd.f32 %v7293, %v7308
  %v7418 = vadd.f32 %v7294, %v7312
  %v7419 = vadd.f32 %v7295, %v7308
  %v7420 = vadd.f32 %v7296, %v7312
  %v7421 = vadd.f32 %v7297, %v7308
  %v7422 = vadd.f32 %v7298, %v7312
  %v7423 = vadd.f32 %v7299, %v7308
  %v7424 = vadd.f32 %v7300, %v7312
  %v7425 = vadd.f32 %v7301, %v7308
  %v7426 = vadd.f32 %v7302, %v7312
  %7427 = vst [vmem:[%s7] sm:$0xff] %v7315
  %7428 = vst [vmem:[%s7 + $0x8] sm:$0xff] %v7316
  %7429 = vst [vmem:[%s7 + $0x10] sm:$0x3f] %v7317
  %7430 = vst [vmem:[%s7 + $0x18] sm:$0x3f] %v7318
  %v7435 = vrot.slane %v7319, 2
  %v7436 = vrot.slane %v7320, 2
  %v7437 = vrot.slane %v7321, 2
  %v7438 = vsel %vm1913, %v7435, %v7437
  %v7439 = vrot.slane %v7322, 2
  %v7440 = vsel %vm1913, %v7436, %v7439
  %7447 = vst [vmem:[%s7 + $0x10] sm:$0xc0] %v7435
  %7448 = vst [vmem:[%s7 + $0x18] sm:$0xc0] %v7436
  %7449 = vst [vmem:[%s7 + $0x20] sm:$0xff] %v7438
  %7450 = vst [vmem:[%s7 + $0x28] sm:$0xff] %v7440
  %7451 = vst [vmem:[%s7 + $0x30] sm:$0xf] %v7437
  %7452 = vst [vmem:[%s7 + $0x38] sm:$0xf] %v7439
  %vm7457 = vcmask 1043456
  %v7458 = vrot.slane %v7323, 4
  %v7459 = vrot.slane %v7324, 4
  %v7460 = vrot.slane %v7325, 4
  %v7461 = vsel %vm7457, %v7458, %v7460
  %v7462 = vrot.slane %v7326, 4
  %v7463 = vsel %vm7457, %v7459, %v7462
  %7470 = vst [vmem:[%s7 + $0x30] sm:$0xf0] %v7458
  %7471 = vst [vmem:[%s7 + $0x38] sm:$0xf0] %v7459
  %7472 = vst [vmem:[%s7 + $0x40] sm:$0xff] %v7461
  %7473 = vst [vmem:[%s7 + $0x48] sm:$0xff] %v7463
  %7474 = vst [vmem:[%s7 + $0x50] sm:$0x3] %v7460
  %7475 = vst [vmem:[%s7 + $0x58] sm:$0x3] %v7462
  %vm7480 = vcmask 1041408
  %v7481 = vrot.slane %v7327, 6
  %v7482 = vrot.slane %v7328, 6
  %v7483 = vrot.slane %v7329, 6
  %v7484 = vsel %vm7480, %v7481, %v7483
  %v7485 = vrot.slane %v7330, 6
  %v7486 = vsel %vm7480, %v7482, %v7485
  %7491 = vst [vmem:[%s7 + $0x50] sm:$0xfc] %v7481
  %7492 = vst [vmem:[%s7 + $0x58] sm:$0xfc] %v7482
  %7493 = vst [vmem:[%s7 + $0x60] sm:$0xff] %v7484
  %7494 = vst [vmem:[%s7 + $0x68] sm:$0xff] %v7486
  %7495 = vst [vmem:[%s7 + $0x70] sm:$0xff] %v7331
  %7496 = vst [vmem:[%s7 + $0x78] sm:$0xff] %v7332
  %7497 = vst [vmem:[%s7 + $0x80] sm:$0x3f] %v7333
  %7498 = vst [vmem:[%s7 + $0x88] sm:$0x3f] %v7334
  %v7503 = vrot.slane %v7335, 2
  %v7504 = vrot.slane %v7336, 2
  %v7505 = vrot.slane %v7337, 2
  %v7506 = vsel %vm1913, %v7503, %v7505
  %v7507 = vrot.slane %v7338, 2
  %v7508 = vsel %vm1913, %v7504, %v7507
  %7515 = vst [vmem:[%s7 + $0x80] sm:$0xc0] %v7503
  %7516 = vst [vmem:[%s7 + $0x88] sm:$0xc0] %v7504
  %7517 = vst [vmem:[%s7 + $0x90] sm:$0xff] %v7506
  %7518 = vst [vmem:[%s7 + $0x98] sm:$0xff] %v7508
  %7519 = vst [vmem:[%s7 + $0xa0] sm:$0xf] %v7505
  %7520 = vst [vmem:[%s7 + $0xa8] sm:$0xf] %v7507
  %v7525 = vrot.slane %v7339, 4
  %v7526 = vrot.slane %v7340, 4
  %v7527 = vrot.slane %v7341, 4
  %v7528 = vsel %vm7457, %v7525, %v7527
  %v7529 = vrot.slane %v7342, 4
  %v7530 = vsel %vm7457, %v7526, %v7529
  %7537 = vst [vmem:[%s7 + $0xa0] sm:$0xf0] %v7525
  %7538 = vst [vmem:[%s7 + $0xa8] sm:$0xf0] %v7526
  %7539 = vst [vmem:[%s7 + $0xb0] sm:$0xff] %v7528
  %7540 = vst [vmem:[%s7 + $0xb8] sm:$0xff] %v7530
  %7541 = vst [vmem:[%s7 + $0xc0] sm:$0x3] %v7527
  %7542 = vst [vmem:[%s7 + $0xc8] sm:$0x3] %v7529
  %v7547 = vrot.slane %v7343, 6
  %v7548 = vrot.slane %v7344, 6
  %v7549 = vrot.slane %v7345, 6
  %v7550 = vsel %vm7480, %v7547, %v7549
  %v7551 = vrot.slane %v7346, 6
  %v7552 = vsel %vm7480, %v7548, %v7551
  %7557 = vst [vmem:[%s7 + $0xc0] sm:$0xfc] %v7547
  %7558 = vst [vmem:[%s7 + $0xc8] sm:$0xfc] %v7548
  %7559 = vst [vmem:[%s7 + $0xd0] sm:$0xff] %v7550
  %7560 = vst [vmem:[%s7 + $0xd8] sm:$0xff] %v7552
  %7561 = vst [vmem:[%s7 + $0xe0] sm:$0xff] %v7347
  %7562 = vst [vmem:[%s7 + $0xe8] sm:$0xff] %v7348
  %7563 = vst [vmem:[%s7 + $0xf0] sm:$0x3f] %v7349
  %7564 = vst [vmem:[%s7 + $0xf8] sm:$0x3f] %v7350
  %v7569 = vrot.slane %v7351, 2
  %v7570 = vrot.slane %v7352, 2
  %v7571 = vrot.slane %v7353, 2
  %v7572 = vsel %vm1913, %v7569, %v7571
  %v7573 = vrot.slane %v7354, 2
  %v7574 = vsel %vm1913, %v7570, %v7573
  %7581 = vst [vmem:[%s7 + $0xf0] sm:$0xc0] %v7569
  %7582 = vst [vmem:[%s7 + $0xf8] sm:$0xc0] %v7570
  %7583 = vst [vmem:[%s7 + $0x100] sm:$0xff] %v7572
  %7584 = vst [vmem:[%s7 + $0x108] sm:$0xff] %v7574
  %7585 = vst [vmem:[%s7 + $0x110] sm:$0xf] %v7571
  %7586 = vst [vmem:[%s7 + $0x118] sm:$0xf] %v7573
  %v7591 = vrot.slane %v7355, 4
  %v7592 = vrot.slane %v7356, 4
  %v7593 = vrot.slane %v7357, 4
  %v7594 = vsel %vm7457, %v7591, %v7593
  %v7595 = vrot.slane %v7358, 4
  %v7596 = vsel %vm7457, %v7592, %v7595
  %7603 = vst [vmem:[%s7 + $0x110] sm:$0xf0] %v7591
  %7604 = vst [vmem:[%s7 + $0x118] sm:$0xf0] %v7592
  %7605 = vst [vmem:[%s7 + $0x120] sm:$0xff] %v7594
  %7606 = vst [vmem:[%s7 + $0x128] sm:$0xff] %v7596
  %7607 = vst [vmem:[%s7 + $0x130] sm:$0x3] %v7593
  %7608 = vst [vmem:[%s7 + $0x138] sm:$0x3] %v7595
  %v7613 = vrot.slane %v7359, 6
  %v7614 = vrot.slane %v7360, 6
  %v7615 = vrot.slane %v7361, 6
  %v7616 = vsel %vm7480, %v7613, %v7615
  %v7617 = vrot.slane %v7362, 6
  %v7618 = vsel %vm7480, %v7614, %v7617
  %7623 = vst [vmem:[%s7 + $0x130] sm:$0xfc] %v7613
  %7624 = vst [vmem:[%s7 + $0x138] sm:$0xfc] %v7614
  %7625 = vst [vmem:[%s7 + $0x140] sm:$0xff] %v7616
  %7626 = vst [vmem:[%s7 + $0x148] sm:$0xff] %v7618
  %7627 = vst [vmem:[%s7 + $0x150] sm:$0xff] %v7363
  %7628 = vst [vmem:[%s7 + $0x158] sm:$0xff] %v7364
  %7629 = vst [vmem:[%s7 + $0x160] sm:$0x3f] %v7365
  %7630 = vst [vmem:[%s7 + $0x168] sm:$0x3f] %v7366
  %v7635 = vrot.slane %v7367, 2
  %v7636 = vrot.slane %v7368, 2
  %v7637 = vrot.slane %v7369, 2
  %v7638 = vsel %vm1913, %v7635, %v7637
  %v7639 = vrot.slane %v7370, 2
  %v7640 = vsel %vm1913, %v7636, %v7639
  %7647 = vst [vmem:[%s7 + $0x160] sm:$0xc0] %v7635
  %7648 = vst [vmem:[%s7 + $0x168] sm:$0xc0] %v7636
  %7649 = vst [vmem:[%s7 + $0x170] sm:$0xff] %v7638
  %7650 = vst [vmem:[%s7 + $0x178] sm:$0xff] %v7640
  %7651 = vst [vmem:[%s7 + $0x180] sm:$0xf] %v7637
  %7652 = vst [vmem:[%s7 + $0x188] sm:$0xf] %v7639
  %v7657 = vrot.slane %v7371, 4
  %v7658 = vrot.slane %v7372, 4
  %v7659 = vrot.slane %v7373, 4
  %v7660 = vsel %vm7457, %v7657, %v7659
  %v7661 = vrot.slane %v7374, 4
  %v7662 = vsel %vm7457, %v7658, %v7661
  %7669 = vst [vmem:[%s7 + $0x180] sm:$0xf0] %v7657
  %7670 = vst [vmem:[%s7 + $0x188] sm:$0xf0] %v7658
  %7671 = vst [vmem:[%s7 + $0x190] sm:$0xff] %v7660
  %7672 = vst [vmem:[%s7 + $0x198] sm:$0xff] %v7662
  %7673 = vst [vmem:[%s7 + $0x1a0] sm:$0x3] %v7659
  %7674 = vst [vmem:[%s7 + $0x1a8] sm:$0x3] %v7661
  %v7679 = vrot.slane %v7375, 6
  %v7680 = vrot.slane %v7376, 6
  %v7681 = vrot.slane %v7377, 6
  %v7682 = vsel %vm7480, %v7679, %v7681
  %v7683 = vrot.slane %v7378, 6
  %v7684 = vsel %vm7480, %v7680, %v7683
  %7689 = vst [vmem:[%s7 + $0x1a0] sm:$0xfc] %v7679
  %7690 = vst [vmem:[%s7 + $0x1a8] sm:$0xfc] %v7680
  %7691 = vst [vmem:[%s7 + $0x1b0] sm:$0xff] %v7682
  %7692 = vst [vmem:[%s7 + $0x1b8] sm:$0xff] %v7684
  %7693 = vst [vmem:[%s7 + $0x1c0] sm:$0xff] %v7379
  %7694 = vst [vmem:[%s7 + $0x1c8] sm:$0xff] %v7380
  %7695 = vst [vmem:[%s7 + $0x1d0] sm:$0x3f] %v7381
  %7696 = vst [vmem:[%s7 + $0x1d8] sm:$0x3f] %v7382
  %v7701 = vrot.slane %v7383, 2
  %v7702 = vrot.slane %v7384, 2
  %v7703 = vrot.slane %v7385, 2
  %v7704 = vsel %vm1913, %v7701, %v7703
  %v7705 = vrot.slane %v7386, 2
  %v7706 = vsel %vm1913, %v7702, %v7705
  %7713 = vst [vmem:[%s7 + $0x1d0] sm:$0xc0] %v7701
  %7714 = vst [vmem:[%s7 + $0x1d8] sm:$0xc0] %v7702
  %7715 = vst [vmem:[%s7 + $0x1e0] sm:$0xff] %v7704
  %7716 = vst [vmem:[%s7 + $0x1e8] sm:$0xff] %v7706
  %7717 = vst [vmem:[%s7 + $0x1f0] sm:$0xf] %v7703
  %7718 = vst [vmem:[%s7 + $0x1f8] sm:$0xf] %v7705
  %v7723 = vrot.slane %v7387, 4
  %v7724 = vrot.slane %v7388, 4
  %v7725 = vrot.slane %v7389, 4
  %v7726 = vsel %vm7457, %v7723, %v7725
  %v7727 = vrot.slane %v7390, 4
  %v7728 = vsel %vm7457, %v7724, %v7727
  %7735 = vst [vmem:[%s7 + $0x1f0] sm:$0xf0] %v7723
  %7736 = vst [vmem:[%s7 + $0x1f8] sm:$0xf0] %v7724
  %7737 = vst [vmem:[%s7 + $0x200] sm:$0xff] %v7726
  %7738 = vst [vmem:[%s7 + $0x208] sm:$0xff] %v7728
  %7739 = vst [vmem:[%s7 + $0x210] sm:$0x3] %v7725
  %7740 = vst [vmem:[%s7 + $0x218] sm:$0x3] %v7727
  %v7745 = vrot.slane %v7391, 6
  %v7746 = vrot.slane %v7392, 6
  %v7747 = vrot.slane %v7393, 6
  %v7748 = vsel %vm7480, %v7745, %v7747
  %v7749 = vrot.slane %v7394, 6
  %v7750 = vsel %vm7480, %v7746, %v7749
  %7755 = vst [vmem:[%s7 + $0x210] sm:$0xfc] %v7745
  %7756 = vst [vmem:[%s7 + $0x218] sm:$0xfc] %v7746
  %7757 = vst [vmem:[%s7 + $0x220] sm:$0xff] %v7748
  %7758 = vst [vmem:[%s7 + $0x228] sm:$0xff] %v7750
  %7759 = vst [vmem:[%s7 + $0x230] sm:$0xff] %v7395
  %7760 = vst [vmem:[%s7 + $0x238] sm:$0xff] %v7396
  %7761 = vst [vmem:[%s7 + $0x240] sm:$0x3f] %v7397
  %7762 = vst [vmem:[%s7 + $0x248] sm:$0x3f] %v7398
  %v7767 = vrot.slane %v7399, 2
  %v7768 = vrot.slane %v7400, 2
  %v7769 = vrot.slane %v7401, 2
  %v7770 = vsel %vm1913, %v7767, %v7769
  %v7771 = vrot.slane %v7402, 2
  %v7772 = vsel %vm1913, %v7768, %v7771
  %7779 = vst [vmem:[%s7 + $0x240] sm:$0xc0] %v7767
  %7780 = vst [vmem:[%s7 + $0x248] sm:$0xc0] %v7768
  %7781 = vst [vmem:[%s7 + $0x250] sm:$0xff] %v7770
  %7782 = vst [vmem:[%s7 + $0x258] sm:$0xff] %v7772
  %7783 = vst [vmem:[%s7 + $0x260] sm:$0xf] %v7769
  %7784 = vst [vmem:[%s7 + $0x268] sm:$0xf] %v7771
  %v7789 = vrot.slane %v7403, 4
  %v7790 = vrot.slane %v7404, 4
  %v7791 = vrot.slane %v7405, 4
  %v7792 = vsel %vm7457, %v7789, %v7791
  %v7793 = vrot.slane %v7406, 4
  %v7794 = vsel %vm7457, %v7790, %v7793
  %7801 = vst [vmem:[%s7 + $0x260] sm:$0xf0] %v7789
  %7802 = vst [vmem:[%s7 + $0x268] sm:$0xf0] %v7790
  %7803 = vst [vmem:[%s7 + $0x270] sm:$0xff] %v7792
  %7804 = vst [vmem:[%s7 + $0x278] sm:$0xff] %v7794
  %7805 = vst [vmem:[%s7 + $0x280] sm:$0x3] %v7791
  %7806 = vst [vmem:[%s7 + $0x288] sm:$0x3] %v7793
  %v7811 = vrot.slane %v7407, 6
  %v7812 = vrot.slane %v7408, 6
  %v7813 = vrot.slane %v7409, 6
  %v7814 = vsel %vm7480, %v7811, %v7813
  %v7815 = vrot.slane %v7410, 6
  %v7816 = vsel %vm7480, %v7812, %v7815
  %7821 = vst [vmem:[%s7 + $0x280] sm:$0xfc] %v7811
  %7822 = vst [vmem:[%s7 + $0x288] sm:$0xfc] %v7812
  %7823 = vst [vmem:[%s7 + $0x290] sm:$0xff] %v7814
  %7824 = vst [vmem:[%s7 + $0x298] sm:$0xff] %v7816
  %7825 = vst [vmem:[%s7 + $0x2a0] sm:$0xff] %v7411
  %7826 = vst [vmem:[%s7 + $0x2a8] sm:$0xff] %v7412
  %7827 = vst [vmem:[%s7 + $0x2b0] sm:$0x3f] %v7413
  %7828 = vst [vmem:[%s7 + $0x2b8] sm:$0x3f] %v7414
  %v7833 = vrot.slane %v7415, 2
  %v7834 = vrot.slane %v7416, 2
  %v7835 = vrot.slane %v7417, 2
  %v7836 = vsel %vm1913, %v7833, %v7835
  %v7837 = vrot.slane %v7418, 2
  %v7838 = vsel %vm1913, %v7834, %v7837
  %7845 = vst [vmem:[%s7 + $0x2b0] sm:$0xc0] %v7833
  %7846 = vst [vmem:[%s7 + $0x2b8] sm:$0xc0] %v7834
  %7847 = vst [vmem:[%s7 + $0x2c0] sm:$0xff] %v7836
  %7848 = vst [vmem:[%s7 + $0x2c8] sm:$0xff] %v7838
  %7849 = vst [vmem:[%s7 + $0x2d0] sm:$0xf] %v7835
  %7850 = vst [vmem:[%s7 + $0x2d8] sm:$0xf] %v7837
  %v7855 = vrot.slane %v7419, 4
  %v7856 = vrot.slane %v7420, 4
  %v7857 = vrot.slane %v7421, 4
  %v7858 = vsel %vm7457, %v7855, %v7857
  %v7859 = vrot.slane %v7422, 4
  %v7860 = vsel %vm7457, %v7856, %v7859
  %7867 = vst [vmem:[%s7 + $0x2d0] sm:$0xf0] %v7855
  %7868 = vst [vmem:[%s7 + $0x2d8] sm:$0xf0] %v7856
  %7869 = vst [vmem:[%s7 + $0x2e0] sm:$0xff] %v7858
  %7870 = vst [vmem:[%s7 + $0x2e8] sm:$0xff] %v7860
  %7871 = vst [vmem:[%s7 + $0x2f0] sm:$0x3] %v7857
  %7872 = vst [vmem:[%s7 + $0x2f8] sm:$0x3] %v7859
  %v7877 = vrot.slane %v7423, 6
  %v7878 = vrot.slane %v7424, 6
  %v7879 = vrot.slane %v7425, 6
  %v7880 = vsel %vm7480, %v7877, %v7879
  %v7881 = vrot.slane %v7426, 6
  %v7882 = vsel %vm7480, %v7878, %v7881
  %7887 = vst [vmem:[%s7 + $0x2f0] sm:$0xfc] %v7877
  %7888 = vst [vmem:[%s7 + $0x2f8] sm:$0xfc] %v7878
  %7889 = vst [vmem:[%s7 + $0x300] sm:$0xff] %v7880
  %7890 = vst [vmem:[%s7 + $0x308] sm:$0xff] %v7882
  // Predicated region
  $region30: #{fpn_forward.5} parent=0 // pred_check
    _
  $region31: #{fpn_forward.5} parent=0 // pred_check_branch
    %7892 = sbr.rel (0) target = $region33
  $region32: #{fpn_forward.5} parent=0 // pred_region
    _
  $region33: #{fpn_forward.5} parent=0 // pred_fallthru
    _
  // Predicated region
  $region34: #{fpn_forward.5} parent=0 // pred_check
    _
  $region35: #{fpn_forward.5} parent=0 // pred_check_branch
    %7894 = sbr.rel (0) target = $region37
  $region36: #{fpn_forward.5} parent=0 // pred_region
    _
  $region37: #{fpn_forward.5} parent=0 // pred_fallthru
    _

</llo_original>
